<compile_context>
chip_gen: v5e
topology: v5e:2x2
jax: 0.10.0
libtpu: 0.0.40
codegen_flags: <defaults>
</compile_context>

<pallas_src>
import functools

import jax
import jax.numpy as jnp
from jax.experimental import pallas as pl
from jax.experimental.pallas import tpu as pltpu

EPS = 1e-5  # nn.GroupNorm default eps


# ----------------------------- kernel helpers ------------------------------
def _silu(x):
    # x * sigmoid(x); exp and the approximate reciprocal both run on the EUP.
    return x * pl.reciprocal(1.0 + jnp.exp(-x), approx=True)


def _group_norm(h, g, gt, n_per_group):
    """GroupNorm(affine=False) over h:(HW, C).

    Per-group stats via one-hot matmuls (g:(C, G), gt:(G, C)); two-pass
    (mean first, then centred sum of squares) to avoid E[x^2]-E[x]^2
    cancellation.
    """
    chan_sum = jnp.sum(h, axis=0, keepdims=True)                          # (1, C)
    mean_g = jnp.dot(chan_sum, g, preferred_element_type=jnp.float32) / n_per_group
    mean_c = jnp.dot(mean_g, gt, preferred_element_type=jnp.float32)      # (1, C)
    centered = h - mean_c
    sq_sum = jnp.sum(centered * centered, axis=0, keepdims=True)          # (1, C)
    var_g = jnp.dot(sq_sum, g, preferred_element_type=jnp.float32) / n_per_group
    var_c = jnp.dot(var_g, gt, preferred_element_type=jnp.float32)        # (1, C)
    return centered * jax.lax.rsqrt(var_c + EPS)


# -------------------------------- kernel ------------------------------------
def _student_block_kernel(xflat_ref, w1_ref, b1_ref, w2_ref, b2_ref,
                          wres_ref, bres_ref,
                          sc1_ref, sh1_ref, sc2_ref, sh2_ref,
                          g_ref, gt_ref,
                          out_ref, hflat_ref, *, W, L):
    HW, C = out_ref.shape
    G = g_ref.shape[1]
    n_per_group = float(HW * (C // G))

    # Per-output-row column index; masks remove taps that would otherwise wrap
    # across image-row boundaries in the flattened (HW, C) layout.
    xpos = jax.lax.broadcasted_iota(jnp.int32, (HW, 1), 0) % W
    masks = (xpos >= 1, None, xpos < (W - 1))                 # dx = 0, 1, 2

    def conv3x3(src_ref, w_ref, to_bf16):
        acc = jnp.zeros((HW, C), jnp.float32)
        for t in range(9):
            dy, dx = t // 3, t % 3
            start = L + (dy - 1) * W + (dx - 1)               # static offset
            lhs = src_ref[start:start + HW, :]
            if masks[dx] is not None:
                lhs = jnp.where(masks[dx], lhs, 0.0)
            if to_bf16:
                lhs = lhs.astype(jnp.bfloat16)
            acc = acc + jnp.dot(lhs, w_ref[t],
                                preferred_element_type=jnp.float32)
        return acc

    # ---- conv1: nine shifted bf16 MXU matmuls, f32 accumulation -------------
    h = conv3x3(xflat_ref, w1_ref, to_bf16=True) + b1_ref[...]

    # ---- norm1: GroupNorm + time scale/shift, then SiLU ----------------------
    h = _group_norm(h, g_ref[...], gt_ref[...], n_per_group)
    h = h * (1.0 + sc1_ref[...]) + sh1_ref[...]
    h = _silu(h)

    # Stage-1 activations stay resident in VMEM (bf16) inside a zero-padded
    # flat buffer; the interior starts at the sublane-aligned offset L.
    hflat_ref[...] = jnp.zeros_like(hflat_ref)
    hflat_ref[L:L + HW, :] = h.astype(jnp.bfloat16)

    # ---- conv2: nine shifted bf16 MXU matmuls, f32 accumulation --------------
    h2 = conv3x3(hflat_ref, w2_ref, to_bf16=False) + b2_ref[...]

    # ---- norm2: GroupNorm + time scale/shift ---------------------------------
    h2 = _group_norm(h2, g_ref[...], gt_ref[...], n_per_group)
    h2 = h2 * (1.0 + sc2_ref[...]) + sh2_ref[...]

    # use_attn=False (module default) -> no attention branch.
    # ---- residual 1x1 conv from the centre rows of the resident x tile ------
    xc = xflat_ref[L:L + HW, :]
    res = jnp.dot(xc, wres_ref[...], preferred_element_type=jnp.float32)
    out_ref[...] = h2 + res + bres_ref[...]


# ------------------------------ call wrapper ---------------------------------
def _full_spec(a):
    nd = a.ndim
    return pl.BlockSpec(a.shape, lambda i, _nd=nd: (0,) * _nd)


def student_block_forward(x, t_emb, p, groups=8):
    n, H, W, cin = x.shape
    cout = p['w1'].shape[-1]
    HW = H * W
    L = 8 * (-(-(W + 1) // 8))      # smallest multiple of 8 that is >= W + 1

    # group one-hot membership matrices for the in-kernel GroupNorm matmuls
    g = (jnp.arange(cout)[:, None] // (cout // groups)
         == jnp.arange(groups)[None, :]).astype(jnp.float32)             # (C, G)
    gt = g.T                                                             # (G, C)

    # time-MLP scale/shift precomputed in XLA (one tiny matmul per call)
    ta = jax.nn.silu(t_emb)
    ss1 = ta @ p['wt1'] + p['bt1']                                       # (N, 2C)
    ss2 = ta @ p['wt2'] + p['bt2']
    sc1 = ss1[:, :cout].reshape(n, 1, cout)
    sh1 = ss1[:, cout:].reshape(n, 1, cout)
    sc2 = ss2[:, :cout].reshape(n, 1, cout)
    sh2 = ss2[:, cout:].reshape(n, 1, cout)

    # conv weights as (tap, Cin, Cout) stacks, cast to bf16 for the MXU
    w1t = p['w1'].reshape(9, cin, cout).astype(jnp.bfloat16)
    w2t = p['w2'].reshape(9, cout, cout).astype(jnp.bfloat16)
    b1 = p['b1'].reshape(1, cout).astype(jnp.float32)
    b2 = p['b2'].reshape(1, cout).astype(jnp.float32)
    wres = p['wres'].astype(jnp.float32)                                 # (Cin, Cout)
    bres = p['bres'].reshape(1, cout).astype(jnp.float32)

    # spatially-flattened x with L zero halo rows on both ends
    xflat = jnp.pad(x.reshape(n, HW, cin), ((0, 0), (L, L), (0, 0)))

    vec_spec = pl.BlockSpec((None, 1, cout), lambda i: (i, 0, 0))

    # TODO(synk): for large images / channel counts, add an "arbitrary" HW-tile
    # grid axis with streamed GroupNorm statistics so the per-image working set
    # fits v7x's 64 MiB VMEM and the pipeline has enough steps to hide DMA.
    kernel = functools.partial(_student_block_kernel, W=W, L=L)
    out = pl.pallas_call(
        kernel,
        out_shape=jax.ShapeDtypeStruct((n, HW, cout), jnp.float32),
        grid_spec=pltpu.PrefetchScalarGridSpec(
            num_scalar_prefetch=0,
            grid=(n,),
            in_specs=[
                pl.BlockSpec((None, HW + 2 * L, cin), lambda i: (i, 0, 0)),
                _full_spec(w1t), _full_spec(b1),
                _full_spec(w2t), _full_spec(b2),
                _full_spec(wres), _full_spec(bres),
                vec_spec, vec_spec, vec_spec, vec_spec,
                _full_spec(g), _full_spec(gt),
            ],
            out_specs=pl.BlockSpec((None, HW, cout), lambda i: (i, 0, 0)),
            scratch_shapes=[pltpu.VMEM((HW + 2 * L, cout), jnp.bfloat16)],
        ),
        compiler_params=pltpu.CompilerParams(
            dimension_semantics=("parallel",)),
    )(xflat, w1t, b1, w2t, b2, wres, bres, sc1, sh1, sc2, sh2, g, gt)

    return out.reshape(n, H, W, cout)


# ------------------------- pure-JAX reference --------------------------------
def ref_forward(x, t_emb, p, groups):
    cout = p['w1'].shape[-1]

    def conv3(z, w, b):
        y = jax.lax.conv_general_dilated(
            z, w, (1, 1), 'SAME', dimension_numbers=('NHWC', 'HWIO', 'NHWC'))
        return y + b.reshape(1, 1, 1, -1)

    def gn(z):
        n, hh, ww, c = z.shape
        zg = z.reshape(n, hh, ww, groups, c // groups)
        m = zg.mean(axis=(1, 2, 4), keepdims=True)
        v = zg.var(axis=(1, 2, 4), keepdims=True)
        return ((zg - m) / jnp.sqrt(v + EPS)).reshape(n, hh, ww, c)

    def tss(wt, bt):
        ts = jax.nn.silu(t_emb) @ wt + bt
        return ts[:, :cout], ts[:, cout:]

    h = conv3(x, p['w1'], p['b1'])
    s1, sh1 = tss(p['wt1'], p['bt1'])
    h = gn(h) * (1 + s1[:, None, None, :]) + sh1[:, None, None, :]
    h = jax.nn.silu(h)
    h = conv3(h, p['w2'], p['b2'])
    s2, sh2 = tss(p['wt2'], p['bt2'])
    h = gn(h) * (1 + s2[:, None, None, :]) + sh2[:, None, None, :]
    res = x @ p['wres'] + p['bres'].reshape(1, 1, 1, -1)
    return h + res


# --------------------------------- main ---------------------------------------
def init_params(key, in_ch, out_ch, time_dim):
    ks = jax.random.split(key, 10)

    def nrm(k, shape, s=0.1):
        return s * jax.random.normal(k, shape, jnp.float32)

    return dict(
        w1=nrm(ks[0], (3, 3, in_ch, out_ch)),
        b1=nrm(ks[1], (out_ch,)),
        wt1=nrm(ks[2], (time_dim, 2 * out_ch)),
        bt1=nrm(ks[3], (2 * out_ch,)),
        w2=nrm(ks[4], (3, 3, out_ch, out_ch)),
        b2=nrm(ks[5], (out_ch,)),
        wt2=nrm(ks[6], (time_dim, 2 * out_ch)),
        bt2=nrm(ks[7], (2 * out_ch,)),
        wres=nrm(ks[8], (in_ch, out_ch)),
        bres=nrm(ks[9], (out_ch,)),
    )


if __name__ == "__main__":
    N, H, W = 2, 16, 16
    IN_CH, OUT_CH, TIME_DIM, GROUPS = 4, 32, 32, 8

    key = jax.random.PRNGKey(0)
    kx, kt, kp = jax.random.split(key, 3)
    x = jax.random.normal(kx, (N, H, W, IN_CH), jnp.float32)
    t_emb = jax.random.normal(kt, (N, TIME_DIM), jnp.float32)
    params = init_params(kp, IN_CH, OUT_CH, TIME_DIM)

    fwd = jax.jit(student_block_forward, static_argnames=("groups",))
    out = jax.block_until_ready(fwd(x, t_emb, params, groups=GROUPS))
    assert out.shape == (N, H, W, OUT_CH)

    ref = jax.block_until_ready(ref_forward(x, t_emb, params, GROUPS))
    err = float(jnp.max(jnp.abs(out - ref)))
    tol = 0.05 * max(1.0, float(jnp.max(jnp.abs(ref))))   # bf16 MXU operands
    assert err < tol, f"mismatch vs reference: err={err} tol={tol}"
    print("KERNEL_OK")
</pallas_src>

<mosaic_0001>
module attributes {stable_mosaic.version = 11 : i64} {
  func.func @_student_block_kernel(%arg0: i32, %arg1: memref<1x304x4xf32, #tpu.memory_space<vmem>>, %arg2: memref<9x4x32xbf16, #tpu.memory_space<vmem>>, %arg3: memref<1x32xf32, #tpu.memory_space<vmem>>, %arg4: memref<9x32x32xbf16, #tpu.memory_space<vmem>>, %arg5: memref<1x32xf32, #tpu.memory_space<vmem>>, %arg6: memref<4x32xf32, #tpu.memory_space<vmem>>, %arg7: memref<1x32xf32, #tpu.memory_space<vmem>>, %arg8: memref<1x1x32xf32, #tpu.memory_space<vmem>>, %arg9: memref<1x1x32xf32, #tpu.memory_space<vmem>>, %arg10: memref<1x1x32xf32, #tpu.memory_space<vmem>>, %arg11: memref<1x1x32xf32, #tpu.memory_space<vmem>>, %arg12: memref<32x8xf32, #tpu.memory_space<vmem>>, %arg13: memref<8x32xf32, #tpu.memory_space<vmem>>, %arg14: memref<1x256x32xf32, #tpu.memory_space<vmem>>, %arg15: memref<304x32xbf16, #tpu.memory_space<vmem>>) attributes {dimension_semantics = [#tpu.dimension_semantics<parallel>], iteration_bounds = array<i64: 2>, scalar_prefetch = 0 : i64, scratch_operands = 1 : i64, tpu.core_type = #tpu.core_type<tc>, window_params = [{transform_indices = @transform_0, window_bounds = array<i64: 1, 304, 4>}, {pipeline_mode = #tpu.pipeline_mode<synchronous>, transform_indices = @transform_1, window_bounds = array<i64: 9, 4, 32>}, {pipeline_mode = #tpu.pipeline_mode<synchronous>, transform_indices = @transform_2, window_bounds = array<i64: 1, 32>}, {pipeline_mode = #tpu.pipeline_mode<synchronous>, transform_indices = @transform_3, window_bounds = array<i64: 9, 32, 32>}, {pipeline_mode = #tpu.pipeline_mode<synchronous>, transform_indices = @transform_4, window_bounds = array<i64: 1, 32>}, {pipeline_mode = #tpu.pipeline_mode<synchronous>, transform_indices = @transform_5, window_bounds = array<i64: 4, 32>}, {pipeline_mode = #tpu.pipeline_mode<synchronous>, transform_indices = @transform_6, window_bounds = array<i64: 1, 32>}, {transform_indices = @transform_7, window_bounds = array<i64: 1, 1, 32>}, {transform_indices = @transform_8, window_bounds = array<i64: 1, 1, 32>}, {transform_indices = @transform_9, window_bounds = array<i64: 1, 1, 32>}, {transform_indices = @transform_10, window_bounds = array<i64: 1, 1, 32>}, {pipeline_mode = #tpu.pipeline_mode<synchronous>, transform_indices = @transform_11, window_bounds = array<i64: 32, 8>}, {pipeline_mode = #tpu.pipeline_mode<synchronous>, transform_indices = @transform_12, window_bounds = array<i64: 8, 32>}, {transform_indices = @transform_13, window_bounds = array<i64: 1, 256, 32>}]} {
    %0 = tpu.iota {dimensions = array<i32: 0>} : vector<256x1xi32>
    %c16_i32 = arith.constant 16 : i32
    %c0_i32 = arith.constant 0 : i32
    %1 = arith.cmpi eq, %c16_i32, %c0_i32 : i32
    %c1_i32 = arith.constant 1 : i32
    %2 = arith.select %1, %c1_i32, %c16_i32 : i32
    %3 = vector.broadcast %2 : i32 to vector<256x1xi32>
    %4 = arith.remsi %0, %3 : vector<256x1xi32>
    %c0_i32_0 = arith.constant 0 : i32
    %5 = vector.broadcast %c0_i32_0 : i32 to vector<256x1xi32>
    %6 = arith.cmpi ne, %4, %5 : vector<256x1xi32>
    %c0_i32_1 = arith.constant 0 : i32
    %7 = vector.broadcast %c0_i32_1 : i32 to vector<256x1xi32>
    %8 = arith.cmpi slt, %4, %7 : vector<256x1xi32>
    %c0_i32_2 = arith.constant 0 : i32
    %9 = arith.cmpi slt, %2, %c0_i32_2 : i32
    %10 = vector.broadcast %9 : i1 to vector<256x1xi1>
    %11 = vector.broadcast %10 : vector<256x1xi1> to vector<256x1xi1>
    %12 = arith.xori %8, %11 : vector<256x1xi1>
    %13 = arith.andi %12, %6 : vector<256x1xi1>
    %14 = vector.broadcast %2 : i32 to vector<256x1xi32>
    %15 = arith.addi %4, %14 : vector<256x1xi32>
    %16 = arith.select %13, %15, %4 : vector<256x1xi1>, vector<256x1xi32>
    %c1_i32_3 = arith.constant 1 : i32
    %17 = vector.broadcast %c1_i32_3 : i32 to vector<256x1xi32>
    %18 = arith.cmpi sge, %16, %17 : vector<256x1xi32>
    %c15_i32 = arith.constant 15 : i32
    %19 = vector.broadcast %c15_i32 : i32 to vector<256x1xi32>
    %20 = arith.cmpi slt, %16, %19 : vector<256x1xi32>
    %cst = arith.constant 0.000000e+00 : f32
    %21 = vector.broadcast %cst : f32 to vector<256x32xf32>
    %c0 = arith.constant 0 : index
    %c7 = arith.constant 7 : index
    %c0_4 = arith.constant 0 : index
    %22 = vector.load %arg1[%c0, %c7, %c0_4] : memref<1x304x4xf32, #tpu.memory_space<vmem>>, vector<1x256x4xf32>
    %23 = vector.shape_cast %22 : vector<1x256x4xf32> to vector<256x4xf32>
    %cst_5 = arith.constant 0.000000e+00 : f32
    %24 = vector.shape_cast %18 : vector<256x1xi1> to vector<256x1xi1>
    %25 = vector.broadcast %24 : vector<256x1xi1> to vector<256x4xi1>
    %26 = vector.broadcast %cst_5 : f32 to vector<256x4xf32>
    %27 = arith.select %25, %23, %26 : vector<256x4xi1>, vector<256x4xf32>
    %28 = arith.truncf %27 : vector<256x4xf32> to vector<256x4xbf16>
    %c0_6 = arith.constant 0 : index
    %c0_7 = arith.constant 0 : index
    %c0_8 = arith.constant 0 : index
    %29 = vector.load %arg2[%c0_6, %c0_7, %c0_8] : memref<9x4x32xbf16, #tpu.memory_space<vmem>>, vector<1x4x32xbf16>
    %30 = vector.shape_cast %29 : vector<1x4x32xbf16> to vector<4x32xbf16>
    %cst_9 = arith.constant dense<0.000000e+00> : vector<256x32xf32>
    %31 = tpu.matmul %28, %30, %cst_9 {dimension_numbers = #tpu.dot_dimension_numbers<[1], [0], [0], [1], [0, 0, 1, 1], [], []>} : vector<256x4xbf16>, vector<4x32xbf16>, vector<256x32xf32> -> vector<256x32xf32>
    %32 = arith.addf %21, %31 : vector<256x32xf32>
    %c0_10 = arith.constant 0 : index
    %c8 = arith.constant 8 : index
    %c0_11 = arith.constant 0 : index
    %33 = vector.load %arg1[%c0_10, %c8, %c0_11] : memref<1x304x4xf32, #tpu.memory_space<vmem>>, vector<1x256x4xf32>
    %34 = vector.shape_cast %33 : vector<1x256x4xf32> to vector<256x4xf32>
    %35 = arith.truncf %34 : vector<256x4xf32> to vector<256x4xbf16>
    %c1 = arith.constant 1 : index
    %c0_12 = arith.constant 0 : index
    %c0_13 = arith.constant 0 : index
    %36 = vector.load %arg2[%c1, %c0_12, %c0_13] : memref<9x4x32xbf16, #tpu.memory_space<vmem>>, vector<1x4x32xbf16>
    %37 = vector.shape_cast %36 : vector<1x4x32xbf16> to vector<4x32xbf16>
    %cst_14 = arith.constant dense<0.000000e+00> : vector<256x32xf32>
    %38 = tpu.matmul %35, %37, %cst_14 {dimension_numbers = #tpu.dot_dimension_numbers<[1], [0], [0], [1], [0, 0, 1, 1], [], []>} : vector<256x4xbf16>, vector<4x32xbf16>, vector<256x32xf32> -> vector<256x32xf32>
    %39 = arith.addf %32, %38 : vector<256x32xf32>
    %c0_15 = arith.constant 0 : index
    %c9 = arith.constant 9 : index
    %c0_16 = arith.constant 0 : index
    %40 = vector.load %arg1[%c0_15, %c9, %c0_16] : memref<1x304x4xf32, #tpu.memory_space<vmem>>, vector<1x256x4xf32>
    %41 = vector.shape_cast %40 : vector<1x256x4xf32> to vector<256x4xf32>
    %cst_17 = arith.constant 0.000000e+00 : f32
    %42 = vector.shape_cast %20 : vector<256x1xi1> to vector<256x1xi1>
    %43 = vector.broadcast %42 : vector<256x1xi1> to vector<256x4xi1>
    %44 = vector.broadcast %cst_17 : f32 to vector<256x4xf32>
    %45 = arith.select %43, %41, %44 : vector<256x4xi1>, vector<256x4xf32>
    %46 = arith.truncf %45 : vector<256x4xf32> to vector<256x4xbf16>
    %c2 = arith.constant 2 : index
    %c0_18 = arith.constant 0 : index
    %c0_19 = arith.constant 0 : index
    %47 = vector.load %arg2[%c2, %c0_18, %c0_19] : memref<9x4x32xbf16, #tpu.memory_space<vmem>>, vector<1x4x32xbf16>
    %48 = vector.shape_cast %47 : vector<1x4x32xbf16> to vector<4x32xbf16>
    %cst_20 = arith.constant dense<0.000000e+00> : vector<256x32xf32>
    %49 = tpu.matmul %46, %48, %cst_20 {dimension_numbers = #tpu.dot_dimension_numbers<[1], [0], [0], [1], [0, 0, 1, 1], [], []>} : vector<256x4xbf16>, vector<4x32xbf16>, vector<256x32xf32> -> vector<256x32xf32>
    %50 = arith.addf %39, %49 : vector<256x32xf32>
    %c0_21 = arith.constant 0 : index
    %c23 = arith.constant 23 : index
    %c0_22 = arith.constant 0 : index
    %51 = vector.load %arg1[%c0_21, %c23, %c0_22] : memref<1x304x4xf32, #tpu.memory_space<vmem>>, vector<1x256x4xf32>
    %52 = vector.shape_cast %51 : vector<1x256x4xf32> to vector<256x4xf32>
    %cst_23 = arith.constant 0.000000e+00 : f32
    %53 = vector.shape_cast %18 : vector<256x1xi1> to vector<256x1xi1>
    %54 = vector.broadcast %53 : vector<256x1xi1> to vector<256x4xi1>
    %55 = vector.broadcast %cst_23 : f32 to vector<256x4xf32>
    %56 = arith.select %54, %52, %55 : vector<256x4xi1>, vector<256x4xf32>
    %57 = arith.truncf %56 : vector<256x4xf32> to vector<256x4xbf16>
    %c3 = arith.constant 3 : index
    %c0_24 = arith.constant 0 : index
    %c0_25 = arith.constant 0 : index
    %58 = vector.load %arg2[%c3, %c0_24, %c0_25] : memref<9x4x32xbf16, #tpu.memory_space<vmem>>, vector<1x4x32xbf16>
    %59 = vector.shape_cast %58 : vector<1x4x32xbf16> to vector<4x32xbf16>
    %cst_26 = arith.constant dense<0.000000e+00> : vector<256x32xf32>
    %60 = tpu.matmul %57, %59, %cst_26 {dimension_numbers = #tpu.dot_dimension_numbers<[1], [0], [0], [1], [0, 0, 1, 1], [], []>} : vector<256x4xbf16>, vector<4x32xbf16>, vector<256x32xf32> -> vector<256x32xf32>
    %61 = arith.addf %50, %60 : vector<256x32xf32>
    %c0_27 = arith.constant 0 : index
    %c24 = arith.constant 24 : index
    %c0_28 = arith.constant 0 : index
    %62 = vector.load %arg1[%c0_27, %c24, %c0_28] : memref<1x304x4xf32, #tpu.memory_space<vmem>>, vector<1x256x4xf32>
    %63 = vector.shape_cast %62 : vector<1x256x4xf32> to vector<256x4xf32>
    %64 = arith.truncf %63 : vector<256x4xf32> to vector<256x4xbf16>
    %c4 = arith.constant 4 : index
    %c0_29 = arith.constant 0 : index
    %c0_30 = arith.constant 0 : index
    %65 = vector.load %arg2[%c4, %c0_29, %c0_30] : memref<9x4x32xbf16, #tpu.memory_space<vmem>>, vector<1x4x32xbf16>
    %66 = vector.shape_cast %65 : vector<1x4x32xbf16> to vector<4x32xbf16>
    %cst_31 = arith.constant dense<0.000000e+00> : vector<256x32xf32>
    %67 = tpu.matmul %64, %66, %cst_31 {dimension_numbers = #tpu.dot_dimension_numbers<[1], [0], [0], [1], [0, 0, 1, 1], [], []>} : vector<256x4xbf16>, vector<4x32xbf16>, vector<256x32xf32> -> vector<256x32xf32>
    %68 = arith.addf %61, %67 : vector<256x32xf32>
    %c0_32 = arith.constant 0 : index
    %c25 = arith.constant 25 : index
    %c0_33 = arith.constant 0 : index
    %69 = vector.load %arg1[%c0_32, %c25, %c0_33] : memref<1x304x4xf32, #tpu.memory_space<vmem>>, vector<1x256x4xf32>
    %70 = vector.shape_cast %69 : vector<1x256x4xf32> to vector<256x4xf32>
    %cst_34 = arith.constant 0.000000e+00 : f32
    %71 = vector.shape_cast %20 : vector<256x1xi1> to vector<256x1xi1>
    %72 = vector.broadcast %71 : vector<256x1xi1> to vector<256x4xi1>
    %73 = vector.broadcast %cst_34 : f32 to vector<256x4xf32>
    %74 = arith.select %72, %70, %73 : vector<256x4xi1>, vector<256x4xf32>
    %75 = arith.truncf %74 : vector<256x4xf32> to vector<256x4xbf16>
    %c5 = arith.constant 5 : index
    %c0_35 = arith.constant 0 : index
    %c0_36 = arith.constant 0 : index
    %76 = vector.load %arg2[%c5, %c0_35, %c0_36] : memref<9x4x32xbf16, #tpu.memory_space<vmem>>, vector<1x4x32xbf16>
    %77 = vector.shape_cast %76 : vector<1x4x32xbf16> to vector<4x32xbf16>
    %cst_37 = arith.constant dense<0.000000e+00> : vector<256x32xf32>
    %78 = tpu.matmul %75, %77, %cst_37 {dimension_numbers = #tpu.dot_dimension_numbers<[1], [0], [0], [1], [0, 0, 1, 1], [], []>} : vector<256x4xbf16>, vector<4x32xbf16>, vector<256x32xf32> -> vector<256x32xf32>
    %79 = arith.addf %68, %78 : vector<256x32xf32>
    %c0_38 = arith.constant 0 : index
    %c39 = arith.constant 39 : index
    %c0_39 = arith.constant 0 : index
    %80 = vector.load %arg1[%c0_38, %c39, %c0_39] : memref<1x304x4xf32, #tpu.memory_space<vmem>>, vector<1x256x4xf32>
    %81 = vector.shape_cast %80 : vector<1x256x4xf32> to vector<256x4xf32>
    %cst_40 = arith.constant 0.000000e+00 : f32
    %82 = vector.shape_cast %18 : vector<256x1xi1> to vector<256x1xi1>
    %83 = vector.broadcast %82 : vector<256x1xi1> to vector<256x4xi1>
    %84 = vector.broadcast %cst_40 : f32 to vector<256x4xf32>
    %85 = arith.select %83, %81, %84 : vector<256x4xi1>, vector<256x4xf32>
    %86 = arith.truncf %85 : vector<256x4xf32> to vector<256x4xbf16>
    %c6 = arith.constant 6 : index
    %c0_41 = arith.constant 0 : index
    %c0_42 = arith.constant 0 : index
    %87 = vector.load %arg2[%c6, %c0_41, %c0_42] : memref<9x4x32xbf16, #tpu.memory_space<vmem>>, vector<1x4x32xbf16>
    %88 = vector.shape_cast %87 : vector<1x4x32xbf16> to vector<4x32xbf16>
    %cst_43 = arith.constant dense<0.000000e+00> : vector<256x32xf32>
    %89 = tpu.matmul %86, %88, %cst_43 {dimension_numbers = #tpu.dot_dimension_numbers<[1], [0], [0], [1], [0, 0, 1, 1], [], []>} : vector<256x4xbf16>, vector<4x32xbf16>, vector<256x32xf32> -> vector<256x32xf32>
    %90 = arith.addf %79, %89 : vector<256x32xf32>
    %c0_44 = arith.constant 0 : index
    %c40 = arith.constant 40 : index
    %c0_45 = arith.constant 0 : index
    %91 = vector.load %arg1[%c0_44, %c40, %c0_45] : memref<1x304x4xf32, #tpu.memory_space<vmem>>, vector<1x256x4xf32>
    %92 = vector.shape_cast %91 : vector<1x256x4xf32> to vector<256x4xf32>
    %93 = arith.truncf %92 : vector<256x4xf32> to vector<256x4xbf16>
    %c7_46 = arith.constant 7 : index
    %c0_47 = arith.constant 0 : index
    %c0_48 = arith.constant 0 : index
    %94 = vector.load %arg2[%c7_46, %c0_47, %c0_48] : memref<9x4x32xbf16, #tpu.memory_space<vmem>>, vector<1x4x32xbf16>
    %95 = vector.shape_cast %94 : vector<1x4x32xbf16> to vector<4x32xbf16>
    %cst_49 = arith.constant dense<0.000000e+00> : vector<256x32xf32>
    %96 = tpu.matmul %93, %95, %cst_49 {dimension_numbers = #tpu.dot_dimension_numbers<[1], [0], [0], [1], [0, 0, 1, 1], [], []>} : vector<256x4xbf16>, vector<4x32xbf16>, vector<256x32xf32> -> vector<256x32xf32>
    %97 = arith.addf %90, %96 : vector<256x32xf32>
    %c0_50 = arith.constant 0 : index
    %c41 = arith.constant 41 : index
    %c0_51 = arith.constant 0 : index
    %98 = vector.load %arg1[%c0_50, %c41, %c0_51] : memref<1x304x4xf32, #tpu.memory_space<vmem>>, vector<1x256x4xf32>
    %99 = vector.shape_cast %98 : vector<1x256x4xf32> to vector<256x4xf32>
    %cst_52 = arith.constant 0.000000e+00 : f32
    %100 = vector.shape_cast %20 : vector<256x1xi1> to vector<256x1xi1>
    %101 = vector.broadcast %100 : vector<256x1xi1> to vector<256x4xi1>
    %102 = vector.broadcast %cst_52 : f32 to vector<256x4xf32>
    %103 = arith.select %101, %99, %102 : vector<256x4xi1>, vector<256x4xf32>
    %104 = arith.truncf %103 : vector<256x4xf32> to vector<256x4xbf16>
    %c8_53 = arith.constant 8 : index
    %c0_54 = arith.constant 0 : index
    %c0_55 = arith.constant 0 : index
    %105 = vector.load %arg2[%c8_53, %c0_54, %c0_55] : memref<9x4x32xbf16, #tpu.memory_space<vmem>>, vector<1x4x32xbf16>
    %106 = vector.shape_cast %105 : vector<1x4x32xbf16> to vector<4x32xbf16>
    %cst_56 = arith.constant dense<0.000000e+00> : vector<256x32xf32>
    %107 = tpu.matmul %104, %106, %cst_56 {dimension_numbers = #tpu.dot_dimension_numbers<[1], [0], [0], [1], [0, 0, 1, 1], [], []>} : vector<256x4xbf16>, vector<4x32xbf16>, vector<256x32xf32> -> vector<256x32xf32>
    %108 = arith.addf %97, %107 : vector<256x32xf32>
    %c0_57 = arith.constant 0 : index
    %c0_58 = arith.constant 0 : index
    %109 = vector.load %arg3[%c0_57, %c0_58] : memref<1x32xf32, #tpu.memory_space<vmem>>, vector<1x32xf32>
    %110 = vector.broadcast %109 : vector<1x32xf32> to vector<256x32xf32>
    %111 = arith.addf %108, %110 : vector<256x32xf32>
    %c0_59 = arith.constant 0 : index
    %c0_60 = arith.constant 0 : index
    %112 = vector.load %arg12[%c0_59, %c0_60] : memref<32x8xf32, #tpu.memory_space<vmem>>, vector<32x8xf32>
    %c0_61 = arith.constant 0 : index
    %c0_62 = arith.constant 0 : index
    %113 = vector.load %arg13[%c0_61, %c0_62] : memref<8x32xf32, #tpu.memory_space<vmem>>, vector<8x32xf32>
    %cst_63 = arith.constant dense<0.000000e+00> : vector<32xf32>
    %114 = vector.multi_reduction <add>, %111, %cst_63 [0] : vector<256x32xf32> to vector<32xf32>
    %115 = vector.shape_cast %114 : vector<32xf32> to vector<1x32xf32>
    %cst_64 = arith.constant dense<0.000000e+00> : vector<1x8xf32>
    %116 = tpu.matmul %115, %112, %cst_64 {dimension_numbers = #tpu.dot_dimension_numbers<[1], [0], [0], [1], [0, 0, 1, 1], [], []>} : vector<1x32xf32>, vector<32x8xf32>, vector<1x8xf32> -> vector<1x8xf32>
    %cst_65 = arith.constant 1.024000e+03 : f32
    %117 = vector.broadcast %cst_65 : f32 to vector<1x8xf32>
    %118 = arith.divf %116, %117 : vector<1x8xf32>
    %cst_66 = arith.constant dense<0.000000e+00> : vector<1x32xf32>
    %119 = tpu.matmul %118, %113, %cst_66 {dimension_numbers = #tpu.dot_dimension_numbers<[1], [0], [0], [1], [0, 0, 1, 1], [], []>} : vector<1x8xf32>, vector<8x32xf32>, vector<1x32xf32> -> vector<1x32xf32>
    %120 = vector.broadcast %119 : vector<1x32xf32> to vector<256x32xf32>
    %121 = arith.subf %111, %120 : vector<256x32xf32>
    %122 = arith.mulf %121, %121 : vector<256x32xf32>
    %cst_67 = arith.constant dense<0.000000e+00> : vector<32xf32>
    %123 = vector.multi_reduction <add>, %122, %cst_67 [0] : vector<256x32xf32> to vector<32xf32>
    %124 = vector.shape_cast %123 : vector<32xf32> to vector<1x32xf32>
    %cst_68 = arith.constant dense<0.000000e+00> : vector<1x8xf32>
    %125 = tpu.matmul %124, %112, %cst_68 {dimension_numbers = #tpu.dot_dimension_numbers<[1], [0], [0], [1], [0, 0, 1, 1], [], []>} : vector<1x32xf32>, vector<32x8xf32>, vector<1x8xf32> -> vector<1x8xf32>
    %cst_69 = arith.constant 1.024000e+03 : f32
    %126 = vector.broadcast %cst_69 : f32 to vector<1x8xf32>
    %127 = arith.divf %125, %126 : vector<1x8xf32>
    %cst_70 = arith.constant dense<0.000000e+00> : vector<1x32xf32>
    %128 = tpu.matmul %127, %113, %cst_70 {dimension_numbers = #tpu.dot_dimension_numbers<[1], [0], [0], [1], [0, 0, 1, 1], [], []>} : vector<1x8xf32>, vector<8x32xf32>, vector<1x32xf32> -> vector<1x32xf32>
    %cst_71 = arith.constant 9.99999974E-6 : f32
    %129 = vector.broadcast %cst_71 : f32 to vector<1x32xf32>
    %130 = arith.addf %128, %129 : vector<1x32xf32>
    %131 = math.rsqrt %130 : vector<1x32xf32>
    %132 = vector.broadcast %131 : vector<1x32xf32> to vector<256x32xf32>
    %133 = arith.mulf %121, %132 : vector<256x32xf32>
    %c0_72 = arith.constant 0 : index
    %c0_73 = arith.constant 0 : index
    %c0_74 = arith.constant 0 : index
    %134 = vector.load %arg8[%c0_72, %c0_73, %c0_74] : memref<1x1x32xf32, #tpu.memory_space<vmem>>, vector<1x1x32xf32>
    %135 = vector.shape_cast %134 : vector<1x1x32xf32> to vector<1x32xf32>
    %cst_75 = arith.constant 1.000000e+00 : f32
    %136 = vector.broadcast %cst_75 : f32 to vector<1x32xf32>
    %137 = arith.addf %136, %135 : vector<1x32xf32>
    %138 = vector.broadcast %137 : vector<1x32xf32> to vector<256x32xf32>
    %139 = arith.mulf %133, %138 : vector<256x32xf32>
    %c0_76 = arith.constant 0 : index
    %c0_77 = arith.constant 0 : index
    %c0_78 = arith.constant 0 : index
    %140 = vector.load %arg9[%c0_76, %c0_77, %c0_78] : memref<1x1x32xf32, #tpu.memory_space<vmem>>, vector<1x1x32xf32>
    %141 = vector.shape_cast %140 : vector<1x1x32xf32> to vector<1x32xf32>
    %142 = vector.broadcast %141 : vector<1x32xf32> to vector<256x32xf32>
    %143 = arith.addf %139, %142 : vector<256x32xf32>
    %cst_79 = arith.constant 0.000000e+00 : f32
    %144 = vector.broadcast %cst_79 : f32 to vector<256x32xf32>
    %145 = arith.subf %144, %143 : vector<256x32xf32>
    %146 = math.exp %145 : vector<256x32xf32>
    %cst_80 = arith.constant 1.000000e+00 : f32
    %147 = vector.broadcast %cst_80 : f32 to vector<256x32xf32>
    %148 = arith.addf %147, %146 : vector<256x32xf32>
    %149 = tpu.reciprocal %148 {approx = true} : vector<256x32xf32> -> vector<256x32xf32>
    %150 = arith.mulf %143, %149 : vector<256x32xf32>
    %cst_81 = arith.constant 0.000000e+00 : bf16
    %151 = vector.broadcast %cst_81 : bf16 to vector<304x32xbf16>
    %c0_82 = arith.constant 0 : index
    %c0_83 = arith.constant 0 : index
    %152 = vector.load %arg15[%c0_82, %c0_83] : memref<304x32xbf16, #tpu.memory_space<vmem>>, vector<304x32xbf16>
    tpu.vector_store %arg15[%c0_82, %c0_83], %151 {strides = array<i32>} : memref<304x32xbf16, #tpu.memory_space<vmem>>, vector<304x32xbf16>,
    %153 = arith.truncf %150 : vector<256x32xf32> to vector<256x32xbf16>
    %c24_84 = arith.constant 24 : index
    %c0_85 = arith.constant 0 : index
    %154 = vector.load %arg15[%c24_84, %c0_85] : memref<304x32xbf16, #tpu.memory_space<vmem>>, vector<256x32xbf16>
    tpu.vector_store %arg15[%c24_84, %c0_85], %153 {strides = array<i32>} : memref<304x32xbf16, #tpu.memory_space<vmem>>, vector<256x32xbf16>,
    %cst_86 = arith.constant 0.000000e+00 : f32
    %155 = vector.broadcast %cst_86 : f32 to vector<256x32xf32>
    %c7_87 = arith.constant 7 : index
    %c0_88 = arith.constant 0 : index
    %156 = vector.load %arg15[%c7_87, %c0_88] : memref<304x32xbf16, #tpu.memory_space<vmem>>, vector<256x32xbf16>
    %cst_89 = arith.constant 0.000000e+00 : f32
    %157 = arith.truncf %cst_89 : f32 to bf16
    %158 = vector.shape_cast %18 : vector<256x1xi1> to vector<256x1xi1>
    %159 = vector.broadcast %158 : vector<256x1xi1> to vector<256x32xi1>
    %160 = vector.broadcast %157 : bf16 to vector<256x32xbf16>
    %161 = arith.select %159, %156, %160 : vector<256x32xi1>, vector<256x32xbf16>
    %c0_90 = arith.constant 0 : index
    %c0_91 = arith.constant 0 : index
    %c0_92 = arith.constant 0 : index
    %162 = vector.load %arg4[%c0_90, %c0_91, %c0_92] : memref<9x32x32xbf16, #tpu.memory_space<vmem>>, vector<1x32x32xbf16>
    %163 = vector.shape_cast %162 : vector<1x32x32xbf16> to vector<32x32xbf16>
    %cst_93 = arith.constant dense<0.000000e+00> : vector<256x32xf32>
    %164 = tpu.matmul %161, %163, %cst_93 {dimension_numbers = #tpu.dot_dimension_numbers<[1], [0], [0], [1], [0, 0, 1, 1], [], []>} : vector<256x32xbf16>, vector<32x32xbf16>, vector<256x32xf32> -> vector<256x32xf32>
    %165 = arith.addf %155, %164 : vector<256x32xf32>
    %c8_94 = arith.constant 8 : index
    %c0_95 = arith.constant 0 : index
    %166 = vector.load %arg15[%c8_94, %c0_95] : memref<304x32xbf16, #tpu.memory_space<vmem>>, vector<256x32xbf16>
    %c1_96 = arith.constant 1 : index
    %c0_97 = arith.constant 0 : index
    %c0_98 = arith.constant 0 : index
    %167 = vector.load %arg4[%c1_96, %c0_97, %c0_98] : memref<9x32x32xbf16, #tpu.memory_space<vmem>>, vector<1x32x32xbf16>
    %168 = vector.shape_cast %167 : vector<1x32x32xbf16> to vector<32x32xbf16>
    %cst_99 = arith.constant dense<0.000000e+00> : vector<256x32xf32>
    %169 = tpu.matmul %166, %168, %cst_99 {dimension_numbers = #tpu.dot_dimension_numbers<[1], [0], [0], [1], [0, 0, 1, 1], [], []>} : vector<256x32xbf16>, vector<32x32xbf16>, vector<256x32xf32> -> vector<256x32xf32>
    %170 = arith.addf %165, %169 : vector<256x32xf32>
    %c9_100 = arith.constant 9 : index
    %c0_101 = arith.constant 0 : index
    %171 = vector.load %arg15[%c9_100, %c0_101] : memref<304x32xbf16, #tpu.memory_space<vmem>>, vector<256x32xbf16>
    %cst_102 = arith.constant 0.000000e+00 : f32
    %172 = arith.truncf %cst_102 : f32 to bf16
    %173 = vector.shape_cast %20 : vector<256x1xi1> to vector<256x1xi1>
    %174 = vector.broadcast %173 : vector<256x1xi1> to vector<256x32xi1>
    %175 = vector.broadcast %172 : bf16 to vector<256x32xbf16>
    %176 = arith.select %174, %171, %175 : vector<256x32xi1>, vector<256x32xbf16>
    %c2_103 = arith.constant 2 : index
    %c0_104 = arith.constant 0 : index
    %c0_105 = arith.constant 0 : index
    %177 = vector.load %arg4[%c2_103, %c0_104, %c0_105] : memref<9x32x32xbf16, #tpu.memory_space<vmem>>, vector<1x32x32xbf16>
    %178 = vector.shape_cast %177 : vector<1x32x32xbf16> to vector<32x32xbf16>
    %cst_106 = arith.constant dense<0.000000e+00> : vector<256x32xf32>
    %179 = tpu.matmul %176, %178, %cst_106 {dimension_numbers = #tpu.dot_dimension_numbers<[1], [0], [0], [1], [0, 0, 1, 1], [], []>} : vector<256x32xbf16>, vector<32x32xbf16>, vector<256x32xf32> -> vector<256x32xf32>
    %180 = arith.addf %170, %179 : vector<256x32xf32>
    %c23_107 = arith.constant 23 : index
    %c0_108 = arith.constant 0 : index
    %181 = vector.load %arg15[%c23_107, %c0_108] : memref<304x32xbf16, #tpu.memory_space<vmem>>, vector<256x32xbf16>
    %cst_109 = arith.constant 0.000000e+00 : f32
    %182 = arith.truncf %cst_109 : f32 to bf16
    %183 = vector.shape_cast %18 : vector<256x1xi1> to vector<256x1xi1>
    %184 = vector.broadcast %183 : vector<256x1xi1> to vector<256x32xi1>
    %185 = vector.broadcast %182 : bf16 to vector<256x32xbf16>
    %186 = arith.select %184, %181, %185 : vector<256x32xi1>, vector<256x32xbf16>
    %c3_110 = arith.constant 3 : index
    %c0_111 = arith.constant 0 : index
    %c0_112 = arith.constant 0 : index
    %187 = vector.load %arg4[%c3_110, %c0_111, %c0_112] : memref<9x32x32xbf16, #tpu.memory_space<vmem>>, vector<1x32x32xbf16>
    %188 = vector.shape_cast %187 : vector<1x32x32xbf16> to vector<32x32xbf16>
    %cst_113 = arith.constant dense<0.000000e+00> : vector<256x32xf32>
    %189 = tpu.matmul %186, %188, %cst_113 {dimension_numbers = #tpu.dot_dimension_numbers<[1], [0], [0], [1], [0, 0, 1, 1], [], []>} : vector<256x32xbf16>, vector<32x32xbf16>, vector<256x32xf32> -> vector<256x32xf32>
    %190 = arith.addf %180, %189 : vector<256x32xf32>
    %c24_114 = arith.constant 24 : index
    %c0_115 = arith.constant 0 : index
    %191 = vector.load %arg15[%c24_114, %c0_115] : memref<304x32xbf16, #tpu.memory_space<vmem>>, vector<256x32xbf16>
    %c4_116 = arith.constant 4 : index
    %c0_117 = arith.constant 0 : index
    %c0_118 = arith.constant 0 : index
    %192 = vector.load %arg4[%c4_116, %c0_117, %c0_118] : memref<9x32x32xbf16, #tpu.memory_space<vmem>>, vector<1x32x32xbf16>
    %193 = vector.shape_cast %192 : vector<1x32x32xbf16> to vector<32x32xbf16>
    %cst_119 = arith.constant dense<0.000000e+00> : vector<256x32xf32>
    %194 = tpu.matmul %191, %193, %cst_119 {dimension_numbers = #tpu.dot_dimension_numbers<[1], [0], [0], [1], [0, 0, 1, 1], [], []>} : vector<256x32xbf16>, vector<32x32xbf16>, vector<256x32xf32> -> vector<256x32xf32>
    %195 = arith.addf %190, %194 : vector<256x32xf32>
    %c25_120 = arith.constant 25 : index
    %c0_121 = arith.constant 0 : index
    %196 = vector.load %arg15[%c25_120, %c0_121] : memref<304x32xbf16, #tpu.memory_space<vmem>>, vector<256x32xbf16>
    %cst_122 = arith.constant 0.000000e+00 : f32
    %197 = arith.truncf %cst_122 : f32 to bf16
    %198 = vector.shape_cast %20 : vector<256x1xi1> to vector<256x1xi1>
    %199 = vector.broadcast %198 : vector<256x1xi1> to vector<256x32xi1>
    %200 = vector.broadcast %197 : bf16 to vector<256x32xbf16>
    %201 = arith.select %199, %196, %200 : vector<256x32xi1>, vector<256x32xbf16>
    %c5_123 = arith.constant 5 : index
    %c0_124 = arith.constant 0 : index
    %c0_125 = arith.constant 0 : index
    %202 = vector.load %arg4[%c5_123, %c0_124, %c0_125] : memref<9x32x32xbf16, #tpu.memory_space<vmem>>, vector<1x32x32xbf16>
    %203 = vector.shape_cast %202 : vector<1x32x32xbf16> to vector<32x32xbf16>
    %cst_126 = arith.constant dense<0.000000e+00> : vector<256x32xf32>
    %204 = tpu.matmul %201, %203, %cst_126 {dimension_numbers = #tpu.dot_dimension_numbers<[1], [0], [0], [1], [0, 0, 1, 1], [], []>} : vector<256x32xbf16>, vector<32x32xbf16>, vector<256x32xf32> -> vector<256x32xf32>
    %205 = arith.addf %195, %204 : vector<256x32xf32>
    %c39_127 = arith.constant 39 : index
    %c0_128 = arith.constant 0 : index
    %206 = vector.load %arg15[%c39_127, %c0_128] : memref<304x32xbf16, #tpu.memory_space<vmem>>, vector<256x32xbf16>
    %cst_129 = arith.constant 0.000000e+00 : f32
    %207 = arith.truncf %cst_129 : f32 to bf16
    %208 = vector.shape_cast %18 : vector<256x1xi1> to vector<256x1xi1>
    %209 = vector.broadcast %208 : vector<256x1xi1> to vector<256x32xi1>
    %210 = vector.broadcast %207 : bf16 to vector<256x32xbf16>
    %211 = arith.select %209, %206, %210 : vector<256x32xi1>, vector<256x32xbf16>
    %c6_130 = arith.constant 6 : index
    %c0_131 = arith.constant 0 : index
    %c0_132 = arith.constant 0 : index
    %212 = vector.load %arg4[%c6_130, %c0_131, %c0_132] : memref<9x32x32xbf16, #tpu.memory_space<vmem>>, vector<1x32x32xbf16>
    %213 = vector.shape_cast %212 : vector<1x32x32xbf16> to vector<32x32xbf16>
    %cst_133 = arith.constant dense<0.000000e+00> : vector<256x32xf32>
    %214 = tpu.matmul %211, %213, %cst_133 {dimension_numbers = #tpu.dot_dimension_numbers<[1], [0], [0], [1], [0, 0, 1, 1], [], []>} : vector<256x32xbf16>, vector<32x32xbf16>, vector<256x32xf32> -> vector<256x32xf32>
    %215 = arith.addf %205, %214 : vector<256x32xf32>
    %c40_134 = arith.constant 40 : index
    %c0_135 = arith.constant 0 : index
    %216 = vector.load %arg15[%c40_134, %c0_135] : memref<304x32xbf16, #tpu.memory_space<vmem>>, vector<256x32xbf16>
    %c7_136 = arith.constant 7 : index
    %c0_137 = arith.constant 0 : index
    %c0_138 = arith.constant 0 : index
    %217 = vector.load %arg4[%c7_136, %c0_137, %c0_138] : memref<9x32x32xbf16, #tpu.memory_space<vmem>>, vector<1x32x32xbf16>
    %218 = vector.shape_cast %217 : vector<1x32x32xbf16> to vector<32x32xbf16>
    %cst_139 = arith.constant dense<0.000000e+00> : vector<256x32xf32>
    %219 = tpu.matmul %216, %218, %cst_139 {dimension_numbers = #tpu.dot_dimension_numbers<[1], [0], [0], [1], [0, 0, 1, 1], [], []>} : vector<256x32xbf16>, vector<32x32xbf16>, vector<256x32xf32> -> vector<256x32xf32>
    %220 = arith.addf %215, %219 : vector<256x32xf32>
    %c41_140 = arith.constant 41 : index
    %c0_141 = arith.constant 0 : index
    %221 = vector.load %arg15[%c41_140, %c0_141] : memref<304x32xbf16, #tpu.memory_space<vmem>>, vector<256x32xbf16>
    %cst_142 = arith.constant 0.000000e+00 : f32
    %222 = arith.truncf %cst_142 : f32 to bf16
    %223 = vector.shape_cast %20 : vector<256x1xi1> to vector<256x1xi1>
    %224 = vector.broadcast %223 : vector<256x1xi1> to vector<256x32xi1>
    %225 = vector.broadcast %222 : bf16 to vector<256x32xbf16>
    %226 = arith.select %224, %221, %225 : vector<256x32xi1>, vector<256x32xbf16>
    %c8_143 = arith.constant 8 : index
    %c0_144 = arith.constant 0 : index
    %c0_145 = arith.constant 0 : index
    %227 = vector.load %arg4[%c8_143, %c0_144, %c0_145] : memref<9x32x32xbf16, #tpu.memory_space<vmem>>, vector<1x32x32xbf16>
    %228 = vector.shape_cast %227 : vector<1x32x32xbf16> to vector<32x32xbf16>
    %cst_146 = arith.constant dense<0.000000e+00> : vector<256x32xf32>
    %229 = tpu.matmul %226, %228, %cst_146 {dimension_numbers = #tpu.dot_dimension_numbers<[1], [0], [0], [1], [0, 0, 1, 1], [], []>} : vector<256x32xbf16>, vector<32x32xbf16>, vector<256x32xf32> -> vector<256x32xf32>
    %230 = arith.addf %220, %229 : vector<256x32xf32>
    %c0_147 = arith.constant 0 : index
    %c0_148 = arith.constant 0 : index
    %231 = vector.load %arg5[%c0_147, %c0_148] : memref<1x32xf32, #tpu.memory_space<vmem>>, vector<1x32xf32>
    %232 = vector.broadcast %231 : vector<1x32xf32> to vector<256x32xf32>
    %233 = arith.addf %230, %232 : vector<256x32xf32>
    %c0_149 = arith.constant 0 : index
    %c0_150 = arith.constant 0 : index
    %234 = vector.load %arg12[%c0_149, %c0_150] : memref<32x8xf32, #tpu.memory_space<vmem>>, vector<32x8xf32>
    %c0_151 = arith.constant 0 : index
    %c0_152 = arith.constant 0 : index
    %235 = vector.load %arg13[%c0_151, %c0_152] : memref<8x32xf32, #tpu.memory_space<vmem>>, vector<8x32xf32>
    %cst_153 = arith.constant dense<0.000000e+00> : vector<32xf32>
    %236 = vector.multi_reduction <add>, %233, %cst_153 [0] : vector<256x32xf32> to vector<32xf32>
    %237 = vector.shape_cast %236 : vector<32xf32> to vector<1x32xf32>
    %cst_154 = arith.constant dense<0.000000e+00> : vector<1x8xf32>
    %238 = tpu.matmul %237, %234, %cst_154 {dimension_numbers = #tpu.dot_dimension_numbers<[1], [0], [0], [1], [0, 0, 1, 1], [], []>} : vector<1x32xf32>, vector<32x8xf32>, vector<1x8xf32> -> vector<1x8xf32>
    %cst_155 = arith.constant 1.024000e+03 : f32
    %239 = vector.broadcast %cst_155 : f32 to vector<1x8xf32>
    %240 = arith.divf %238, %239 : vector<1x8xf32>
    %cst_156 = arith.constant dense<0.000000e+00> : vector<1x32xf32>
    %241 = tpu.matmul %240, %235, %cst_156 {dimension_numbers = #tpu.dot_dimension_numbers<[1], [0], [0], [1], [0, 0, 1, 1], [], []>} : vector<1x8xf32>, vector<8x32xf32>, vector<1x32xf32> -> vector<1x32xf32>
    %242 = vector.broadcast %241 : vector<1x32xf32> to vector<256x32xf32>
    %243 = arith.subf %233, %242 : vector<256x32xf32>
    %244 = arith.mulf %243, %243 : vector<256x32xf32>
    %cst_157 = arith.constant dense<0.000000e+00> : vector<32xf32>
    %245 = vector.multi_reduction <add>, %244, %cst_157 [0] : vector<256x32xf32> to vector<32xf32>
    %246 = vector.shape_cast %245 : vector<32xf32> to vector<1x32xf32>
    %cst_158 = arith.constant dense<0.000000e+00> : vector<1x8xf32>
    %247 = tpu.matmul %246, %234, %cst_158 {dimension_numbers = #tpu.dot_dimension_numbers<[1], [0], [0], [1], [0, 0, 1, 1], [], []>} : vector<1x32xf32>, vector<32x8xf32>, vector<1x8xf32> -> vector<1x8xf32>
    %cst_159 = arith.constant 1.024000e+03 : f32
    %248 = vector.broadcast %cst_159 : f32 to vector<1x8xf32>
    %249 = arith.divf %247, %248 : vector<1x8xf32>
    %cst_160 = arith.constant dense<0.000000e+00> : vector<1x32xf32>
    %250 = tpu.matmul %249, %235, %cst_160 {dimension_numbers = #tpu.dot_dimension_numbers<[1], [0], [0], [1], [0, 0, 1, 1], [], []>} : vector<1x8xf32>, vector<8x32xf32>, vector<1x32xf32> -> vector<1x32xf32>
    %cst_161 = arith.constant 9.99999974E-6 : f32
    %251 = vector.broadcast %cst_161 : f32 to vector<1x32xf32>
    %252 = arith.addf %250, %251 : vector<1x32xf32>
    %253 = math.rsqrt %252 : vector<1x32xf32>
    %254 = vector.broadcast %253 : vector<1x32xf32> to vector<256x32xf32>
    %255 = arith.mulf %243, %254 : vector<256x32xf32>
    %c0_162 = arith.constant 0 : index
    %c0_163 = arith.constant 0 : index
    %c0_164 = arith.constant 0 : index
    %256 = vector.load %arg10[%c0_162, %c0_163, %c0_164] : memref<1x1x32xf32, #tpu.memory_space<vmem>>, vector<1x1x32xf32>
    %257 = vector.shape_cast %256 : vector<1x1x32xf32> to vector<1x32xf32>
    %cst_165 = arith.constant 1.000000e+00 : f32
    %258 = vector.broadcast %cst_165 : f32 to vector<1x32xf32>
    %259 = arith.addf %258, %257 : vector<1x32xf32>
    %260 = vector.broadcast %259 : vector<1x32xf32> to vector<256x32xf32>
    %261 = arith.mulf %255, %260 : vector<256x32xf32>
    %c0_166 = arith.constant 0 : index
    %c0_167 = arith.constant 0 : index
    %c0_168 = arith.constant 0 : index
    %262 = vector.load %arg11[%c0_166, %c0_167, %c0_168] : memref<1x1x32xf32, #tpu.memory_space<vmem>>, vector<1x1x32xf32>
    %263 = vector.shape_cast %262 : vector<1x1x32xf32> to vector<1x32xf32>
    %264 = vector.broadcast %263 : vector<1x32xf32> to vector<256x32xf32>
    %265 = arith.addf %261, %264 : vector<256x32xf32>
    %c0_169 = arith.constant 0 : index
    %c24_170 = arith.constant 24 : index
    %c0_171 = arith.constant 0 : index
    %266 = vector.load %arg1[%c0_169, %c24_170, %c0_171] : memref<1x304x4xf32, #tpu.memory_space<vmem>>, vector<1x256x4xf32>
    %267 = vector.shape_cast %266 : vector<1x256x4xf32> to vector<256x4xf32>
    %c0_172 = arith.constant 0 : index
    %c0_173 = arith.constant 0 : index
    %268 = vector.load %arg6[%c0_172, %c0_173] : memref<4x32xf32, #tpu.memory_space<vmem>>, vector<4x32xf32>
    %cst_174 = arith.constant dense<0.000000e+00> : vector<256x32xf32>
    %269 = tpu.matmul %267, %268, %cst_174 {dimension_numbers = #tpu.dot_dimension_numbers<[1], [0], [0], [1], [0, 0, 1, 1], [], []>} : vector<256x4xf32>, vector<4x32xf32>, vector<256x32xf32> -> vector<256x32xf32>
    %270 = arith.addf %265, %269 : vector<256x32xf32>
    %c0_175 = arith.constant 0 : index
    %c0_176 = arith.constant 0 : index
    %271 = vector.load %arg7[%c0_175, %c0_176] : memref<1x32xf32, #tpu.memory_space<vmem>>, vector<1x32xf32>
    %272 = vector.broadcast %271 : vector<1x32xf32> to vector<256x32xf32>
    %273 = arith.addf %270, %272 : vector<256x32xf32>
    %c0_177 = arith.constant 0 : index
    %c0_178 = arith.constant 0 : index
    %c0_179 = arith.constant 0 : index
    %274 = vector.load %arg14[%c0_177, %c0_178, %c0_179] : memref<1x256x32xf32, #tpu.memory_space<vmem>>, vector<1x256x32xf32>
    %275 = vector.shape_cast %274 : vector<1x256x32xf32> to vector<256x32xf32>
    %276 = vector.shape_cast %273 : vector<256x32xf32> to vector<1x256x32xf32>
    tpu.vector_store %arg14[%c0_177, %c0_178, %c0_179], %276 {strides = array<i32>} : memref<1x256x32xf32, #tpu.memory_space<vmem>>, vector<1x256x32xf32>,
    return
  }
  func.func @transform_0(%arg0: i32) -> (i32, i32, i32) {
    %c0_i32 = arith.constant 0 : i32
    %c0_i32_0 = arith.constant 0 : i32
    %c0_i32_1 = arith.constant 0 : i32
    return %arg0, %c0_i32, %c0_i32_0 : i32, i32, i32
  }
  func.func @transform_1(%arg0: i32) -> (i32, i32, i32) {
    %c0_i32 = arith.constant 0 : i32
    %c0_i32_0 = arith.constant 0 : i32
    %c0_i32_1 = arith.constant 0 : i32
    %c0_i32_2 = arith.constant 0 : i32
    return %c0_i32, %c0_i32_0, %c0_i32_1 : i32, i32, i32
  }
  func.func @transform_2(%arg0: i32) -> (i32, i32) {
    %c0_i32 = arith.constant 0 : i32
    %c0_i32_0 = arith.constant 0 : i32
    %c0_i32_1 = arith.constant 0 : i32
    return %c0_i32, %c0_i32_0 : i32, i32
  }
  func.func @transform_3(%arg0: i32) -> (i32, i32, i32) {
    %c0_i32 = arith.constant 0 : i32
    %c0_i32_0 = arith.constant 0 : i32
    %c0_i32_1 = arith.constant 0 : i32
    %c0_i32_2 = arith.constant 0 : i32
    return %c0_i32, %c0_i32_0, %c0_i32_1 : i32, i32, i32
  }
  func.func @transform_4(%arg0: i32) -> (i32, i32) {
    %c0_i32 = arith.constant 0 : i32
    %c0_i32_0 = arith.constant 0 : i32
    %c0_i32_1 = arith.constant 0 : i32
    return %c0_i32, %c0_i32_0 : i32, i32
  }
  func.func @transform_5(%arg0: i32) -> (i32, i32) {
    %c0_i32 = arith.constant 0 : i32
    %c0_i32_0 = arith.constant 0 : i32
    %c0_i32_1 = arith.constant 0 : i32
    return %c0_i32, %c0_i32_0 : i32, i32
  }
  func.func @transform_6(%arg0: i32) -> (i32, i32) {
    %c0_i32 = arith.constant 0 : i32
    %c0_i32_0 = arith.constant 0 : i32
    %c0_i32_1 = arith.constant 0 : i32
    return %c0_i32, %c0_i32_0 : i32, i32
  }
  func.func @transform_7(%arg0: i32) -> (i32, i32, i32) {
    %c0_i32 = arith.constant 0 : i32
    %c0_i32_0 = arith.constant 0 : i32
    %c0_i32_1 = arith.constant 0 : i32
    return %arg0, %c0_i32, %c0_i32_0 : i32, i32, i32
  }
  func.func @transform_8(%arg0: i32) -> (i32, i32, i32) {
    %c0_i32 = arith.constant 0 : i32
    %c0_i32_0 = arith.constant 0 : i32
    %c0_i32_1 = arith.constant 0 : i32
    return %arg0, %c0_i32, %c0_i32_0 : i32, i32, i32
  }
  func.func @transform_9(%arg0: i32) -> (i32, i32, i32) {
    %c0_i32 = arith.constant 0 : i32
    %c0_i32_0 = arith.constant 0 : i32
    %c0_i32_1 = arith.constant 0 : i32
    return %arg0, %c0_i32, %c0_i32_0 : i32, i32, i32
  }
  func.func @transform_10(%arg0: i32) -> (i32, i32, i32) {
    %c0_i32 = arith.constant 0 : i32
    %c0_i32_0 = arith.constant 0 : i32
    %c0_i32_1 = arith.constant 0 : i32
    return %arg0, %c0_i32, %c0_i32_0 : i32, i32, i32
  }
  func.func @transform_11(%arg0: i32) -> (i32, i32) {
    %c0_i32 = arith.constant 0 : i32
    %c0_i32_0 = arith.constant 0 : i32
    %c0_i32_1 = arith.constant 0 : i32
    return %c0_i32, %c0_i32_0 : i32, i32
  }
  func.func @transform_12(%arg0: i32) -> (i32, i32) {
    %c0_i32 = arith.constant 0 : i32
    %c0_i32_0 = arith.constant 0 : i32
    %c0_i32_1 = arith.constant 0 : i32
    return %c0_i32, %c0_i32_0 : i32, i32
  }
  func.func @transform_13(%arg0: i32) -> (i32, i32, i32) {
    %c0_i32 = arith.constant 0 : i32
    %c0_i32_0 = arith.constant 0 : i32
    %c0_i32_1 = arith.constant 0 : i32
    return %arg0, %c0_i32, %c0_i32_0 : i32, i32, i32
  }
}

</mosaic_0001>

<llo_original>
// kernel: student_block_forward.1
$region0: #{student_block_forward.1}
  #allocation0 [shape = 'u32[]', space=smem, size = 0x4, offset = 0x4, fixed_abs, tag = 'smem constant byte address 0x4 - core index']
  #allocation1 [shape = 'u32[72,128]{1,0:T(1,128)}', space=vmem, size = 0x9000, scoped, tag = 'internal scratch']
  #allocation2 [shape = 'bf16[304,32]{1,0:T(8,128)(2,1)}', space=vmem, size = 0x13000, scoped, tag = 'scratch operand']
  %s0 = inlined_call_operand.vmem [shape: f32[2,304,4], index: 0, kind: input, shape index: {}]
  %s1 = inlined_call_operand.vmem [shape: bf16[9,4,32], index: 1, kind: input, shape index: {}]
  %s2 = inlined_call_operand.vmem [shape: f32[1,32], index: 2, kind: input, shape index: {}]
  %s3 = inlined_call_operand.vmem [shape: bf16[9,32,32], index: 3, kind: input, shape index: {}]
  %s4 = inlined_call_operand.vmem [shape: f32[1,32], index: 4, kind: input, shape index: {}]
  %s5 = inlined_call_operand.vmem [shape: f32[4,32], index: 5, kind: input, shape index: {}]
  %s6 = inlined_call_operand.vmem [shape: f32[1,32], index: 6, kind: input, shape index: {}]
  %s7 = inlined_call_operand.vmem [shape: f32[2,1,32], index: 7, kind: input, shape index: {}]
  %s8 = inlined_call_operand.vmem [shape: f32[2,1,32], index: 8, kind: input, shape index: {}]
  %s9 = inlined_call_operand.vmem [shape: f32[2,1,32], index: 9, kind: input, shape index: {}]
  %s10 = inlined_call_operand.vmem [shape: f32[2,1,32], index: 10, kind: input, shape index: {}]
  %s11 = inlined_call_operand.vmem [shape: f32[32,8], index: 11, kind: input, shape index: {}]
  %s12 = inlined_call_operand.vmem [shape: f32[8,32], index: 12, kind: input, shape index: {}]
  %s13 = inlined_call_operand.hbm [shape: f32[2,256,32], index: 13, kind: output, shape index: {}]
  %s14 = sld [smem:[#allocation0]]
  $region85: #{student_block_forward.1} parent=0
    _
  %s16 = ssub.s32 1, %s14
  %s17 = scalar_select 0, %s16, %s14
  $region1: #{student_block_forward.1} parent=0
    #allocation3 [shape = 'u8[262144]{0}', space=vmem, size = 0x40000, scoped, tag = 'output window, operand 0']
    #allocation4 [shape = 's32[2]{0}', space=sflag, size = 0x8, scoped, tag = 'scoped memory for student_block_forward.1']
    %18 = vsyncpa [#allocation4], 0
    %s19 = scalar_lea.sflag [#allocation4], 1
    %20 = vsyncpa %s19, 0
    loop: start=0, step=1, limit=4
    $region2: #{student_block_forward.1} parent=1 // loop_pre_header
      _
    $region3: #{student_block_forward.1} parent=1 // loop_header
      %s22 = sphi 0, %s26
      %p23 = scmp.ge.s32.totalorder %s22, 4
      %s32 = sphi 0, %s34
      %s35 = sphi 0, %s32
      %s36 = sphi 0, %s35
      %s52 = sphi 0, %s36
      %s56 = sphi 0, %s56
      %s58 = sphi 0, %s56
      %s59 = sphi 0, %s58
      %s73 = sphi 0, %s59
      %s77 = sphi 0, %s77
      %s79 = sphi 0, %s77
      %s80 = sphi 0, %s79
      %s94 = sphi 0, %s80
      %s98 = sphi 0, %s98
      %s100 = sphi 0, %s98
      %s101 = sphi 0, %s100
      %s115 = sphi 0, %s101
      %s119 = sphi 0, %s119
      %s121 = sphi 0, %s119
      %s122 = sphi 0, %s121
      %s136 = sphi 0, %s122
      %s140 = sphi 0, %s140
      %s142 = sphi 0, %s140
      %s143 = sphi 0, %s142
      %s157 = sphi 0, %s143
      %s161 = sphi 0, %s161
      %s163 = sphi 0, %s161
      %s164 = sphi 0, %s163
      %s178 = sphi 0, %s164
      %s184 = sphi 0, %s186
      %s187 = sphi 0, %s184
      %s188 = sphi 0, %s187
      %s204 = sphi 0, %s188
      %s210 = sphi 0, %s212
      %s213 = sphi 0, %s210
      %s214 = sphi 0, %s213
      %s230 = sphi 0, %s214
      %s236 = sphi 0, %s238
      %s239 = sphi 0, %s236
      %s240 = sphi 0, %s239
      %s256 = sphi 0, %s240
      %s262 = sphi 0, %s264
      %s265 = sphi 0, %s262
      %s266 = sphi 0, %s265
      %s282 = sphi 0, %s266
      %s286 = sphi 0, %s286
      %s288 = sphi 0, %s286
      %s289 = sphi 0, %s288
      %s303 = sphi 0, %s289
      %s307 = sphi 0, %s307
      %s309 = sphi 0, %s307
      %s310 = sphi 0, %s309
      %s324 = sphi 0, %s310
      %s330 = sphi 0, %s332
      %s333 = sphi 0, %s330
      %s334 = sphi 0, %s333
      %s350 = sphi 0, %s334
    $region4: #{student_block_forward.1} parent=1 // loop_header_branch
      %25 = sbr.rel (%p23) target = $region8
    $region5: #{student_block_forward.1} parent=1 // loop_body
      %s27 = ssub.s32 %s22, 1
      %s28 = ssub.s32 %s22, 2
      %s29 = sadd.s32 %s22, 1
      %s30 = ssub.s32 %s22, %s29
      %p31 = scmp.eq.s32.totalorder %s30, 0
      %s33 = sadd.s32 %s32, 1
      %s34 = scalar_select %p31, %s32, %s33
      %p37 = pneg %p31
      %p38 = scmp.eq.s32.totalorder %s22, 1
      %p39 = por %p37, %p38
      %p40 = scmp.ne.s32.totalorder %s32, %s35
      %p41 = scmp.eq.s32.totalorder %s22, 0
      %p42 = por %p40, %p41
      %p43 = scmp.ne.s32.totalorder %s32, %s35
      %p44 = scmp.eq.s32.totalorder %s27, 1
      %p45 = por %p43, %p44
      %p46 = scmp.ne.s32.totalorder %s35, %s36
      %p47 = scmp.eq.s32.totalorder %s27, 0
      %p48 = por %p46, %p47
      %p49 = scmp.ne.s32.totalorder %s35, %s36
      %p50 = scmp.eq.s32.totalorder %s28, 1
      %p51 = por %p49, %p50
      %p53 = scmp.ne.s32.totalorder %s36, %s52
      %p54 = scmp.eq.s32.totalorder %s28, 0
      %p55 = por %p53, %p54
      %s57 = sadd.s32 %s56, 1
      %p60 = scmp.eq.s32.totalorder %s22, 1
      %p61 = scmp.ne.s32.totalorder %s56, %s58
      %p62 = scmp.eq.s32.totalorder %s22, 0
      %p63 = por %p61, %p62
      %p64 = scmp.ne.s32.totalorder %s56, %s58
      %p65 = scmp.eq.s32.totalorder %s27, 1
      %p66 = por %p64, %p65
      %p67 = scmp.ne.s32.totalorder %s58, %s59
      %p68 = scmp.eq.s32.totalorder %s27, 0
      %p69 = por %p67, %p68
      %p70 = scmp.ne.s32.totalorder %s58, %s59
      %p71 = scmp.eq.s32.totalorder %s28, 1
      %p72 = por %p70, %p71
      %p74 = scmp.ne.s32.totalorder %s59, %s73
      %p75 = scmp.eq.s32.totalorder %s28, 0
      %p76 = por %p74, %p75
      %s78 = sadd.s32 %s77, 1
      %p81 = scmp.eq.s32.totalorder %s22, 1
      %p82 = scmp.ne.s32.totalorder %s77, %s79
      %p83 = scmp.eq.s32.totalorder %s22, 0
      %p84 = por %p82, %p83
      %p85 = scmp.ne.s32.totalorder %s77, %s79
      %p86 = scmp.eq.s32.totalorder %s27, 1
      %p87 = por %p85, %p86
      %p88 = scmp.ne.s32.totalorder %s79, %s80
      %p89 = scmp.eq.s32.totalorder %s27, 0
      %p90 = por %p88, %p89
      %p91 = scmp.ne.s32.totalorder %s79, %s80
      %p92 = scmp.eq.s32.totalorder %s28, 1
      %p93 = por %p91, %p92
      %p95 = scmp.ne.s32.totalorder %s80, %s94
      %p96 = scmp.eq.s32.totalorder %s28, 0
      %p97 = por %p95, %p96
      %s99 = sadd.s32 %s98, 1
      %p102 = scmp.eq.s32.totalorder %s22, 1
      %p103 = scmp.ne.s32.totalorder %s98, %s100
      %p104 = scmp.eq.s32.totalorder %s22, 0
      %p105 = por %p103, %p104
      %p106 = scmp.ne.s32.totalorder %s98, %s100
      %p107 = scmp.eq.s32.totalorder %s27, 1
      %p108 = por %p106, %p107
      %p109 = scmp.ne.s32.totalorder %s100, %s101
      %p110 = scmp.eq.s32.totalorder %s27, 0
      %p111 = por %p109, %p110
      %p112 = scmp.ne.s32.totalorder %s100, %s101
      %p113 = scmp.eq.s32.totalorder %s28, 1
      %p114 = por %p112, %p113
      %p116 = scmp.ne.s32.totalorder %s101, %s115
      %p117 = scmp.eq.s32.totalorder %s28, 0
      %p118 = por %p116, %p117
      %s120 = sadd.s32 %s119, 1
      %p123 = scmp.eq.s32.totalorder %s22, 1
      %p124 = scmp.ne.s32.totalorder %s119, %s121
      %p125 = scmp.eq.s32.totalorder %s22, 0
      %p126 = por %p124, %p125
      %p127 = scmp.ne.s32.totalorder %s119, %s121
      %p128 = scmp.eq.s32.totalorder %s27, 1
      %p129 = por %p127, %p128
      %p130 = scmp.ne.s32.totalorder %s121, %s122
      %p131 = scmp.eq.s32.totalorder %s27, 0
      %p132 = por %p130, %p131
      %p133 = scmp.ne.s32.totalorder %s121, %s122
      %p134 = scmp.eq.s32.totalorder %s28, 1
      %p135 = por %p133, %p134
      %p137 = scmp.ne.s32.totalorder %s122, %s136
      %p138 = scmp.eq.s32.totalorder %s28, 0
      %p139 = por %p137, %p138
      %s141 = sadd.s32 %s140, 1
      %p144 = scmp.eq.s32.totalorder %s22, 1
      %p145 = scmp.ne.s32.totalorder %s140, %s142
      %p146 = scmp.eq.s32.totalorder %s22, 0
      %p147 = por %p145, %p146
      %p148 = scmp.ne.s32.totalorder %s140, %s142
      %p149 = scmp.eq.s32.totalorder %s27, 1
      %p150 = por %p148, %p149
      %p151 = scmp.ne.s32.totalorder %s142, %s143
      %p152 = scmp.eq.s32.totalorder %s27, 0
      %p153 = por %p151, %p152
      %p154 = scmp.ne.s32.totalorder %s142, %s143
      %p155 = scmp.eq.s32.totalorder %s28, 1
      %p156 = por %p154, %p155
      %p158 = scmp.ne.s32.totalorder %s143, %s157
      %p159 = scmp.eq.s32.totalorder %s28, 0
      %p160 = por %p158, %p159
      %s162 = sadd.s32 %s161, 1
      %p165 = scmp.eq.s32.totalorder %s22, 1
      %p166 = scmp.ne.s32.totalorder %s161, %s163
      %p167 = scmp.eq.s32.totalorder %s22, 0
      %p168 = por %p166, %p167
      %p169 = scmp.ne.s32.totalorder %s161, %s163
      %p170 = scmp.eq.s32.totalorder %s27, 1
      %p171 = por %p169, %p170
      %p172 = scmp.ne.s32.totalorder %s163, %s164
      %p173 = scmp.eq.s32.totalorder %s27, 0
      %p174 = por %p172, %p173
      %p175 = scmp.ne.s32.totalorder %s163, %s164
      %p176 = scmp.eq.s32.totalorder %s28, 1
      %p177 = por %p175, %p176
      %p179 = scmp.ne.s32.totalorder %s164, %s178
      %p180 = scmp.eq.s32.totalorder %s28, 0
      %p181 = por %p179, %p180
      %s182 = ssub.s32 %s22, %s29
      %p183 = scmp.eq.s32.totalorder %s182, 0
      %s185 = sadd.s32 %s184, 1
      %s186 = scalar_select %p183, %s184, %s185
      %p189 = pneg %p183
      %p190 = scmp.eq.s32.totalorder %s22, 1
      %p191 = por %p189, %p190
      %p192 = scmp.ne.s32.totalorder %s184, %s187
      %p193 = scmp.eq.s32.totalorder %s22, 0
      %p194 = por %p192, %p193
      %p195 = scmp.ne.s32.totalorder %s184, %s187
      %p196 = scmp.eq.s32.totalorder %s27, 1
      %p197 = por %p195, %p196
      %p198 = scmp.ne.s32.totalorder %s187, %s188
      %p199 = scmp.eq.s32.totalorder %s27, 0
      %p200 = por %p198, %p199
      %p201 = scmp.ne.s32.totalorder %s187, %s188
      %p202 = scmp.eq.s32.totalorder %s28, 1
      %p203 = por %p201, %p202
      %p205 = scmp.ne.s32.totalorder %s188, %s204
      %p206 = scmp.eq.s32.totalorder %s28, 0
      %p207 = por %p205, %p206
      %s208 = ssub.s32 %s22, %s29
      %p209 = scmp.eq.s32.totalorder %s208, 0
      %s211 = sadd.s32 %s210, 1
      %s212 = scalar_select %p209, %s210, %s211
      %p215 = pneg %p209
      %p216 = scmp.eq.s32.totalorder %s22, 1
      %p217 = por %p215, %p216
      %p218 = scmp.ne.s32.totalorder %s210, %s213
      %p219 = scmp.eq.s32.totalorder %s22, 0
      %p220 = por %p218, %p219
      %p221 = scmp.ne.s32.totalorder %s210, %s213
      %p222 = scmp.eq.s32.totalorder %s27, 1
      %p223 = por %p221, %p222
      %p224 = scmp.ne.s32.totalorder %s213, %s214
      %p225 = scmp.eq.s32.totalorder %s27, 0
      %p226 = por %p224, %p225
      %p227 = scmp.ne.s32.totalorder %s213, %s214
      %p228 = scmp.eq.s32.totalorder %s28, 1
      %p229 = por %p227, %p228
      %p231 = scmp.ne.s32.totalorder %s214, %s230
      %p232 = scmp.eq.s32.totalorder %s28, 0
      %p233 = por %p231, %p232
      %s234 = ssub.s32 %s22, %s29
      %p235 = scmp.eq.s32.totalorder %s234, 0
      %s237 = sadd.s32 %s236, 1
      %s238 = scalar_select %p235, %s236, %s237
      %p241 = pneg %p235
      %p242 = scmp.eq.s32.totalorder %s22, 1
      %p243 = por %p241, %p242
      %p244 = scmp.ne.s32.totalorder %s236, %s239
      %p245 = scmp.eq.s32.totalorder %s22, 0
      %p246 = por %p244, %p245
      %p247 = scmp.ne.s32.totalorder %s236, %s239
      %p248 = scmp.eq.s32.totalorder %s27, 1
      %p249 = por %p247, %p248
      %p250 = scmp.ne.s32.totalorder %s239, %s240
      %p251 = scmp.eq.s32.totalorder %s27, 0
      %p252 = por %p250, %p251
      %p253 = scmp.ne.s32.totalorder %s239, %s240
      %p254 = scmp.eq.s32.totalorder %s28, 1
      %p255 = por %p253, %p254
      %p257 = scmp.ne.s32.totalorder %s240, %s256
      %p258 = scmp.eq.s32.totalorder %s28, 0
      %p259 = por %p257, %p258
      %s260 = ssub.s32 %s22, %s29
      %p261 = scmp.eq.s32.totalorder %s260, 0
      %s263 = sadd.s32 %s262, 1
      %s264 = scalar_select %p261, %s262, %s263
      %p267 = pneg %p261
      %p268 = scmp.eq.s32.totalorder %s22, 1
      %p269 = por %p267, %p268
      %p270 = scmp.ne.s32.totalorder %s262, %s265
      %p271 = scmp.eq.s32.totalorder %s22, 0
      %p272 = por %p270, %p271
      %p273 = scmp.ne.s32.totalorder %s262, %s265
      %p274 = scmp.eq.s32.totalorder %s27, 1
      %p275 = por %p273, %p274
      %p276 = scmp.ne.s32.totalorder %s265, %s266
      %p277 = scmp.eq.s32.totalorder %s27, 0
      %p278 = por %p276, %p277
      %p279 = scmp.ne.s32.totalorder %s265, %s266
      %p280 = scmp.eq.s32.totalorder %s28, 1
      %p281 = por %p279, %p280
      %p283 = scmp.ne.s32.totalorder %s266, %s282
      %p284 = scmp.eq.s32.totalorder %s28, 0
      %p285 = por %p283, %p284
      %s287 = sadd.s32 %s286, 1
      %p290 = scmp.eq.s32.totalorder %s22, 1
      %p291 = scmp.ne.s32.totalorder %s286, %s288
      %p292 = scmp.eq.s32.totalorder %s22, 0
      %p293 = por %p291, %p292
      %p294 = scmp.ne.s32.totalorder %s286, %s288
      %p295 = scmp.eq.s32.totalorder %s27, 1
      %p296 = por %p294, %p295
      %p297 = scmp.ne.s32.totalorder %s288, %s289
      %p298 = scmp.eq.s32.totalorder %s27, 0
      %p299 = por %p297, %p298
      %p300 = scmp.ne.s32.totalorder %s288, %s289
      %p301 = scmp.eq.s32.totalorder %s28, 1
      %p302 = por %p300, %p301
      %p304 = scmp.ne.s32.totalorder %s289, %s303
      %p305 = scmp.eq.s32.totalorder %s28, 0
      %p306 = por %p304, %p305
      %s308 = sadd.s32 %s307, 1
      %p311 = scmp.eq.s32.totalorder %s22, 1
      %p312 = scmp.ne.s32.totalorder %s307, %s309
      %p313 = scmp.eq.s32.totalorder %s22, 0
      %p314 = por %p312, %p313
      %p315 = scmp.ne.s32.totalorder %s307, %s309
      %p316 = scmp.eq.s32.totalorder %s27, 1
      %p317 = por %p315, %p316
      %p318 = scmp.ne.s32.totalorder %s309, %s310
      %p319 = scmp.eq.s32.totalorder %s27, 0
      %p320 = por %p318, %p319
      %p321 = scmp.ne.s32.totalorder %s309, %s310
      %p322 = scmp.eq.s32.totalorder %s28, 1
      %p323 = por %p321, %p322
      %p325 = scmp.ne.s32.totalorder %s310, %s324
      %p326 = scmp.eq.s32.totalorder %s28, 0
      %p327 = por %p325, %p326
      %s328 = ssub.s32 %s22, %s29
      %p329 = scmp.eq.s32.totalorder %s328, 0
      %s331 = sadd.s32 %s330, 1
      %s332 = scalar_select %p329, %s330, %s331
      %p335 = pneg %p329
      %p336 = scmp.eq.s32.totalorder %s22, 1
      %p337 = por %p335, %p336
      %p338 = scmp.ne.s32.totalorder %s330, %s333
      %p339 = scmp.eq.s32.totalorder %s22, 0
      %p340 = por %p338, %p339
      %p341 = scmp.ne.s32.totalorder %s330, %s333
      %p342 = scmp.eq.s32.totalorder %s27, 1
      %p343 = por %p341, %p342
      %p344 = scmp.ne.s32.totalorder %s333, %s334
      %p345 = scmp.eq.s32.totalorder %s27, 0
      %p346 = por %p344, %p345
      %p347 = scmp.ne.s32.totalorder %s333, %s334
      %p348 = scmp.eq.s32.totalorder %s28, 1
      %p349 = por %p347, %p348
      %p351 = scmp.ne.s32.totalorder %s334, %s350
      %p352 = scmp.eq.s32.totalorder %s28, 0
      %p353 = por %p351, %p352
      %p354 = scmp.le.s32.totalorder 1, %s22
      %p355 = scmp.lt.s32.totalorder %s22, 3
      %p356 = pnand %p354, %p355
      %p357 = pneg %p356
      // Predicated region
      $region9: #{student_block_forward.1} parent=5 // pred_check
        _
      $region10: #{student_block_forward.1} parent=5 // pred_check_branch
        %359 = sbr.rel (%p356) target = $region12
      $region11: #{student_block_forward.1} parent=5 // pred_region
        %s360 = ssub.s32 %s22, 1
        // Predicated region
        $region13: #{student_block_forward.1} parent=11 // pred_check
          %p361 = pneg %p69
        $region14: #{student_block_forward.1} parent=11 // pred_check_branch
          %363 = sbr.rel (%p361) target = $region16
        $region15: #{student_block_forward.1} parent=11 // pred_region
          _
        $region16: #{student_block_forward.1} parent=11 // pred_fallthru
          _
        // Predicated region
        $region17: #{student_block_forward.1} parent=11 // pred_check
          %p364 = pneg %p90
        $region18: #{student_block_forward.1} parent=11 // pred_check_branch
          %366 = sbr.rel (%p364) target = $region20
        $region19: #{student_block_forward.1} parent=11 // pred_region
          _
        $region20: #{student_block_forward.1} parent=11 // pred_fallthru
          _
        // Predicated region
        $region21: #{student_block_forward.1} parent=11 // pred_check
          %p367 = pneg %p111
        $region22: #{student_block_forward.1} parent=11 // pred_check_branch
          %369 = sbr.rel (%p367) target = $region24
        $region23: #{student_block_forward.1} parent=11 // pred_region
          _
        $region24: #{student_block_forward.1} parent=11 // pred_fallthru
          _
        // Predicated region
        $region25: #{student_block_forward.1} parent=11 // pred_check
          %p370 = pneg %p132
        $region26: #{student_block_forward.1} parent=11 // pred_check_branch
          %372 = sbr.rel (%p370) target = $region28
        $region27: #{student_block_forward.1} parent=11 // pred_region
          _
        $region28: #{student_block_forward.1} parent=11 // pred_fallthru
          _
        // Predicated region
        $region29: #{student_block_forward.1} parent=11 // pred_check
          %p373 = pneg %p153
        $region30: #{student_block_forward.1} parent=11 // pred_check_branch
          %375 = sbr.rel (%p373) target = $region32
        $region31: #{student_block_forward.1} parent=11 // pred_region
          _
        $region32: #{student_block_forward.1} parent=11 // pred_fallthru
          _
        // Predicated region
        $region33: #{student_block_forward.1} parent=11 // pred_check
          %p376 = pneg %p174
        $region34: #{student_block_forward.1} parent=11 // pred_check_branch
          %378 = sbr.rel (%p376) target = $region36
        $region35: #{student_block_forward.1} parent=11 // pred_region
          _
        $region36: #{student_block_forward.1} parent=11 // pred_fallthru
          _
        // Predicated region
        $region37: #{student_block_forward.1} parent=11 // pred_check
          %p379 = pneg %p299
        $region38: #{student_block_forward.1} parent=11 // pred_check_branch
          %381 = sbr.rel (%p379) target = $region40
        $region39: #{student_block_forward.1} parent=11 // pred_region
          _
        $region40: #{student_block_forward.1} parent=11 // pred_fallthru
          _
        // Predicated region
        $region41: #{student_block_forward.1} parent=11 // pred_check
          %p382 = pneg %p320
        $region42: #{student_block_forward.1} parent=11 // pred_check_branch
          %384 = sbr.rel (%p382) target = $region44
        $region43: #{student_block_forward.1} parent=11 // pred_region
          _
        $region44: #{student_block_forward.1} parent=11 // pred_fallthru
          _
      $region12: #{student_block_forward.1} parent=5 // pred_fallthru
        _
      %p385 = scmp.lt.s32.totalorder %s22, 2
      // Predicated region
      $region45: #{student_block_forward.1} parent=5 // pred_check
        %p386 = pneg %p385
      $region46: #{student_block_forward.1} parent=5 // pred_check_branch
        %388 = sbr.rel (%p386) target = $region48
      $region47: #{student_block_forward.1} parent=5 // pred_region
        // Predicated region
        $region49: #{student_block_forward.1} parent=47 // pred_check
          %p389 = pneg %p42
        $region50: #{student_block_forward.1} parent=47 // pred_check_branch
          %391 = sbr.rel (%p389) target = $region52
        $region51: #{student_block_forward.1} parent=47 // pred_region
          %p392 = scmp.lt.s32.totalorder %s22, 1
          %s393 = scalar_select %p392, %s22, 1
          %s394 = smul.addr %s393, 38
          %s395 = smul.addr %s394, 8
          %s396 = scalar_lea.vmem %s0, %s395
        $region52: #{student_block_forward.1} parent=47 // pred_fallthru
          _
        // Predicated region
        $region53: #{student_block_forward.1} parent=47 // pred_check
          %p397 = pneg %p194
        $region54: #{student_block_forward.1} parent=47 // pred_check_branch
          %399 = sbr.rel (%p397) target = $region56
        $region55: #{student_block_forward.1} parent=47 // pred_region
          %p400 = scmp.lt.s32.totalorder %s22, 1
          %s401 = scalar_select %p400, %s22, 1
          %s402 = scalar_lea.vmem %s7, %s401
        $region56: #{student_block_forward.1} parent=47 // pred_fallthru
          _
        // Predicated region
        $region57: #{student_block_forward.1} parent=47 // pred_check
          %p403 = pneg %p220
        $region58: #{student_block_forward.1} parent=47 // pred_check_branch
          %405 = sbr.rel (%p403) target = $region60
        $region59: #{student_block_forward.1} parent=47 // pred_region
          %p406 = scmp.lt.s32.totalorder %s22, 1
          %s407 = scalar_select %p406, %s22, 1
          %s408 = scalar_lea.vmem %s8, %s407
        $region60: #{student_block_forward.1} parent=47 // pred_fallthru
          _
        // Predicated region
        $region61: #{student_block_forward.1} parent=47 // pred_check
          %p409 = pneg %p246
        $region62: #{student_block_forward.1} parent=47 // pred_check_branch
          %411 = sbr.rel (%p409) target = $region64
        $region63: #{student_block_forward.1} parent=47 // pred_region
          %p412 = scmp.lt.s32.totalorder %s22, 1
          %s413 = scalar_select %p412, %s22, 1
          %s414 = scalar_lea.vmem %s9, %s413
        $region64: #{student_block_forward.1} parent=47 // pred_fallthru
          _
        // Predicated region
        $region65: #{student_block_forward.1} parent=47 // pred_check
          %p415 = pneg %p272
        $region66: #{student_block_forward.1} parent=47 // pred_check_branch
          %417 = sbr.rel (%p415) target = $region68
        $region67: #{student_block_forward.1} parent=47 // pred_region
          %p418 = scmp.lt.s32.totalorder %s22, 1
          %s419 = scalar_select %p418, %s22, 1
          %s420 = scalar_lea.vmem %s10, %s419
        $region68: #{student_block_forward.1} parent=47 // pred_fallthru
          _
      $region48: #{student_block_forward.1} parent=5 // pred_fallthru
        _
      %p421 = scmp.le.s32.totalorder 1, %s22
      %p422 = scmp.lt.s32.totalorder %s22, 3
      %p423 = pnand %p421, %p422
      %p424 = pneg %p423
      // Predicated region
      $region69: #{student_block_forward.1} parent=5 // pred_check
        _
      $region70: #{student_block_forward.1} parent=5 // pred_check_branch
        %426 = sbr.rel (%p423) target = $region72
      $region71: #{student_block_forward.1} parent=5 // pred_region
        %s427 = ssub.s32 %s22, 1
        %p428 = scmp.lt.s32.totalorder %s27, 1
        %s429 = scalar_select %p428, %s27, 1
        %s430 = smul.addr %s429, 38
        %s431 = smul.addr %s430, 8
        %s432 = scalar_lea.vmem %s0, %s431
        %p433 = pneg %p48
        %p434 = pneg %p45
        %p435 = pneg %p69
        %p436 = pneg %p66
        %p437 = pneg %p90
        %p438 = pneg %p87
        %p439 = pneg %p111
        %p440 = pneg %p108
        %p441 = pneg %p132
        %p442 = pneg %p129
        %p443 = pneg %p153
        %p444 = pneg %p150
        %p445 = pneg %p174
        %p446 = pneg %p171
        %p447 = scmp.lt.s32.totalorder %s27, 1
        %s448 = scalar_select %p447, %s27, 1
        %s449 = scalar_lea.vmem %s7, %s448
        %p450 = pneg %p200
        %p451 = pneg %p197
        %p452 = scmp.lt.s32.totalorder %s27, 1
        %s453 = scalar_select %p452, %s27, 1
        %s454 = scalar_lea.vmem %s8, %s453
        %p455 = pneg %p226
        %p456 = pneg %p223
        %p457 = scmp.lt.s32.totalorder %s27, 1
        %s458 = scalar_select %p457, %s27, 1
        %s459 = scalar_lea.vmem %s9, %s458
        %p460 = pneg %p252
        %p461 = pneg %p249
        %p462 = scmp.lt.s32.totalorder %s27, 1
        %s463 = scalar_select %p462, %s27, 1
        %s464 = scalar_lea.vmem %s10, %s463
        %p465 = pneg %p278
        %p466 = pneg %p275
        %p467 = pneg %p299
        %p468 = pneg %p296
        %p469 = pneg %p320
        %p470 = pneg %p317
        %p471 = pneg %p346
        %p472 = pneg %p343
        %s473 = sand.u32 %s333, 1
        %s474 = scalar_lea.sflag [#allocation4], %s473
        %s475 = sand.u32 %s333, 1
        %s476 = smul.addr %s475, 256
        %s477 = scalar_lea.vmem [#allocation3], %s476
        %p478 = scmp.lt.s32.totalorder %s27, 1
        %s479 = scalar_select %p478, %s27, 1
        %s480 = smul.addr %s479, 38
        %s481 = smul.addr %s480, 8
        %s482 = scalar_lea.vmem %s0, %s481
        %p483 = scmp.lt.s32.totalorder %s27, 1
        %s484 = scalar_select %p483, %s27, 1
        %s485 = scalar_lea.vmem %s7, %s484
        %p486 = scmp.lt.s32.totalorder %s27, 1
        %s487 = scalar_select %p486, %s27, 1
        %s488 = scalar_lea.vmem %s8, %s487
        %p489 = scmp.lt.s32.totalorder %s27, 1
        %s490 = scalar_select %p489, %s27, 1
        %s491 = scalar_lea.vmem %s9, %s490
        %p492 = scmp.lt.s32.totalorder %s27, 1
        %s493 = scalar_select %p492, %s27, 1
        %s494 = scalar_lea.vmem %s10, %s493
        %v498 = vlaneseq
        %v499 = vshrl.u32 %v498, 7
        %v500 = vadd.s32 %v499, 8
        %v501 = vadd.s32 %v499, 16
        %v502 = vadd.s32 %v499, 24
        %v503 = vadd.s32 %v499, 32
        %v504 = vadd.s32 %v499, 40
        %v505 = vadd.s32 %v499, 48
        %v506 = vadd.s32 %v499, 56
        %v507 = vadd.s32 %v499, 64
        %v508 = vadd.s32 %v499, 72
        %v509 = vadd.s32 %v499, 80
        %v510 = vadd.s32 %v499, 88
        %v511 = vadd.s32 %v499, 96
        %v512 = vadd.s32 %v499, 104
        %v513 = vadd.s32 %v499, 112
        %v514 = vadd.s32 %v499, 120
        %v515 = vadd.s32 %v499, 128
        %v516 = vadd.s32 %v499, 136
        %v517 = vadd.s32 %v499, 144
        %v518 = vadd.s32 %v499, 152
        %v519 = vadd.s32 %v499, 160
        %v520 = vadd.s32 %v499, 168
        %v521 = vadd.s32 %v499, 176
        %v522 = vadd.s32 %v499, 184
        %v523 = vadd.s32 %v499, 192
        %v524 = vadd.s32 %v499, 200
        %v525 = vadd.s32 %v499, 208
        %v526 = vadd.s32 %v499, 216
        %v527 = vadd.s32 %v499, 224
        %v528 = vadd.s32 %v499, 232
        %v529 = vadd.s32 %v499, 240
        %v530 = vadd.s32 %v499, 248
        %vm531 = vcmp.lt.s32.totalorder %v499, 0
        %v532 = vsub.s32 0, %v499
        %v533 = vsel %vm531, %v532, %v499
        %v534 = vshrl.u32 %v533, 4
        %v535 = vand.u32 %v533, 15
        %v536 = vsub.s32 0, %v535
        %v537 = vsel %vm531, %v536, %v535
        %vm538 = vcmp.lt.s32.totalorder %v500, 0
        %v539 = vsub.s32 0, %v500
        %v540 = vsel %vm538, %v539, %v500
        %v541 = vshrl.u32 %v540, 4
        %v542 = vand.u32 %v540, 15
        %v543 = vsub.s32 0, %v542
        %v544 = vsel %vm538, %v543, %v542
        %vm545 = vcmp.lt.s32.totalorder %v501, 0
        %v546 = vsub.s32 0, %v501
        %v547 = vsel %vm545, %v546, %v501
        %v548 = vshrl.u32 %v547, 4
        %v549 = vand.u32 %v547, 15
        %v550 = vsub.s32 0, %v549
        %v551 = vsel %vm545, %v550, %v549
        %vm552 = vcmp.lt.s32.totalorder %v502, 0
        %v553 = vsub.s32 0, %v502
        %v554 = vsel %vm552, %v553, %v502
        %v555 = vshrl.u32 %v554, 4
        %v556 = vand.u32 %v554, 15
        %v557 = vsub.s32 0, %v556
        %v558 = vsel %vm552, %v557, %v556
        %vm559 = vcmp.lt.s32.totalorder %v503, 0
        %v560 = vsub.s32 0, %v503
        %v561 = vsel %vm559, %v560, %v503
        %v562 = vshrl.u32 %v561, 4
        %v563 = vand.u32 %v561, 15
        %v564 = vsub.s32 0, %v563
        %v565 = vsel %vm559, %v564, %v563
        %vm566 = vcmp.lt.s32.totalorder %v504, 0
        %v567 = vsub.s32 0, %v504
        %v568 = vsel %vm566, %v567, %v504
        %v569 = vshrl.u32 %v568, 4
        %v570 = vand.u32 %v568, 15
        %v571 = vsub.s32 0, %v570
        %v572 = vsel %vm566, %v571, %v570
        %vm573 = vcmp.lt.s32.totalorder %v505, 0
        %v574 = vsub.s32 0, %v505
        %v575 = vsel %vm573, %v574, %v505
        %v576 = vshrl.u32 %v575, 4
        %v577 = vand.u32 %v575, 15
        %v578 = vsub.s32 0, %v577
        %v579 = vsel %vm573, %v578, %v577
        %vm580 = vcmp.lt.s32.totalorder %v506, 0
        %v581 = vsub.s32 0, %v506
        %v582 = vsel %vm580, %v581, %v506
        %v583 = vshrl.u32 %v582, 4
        %v584 = vand.u32 %v582, 15
        %v585 = vsub.s32 0, %v584
        %v586 = vsel %vm580, %v585, %v584
        %vm587 = vcmp.lt.s32.totalorder %v507, 0
        %v588 = vsub.s32 0, %v507
        %v589 = vsel %vm587, %v588, %v507
        %v590 = vshrl.u32 %v589, 4
        %v591 = vand.u32 %v589, 15
        %v592 = vsub.s32 0, %v591
        %v593 = vsel %vm587, %v592, %v591
        %vm594 = vcmp.lt.s32.totalorder %v508, 0
        %v595 = vsub.s32 0, %v508
        %v596 = vsel %vm594, %v595, %v508
        %v597 = vshrl.u32 %v596, 4
        %v598 = vand.u32 %v596, 15
        %v599 = vsub.s32 0, %v598
        %v600 = vsel %vm594, %v599, %v598
        %vm601 = vcmp.lt.s32.totalorder %v509, 0
        %v602 = vsub.s32 0, %v509
        %v603 = vsel %vm601, %v602, %v509
        %v604 = vshrl.u32 %v603, 4
        %v605 = vand.u32 %v603, 15
        %v606 = vsub.s32 0, %v605
        %v607 = vsel %vm601, %v606, %v605
        %vm608 = vcmp.lt.s32.totalorder %v510, 0
        %v609 = vsub.s32 0, %v510
        %v610 = vsel %vm608, %v609, %v510
        %v611 = vshrl.u32 %v610, 4
        %v612 = vand.u32 %v610, 15
        %v613 = vsub.s32 0, %v612
        %v614 = vsel %vm608, %v613, %v612
        %vm615 = vcmp.lt.s32.totalorder %v511, 0
        %v616 = vsub.s32 0, %v511
        %v617 = vsel %vm615, %v616, %v511
        %v618 = vshrl.u32 %v617, 4
        %v619 = vand.u32 %v617, 15
        %v620 = vsub.s32 0, %v619
        %v621 = vsel %vm615, %v620, %v619
        %vm622 = vcmp.lt.s32.totalorder %v512, 0
        %v623 = vsub.s32 0, %v512
        %v624 = vsel %vm622, %v623, %v512
        %v625 = vshrl.u32 %v624, 4
        %v626 = vand.u32 %v624, 15
        %v627 = vsub.s32 0, %v626
        %v628 = vsel %vm622, %v627, %v626
        %vm629 = vcmp.lt.s32.totalorder %v513, 0
        %v630 = vsub.s32 0, %v513
        %v631 = vsel %vm629, %v630, %v513
        %v632 = vshrl.u32 %v631, 4
        %v633 = vand.u32 %v631, 15
        %v634 = vsub.s32 0, %v633
        %v635 = vsel %vm629, %v634, %v633
        %vm636 = vcmp.lt.s32.totalorder %v514, 0
        %v637 = vsub.s32 0, %v514
        %v638 = vsel %vm636, %v637, %v514
        %v639 = vshrl.u32 %v638, 4
        %v640 = vand.u32 %v638, 15
        %v641 = vsub.s32 0, %v640
        %v642 = vsel %vm636, %v641, %v640
        %vm643 = vcmp.lt.s32.totalorder %v515, 0
        %v644 = vsub.s32 0, %v515
        %v645 = vsel %vm643, %v644, %v515
        %v646 = vshrl.u32 %v645, 4
        %v647 = vand.u32 %v645, 15
        %v648 = vsub.s32 0, %v647
        %v649 = vsel %vm643, %v648, %v647
        %vm650 = vcmp.lt.s32.totalorder %v516, 0
        %v651 = vsub.s32 0, %v516
        %v652 = vsel %vm650, %v651, %v516
        %v653 = vshrl.u32 %v652, 4
        %v654 = vand.u32 %v652, 15
        %v655 = vsub.s32 0, %v654
        %v656 = vsel %vm650, %v655, %v654
        %vm657 = vcmp.lt.s32.totalorder %v517, 0
        %v658 = vsub.s32 0, %v517
        %v659 = vsel %vm657, %v658, %v517
        %v660 = vshrl.u32 %v659, 4
        %v661 = vand.u32 %v659, 15
        %v662 = vsub.s32 0, %v661
        %v663 = vsel %vm657, %v662, %v661
        %vm664 = vcmp.lt.s32.totalorder %v518, 0
        %v665 = vsub.s32 0, %v518
        %v666 = vsel %vm664, %v665, %v518
        %v667 = vshrl.u32 %v666, 4
        %v668 = vand.u32 %v666, 15
        %v669 = vsub.s32 0, %v668
        %v670 = vsel %vm664, %v669, %v668
        %vm671 = vcmp.lt.s32.totalorder %v519, 0
        %v672 = vsub.s32 0, %v519
        %v673 = vsel %vm671, %v672, %v519
        %v674 = vshrl.u32 %v673, 4
        %v675 = vand.u32 %v673, 15
        %v676 = vsub.s32 0, %v675
        %v677 = vsel %vm671, %v676, %v675
        %vm678 = vcmp.lt.s32.totalorder %v520, 0
        %v679 = vsub.s32 0, %v520
        %v680 = vsel %vm678, %v679, %v520
        %v681 = vshrl.u32 %v680, 4
        %v682 = vand.u32 %v680, 15
        %v683 = vsub.s32 0, %v682
        %v684 = vsel %vm678, %v683, %v682
        %vm685 = vcmp.lt.s32.totalorder %v521, 0
        %v686 = vsub.s32 0, %v521
        %v687 = vsel %vm685, %v686, %v521
        %v688 = vshrl.u32 %v687, 4
        %v689 = vand.u32 %v687, 15
        %v690 = vsub.s32 0, %v689
        %v691 = vsel %vm685, %v690, %v689
        %vm692 = vcmp.lt.s32.totalorder %v522, 0
        %v693 = vsub.s32 0, %v522
        %v694 = vsel %vm692, %v693, %v522
        %v695 = vshrl.u32 %v694, 4
        %v696 = vand.u32 %v694, 15
        %v697 = vsub.s32 0, %v696
        %v698 = vsel %vm692, %v697, %v696
        %vm699 = vcmp.lt.s32.totalorder %v523, 0
        %v700 = vsub.s32 0, %v523
        %v701 = vsel %vm699, %v700, %v523
        %v702 = vshrl.u32 %v701, 4
        %v703 = vand.u32 %v701, 15
        %v704 = vsub.s32 0, %v703
        %v705 = vsel %vm699, %v704, %v703
        %vm706 = vcmp.lt.s32.totalorder %v524, 0
        %v707 = vsub.s32 0, %v524
        %v708 = vsel %vm706, %v707, %v524
        %v709 = vshrl.u32 %v708, 4
        %v710 = vand.u32 %v708, 15
        %v711 = vsub.s32 0, %v710
        %v712 = vsel %vm706, %v711, %v710
        %vm713 = vcmp.lt.s32.totalorder %v525, 0
        %v714 = vsub.s32 0, %v525
        %v715 = vsel %vm713, %v714, %v525
        %v716 = vshrl.u32 %v715, 4
        %v717 = vand.u32 %v715, 15
        %v718 = vsub.s32 0, %v717
        %v719 = vsel %vm713, %v718, %v717
        %vm720 = vcmp.lt.s32.totalorder %v526, 0
        %v721 = vsub.s32 0, %v526
        %v722 = vsel %vm720, %v721, %v526
        %v723 = vshrl.u32 %v722, 4
        %v724 = vand.u32 %v722, 15
        %v725 = vsub.s32 0, %v724
        %v726 = vsel %vm720, %v725, %v724
        %vm727 = vcmp.lt.s32.totalorder %v527, 0
        %v728 = vsub.s32 0, %v527
        %v729 = vsel %vm727, %v728, %v527
        %v730 = vshrl.u32 %v729, 4
        %v731 = vand.u32 %v729, 15
        %v732 = vsub.s32 0, %v731
        %v733 = vsel %vm727, %v732, %v731
        %vm734 = vcmp.lt.s32.totalorder %v528, 0
        %v735 = vsub.s32 0, %v528
        %v736 = vsel %vm734, %v735, %v528
        %v737 = vshrl.u32 %v736, 4
        %v738 = vand.u32 %v736, 15
        %v739 = vsub.s32 0, %v738
        %v740 = vsel %vm734, %v739, %v738
        %vm741 = vcmp.lt.s32.totalorder %v529, 0
        %v742 = vsub.s32 0, %v529
        %v743 = vsel %vm741, %v742, %v529
        %v744 = vshrl.u32 %v743, 4
        %v745 = vand.u32 %v743, 15
        %v746 = vsub.s32 0, %v745
        %v747 = vsel %vm741, %v746, %v745
        %vm748 = vcmp.lt.s32.totalorder %v530, 0
        %v749 = vsub.s32 0, %v530
        %v750 = vsel %vm748, %v749, %v530
        %v751 = vshrl.u32 %v750, 4
        %v752 = vand.u32 %v750, 15
        %v753 = vsub.s32 0, %v752
        %v754 = vsel %vm748, %v753, %v752
        %vm755 = vcmp.ne.s32.totalorder %v537, 0
        %vm756 = vcmp.ne.s32.totalorder %v544, 0
        %vm757 = vcmp.ne.s32.totalorder %v551, 0
        %vm758 = vcmp.ne.s32.totalorder %v558, 0
        %vm759 = vcmp.ne.s32.totalorder %v565, 0
        %vm760 = vcmp.ne.s32.totalorder %v572, 0
        %vm761 = vcmp.ne.s32.totalorder %v579, 0
        %vm762 = vcmp.ne.s32.totalorder %v586, 0
        %vm763 = vcmp.ne.s32.totalorder %v593, 0
        %vm764 = vcmp.ne.s32.totalorder %v600, 0
        %vm765 = vcmp.ne.s32.totalorder %v607, 0
        %vm766 = vcmp.ne.s32.totalorder %v614, 0
        %vm767 = vcmp.ne.s32.totalorder %v621, 0
        %vm768 = vcmp.ne.s32.totalorder %v628, 0
        %vm769 = vcmp.ne.s32.totalorder %v635, 0
        %vm770 = vcmp.ne.s32.totalorder %v642, 0
        %vm771 = vcmp.ne.s32.totalorder %v649, 0
        %vm772 = vcmp.ne.s32.totalorder %v656, 0
        %vm773 = vcmp.ne.s32.totalorder %v663, 0
        %vm774 = vcmp.ne.s32.totalorder %v670, 0
        %vm775 = vcmp.ne.s32.totalorder %v677, 0
        %vm776 = vcmp.ne.s32.totalorder %v684, 0
        %vm777 = vcmp.ne.s32.totalorder %v691, 0
        %vm778 = vcmp.ne.s32.totalorder %v698, 0
        %vm779 = vcmp.ne.s32.totalorder %v705, 0
        %vm780 = vcmp.ne.s32.totalorder %v712, 0
        %vm781 = vcmp.ne.s32.totalorder %v719, 0
        %vm782 = vcmp.ne.s32.totalorder %v726, 0
        %vm783 = vcmp.ne.s32.totalorder %v733, 0
        %vm784 = vcmp.ne.s32.totalorder %v740, 0
        %vm785 = vcmp.ne.s32.totalorder %v747, 0
        %vm786 = vcmp.ne.s32.totalorder %v754, 0
        %vm787 = vcmp.lt.s32.totalorder %v537, 0
        %vm788 = vcmp.lt.s32.totalorder %v544, 0
        %vm789 = vcmp.lt.s32.totalorder %v551, 0
        %vm790 = vcmp.lt.s32.totalorder %v558, 0
        %vm791 = vcmp.lt.s32.totalorder %v565, 0
        %vm792 = vcmp.lt.s32.totalorder %v572, 0
        %vm793 = vcmp.lt.s32.totalorder %v579, 0
        %vm794 = vcmp.lt.s32.totalorder %v586, 0
        %vm795 = vcmp.lt.s32.totalorder %v593, 0
        %vm796 = vcmp.lt.s32.totalorder %v600, 0
        %vm797 = vcmp.lt.s32.totalorder %v607, 0
        %vm798 = vcmp.lt.s32.totalorder %v614, 0
        %vm799 = vcmp.lt.s32.totalorder %v621, 0
        %vm800 = vcmp.lt.s32.totalorder %v628, 0
        %vm801 = vcmp.lt.s32.totalorder %v635, 0
        %vm802 = vcmp.lt.s32.totalorder %v642, 0
        %vm803 = vcmp.lt.s32.totalorder %v649, 0
        %vm804 = vcmp.lt.s32.totalorder %v656, 0
        %vm805 = vcmp.lt.s32.totalorder %v663, 0
        %vm806 = vcmp.lt.s32.totalorder %v670, 0
        %vm807 = vcmp.lt.s32.totalorder %v677, 0
        %vm808 = vcmp.lt.s32.totalorder %v684, 0
        %vm809 = vcmp.lt.s32.totalorder %v691, 0
        %vm810 = vcmp.lt.s32.totalorder %v698, 0
        %vm811 = vcmp.lt.s32.totalorder %v705, 0
        %vm812 = vcmp.lt.s32.totalorder %v712, 0
        %vm813 = vcmp.lt.s32.totalorder %v719, 0
        %vm814 = vcmp.lt.s32.totalorder %v726, 0
        %vm815 = vcmp.lt.s32.totalorder %v733, 0
        %vm816 = vcmp.lt.s32.totalorder %v740, 0
        %vm817 = vcmp.lt.s32.totalorder %v747, 0
        %vm818 = vcmp.lt.s32.totalorder %v754, 0
        %vm819 = vmand %vm787, %vm755
        %vm820 = vmand %vm788, %vm756
        %vm821 = vmand %vm789, %vm757
        %vm822 = vmand %vm790, %vm758
        %vm823 = vmand %vm791, %vm759
        %vm824 = vmand %vm792, %vm760
        %vm825 = vmand %vm793, %vm761
        %vm826 = vmand %vm794, %vm762
        %vm827 = vmand %vm795, %vm763
        %vm828 = vmand %vm796, %vm764
        %vm829 = vmand %vm797, %vm765
        %vm830 = vmand %vm798, %vm766
        %vm831 = vmand %vm799, %vm767
        %vm832 = vmand %vm800, %vm768
        %vm833 = vmand %vm801, %vm769
        %vm834 = vmand %vm802, %vm770
        %vm835 = vmand %vm803, %vm771
        %vm836 = vmand %vm804, %vm772
        %vm837 = vmand %vm805, %vm773
        %vm838 = vmand %vm806, %vm774
        %vm839 = vmand %vm807, %vm775
        %vm840 = vmand %vm808, %vm776
        %vm841 = vmand %vm809, %vm777
        %vm842 = vmand %vm810, %vm778
        %vm843 = vmand %vm811, %vm779
        %vm844 = vmand %vm812, %vm780
        %vm845 = vmand %vm813, %vm781
        %vm846 = vmand %vm814, %vm782
        %vm847 = vmand %vm815, %vm783
        %vm848 = vmand %vm816, %vm784
        %vm849 = vmand %vm817, %vm785
        %vm850 = vmand %vm818, %vm786
        %v851 = vadd.s32 %v537, 16
        %v852 = vadd.s32 %v544, 16
        %v853 = vadd.s32 %v551, 16
        %v854 = vadd.s32 %v558, 16
        %v855 = vadd.s32 %v565, 16
        %v856 = vadd.s32 %v572, 16
        %v857 = vadd.s32 %v579, 16
        %v858 = vadd.s32 %v586, 16
        %v859 = vadd.s32 %v593, 16
        %v860 = vadd.s32 %v600, 16
        %v861 = vadd.s32 %v607, 16
        %v862 = vadd.s32 %v614, 16
        %v863 = vadd.s32 %v621, 16
        %v864 = vadd.s32 %v628, 16
        %v865 = vadd.s32 %v635, 16
        %v866 = vadd.s32 %v642, 16
        %v867 = vadd.s32 %v649, 16
        %v868 = vadd.s32 %v656, 16
        %v869 = vadd.s32 %v663, 16
        %v870 = vadd.s32 %v670, 16
        %v871 = vadd.s32 %v677, 16
        %v872 = vadd.s32 %v684, 16
        %v873 = vadd.s32 %v691, 16
        %v874 = vadd.s32 %v698, 16
        %v875 = vadd.s32 %v705, 16
        %v876 = vadd.s32 %v712, 16
        %v877 = vadd.s32 %v719, 16
        %v878 = vadd.s32 %v726, 16
        %v879 = vadd.s32 %v733, 16
        %v880 = vadd.s32 %v740, 16
        %v881 = vadd.s32 %v747, 16
        %v882 = vadd.s32 %v754, 16
        %v883 = vsel %vm819, %v851, %v537
        %v884 = vsel %vm820, %v852, %v544
        %v885 = vsel %vm821, %v853, %v551
        %v886 = vsel %vm822, %v854, %v558
        %v887 = vsel %vm823, %v855, %v565
        %v888 = vsel %vm824, %v856, %v572
        %v889 = vsel %vm825, %v857, %v579
        %v890 = vsel %vm826, %v858, %v586
        %v891 = vsel %vm827, %v859, %v593
        %v892 = vsel %vm828, %v860, %v600
        %v893 = vsel %vm829, %v861, %v607
        %v894 = vsel %vm830, %v862, %v614
        %v895 = vsel %vm831, %v863, %v621
        %v896 = vsel %vm832, %v864, %v628
        %v897 = vsel %vm833, %v865, %v635
        %v898 = vsel %vm834, %v866, %v642
        %v899 = vsel %vm835, %v867, %v649
        %v900 = vsel %vm836, %v868, %v656
        %v901 = vsel %vm837, %v869, %v663
        %v902 = vsel %vm838, %v870, %v670
        %v903 = vsel %vm839, %v871, %v677
        %v904 = vsel %vm840, %v872, %v684
        %v905 = vsel %vm841, %v873, %v691
        %v906 = vsel %vm842, %v874, %v698
        %v907 = vsel %vm843, %v875, %v705
        %v908 = vsel %vm844, %v876, %v712
        %v909 = vsel %vm845, %v877, %v719
        %v910 = vsel %vm846, %v878, %v726
        %v911 = vsel %vm847, %v879, %v733
        %v912 = vsel %vm848, %v880, %v740
        %v913 = vsel %vm849, %v881, %v747
        %v914 = vsel %vm850, %v882, %v754
        %vm915 = vcmp.ge.s32.totalorder %v883, 1
        %vm916 = vcmp.ge.s32.totalorder %v884, 1
        %vm917 = vcmp.ge.s32.totalorder %v885, 1
        %vm918 = vcmp.ge.s32.totalorder %v886, 1
        %vm919 = vcmp.ge.s32.totalorder %v887, 1
        %vm920 = vcmp.ge.s32.totalorder %v888, 1
        %vm921 = vcmp.ge.s32.totalorder %v889, 1
        %vm922 = vcmp.ge.s32.totalorder %v890, 1
        %vm923 = vcmp.ge.s32.totalorder %v891, 1
        %vm924 = vcmp.ge.s32.totalorder %v892, 1
        %vm925 = vcmp.ge.s32.totalorder %v893, 1
        %vm926 = vcmp.ge.s32.totalorder %v894, 1
        %vm927 = vcmp.ge.s32.totalorder %v895, 1
        %vm928 = vcmp.ge.s32.totalorder %v896, 1
        %vm929 = vcmp.ge.s32.totalorder %v897, 1
        %vm930 = vcmp.ge.s32.totalorder %v898, 1
        %vm931 = vcmp.ge.s32.totalorder %v899, 1
        %vm932 = vcmp.ge.s32.totalorder %v900, 1
        %vm933 = vcmp.ge.s32.totalorder %v901, 1
        %vm934 = vcmp.ge.s32.totalorder %v902, 1
        %vm935 = vcmp.ge.s32.totalorder %v903, 1
        %vm936 = vcmp.ge.s32.totalorder %v904, 1
        %vm937 = vcmp.ge.s32.totalorder %v905, 1
        %vm938 = vcmp.ge.s32.totalorder %v906, 1
        %vm939 = vcmp.ge.s32.totalorder %v907, 1
        %vm940 = vcmp.ge.s32.totalorder %v908, 1
        %vm941 = vcmp.ge.s32.totalorder %v909, 1
        %vm942 = vcmp.ge.s32.totalorder %v910, 1
        %vm943 = vcmp.ge.s32.totalorder %v911, 1
        %vm944 = vcmp.ge.s32.totalorder %v912, 1
        %vm945 = vcmp.ge.s32.totalorder %v913, 1
        %vm946 = vcmp.ge.s32.totalorder %v914, 1
        %vm947 = vcmp.lt.s32.totalorder %v883, 15
        %vm948 = vcmp.lt.s32.totalorder %v884, 15
        %vm949 = vcmp.lt.s32.totalorder %v885, 15
        %vm950 = vcmp.lt.s32.totalorder %v886, 15
        %vm951 = vcmp.lt.s32.totalorder %v887, 15
        %vm952 = vcmp.lt.s32.totalorder %v888, 15
        %vm953 = vcmp.lt.s32.totalorder %v889, 15
        %vm954 = vcmp.lt.s32.totalorder %v890, 15
        %vm955 = vcmp.lt.s32.totalorder %v891, 15
        %vm956 = vcmp.lt.s32.totalorder %v892, 15
        %vm957 = vcmp.lt.s32.totalorder %v893, 15
        %vm958 = vcmp.lt.s32.totalorder %v894, 15
        %vm959 = vcmp.lt.s32.totalorder %v895, 15
        %vm960 = vcmp.lt.s32.totalorder %v896, 15
        %vm961 = vcmp.lt.s32.totalorder %v897, 15
        %vm962 = vcmp.lt.s32.totalorder %v898, 15
        %vm963 = vcmp.lt.s32.totalorder %v899, 15
        %vm964 = vcmp.lt.s32.totalorder %v900, 15
        %vm965 = vcmp.lt.s32.totalorder %v901, 15
        %vm966 = vcmp.lt.s32.totalorder %v902, 15
        %vm967 = vcmp.lt.s32.totalorder %v903, 15
        %vm968 = vcmp.lt.s32.totalorder %v904, 15
        %vm969 = vcmp.lt.s32.totalorder %v905, 15
        %vm970 = vcmp.lt.s32.totalorder %v906, 15
        %vm971 = vcmp.lt.s32.totalorder %v907, 15
        %vm972 = vcmp.lt.s32.totalorder %v908, 15
        %vm973 = vcmp.lt.s32.totalorder %v909, 15
        %vm974 = vcmp.lt.s32.totalorder %v910, 15
        %vm975 = vcmp.lt.s32.totalorder %v911, 15
        %vm976 = vcmp.lt.s32.totalorder %v912, 15
        %vm977 = vcmp.lt.s32.totalorder %v913, 15
        %vm978 = vcmp.lt.s32.totalorder %v914, 15
        %v979 = vld [vmem:[%s482 + $0x7] sm:$0xff]
        %v980 = vld [vmem:[%s482 + $0xf] sm:$0xff]
        %v981 = vld [vmem:[%s482 + $0x17] sm:$0xff]
        %v982 = vld [vmem:[%s482 + $0x1f] sm:$0xff]
        %v983 = vld [vmem:[%s482 + $0x27] sm:$0xff]
        %v984 = vld [vmem:[%s482 + $0x2f] sm:$0xff]
        %v985 = vld [vmem:[%s482 + $0x37] sm:$0xff]
        %v986 = vld [vmem:[%s482 + $0x3f] sm:$0xff]
        %v987 = vld [vmem:[%s482 + $0x47] sm:$0xff]
        %v988 = vld [vmem:[%s482 + $0x4f] sm:$0xff]
        %v989 = vld [vmem:[%s482 + $0x57] sm:$0xff]
        %v990 = vld [vmem:[%s482 + $0x5f] sm:$0xff]
        %v991 = vld [vmem:[%s482 + $0x67] sm:$0xff]
        %v992 = vld [vmem:[%s482 + $0x6f] sm:$0xff]
        %v993 = vld [vmem:[%s482 + $0x77] sm:$0xff]
        %v994 = vld [vmem:[%s482 + $0x7f] sm:$0xff]
        %v995 = vld [vmem:[%s482 + $0x87] sm:$0xff]
        %v996 = vld [vmem:[%s482 + $0x8f] sm:$0xff]
        %v997 = vld [vmem:[%s482 + $0x97] sm:$0xff]
        %v998 = vld [vmem:[%s482 + $0x9f] sm:$0xff]
        %v999 = vld [vmem:[%s482 + $0xa7] sm:$0xff]
        %v1000 = vld [vmem:[%s482 + $0xaf] sm:$0xff]
        %v1001 = vld [vmem:[%s482 + $0xb7] sm:$0xff]
        %v1002 = vld [vmem:[%s482 + $0xbf] sm:$0xff]
        %v1003 = vld [vmem:[%s482 + $0xc7] sm:$0xff]
        %v1004 = vld [vmem:[%s482 + $0xcf] sm:$0xff]
        %v1005 = vld [vmem:[%s482 + $0xd7] sm:$0xff]
        %v1006 = vld [vmem:[%s482 + $0xdf] sm:$0xff]
        %v1007 = vld [vmem:[%s482 + $0xe7] sm:$0xff]
        %v1008 = vld [vmem:[%s482 + $0xef] sm:$0xff]
        %v1009 = vld [vmem:[%s482 + $0xf7] sm:$0xff]
        %v1010 = vld [vmem:[%s482 + $0xff] sm:$0xff]
        %v1011 = vsel %vm915, 1, 0
        %v1012 = vsel %vm916, 1, 0
        %v1013 = vsel %vm917, 1, 0
        %v1014 = vsel %vm918, 1, 0
        %v1015 = vsel %vm919, 1, 0
        %v1016 = vsel %vm920, 1, 0
        %v1017 = vsel %vm921, 1, 0
        %v1018 = vsel %vm922, 1, 0
        %v1019 = vsel %vm923, 1, 0
        %v1020 = vsel %vm924, 1, 0
        %v1021 = vsel %vm925, 1, 0
        %v1022 = vsel %vm926, 1, 0
        %v1023 = vsel %vm927, 1, 0
        %v1024 = vsel %vm928, 1, 0
        %v1025 = vsel %vm929, 1, 0
        %v1026 = vsel %vm930, 1, 0
        %v1027 = vsel %vm931, 1, 0
        %v1028 = vsel %vm932, 1, 0
        %v1029 = vsel %vm933, 1, 0
        %v1030 = vsel %vm934, 1, 0
        %v1031 = vsel %vm935, 1, 0
        %v1032 = vsel %vm936, 1, 0
        %v1033 = vsel %vm937, 1, 0
        %v1034 = vsel %vm938, 1, 0
        %v1035 = vsel %vm939, 1, 0
        %v1036 = vsel %vm940, 1, 0
        %v1037 = vsel %vm941, 1, 0
        %v1038 = vsel %vm942, 1, 0
        %v1039 = vsel %vm943, 1, 0
        %v1040 = vsel %vm944, 1, 0
        %v1041 = vsel %vm945, 1, 0
        %v1042 = vsel %vm946, 1, 0
        %vm1043 = vcmp.eq.s32.totalorder %v1011, 1
        %vm1044 = vcmp.eq.s32.totalorder %v1012, 1
        %vm1045 = vcmp.eq.s32.totalorder %v1013, 1
        %vm1046 = vcmp.eq.s32.totalorder %v1014, 1
        %vm1047 = vcmp.eq.s32.totalorder %v1015, 1
        %vm1048 = vcmp.eq.s32.totalorder %v1016, 1
        %vm1049 = vcmp.eq.s32.totalorder %v1017, 1
        %vm1050 = vcmp.eq.s32.totalorder %v1018, 1
        %vm1051 = vcmp.eq.s32.totalorder %v1019, 1
        %vm1052 = vcmp.eq.s32.totalorder %v1020, 1
        %vm1053 = vcmp.eq.s32.totalorder %v1021, 1
        %vm1054 = vcmp.eq.s32.totalorder %v1022, 1
        %vm1055 = vcmp.eq.s32.totalorder %v1023, 1
        %vm1056 = vcmp.eq.s32.totalorder %v1024, 1
        %vm1057 = vcmp.eq.s32.totalorder %v1025, 1
        %vm1058 = vcmp.eq.s32.totalorder %v1026, 1
        %vm1059 = vcmp.eq.s32.totalorder %v1027, 1
        %vm1060 = vcmp.eq.s32.totalorder %v1028, 1
        %vm1061 = vcmp.eq.s32.totalorder %v1029, 1
        %vm1062 = vcmp.eq.s32.totalorder %v1030, 1
        %vm1063 = vcmp.eq.s32.totalorder %v1031, 1
        %vm1064 = vcmp.eq.s32.totalorder %v1032, 1
        %vm1065 = vcmp.eq.s32.totalorder %v1033, 1
        %vm1066 = vcmp.eq.s32.totalorder %v1034, 1
        %vm1067 = vcmp.eq.s32.totalorder %v1035, 1
        %vm1068 = vcmp.eq.s32.totalorder %v1036, 1
        %vm1069 = vcmp.eq.s32.totalorder %v1037, 1
        %vm1070 = vcmp.eq.s32.totalorder %v1038, 1
        %vm1071 = vcmp.eq.s32.totalorder %v1039, 1
        %vm1072 = vcmp.eq.s32.totalorder %v1040, 1
        %vm1073 = vcmp.eq.s32.totalorder %v1041, 1
        %vm1074 = vcmp.eq.s32.totalorder %v1042, 1
        %v1075 = vsel %vm1043, %v979, 0.0
        %v1076 = vsel %vm1044, %v980, 0.0
        %v1077 = vsel %vm1045, %v981, 0.0
        %v1078 = vsel %vm1046, %v982, 0.0
        %v1079 = vsel %vm1047, %v983, 0.0
        %v1080 = vsel %vm1048, %v984, 0.0
        %v1081 = vsel %vm1049, %v985, 0.0
        %v1082 = vsel %vm1050, %v986, 0.0
        %v1083 = vsel %vm1051, %v987, 0.0
        %v1084 = vsel %vm1052, %v988, 0.0
        %v1085 = vsel %vm1053, %v989, 0.0
        %v1086 = vsel %vm1054, %v990, 0.0
        %v1087 = vsel %vm1055, %v991, 0.0
        %v1088 = vsel %vm1056, %v992, 0.0
        %v1089 = vsel %vm1057, %v993, 0.0
        %v1090 = vsel %vm1058, %v994, 0.0
        %v1091 = vsel %vm1059, %v995, 0.0
        %v1092 = vsel %vm1060, %v996, 0.0
        %v1093 = vsel %vm1061, %v997, 0.0
        %v1094 = vsel %vm1062, %v998, 0.0
        %v1095 = vsel %vm1063, %v999, 0.0
        %v1096 = vsel %vm1064, %v1000, 0.0
        %v1097 = vsel %vm1065, %v1001, 0.0
        %v1098 = vsel %vm1066, %v1002, 0.0
        %v1099 = vsel %vm1067, %v1003, 0.0
        %v1100 = vsel %vm1068, %v1004, 0.0
        %v1101 = vsel %vm1069, %v1005, 0.0
        %v1102 = vsel %vm1070, %v1006, 0.0
        %v1103 = vsel %vm1071, %v1007, 0.0
        %v1104 = vsel %vm1072, %v1008, 0.0
        %v1105 = vsel %vm1073, %v1009, 0.0
        %v1106 = vsel %vm1074, %v1010, 0.0
        %v1107 = vpack.c.bf16 %v1076, %v1075
        %v1108 = vpack.c.bf16 %v1078, %v1077
        %v1109 = vpack.c.bf16 %v1080, %v1079
        %v1110 = vpack.c.bf16 %v1082, %v1081
        %v1111 = vpack.c.bf16 %v1084, %v1083
        %v1112 = vpack.c.bf16 %v1086, %v1085
        %v1113 = vpack.c.bf16 %v1088, %v1087
        %v1114 = vpack.c.bf16 %v1090, %v1089
        %v1115 = vpack.c.bf16 %v1092, %v1091
        %v1116 = vpack.c.bf16 %v1094, %v1093
        %v1117 = vpack.c.bf16 %v1096, %v1095
        %v1118 = vpack.c.bf16 %v1098, %v1097
        %v1119 = vpack.c.bf16 %v1100, %v1099
        %v1120 = vpack.c.bf16 %v1102, %v1101
        %v1121 = vpack.c.bf16 %v1104, %v1103
        %v1122 = vpack.c.bf16 %v1106, %v1105
        %v1123 = vld [vmem:[%s1] sm:$0x3]
        %v1124 = vld [vmem:[%s482 + $0x8] sm:$0xff]
        %v1125 = vld [vmem:[%s482 + $0x10] sm:$0xff]
        %v1126 = vld [vmem:[%s482 + $0x18] sm:$0xff]
        %v1127 = vld [vmem:[%s482 + $0x20] sm:$0xff]
        %v1128 = vld [vmem:[%s482 + $0x28] sm:$0xff]
        %v1129 = vld [vmem:[%s482 + $0x30] sm:$0xff]
        %v1130 = vld [vmem:[%s482 + $0x38] sm:$0xff]
        %v1131 = vld [vmem:[%s482 + $0x40] sm:$0xff]
        %v1132 = vld [vmem:[%s482 + $0x48] sm:$0xff]
        %v1133 = vld [vmem:[%s482 + $0x50] sm:$0xff]
        %v1134 = vld [vmem:[%s482 + $0x58] sm:$0xff]
        %v1135 = vld [vmem:[%s482 + $0x60] sm:$0xff]
        %v1136 = vld [vmem:[%s482 + $0x68] sm:$0xff]
        %v1137 = vld [vmem:[%s482 + $0x70] sm:$0xff]
        %v1138 = vld [vmem:[%s482 + $0x78] sm:$0xff]
        %v1139 = vld [vmem:[%s482 + $0x80] sm:$0xff]
        %v1140 = vld [vmem:[%s482 + $0x88] sm:$0xff]
        %v1141 = vld [vmem:[%s482 + $0x90] sm:$0xff]
        %v1142 = vld [vmem:[%s482 + $0x98] sm:$0xff]
        %v1143 = vld [vmem:[%s482 + $0xa0] sm:$0xff]
        %v1144 = vld [vmem:[%s482 + $0xa8] sm:$0xff]
        %v1145 = vld [vmem:[%s482 + $0xb0] sm:$0xff]
        %v1146 = vld [vmem:[%s482 + $0xb8] sm:$0xff]
        %v1147 = vld [vmem:[%s482 + $0xc0] sm:$0xff]
        %v1148 = vld [vmem:[%s482 + $0xc8] sm:$0xff]
        %v1149 = vld [vmem:[%s482 + $0xd0] sm:$0xff]
        %v1150 = vld [vmem:[%s482 + $0xd8] sm:$0xff]
        %v1151 = vld [vmem:[%s482 + $0xe0] sm:$0xff]
        %v1152 = vld [vmem:[%s482 + $0xe8] sm:$0xff]
        %v1153 = vld [vmem:[%s482 + $0xf0] sm:$0xff]
        %v1154 = vld [vmem:[%s482 + $0xf8] sm:$0xff]
        %v1155 = vld [vmem:[%s482 + $0x100] sm:$0xff]
        %v1156 = vpack.c.bf16 %v1125, %v1124
        %v1157 = vpack.c.bf16 %v1127, %v1126
        %v1158 = vpack.c.bf16 %v1129, %v1128
        %v1159 = vpack.c.bf16 %v1131, %v1130
        %v1160 = vpack.c.bf16 %v1133, %v1132
        %v1161 = vpack.c.bf16 %v1135, %v1134
        %v1162 = vpack.c.bf16 %v1137, %v1136
        %v1163 = vpack.c.bf16 %v1139, %v1138
        %v1164 = vpack.c.bf16 %v1141, %v1140
        %v1165 = vpack.c.bf16 %v1143, %v1142
        %v1166 = vpack.c.bf16 %v1145, %v1144
        %v1167 = vpack.c.bf16 %v1147, %v1146
        %v1168 = vpack.c.bf16 %v1149, %v1148
        %v1169 = vpack.c.bf16 %v1151, %v1150
        %v1170 = vpack.c.bf16 %v1153, %v1152
        %v1171 = vpack.c.bf16 %v1155, %v1154
        %s1172 = scalar_lea.vmem %s1, 2
        %v1173 = vld [vmem:[%s1172] sm:$0x3]
        %vm1174 = vcmask 31744
        %v1176 = vsel %vm1174, %v1156, 0
        %v1179 = vsel %vm1174, %v1157, 0
        %v1182 = vsel %vm1174, %v1158, 0
        %v1185 = vsel %vm1174, %v1159, 0
        %v1188 = vsel %vm1174, %v1160, 0
        %v1191 = vsel %vm1174, %v1161, 0
        %v1194 = vsel %vm1174, %v1162, 0
        %v1197 = vsel %vm1174, %v1163, 0
        %v1200 = vsel %vm1174, %v1164, 0
        %v1203 = vsel %vm1174, %v1165, 0
        %v1206 = vsel %vm1174, %v1166, 0
        %v1209 = vsel %vm1174, %v1167, 0
        %v1212 = vsel %vm1174, %v1168, 0
        %v1215 = vsel %vm1174, %v1169, 0
        %v1218 = vsel %vm1174, %v1170, 0
        %v1221 = vsel %vm1174, %v1171, 0
        %vm1223 = vcmask 1041408
        %v1225 = vsel %vm1223, %v1173, 0
        %1227 = vmatpush.bf16.msra.mxu0 0
        %1228 = vmatpush.bf16.msra.mxu0 0
        %1229 = vmatpush.bf16.msra.mxu0 0
        %1230 = vmatpush.bf16.msra.mxu0 0
        %1231 = vmatpush.bf16.msra.mxu0 0
        %1232 = vmatpush.bf16.msra.mxu0 0
        %1233 = vmatpush.bf16.msra.mxu0 0
        %1234 = vmatpush.bf16.msra.mxu0 %v1225
        %1235 = vmatmul.bf16.gmra.mxu0 %v1176
        %v1236 = vpop.f32.mrf.mxu0
        %v1237 = vadd.f32 0.0, %v1236
        %v1238 = vpop.f32.mrf.mxu0
        %v1239 = vadd.f32 0.0, %v1238
        %1240 = vmatmul.bf16.gmra.mxu0 %v1179
        %v1241 = vpop.f32.mrf.mxu0
        %v1242 = vadd.f32 0.0, %v1241
        %v1243 = vpop.f32.mrf.mxu0
        %v1244 = vadd.f32 0.0, %v1243
        %1245 = vmatmul.bf16.gmra.mxu0 %v1182
        %v1246 = vpop.f32.mrf.mxu0
        %v1247 = vadd.f32 0.0, %v1246
        %v1248 = vpop.f32.mrf.mxu0
        %v1249 = vadd.f32 0.0, %v1248
        %1250 = vmatmul.bf16.gmra.mxu0 %v1185
        %v1251 = vpop.f32.mrf.mxu0
        %v1252 = vadd.f32 0.0, %v1251
        %v1253 = vpop.f32.mrf.mxu0
        %v1254 = vadd.f32 0.0, %v1253
        %1255 = vmatmul.bf16.gmra.mxu0 %v1188
        %v1256 = vpop.f32.mrf.mxu0
        %v1257 = vadd.f32 0.0, %v1256
        %v1258 = vpop.f32.mrf.mxu0
        %v1259 = vadd.f32 0.0, %v1258
        %1260 = vmatmul.bf16.gmra.mxu0 %v1191
        %v1261 = vpop.f32.mrf.mxu0
        %v1262 = vadd.f32 0.0, %v1261
        %v1263 = vpop.f32.mrf.mxu0
        %v1264 = vadd.f32 0.0, %v1263
        %1265 = vmatmul.bf16.gmra.mxu0 %v1194
        %v1266 = vpop.f32.mrf.mxu0
        %v1267 = vadd.f32 0.0, %v1266
        %v1268 = vpop.f32.mrf.mxu0
        %v1269 = vadd.f32 0.0, %v1268
        %1270 = vmatmul.bf16.gmra.mxu0 %v1197
        %v1271 = vpop.f32.mrf.mxu0
        %v1272 = vadd.f32 0.0, %v1271
        %v1273 = vpop.f32.mrf.mxu0
        %v1274 = vadd.f32 0.0, %v1273
        %1275 = vmatmul.bf16.gmra.mxu0 %v1200
        %v1276 = vpop.f32.mrf.mxu0
        %v1277 = vadd.f32 0.0, %v1276
        %v1278 = vpop.f32.mrf.mxu0
        %v1279 = vadd.f32 0.0, %v1278
        %1280 = vmatmul.bf16.gmra.mxu0 %v1203
        %v1281 = vpop.f32.mrf.mxu0
        %v1282 = vadd.f32 0.0, %v1281
        %v1283 = vpop.f32.mrf.mxu0
        %v1284 = vadd.f32 0.0, %v1283
        %1285 = vmatmul.bf16.gmra.mxu0 %v1206
        %v1286 = vpop.f32.mrf.mxu0
        %v1287 = vadd.f32 0.0, %v1286
        %v1288 = vpop.f32.mrf.mxu0
        %v1289 = vadd.f32 0.0, %v1288
        %1290 = vmatmul.bf16.gmra.mxu0 %v1209
        %v1291 = vpop.f32.mrf.mxu0
        %v1292 = vadd.f32 0.0, %v1291
        %v1293 = vpop.f32.mrf.mxu0
        %v1294 = vadd.f32 0.0, %v1293
        %1295 = vmatmul.bf16.gmra.mxu0 %v1212
        %v1296 = vpop.f32.mrf.mxu0
        %v1297 = vadd.f32 0.0, %v1296
        %v1298 = vpop.f32.mrf.mxu0
        %v1299 = vadd.f32 0.0, %v1298
        %1300 = vmatmul.bf16.gmra.mxu0 %v1215
        %v1301 = vpop.f32.mrf.mxu0
        %v1302 = vadd.f32 0.0, %v1301
        %v1303 = vpop.f32.mrf.mxu0
        %v1304 = vadd.f32 0.0, %v1303
        %1305 = vmatmul.bf16.gmra.mxu0 %v1218
        %v1306 = vpop.f32.mrf.mxu0
        %v1307 = vadd.f32 0.0, %v1306
        %v1308 = vpop.f32.mrf.mxu0
        %v1309 = vadd.f32 0.0, %v1308
        %1310 = vmatmul.bf16.gmra.mxu0 %v1221
        %v1311 = vpop.f32.mrf.mxu0
        %v1312 = vadd.f32 0.0, %v1311
        %v1313 = vpop.f32.mrf.mxu0
        %v1314 = vadd.f32 0.0, %v1313
        %1315 = vdwg.mxu0
        %v1317 = vsel %vm1174, %v1107, 0
        %v1320 = vsel %vm1174, %v1108, 0
        %v1323 = vsel %vm1174, %v1109, 0
        %v1326 = vsel %vm1174, %v1110, 0
        %v1329 = vsel %vm1174, %v1111, 0
        %v1332 = vsel %vm1174, %v1112, 0
        %v1335 = vsel %vm1174, %v1113, 0
        %v1338 = vsel %vm1174, %v1114, 0
        %v1341 = vsel %vm1174, %v1115, 0
        %v1344 = vsel %vm1174, %v1116, 0
        %v1347 = vsel %vm1174, %v1117, 0
        %v1350 = vsel %vm1174, %v1118, 0
        %v1353 = vsel %vm1174, %v1119, 0
        %v1356 = vsel %vm1174, %v1120, 0
        %v1359 = vsel %vm1174, %v1121, 0
        %v1362 = vsel %vm1174, %v1122, 0
        %v1365 = vsel %vm1223, %v1123, 0
        %1367 = vmatpush.bf16.msra.mxu0 0
        %1368 = vmatpush.bf16.msra.mxu0 0
        %1369 = vmatpush.bf16.msra.mxu0 0
        %1370 = vmatpush.bf16.msra.mxu0 0
        %1371 = vmatpush.bf16.msra.mxu0 0
        %1372 = vmatpush.bf16.msra.mxu0 0
        %1373 = vmatpush.bf16.msra.mxu0 0
        %1374 = vmatpush.bf16.msra.mxu0 %v1365
        %1375 = vmatmul.bf16.gmra.mxu0 %v1317
        %v1376 = vpop.f32.mrf.mxu0
        %v1377 = vadd.f32 %v1237, %v1376
        %v1378 = vpop.f32.mrf.mxu0
        %v1379 = vadd.f32 %v1239, %v1378
        %1380 = vmatmul.bf16.gmra.mxu0 %v1320
        %v1381 = vpop.f32.mrf.mxu0
        %v1382 = vadd.f32 %v1242, %v1381
        %v1383 = vpop.f32.mrf.mxu0
        %v1384 = vadd.f32 %v1244, %v1383
        %1385 = vmatmul.bf16.gmra.mxu0 %v1323
        %v1386 = vpop.f32.mrf.mxu0
        %v1387 = vadd.f32 %v1247, %v1386
        %v1388 = vpop.f32.mrf.mxu0
        %v1389 = vadd.f32 %v1249, %v1388
        %1390 = vmatmul.bf16.gmra.mxu0 %v1326
        %v1391 = vpop.f32.mrf.mxu0
        %v1392 = vadd.f32 %v1252, %v1391
        %v1393 = vpop.f32.mrf.mxu0
        %v1394 = vadd.f32 %v1254, %v1393
        %1395 = vmatmul.bf16.gmra.mxu0 %v1329
        %v1396 = vpop.f32.mrf.mxu0
        %v1397 = vadd.f32 %v1257, %v1396
        %v1398 = vpop.f32.mrf.mxu0
        %v1399 = vadd.f32 %v1259, %v1398
        %1400 = vmatmul.bf16.gmra.mxu0 %v1332
        %v1401 = vpop.f32.mrf.mxu0
        %v1402 = vadd.f32 %v1262, %v1401
        %v1403 = vpop.f32.mrf.mxu0
        %v1404 = vadd.f32 %v1264, %v1403
        %1405 = vmatmul.bf16.gmra.mxu0 %v1335
        %v1406 = vpop.f32.mrf.mxu0
        %v1407 = vadd.f32 %v1267, %v1406
        %v1408 = vpop.f32.mrf.mxu0
        %v1409 = vadd.f32 %v1269, %v1408
        %1410 = vmatmul.bf16.gmra.mxu0 %v1338
        %v1411 = vpop.f32.mrf.mxu0
        %v1412 = vadd.f32 %v1272, %v1411
        %v1413 = vpop.f32.mrf.mxu0
        %v1414 = vadd.f32 %v1274, %v1413
        %1415 = vmatmul.bf16.gmra.mxu0 %v1341
        %v1416 = vpop.f32.mrf.mxu0
        %v1417 = vadd.f32 %v1277, %v1416
        %v1418 = vpop.f32.mrf.mxu0
        %v1419 = vadd.f32 %v1279, %v1418
        %1420 = vmatmul.bf16.gmra.mxu0 %v1344
        %v1421 = vpop.f32.mrf.mxu0
        %v1422 = vadd.f32 %v1282, %v1421
        %v1423 = vpop.f32.mrf.mxu0
        %v1424 = vadd.f32 %v1284, %v1423
        %1425 = vmatmul.bf16.gmra.mxu0 %v1347
        %v1426 = vpop.f32.mrf.mxu0
        %v1427 = vadd.f32 %v1287, %v1426
        %v1428 = vpop.f32.mrf.mxu0
        %v1429 = vadd.f32 %v1289, %v1428
        %1430 = vmatmul.bf16.gmra.mxu0 %v1350
        %v1431 = vpop.f32.mrf.mxu0
        %v1432 = vadd.f32 %v1292, %v1431
        %v1433 = vpop.f32.mrf.mxu0
        %v1434 = vadd.f32 %v1294, %v1433
        %1435 = vmatmul.bf16.gmra.mxu0 %v1353
        %v1436 = vpop.f32.mrf.mxu0
        %v1437 = vadd.f32 %v1297, %v1436
        %v1438 = vpop.f32.mrf.mxu0
        %v1439 = vadd.f32 %v1299, %v1438
        %1440 = vmatmul.bf16.gmra.mxu0 %v1356
        %v1441 = vpop.f32.mrf.mxu0
        %v1442 = vadd.f32 %v1302, %v1441
        %v1443 = vpop.f32.mrf.mxu0
        %v1444 = vadd.f32 %v1304, %v1443
        %1445 = vmatmul.bf16.gmra.mxu0 %v1359
        %v1446 = vpop.f32.mrf.mxu0
        %v1447 = vadd.f32 %v1307, %v1446
        %v1448 = vpop.f32.mrf.mxu0
        %v1449 = vadd.f32 %v1309, %v1448
        %1450 = vmatmul.bf16.gmra.mxu0 %v1362
        %v1451 = vpop.f32.mrf.mxu0
        %v1452 = vadd.f32 %v1312, %v1451
        %v1453 = vpop.f32.mrf.mxu0
        %v1454 = vadd.f32 %v1314, %v1453
        %1455 = vdwg.mxu0
        %v1456 = vld [vmem:[%s482 + $0x9] sm:$0xff]
        %v1457 = vld [vmem:[%s482 + $0x11] sm:$0xff]
        %v1458 = vld [vmem:[%s482 + $0x19] sm:$0xff]
        %v1459 = vld [vmem:[%s482 + $0x21] sm:$0xff]
        %v1460 = vld [vmem:[%s482 + $0x29] sm:$0xff]
        %v1461 = vld [vmem:[%s482 + $0x31] sm:$0xff]
        %v1462 = vld [vmem:[%s482 + $0x39] sm:$0xff]
        %v1463 = vld [vmem:[%s482 + $0x41] sm:$0xff]
        %v1464 = vld [vmem:[%s482 + $0x49] sm:$0xff]
        %v1465 = vld [vmem:[%s482 + $0x51] sm:$0xff]
        %v1466 = vld [vmem:[%s482 + $0x59] sm:$0xff]
        %v1467 = vld [vmem:[%s482 + $0x61] sm:$0xff]
        %v1468 = vld [vmem:[%s482 + $0x69] sm:$0xff]
        %v1469 = vld [vmem:[%s482 + $0x71] sm:$0xff]
        %v1470 = vld [vmem:[%s482 + $0x79] sm:$0xff]
        %v1471 = vld [vmem:[%s482 + $0x81] sm:$0xff]
        %v1472 = vld [vmem:[%s482 + $0x89] sm:$0xff]
        %v1473 = vld [vmem:[%s482 + $0x91] sm:$0xff]
        %v1474 = vld [vmem:[%s482 + $0x99] sm:$0xff]
        %v1475 = vld [vmem:[%s482 + $0xa1] sm:$0xff]
        %v1476 = vld [vmem:[%s482 + $0xa9] sm:$0xff]
        %v1477 = vld [vmem:[%s482 + $0xb1] sm:$0xff]
        %v1478 = vld [vmem:[%s482 + $0xb9] sm:$0xff]
        %v1479 = vld [vmem:[%s482 + $0xc1] sm:$0xff]
        %v1480 = vld [vmem:[%s482 + $0xc9] sm:$0xff]
        %v1481 = vld [vmem:[%s482 + $0xd1] sm:$0xff]
        %v1482 = vld [vmem:[%s482 + $0xd9] sm:$0xff]
        %v1483 = vld [vmem:[%s482 + $0xe1] sm:$0xff]
        %v1484 = vld [vmem:[%s482 + $0xe9] sm:$0xff]
        %v1485 = vld [vmem:[%s482 + $0xf1] sm:$0xff]
        %v1486 = vld [vmem:[%s482 + $0xf9] sm:$0xff]
        %v1487 = vld [vmem:[%s482 + $0x101] sm:$0xff]
        %v1488 = vsel %vm947, 1, 0
        %v1489 = vsel %vm948, 1, 0
        %v1490 = vsel %vm949, 1, 0
        %v1491 = vsel %vm950, 1, 0
        %v1492 = vsel %vm951, 1, 0
        %v1493 = vsel %vm952, 1, 0
        %v1494 = vsel %vm953, 1, 0
        %v1495 = vsel %vm954, 1, 0
        %v1496 = vsel %vm955, 1, 0
        %v1497 = vsel %vm956, 1, 0
        %v1498 = vsel %vm957, 1, 0
        %v1499 = vsel %vm958, 1, 0
        %v1500 = vsel %vm959, 1, 0
        %v1501 = vsel %vm960, 1, 0
        %v1502 = vsel %vm961, 1, 0
        %v1503 = vsel %vm962, 1, 0
        %v1504 = vsel %vm963, 1, 0
        %v1505 = vsel %vm964, 1, 0
        %v1506 = vsel %vm965, 1, 0
        %v1507 = vsel %vm966, 1, 0
        %v1508 = vsel %vm967, 1, 0
        %v1509 = vsel %vm968, 1, 0
        %v1510 = vsel %vm969, 1, 0
        %v1511 = vsel %vm970, 1, 0
        %v1512 = vsel %vm971, 1, 0
        %v1513 = vsel %vm972, 1, 0
        %v1514 = vsel %vm973, 1, 0
        %v1515 = vsel %vm974, 1, 0
        %v1516 = vsel %vm975, 1, 0
        %v1517 = vsel %vm976, 1, 0
        %v1518 = vsel %vm977, 1, 0
        %v1519 = vsel %vm978, 1, 0
        %vm1520 = vcmp.eq.s32.totalorder %v1488, 1
        %vm1521 = vcmp.eq.s32.totalorder %v1489, 1
        %vm1522 = vcmp.eq.s32.totalorder %v1490, 1
        %vm1523 = vcmp.eq.s32.totalorder %v1491, 1
        %vm1524 = vcmp.eq.s32.totalorder %v1492, 1
        %vm1525 = vcmp.eq.s32.totalorder %v1493, 1
        %vm1526 = vcmp.eq.s32.totalorder %v1494, 1
        %vm1527 = vcmp.eq.s32.totalorder %v1495, 1
        %vm1528 = vcmp.eq.s32.totalorder %v1496, 1
        %vm1529 = vcmp.eq.s32.totalorder %v1497, 1
        %vm1530 = vcmp.eq.s32.totalorder %v1498, 1
        %vm1531 = vcmp.eq.s32.totalorder %v1499, 1
        %vm1532 = vcmp.eq.s32.totalorder %v1500, 1
        %vm1533 = vcmp.eq.s32.totalorder %v1501, 1
        %vm1534 = vcmp.eq.s32.totalorder %v1502, 1
        %vm1535 = vcmp.eq.s32.totalorder %v1503, 1
        %vm1536 = vcmp.eq.s32.totalorder %v1504, 1
        %vm1537 = vcmp.eq.s32.totalorder %v1505, 1
        %vm1538 = vcmp.eq.s32.totalorder %v1506, 1
        %vm1539 = vcmp.eq.s32.totalorder %v1507, 1
        %vm1540 = vcmp.eq.s32.totalorder %v1508, 1
        %vm1541 = vcmp.eq.s32.totalorder %v1509, 1
        %vm1542 = vcmp.eq.s32.totalorder %v1510, 1
        %vm1543 = vcmp.eq.s32.totalorder %v1511, 1
        %vm1544 = vcmp.eq.s32.totalorder %v1512, 1
        %vm1545 = vcmp.eq.s32.totalorder %v1513, 1
        %vm1546 = vcmp.eq.s32.totalorder %v1514, 1
        %vm1547 = vcmp.eq.s32.totalorder %v1515, 1
        %vm1548 = vcmp.eq.s32.totalorder %v1516, 1
        %vm1549 = vcmp.eq.s32.totalorder %v1517, 1
        %vm1550 = vcmp.eq.s32.totalorder %v1518, 1
        %vm1551 = vcmp.eq.s32.totalorder %v1519, 1
        %v1552 = vsel %vm1520, %v1456, 0.0
        %v1553 = vsel %vm1521, %v1457, 0.0
        %v1554 = vsel %vm1522, %v1458, 0.0
        %v1555 = vsel %vm1523, %v1459, 0.0
        %v1556 = vsel %vm1524, %v1460, 0.0
        %v1557 = vsel %vm1525, %v1461, 0.0
        %v1558 = vsel %vm1526, %v1462, 0.0
        %v1559 = vsel %vm1527, %v1463, 0.0
        %v1560 = vsel %vm1528, %v1464, 0.0
        %v1561 = vsel %vm1529, %v1465, 0.0
        %v1562 = vsel %vm1530, %v1466, 0.0
        %v1563 = vsel %vm1531, %v1467, 0.0
        %v1564 = vsel %vm1532, %v1468, 0.0
        %v1565 = vsel %vm1533, %v1469, 0.0
        %v1566 = vsel %vm1534, %v1470, 0.0
        %v1567 = vsel %vm1535, %v1471, 0.0
        %v1568 = vsel %vm1536, %v1472, 0.0
        %v1569 = vsel %vm1537, %v1473, 0.0
        %v1570 = vsel %vm1538, %v1474, 0.0
        %v1571 = vsel %vm1539, %v1475, 0.0
        %v1572 = vsel %vm1540, %v1476, 0.0
        %v1573 = vsel %vm1541, %v1477, 0.0
        %v1574 = vsel %vm1542, %v1478, 0.0
        %v1575 = vsel %vm1543, %v1479, 0.0
        %v1576 = vsel %vm1544, %v1480, 0.0
        %v1577 = vsel %vm1545, %v1481, 0.0
        %v1578 = vsel %vm1546, %v1482, 0.0
        %v1579 = vsel %vm1547, %v1483, 0.0
        %v1580 = vsel %vm1548, %v1484, 0.0
        %v1581 = vsel %vm1549, %v1485, 0.0
        %v1582 = vsel %vm1550, %v1486, 0.0
        %v1583 = vsel %vm1551, %v1487, 0.0
        %v1584 = vpack.c.bf16 %v1553, %v1552
        %v1585 = vpack.c.bf16 %v1555, %v1554
        %v1586 = vpack.c.bf16 %v1557, %v1556
        %v1587 = vpack.c.bf16 %v1559, %v1558
        %v1588 = vpack.c.bf16 %v1561, %v1560
        %v1589 = vpack.c.bf16 %v1563, %v1562
        %v1590 = vpack.c.bf16 %v1565, %v1564
        %v1591 = vpack.c.bf16 %v1567, %v1566
        %v1592 = vpack.c.bf16 %v1569, %v1568
        %v1593 = vpack.c.bf16 %v1571, %v1570
        %v1594 = vpack.c.bf16 %v1573, %v1572
        %v1595 = vpack.c.bf16 %v1575, %v1574
        %v1596 = vpack.c.bf16 %v1577, %v1576
        %v1597 = vpack.c.bf16 %v1579, %v1578
        %v1598 = vpack.c.bf16 %v1581, %v1580
        %v1599 = vpack.c.bf16 %v1583, %v1582
        %s1600 = scalar_lea.vmem %s1, 4
        %v1601 = vld [vmem:[%s1600] sm:$0x3]
        %v1603 = vsel %vm1174, %v1584, 0
        %v1606 = vsel %vm1174, %v1585, 0
        %v1609 = vsel %vm1174, %v1586, 0
        %v1612 = vsel %vm1174, %v1587, 0
        %v1615 = vsel %vm1174, %v1588, 0
        %v1618 = vsel %vm1174, %v1589, 0
        %v1621 = vsel %vm1174, %v1590, 0
        %v1624 = vsel %vm1174, %v1591, 0
        %v1627 = vsel %vm1174, %v1592, 0
        %v1630 = vsel %vm1174, %v1593, 0
        %v1633 = vsel %vm1174, %v1594, 0
        %v1636 = vsel %vm1174, %v1595, 0
        %v1639 = vsel %vm1174, %v1596, 0
        %v1642 = vsel %vm1174, %v1597, 0
        %v1645 = vsel %vm1174, %v1598, 0
        %v1648 = vsel %vm1174, %v1599, 0
        %v1651 = vsel %vm1223, %v1601, 0
        %1653 = vmatpush.bf16.msra.mxu0 0
        %1654 = vmatpush.bf16.msra.mxu0 0
        %1655 = vmatpush.bf16.msra.mxu0 0
        %1656 = vmatpush.bf16.msra.mxu0 0
        %1657 = vmatpush.bf16.msra.mxu0 0
        %1658 = vmatpush.bf16.msra.mxu0 0
        %1659 = vmatpush.bf16.msra.mxu0 0
        %1660 = vmatpush.bf16.msra.mxu0 %v1651
        %1661 = vmatmul.bf16.gmra.mxu0 %v1603
        %v1662 = vpop.f32.mrf.mxu0
        %v1663 = vadd.f32 0.0, %v1662
        %v1664 = vpop.f32.mrf.mxu0
        %v1665 = vadd.f32 0.0, %v1664
        %1666 = vmatmul.bf16.gmra.mxu0 %v1606
        %v1667 = vpop.f32.mrf.mxu0
        %v1668 = vadd.f32 0.0, %v1667
        %v1669 = vpop.f32.mrf.mxu0
        %v1670 = vadd.f32 0.0, %v1669
        %1671 = vmatmul.bf16.gmra.mxu0 %v1609
        %v1672 = vpop.f32.mrf.mxu0
        %v1673 = vadd.f32 0.0, %v1672
        %v1674 = vpop.f32.mrf.mxu0
        %v1675 = vadd.f32 0.0, %v1674
        %1676 = vmatmul.bf16.gmra.mxu0 %v1612
        %v1677 = vpop.f32.mrf.mxu0
        %v1678 = vadd.f32 0.0, %v1677
        %v1679 = vpop.f32.mrf.mxu0
        %v1680 = vadd.f32 0.0, %v1679
        %1681 = vmatmul.bf16.gmra.mxu0 %v1615
        %v1682 = vpop.f32.mrf.mxu0
        %v1683 = vadd.f32 0.0, %v1682
        %v1684 = vpop.f32.mrf.mxu0
        %v1685 = vadd.f32 0.0, %v1684
        %1686 = vmatmul.bf16.gmra.mxu0 %v1618
        %v1687 = vpop.f32.mrf.mxu0
        %v1688 = vadd.f32 0.0, %v1687
        %v1689 = vpop.f32.mrf.mxu0
        %v1690 = vadd.f32 0.0, %v1689
        %1691 = vmatmul.bf16.gmra.mxu0 %v1621
        %v1692 = vpop.f32.mrf.mxu0
        %v1693 = vadd.f32 0.0, %v1692
        %v1694 = vpop.f32.mrf.mxu0
        %v1695 = vadd.f32 0.0, %v1694
        %1696 = vmatmul.bf16.gmra.mxu0 %v1624
        %v1697 = vpop.f32.mrf.mxu0
        %v1698 = vadd.f32 0.0, %v1697
        %v1699 = vpop.f32.mrf.mxu0
        %v1700 = vadd.f32 0.0, %v1699
        %1701 = vmatmul.bf16.gmra.mxu0 %v1627
        %v1702 = vpop.f32.mrf.mxu0
        %v1703 = vadd.f32 0.0, %v1702
        %v1704 = vpop.f32.mrf.mxu0
        %v1705 = vadd.f32 0.0, %v1704
        %1706 = vmatmul.bf16.gmra.mxu0 %v1630
        %v1707 = vpop.f32.mrf.mxu0
        %v1708 = vadd.f32 0.0, %v1707
        %v1709 = vpop.f32.mrf.mxu0
        %v1710 = vadd.f32 0.0, %v1709
        %1711 = vmatmul.bf16.gmra.mxu0 %v1633
        %v1712 = vpop.f32.mrf.mxu0
        %v1713 = vadd.f32 0.0, %v1712
        %v1714 = vpop.f32.mrf.mxu0
        %v1715 = vadd.f32 0.0, %v1714
        %1716 = vmatmul.bf16.gmra.mxu0 %v1636
        %v1717 = vpop.f32.mrf.mxu0
        %v1718 = vadd.f32 0.0, %v1717
        %v1719 = vpop.f32.mrf.mxu0
        %v1720 = vadd.f32 0.0, %v1719
        %1721 = vmatmul.bf16.gmra.mxu0 %v1639
        %v1722 = vpop.f32.mrf.mxu0
        %v1723 = vadd.f32 0.0, %v1722
        %v1724 = vpop.f32.mrf.mxu0
        %v1725 = vadd.f32 0.0, %v1724
        %1726 = vmatmul.bf16.gmra.mxu0 %v1642
        %v1727 = vpop.f32.mrf.mxu0
        %v1728 = vadd.f32 0.0, %v1727
        %v1729 = vpop.f32.mrf.mxu0
        %v1730 = vadd.f32 0.0, %v1729
        %1731 = vmatmul.bf16.gmra.mxu0 %v1645
        %v1732 = vpop.f32.mrf.mxu0
        %v1733 = vadd.f32 0.0, %v1732
        %v1734 = vpop.f32.mrf.mxu0
        %v1735 = vadd.f32 0.0, %v1734
        %1736 = vmatmul.bf16.gmra.mxu0 %v1648
        %v1737 = vpop.f32.mrf.mxu0
        %v1738 = vadd.f32 0.0, %v1737
        %v1739 = vpop.f32.mrf.mxu0
        %v1740 = vadd.f32 0.0, %v1739
        %1741 = vdwg.mxu0
        %v1742 = vadd.f32 %v1377, %v1663
        %v1743 = vadd.f32 %v1379, %v1665
        %v1744 = vadd.f32 %v1382, %v1668
        %v1745 = vadd.f32 %v1384, %v1670
        %v1746 = vadd.f32 %v1387, %v1673
        %v1747 = vadd.f32 %v1389, %v1675
        %v1748 = vadd.f32 %v1392, %v1678
        %v1749 = vadd.f32 %v1394, %v1680
        %v1750 = vadd.f32 %v1397, %v1683
        %v1751 = vadd.f32 %v1399, %v1685
        %v1752 = vadd.f32 %v1402, %v1688
        %v1753 = vadd.f32 %v1404, %v1690
        %v1754 = vadd.f32 %v1407, %v1693
        %v1755 = vadd.f32 %v1409, %v1695
        %v1756 = vadd.f32 %v1412, %v1698
        %v1757 = vadd.f32 %v1414, %v1700
        %v1758 = vadd.f32 %v1417, %v1703
        %v1759 = vadd.f32 %v1419, %v1705
        %v1760 = vadd.f32 %v1422, %v1708
        %v1761 = vadd.f32 %v1424, %v1710
        %v1762 = vadd.f32 %v1427, %v1713
        %v1763 = vadd.f32 %v1429, %v1715
        %v1764 = vadd.f32 %v1432, %v1718
        %v1765 = vadd.f32 %v1434, %v1720
        %v1766 = vadd.f32 %v1437, %v1723
        %v1767 = vadd.f32 %v1439, %v1725
        %v1768 = vadd.f32 %v1442, %v1728
        %v1769 = vadd.f32 %v1444, %v1730
        %v1770 = vadd.f32 %v1447, %v1733
        %v1771 = vadd.f32 %v1449, %v1735
        %v1772 = vadd.f32 %v1452, %v1738
        %v1773 = vadd.f32 %v1454, %v1740
        %v1774 = vld [vmem:[%s482 + $0x17] sm:$0xff]
        %v1775 = vld [vmem:[%s482 + $0x1f] sm:$0xff]
        %v1776 = vld [vmem:[%s482 + $0x27] sm:$0xff]
        %v1777 = vld [vmem:[%s482 + $0x2f] sm:$0xff]
        %v1778 = vld [vmem:[%s482 + $0x37] sm:$0xff]
        %v1779 = vld [vmem:[%s482 + $0x3f] sm:$0xff]
        %v1780 = vld [vmem:[%s482 + $0x47] sm:$0xff]
        %v1781 = vld [vmem:[%s482 + $0x4f] sm:$0xff]
        %v1782 = vld [vmem:[%s482 + $0x57] sm:$0xff]
        %v1783 = vld [vmem:[%s482 + $0x5f] sm:$0xff]
        %v1784 = vld [vmem:[%s482 + $0x67] sm:$0xff]
        %v1785 = vld [vmem:[%s482 + $0x6f] sm:$0xff]
        %v1786 = vld [vmem:[%s482 + $0x77] sm:$0xff]
        %v1787 = vld [vmem:[%s482 + $0x7f] sm:$0xff]
        %v1788 = vld [vmem:[%s482 + $0x87] sm:$0xff]
        %v1789 = vld [vmem:[%s482 + $0x8f] sm:$0xff]
        %v1790 = vld [vmem:[%s482 + $0x97] sm:$0xff]
        %v1791 = vld [vmem:[%s482 + $0x9f] sm:$0xff]
        %v1792 = vld [vmem:[%s482 + $0xa7] sm:$0xff]
        %v1793 = vld [vmem:[%s482 + $0xaf] sm:$0xff]
        %v1794 = vld [vmem:[%s482 + $0xb7] sm:$0xff]
        %v1795 = vld [vmem:[%s482 + $0xbf] sm:$0xff]
        %v1796 = vld [vmem:[%s482 + $0xc7] sm:$0xff]
        %v1797 = vld [vmem:[%s482 + $0xcf] sm:$0xff]
        %v1798 = vld [vmem:[%s482 + $0xd7] sm:$0xff]
        %v1799 = vld [vmem:[%s482 + $0xdf] sm:$0xff]
        %v1800 = vld [vmem:[%s482 + $0xe7] sm:$0xff]
        %v1801 = vld [vmem:[%s482 + $0xef] sm:$0xff]
        %v1802 = vld [vmem:[%s482 + $0xf7] sm:$0xff]
        %v1803 = vld [vmem:[%s482 + $0xff] sm:$0xff]
        %v1804 = vld [vmem:[%s482 + $0x107] sm:$0xff]
        %v1805 = vld [vmem:[%s482 + $0x10f] sm:$0xff]
        %v1806 = vsel %vm1043, %v1774, 0.0
        %v1807 = vsel %vm1044, %v1775, 0.0
        %v1808 = vsel %vm1045, %v1776, 0.0
        %v1809 = vsel %vm1046, %v1777, 0.0
        %v1810 = vsel %vm1047, %v1778, 0.0
        %v1811 = vsel %vm1048, %v1779, 0.0
        %v1812 = vsel %vm1049, %v1780, 0.0
        %v1813 = vsel %vm1050, %v1781, 0.0
        %v1814 = vsel %vm1051, %v1782, 0.0
        %v1815 = vsel %vm1052, %v1783, 0.0
        %v1816 = vsel %vm1053, %v1784, 0.0
        %v1817 = vsel %vm1054, %v1785, 0.0
        %v1818 = vsel %vm1055, %v1786, 0.0
        %v1819 = vsel %vm1056, %v1787, 0.0
        %v1820 = vsel %vm1057, %v1788, 0.0
        %v1821 = vsel %vm1058, %v1789, 0.0
        %v1822 = vsel %vm1059, %v1790, 0.0
        %v1823 = vsel %vm1060, %v1791, 0.0
        %v1824 = vsel %vm1061, %v1792, 0.0
        %v1825 = vsel %vm1062, %v1793, 0.0
        %v1826 = vsel %vm1063, %v1794, 0.0
        %v1827 = vsel %vm1064, %v1795, 0.0
        %v1828 = vsel %vm1065, %v1796, 0.0
        %v1829 = vsel %vm1066, %v1797, 0.0
        %v1830 = vsel %vm1067, %v1798, 0.0
        %v1831 = vsel %vm1068, %v1799, 0.0
        %v1832 = vsel %vm1069, %v1800, 0.0
        %v1833 = vsel %vm1070, %v1801, 0.0
        %v1834 = vsel %vm1071, %v1802, 0.0
        %v1835 = vsel %vm1072, %v1803, 0.0
        %v1836 = vsel %vm1073, %v1804, 0.0
        %v1837 = vsel %vm1074, %v1805, 0.0
        %v1838 = vpack.c.bf16 %v1807, %v1806
        %v1839 = vpack.c.bf16 %v1809, %v1808
        %v1840 = vpack.c.bf16 %v1811, %v1810
        %v1841 = vpack.c.bf16 %v1813, %v1812
        %v1842 = vpack.c.bf16 %v1815, %v1814
        %v1843 = vpack.c.bf16 %v1817, %v1816
        %v1844 = vpack.c.bf16 %v1819, %v1818
        %v1845 = vpack.c.bf16 %v1821, %v1820
        %v1846 = vpack.c.bf16 %v1823, %v1822
        %v1847 = vpack.c.bf16 %v1825, %v1824
        %v1848 = vpack.c.bf16 %v1827, %v1826
        %v1849 = vpack.c.bf16 %v1829, %v1828
        %v1850 = vpack.c.bf16 %v1831, %v1830
        %v1851 = vpack.c.bf16 %v1833, %v1832
        %v1852 = vpack.c.bf16 %v1835, %v1834
        %v1853 = vpack.c.bf16 %v1837, %v1836
        %s1854 = scalar_lea.vmem %s1, 6
        %v1855 = vld [vmem:[%s1854] sm:$0x3]
        %v1857 = vsel %vm1174, %v1838, 0
        %v1860 = vsel %vm1174, %v1839, 0
        %v1863 = vsel %vm1174, %v1840, 0
        %v1866 = vsel %vm1174, %v1841, 0
        %v1869 = vsel %vm1174, %v1842, 0
        %v1872 = vsel %vm1174, %v1843, 0
        %v1875 = vsel %vm1174, %v1844, 0
        %v1878 = vsel %vm1174, %v1845, 0
        %v1881 = vsel %vm1174, %v1846, 0
        %v1884 = vsel %vm1174, %v1847, 0
        %v1887 = vsel %vm1174, %v1848, 0
        %v1890 = vsel %vm1174, %v1849, 0
        %v1893 = vsel %vm1174, %v1850, 0
        %v1896 = vsel %vm1174, %v1851, 0
        %v1899 = vsel %vm1174, %v1852, 0
        %v1902 = vsel %vm1174, %v1853, 0
        %v1905 = vsel %vm1223, %v1855, 0
        %1907 = vmatpush.bf16.msra.mxu0 0
        %1908 = vmatpush.bf16.msra.mxu0 0
        %1909 = vmatpush.bf16.msra.mxu0 0
        %1910 = vmatpush.bf16.msra.mxu0 0
        %1911 = vmatpush.bf16.msra.mxu0 0
        %1912 = vmatpush.bf16.msra.mxu0 0
        %1913 = vmatpush.bf16.msra.mxu0 0
        %1914 = vmatpush.bf16.msra.mxu0 %v1905
        %1915 = vmatmul.bf16.gmra.mxu0 %v1857
        %v1916 = vpop.f32.mrf.mxu0
        %v1917 = vadd.f32 0.0, %v1916
        %v1918 = vpop.f32.mrf.mxu0
        %v1919 = vadd.f32 0.0, %v1918
        %1920 = vmatmul.bf16.gmra.mxu0 %v1860
        %v1921 = vpop.f32.mrf.mxu0
        %v1922 = vadd.f32 0.0, %v1921
        %v1923 = vpop.f32.mrf.mxu0
        %v1924 = vadd.f32 0.0, %v1923
        %1925 = vmatmul.bf16.gmra.mxu0 %v1863
        %v1926 = vpop.f32.mrf.mxu0
        %v1927 = vadd.f32 0.0, %v1926
        %v1928 = vpop.f32.mrf.mxu0
        %v1929 = vadd.f32 0.0, %v1928
        %1930 = vmatmul.bf16.gmra.mxu0 %v1866
        %v1931 = vpop.f32.mrf.mxu0
        %v1932 = vadd.f32 0.0, %v1931
        %v1933 = vpop.f32.mrf.mxu0
        %v1934 = vadd.f32 0.0, %v1933
        %1935 = vmatmul.bf16.gmra.mxu0 %v1869
        %v1936 = vpop.f32.mrf.mxu0
        %v1937 = vadd.f32 0.0, %v1936
        %v1938 = vpop.f32.mrf.mxu0
        %v1939 = vadd.f32 0.0, %v1938
        %1940 = vmatmul.bf16.gmra.mxu0 %v1872
        %v1941 = vpop.f32.mrf.mxu0
        %v1942 = vadd.f32 0.0, %v1941
        %v1943 = vpop.f32.mrf.mxu0
        %v1944 = vadd.f32 0.0, %v1943
        %1945 = vmatmul.bf16.gmra.mxu0 %v1875
        %v1946 = vpop.f32.mrf.mxu0
        %v1947 = vadd.f32 0.0, %v1946
        %v1948 = vpop.f32.mrf.mxu0
        %v1949 = vadd.f32 0.0, %v1948
        %1950 = vmatmul.bf16.gmra.mxu0 %v1878
        %v1951 = vpop.f32.mrf.mxu0
        %v1952 = vadd.f32 0.0, %v1951
        %v1953 = vpop.f32.mrf.mxu0
        %v1954 = vadd.f32 0.0, %v1953
        %1955 = vmatmul.bf16.gmra.mxu0 %v1881
        %v1956 = vpop.f32.mrf.mxu0
        %v1957 = vadd.f32 0.0, %v1956
        %v1958 = vpop.f32.mrf.mxu0
        %v1959 = vadd.f32 0.0, %v1958
        %1960 = vmatmul.bf16.gmra.mxu0 %v1884
        %v1961 = vpop.f32.mrf.mxu0
        %v1962 = vadd.f32 0.0, %v1961
        %v1963 = vpop.f32.mrf.mxu0
        %v1964 = vadd.f32 0.0, %v1963
        %1965 = vmatmul.bf16.gmra.mxu0 %v1887
        %v1966 = vpop.f32.mrf.mxu0
        %v1967 = vadd.f32 0.0, %v1966
        %v1968 = vpop.f32.mrf.mxu0
        %v1969 = vadd.f32 0.0, %v1968
        %1970 = vmatmul.bf16.gmra.mxu0 %v1890
        %v1971 = vpop.f32.mrf.mxu0
        %v1972 = vadd.f32 0.0, %v1971
        %v1973 = vpop.f32.mrf.mxu0
        %v1974 = vadd.f32 0.0, %v1973
        %1975 = vmatmul.bf16.gmra.mxu0 %v1893
        %v1976 = vpop.f32.mrf.mxu0
        %v1977 = vadd.f32 0.0, %v1976
        %v1978 = vpop.f32.mrf.mxu0
        %v1979 = vadd.f32 0.0, %v1978
        %1980 = vmatmul.bf16.gmra.mxu0 %v1896
        %v1981 = vpop.f32.mrf.mxu0
        %v1982 = vadd.f32 0.0, %v1981
        %v1983 = vpop.f32.mrf.mxu0
        %v1984 = vadd.f32 0.0, %v1983
        %1985 = vmatmul.bf16.gmra.mxu0 %v1899
        %v1986 = vpop.f32.mrf.mxu0
        %v1987 = vadd.f32 0.0, %v1986
        %v1988 = vpop.f32.mrf.mxu0
        %v1989 = vadd.f32 0.0, %v1988
        %1990 = vmatmul.bf16.gmra.mxu0 %v1902
        %v1991 = vpop.f32.mrf.mxu0
        %v1992 = vadd.f32 0.0, %v1991
        %v1993 = vpop.f32.mrf.mxu0
        %v1994 = vadd.f32 0.0, %v1993
        %1995 = vdwg.mxu0
        %v1996 = vadd.f32 %v1742, %v1917
        %v1997 = vadd.f32 %v1743, %v1919
        %v1998 = vadd.f32 %v1744, %v1922
        %v1999 = vadd.f32 %v1745, %v1924
        %v2000 = vadd.f32 %v1746, %v1927
        %v2001 = vadd.f32 %v1747, %v1929
        %v2002 = vadd.f32 %v1748, %v1932
        %v2003 = vadd.f32 %v1749, %v1934
        %v2004 = vadd.f32 %v1750, %v1937
        %v2005 = vadd.f32 %v1751, %v1939
        %v2006 = vadd.f32 %v1752, %v1942
        %v2007 = vadd.f32 %v1753, %v1944
        %v2008 = vadd.f32 %v1754, %v1947
        %v2009 = vadd.f32 %v1755, %v1949
        %v2010 = vadd.f32 %v1756, %v1952
        %v2011 = vadd.f32 %v1757, %v1954
        %v2012 = vadd.f32 %v1758, %v1957
        %v2013 = vadd.f32 %v1759, %v1959
        %v2014 = vadd.f32 %v1760, %v1962
        %v2015 = vadd.f32 %v1761, %v1964
        %v2016 = vadd.f32 %v1762, %v1967
        %v2017 = vadd.f32 %v1763, %v1969
        %v2018 = vadd.f32 %v1764, %v1972
        %v2019 = vadd.f32 %v1765, %v1974
        %v2020 = vadd.f32 %v1766, %v1977
        %v2021 = vadd.f32 %v1767, %v1979
        %v2022 = vadd.f32 %v1768, %v1982
        %v2023 = vadd.f32 %v1769, %v1984
        %v2024 = vadd.f32 %v1770, %v1987
        %v2025 = vadd.f32 %v1771, %v1989
        %v2026 = vadd.f32 %v1772, %v1992
        %v2027 = vadd.f32 %v1773, %v1994
        %v2028 = vld [vmem:[%s482 + $0x18] sm:$0xff]
        %v2029 = vld [vmem:[%s482 + $0x20] sm:$0xff]
        %v2030 = vld [vmem:[%s482 + $0x28] sm:$0xff]
        %v2031 = vld [vmem:[%s482 + $0x30] sm:$0xff]
        %v2032 = vld [vmem:[%s482 + $0x38] sm:$0xff]
        %v2033 = vld [vmem:[%s482 + $0x40] sm:$0xff]
        %v2034 = vld [vmem:[%s482 + $0x48] sm:$0xff]
        %v2035 = vld [vmem:[%s482 + $0x50] sm:$0xff]
        %v2036 = vld [vmem:[%s482 + $0x58] sm:$0xff]
        %v2037 = vld [vmem:[%s482 + $0x60] sm:$0xff]
        %v2038 = vld [vmem:[%s482 + $0x68] sm:$0xff]
        %v2039 = vld [vmem:[%s482 + $0x70] sm:$0xff]
        %v2040 = vld [vmem:[%s482 + $0x78] sm:$0xff]
        %v2041 = vld [vmem:[%s482 + $0x80] sm:$0xff]
        %v2042 = vld [vmem:[%s482 + $0x88] sm:$0xff]
        %v2043 = vld [vmem:[%s482 + $0x90] sm:$0xff]
        %v2044 = vld [vmem:[%s482 + $0x98] sm:$0xff]
        %v2045 = vld [vmem:[%s482 + $0xa0] sm:$0xff]
        %v2046 = vld [vmem:[%s482 + $0xa8] sm:$0xff]
        %v2047 = vld [vmem:[%s482 + $0xb0] sm:$0xff]
        %v2048 = vld [vmem:[%s482 + $0xb8] sm:$0xff]
        %v2049 = vld [vmem:[%s482 + $0xc0] sm:$0xff]
        %v2050 = vld [vmem:[%s482 + $0xc8] sm:$0xff]
        %v2051 = vld [vmem:[%s482 + $0xd0] sm:$0xff]
        %v2052 = vld [vmem:[%s482 + $0xd8] sm:$0xff]
        %v2053 = vld [vmem:[%s482 + $0xe0] sm:$0xff]
        %v2054 = vld [vmem:[%s482 + $0xe8] sm:$0xff]
        %v2055 = vld [vmem:[%s482 + $0xf0] sm:$0xff]
        %v2056 = vld [vmem:[%s482 + $0xf8] sm:$0xff]
        %v2057 = vld [vmem:[%s482 + $0x100] sm:$0xff]
        %v2058 = vld [vmem:[%s482 + $0x108] sm:$0xff]
        %v2059 = vld [vmem:[%s482 + $0x110] sm:$0xff]
        %v2060 = vpack.c.bf16 %v2029, %v2028
        %v2061 = vpack.c.bf16 %v2031, %v2030
        %v2062 = vpack.c.bf16 %v2033, %v2032
        %v2063 = vpack.c.bf16 %v2035, %v2034
        %v2064 = vpack.c.bf16 %v2037, %v2036
        %v2065 = vpack.c.bf16 %v2039, %v2038
        %v2066 = vpack.c.bf16 %v2041, %v2040
        %v2067 = vpack.c.bf16 %v2043, %v2042
        %v2068 = vpack.c.bf16 %v2045, %v2044
        %v2069 = vpack.c.bf16 %v2047, %v2046
        %v2070 = vpack.c.bf16 %v2049, %v2048
        %v2071 = vpack.c.bf16 %v2051, %v2050
        %v2072 = vpack.c.bf16 %v2053, %v2052
        %v2073 = vpack.c.bf16 %v2055, %v2054
        %v2074 = vpack.c.bf16 %v2057, %v2056
        %v2075 = vpack.c.bf16 %v2059, %v2058
        %s2076 = scalar_lea.vmem %s1, 8
        %v2077 = vld [vmem:[%s2076] sm:$0x3]
        %v2079 = vsel %vm1174, %v2060, 0
        %v2082 = vsel %vm1174, %v2061, 0
        %v2085 = vsel %vm1174, %v2062, 0
        %v2088 = vsel %vm1174, %v2063, 0
        %v2091 = vsel %vm1174, %v2064, 0
        %v2094 = vsel %vm1174, %v2065, 0
        %v2097 = vsel %vm1174, %v2066, 0
        %v2100 = vsel %vm1174, %v2067, 0
        %v2103 = vsel %vm1174, %v2068, 0
        %v2106 = vsel %vm1174, %v2069, 0
        %v2109 = vsel %vm1174, %v2070, 0
        %v2112 = vsel %vm1174, %v2071, 0
        %v2115 = vsel %vm1174, %v2072, 0
        %v2118 = vsel %vm1174, %v2073, 0
        %v2121 = vsel %vm1174, %v2074, 0
        %v2124 = vsel %vm1174, %v2075, 0
        %v2127 = vsel %vm1223, %v2077, 0
        %2129 = vmatpush.bf16.msra.mxu0 0
        %2130 = vmatpush.bf16.msra.mxu0 0
        %2131 = vmatpush.bf16.msra.mxu0 0
        %2132 = vmatpush.bf16.msra.mxu0 0
        %2133 = vmatpush.bf16.msra.mxu0 0
        %2134 = vmatpush.bf16.msra.mxu0 0
        %2135 = vmatpush.bf16.msra.mxu0 0
        %2136 = vmatpush.bf16.msra.mxu0 %v2127
        %2137 = vmatmul.bf16.gmra.mxu0 %v2079
        %v2138 = vpop.f32.mrf.mxu0
        %v2139 = vadd.f32 0.0, %v2138
        %v2140 = vpop.f32.mrf.mxu0
        %v2141 = vadd.f32 0.0, %v2140
        %2142 = vmatmul.bf16.gmra.mxu0 %v2082
        %v2143 = vpop.f32.mrf.mxu0
        %v2144 = vadd.f32 0.0, %v2143
        %v2145 = vpop.f32.mrf.mxu0
        %v2146 = vadd.f32 0.0, %v2145
        %2147 = vmatmul.bf16.gmra.mxu0 %v2085
        %v2148 = vpop.f32.mrf.mxu0
        %v2149 = vadd.f32 0.0, %v2148
        %v2150 = vpop.f32.mrf.mxu0
        %v2151 = vadd.f32 0.0, %v2150
        %2152 = vmatmul.bf16.gmra.mxu0 %v2088
        %v2153 = vpop.f32.mrf.mxu0
        %v2154 = vadd.f32 0.0, %v2153
        %v2155 = vpop.f32.mrf.mxu0
        %v2156 = vadd.f32 0.0, %v2155
        %2157 = vmatmul.bf16.gmra.mxu0 %v2091
        %v2158 = vpop.f32.mrf.mxu0
        %v2159 = vadd.f32 0.0, %v2158
        %v2160 = vpop.f32.mrf.mxu0
        %v2161 = vadd.f32 0.0, %v2160
        %2162 = vmatmul.bf16.gmra.mxu0 %v2094
        %v2163 = vpop.f32.mrf.mxu0
        %v2164 = vadd.f32 0.0, %v2163
        %v2165 = vpop.f32.mrf.mxu0
        %v2166 = vadd.f32 0.0, %v2165
        %2167 = vmatmul.bf16.gmra.mxu0 %v2097
        %v2168 = vpop.f32.mrf.mxu0
        %v2169 = vadd.f32 0.0, %v2168
        %v2170 = vpop.f32.mrf.mxu0
        %v2171 = vadd.f32 0.0, %v2170
        %2172 = vmatmul.bf16.gmra.mxu0 %v2100
        %v2173 = vpop.f32.mrf.mxu0
        %v2174 = vadd.f32 0.0, %v2173
        %v2175 = vpop.f32.mrf.mxu0
        %v2176 = vadd.f32 0.0, %v2175
        %2177 = vmatmul.bf16.gmra.mxu0 %v2103
        %v2178 = vpop.f32.mrf.mxu0
        %v2179 = vadd.f32 0.0, %v2178
        %v2180 = vpop.f32.mrf.mxu0
        %v2181 = vadd.f32 0.0, %v2180
        %2182 = vmatmul.bf16.gmra.mxu0 %v2106
        %v2183 = vpop.f32.mrf.mxu0
        %v2184 = vadd.f32 0.0, %v2183
        %v2185 = vpop.f32.mrf.mxu0
        %v2186 = vadd.f32 0.0, %v2185
        %2187 = vmatmul.bf16.gmra.mxu0 %v2109
        %v2188 = vpop.f32.mrf.mxu0
        %v2189 = vadd.f32 0.0, %v2188
        %v2190 = vpop.f32.mrf.mxu0
        %v2191 = vadd.f32 0.0, %v2190
        %2192 = vmatmul.bf16.gmra.mxu0 %v2112
        %v2193 = vpop.f32.mrf.mxu0
        %v2194 = vadd.f32 0.0, %v2193
        %v2195 = vpop.f32.mrf.mxu0
        %v2196 = vadd.f32 0.0, %v2195
        %2197 = vmatmul.bf16.gmra.mxu0 %v2115
        %v2198 = vpop.f32.mrf.mxu0
        %v2199 = vadd.f32 0.0, %v2198
        %v2200 = vpop.f32.mrf.mxu0
        %v2201 = vadd.f32 0.0, %v2200
        %2202 = vmatmul.bf16.gmra.mxu0 %v2118
        %v2203 = vpop.f32.mrf.mxu0
        %v2204 = vadd.f32 0.0, %v2203
        %v2205 = vpop.f32.mrf.mxu0
        %v2206 = vadd.f32 0.0, %v2205
        %2207 = vmatmul.bf16.gmra.mxu0 %v2121
        %v2208 = vpop.f32.mrf.mxu0
        %v2209 = vadd.f32 0.0, %v2208
        %v2210 = vpop.f32.mrf.mxu0
        %v2211 = vadd.f32 0.0, %v2210
        %2212 = vmatmul.bf16.gmra.mxu0 %v2124
        %v2213 = vpop.f32.mrf.mxu0
        %v2214 = vadd.f32 0.0, %v2213
        %v2215 = vpop.f32.mrf.mxu0
        %v2216 = vadd.f32 0.0, %v2215
        %2217 = vdwg.mxu0
        %v2218 = vadd.f32 %v1996, %v2139
        %v2219 = vadd.f32 %v1997, %v2141
        %v2220 = vadd.f32 %v1998, %v2144
        %v2221 = vadd.f32 %v1999, %v2146
        %v2222 = vadd.f32 %v2000, %v2149
        %v2223 = vadd.f32 %v2001, %v2151
        %v2224 = vadd.f32 %v2002, %v2154
        %v2225 = vadd.f32 %v2003, %v2156
        %v2226 = vadd.f32 %v2004, %v2159
        %v2227 = vadd.f32 %v2005, %v2161
        %v2228 = vadd.f32 %v2006, %v2164
        %v2229 = vadd.f32 %v2007, %v2166
        %v2230 = vadd.f32 %v2008, %v2169
        %v2231 = vadd.f32 %v2009, %v2171
        %v2232 = vadd.f32 %v2010, %v2174
        %v2233 = vadd.f32 %v2011, %v2176
        %v2234 = vadd.f32 %v2012, %v2179
        %v2235 = vadd.f32 %v2013, %v2181
        %v2236 = vadd.f32 %v2014, %v2184
        %v2237 = vadd.f32 %v2015, %v2186
        %v2238 = vadd.f32 %v2016, %v2189
        %v2239 = vadd.f32 %v2017, %v2191
        %v2240 = vadd.f32 %v2018, %v2194
        %v2241 = vadd.f32 %v2019, %v2196
        %v2242 = vadd.f32 %v2020, %v2199
        %v2243 = vadd.f32 %v2021, %v2201
        %v2244 = vadd.f32 %v2022, %v2204
        %v2245 = vadd.f32 %v2023, %v2206
        %v2246 = vadd.f32 %v2024, %v2209
        %v2247 = vadd.f32 %v2025, %v2211
        %v2248 = vadd.f32 %v2026, %v2214
        %v2249 = vadd.f32 %v2027, %v2216
        %v2250 = vld [vmem:[%s482 + $0x19] sm:$0xff]
        %v2251 = vld [vmem:[%s482 + $0x21] sm:$0xff]
        %v2252 = vld [vmem:[%s482 + $0x29] sm:$0xff]
        %v2253 = vld [vmem:[%s482 + $0x31] sm:$0xff]
        %v2254 = vld [vmem:[%s482 + $0x39] sm:$0xff]
        %v2255 = vld [vmem:[%s482 + $0x41] sm:$0xff]
        %v2256 = vld [vmem:[%s482 + $0x49] sm:$0xff]
        %v2257 = vld [vmem:[%s482 + $0x51] sm:$0xff]
        %v2258 = vld [vmem:[%s482 + $0x59] sm:$0xff]
        %v2259 = vld [vmem:[%s482 + $0x61] sm:$0xff]
        %v2260 = vld [vmem:[%s482 + $0x69] sm:$0xff]
        %v2261 = vld [vmem:[%s482 + $0x71] sm:$0xff]
        %v2262 = vld [vmem:[%s482 + $0x79] sm:$0xff]
        %v2263 = vld [vmem:[%s482 + $0x81] sm:$0xff]
        %v2264 = vld [vmem:[%s482 + $0x89] sm:$0xff]
        %v2265 = vld [vmem:[%s482 + $0x91] sm:$0xff]
        %v2266 = vld [vmem:[%s482 + $0x99] sm:$0xff]
        %v2267 = vld [vmem:[%s482 + $0xa1] sm:$0xff]
        %v2268 = vld [vmem:[%s482 + $0xa9] sm:$0xff]
        %v2269 = vld [vmem:[%s482 + $0xb1] sm:$0xff]
        %v2270 = vld [vmem:[%s482 + $0xb9] sm:$0xff]
        %v2271 = vld [vmem:[%s482 + $0xc1] sm:$0xff]
        %v2272 = vld [vmem:[%s482 + $0xc9] sm:$0xff]
        %v2273 = vld [vmem:[%s482 + $0xd1] sm:$0xff]
        %v2274 = vld [vmem:[%s482 + $0xd9] sm:$0xff]
        %v2275 = vld [vmem:[%s482 + $0xe1] sm:$0xff]
        %v2276 = vld [vmem:[%s482 + $0xe9] sm:$0xff]
        %v2277 = vld [vmem:[%s482 + $0xf1] sm:$0xff]
        %v2278 = vld [vmem:[%s482 + $0xf9] sm:$0xff]
        %v2279 = vld [vmem:[%s482 + $0x101] sm:$0xff]
        %v2280 = vld [vmem:[%s482 + $0x109] sm:$0xff]
        %v2281 = vld [vmem:[%s482 + $0x111] sm:$0xff]
        %v2282 = vsel %vm1520, %v2250, 0.0
        %v2283 = vsel %vm1521, %v2251, 0.0
        %v2284 = vsel %vm1522, %v2252, 0.0
        %v2285 = vsel %vm1523, %v2253, 0.0
        %v2286 = vsel %vm1524, %v2254, 0.0
        %v2287 = vsel %vm1525, %v2255, 0.0
        %v2288 = vsel %vm1526, %v2256, 0.0
        %v2289 = vsel %vm1527, %v2257, 0.0
        %v2290 = vsel %vm1528, %v2258, 0.0
        %v2291 = vsel %vm1529, %v2259, 0.0
        %v2292 = vsel %vm1530, %v2260, 0.0
        %v2293 = vsel %vm1531, %v2261, 0.0
        %v2294 = vsel %vm1532, %v2262, 0.0
        %v2295 = vsel %vm1533, %v2263, 0.0
        %v2296 = vsel %vm1534, %v2264, 0.0
        %v2297 = vsel %vm1535, %v2265, 0.0
        %v2298 = vsel %vm1536, %v2266, 0.0
        %v2299 = vsel %vm1537, %v2267, 0.0
        %v2300 = vsel %vm1538, %v2268, 0.0
        %v2301 = vsel %vm1539, %v2269, 0.0
        %v2302 = vsel %vm1540, %v2270, 0.0
        %v2303 = vsel %vm1541, %v2271, 0.0
        %v2304 = vsel %vm1542, %v2272, 0.0
        %v2305 = vsel %vm1543, %v2273, 0.0
        %v2306 = vsel %vm1544, %v2274, 0.0
        %v2307 = vsel %vm1545, %v2275, 0.0
        %v2308 = vsel %vm1546, %v2276, 0.0
        %v2309 = vsel %vm1547, %v2277, 0.0
        %v2310 = vsel %vm1548, %v2278, 0.0
        %v2311 = vsel %vm1549, %v2279, 0.0
        %v2312 = vsel %vm1550, %v2280, 0.0
        %v2313 = vsel %vm1551, %v2281, 0.0
        %v2314 = vpack.c.bf16 %v2283, %v2282
        %v2315 = vpack.c.bf16 %v2285, %v2284
        %v2316 = vpack.c.bf16 %v2287, %v2286
        %v2317 = vpack.c.bf16 %v2289, %v2288
        %v2318 = vpack.c.bf16 %v2291, %v2290
        %v2319 = vpack.c.bf16 %v2293, %v2292
        %v2320 = vpack.c.bf16 %v2295, %v2294
        %v2321 = vpack.c.bf16 %v2297, %v2296
        %v2322 = vpack.c.bf16 %v2299, %v2298
        %v2323 = vpack.c.bf16 %v2301, %v2300
        %v2324 = vpack.c.bf16 %v2303, %v2302
        %v2325 = vpack.c.bf16 %v2305, %v2304
        %v2326 = vpack.c.bf16 %v2307, %v2306
        %v2327 = vpack.c.bf16 %v2309, %v2308
        %v2328 = vpack.c.bf16 %v2311, %v2310
        %v2329 = vpack.c.bf16 %v2313, %v2312
        %s2330 = scalar_lea.vmem %s1, 10
        %v2331 = vld [vmem:[%s2330] sm:$0x3]
        %v2333 = vsel %vm1174, %v2314, 0
        %v2336 = vsel %vm1174, %v2315, 0
        %v2339 = vsel %vm1174, %v2316, 0
        %v2342 = vsel %vm1174, %v2317, 0
        %v2345 = vsel %vm1174, %v2318, 0
        %v2348 = vsel %vm1174, %v2319, 0
        %v2351 = vsel %vm1174, %v2320, 0
        %v2354 = vsel %vm1174, %v2321, 0
        %v2357 = vsel %vm1174, %v2322, 0
        %v2360 = vsel %vm1174, %v2323, 0
        %v2363 = vsel %vm1174, %v2324, 0
        %v2366 = vsel %vm1174, %v2325, 0
        %v2369 = vsel %vm1174, %v2326, 0
        %v2372 = vsel %vm1174, %v2327, 0
        %v2375 = vsel %vm1174, %v2328, 0
        %v2378 = vsel %vm1174, %v2329, 0
        %v2381 = vsel %vm1223, %v2331, 0
        %2383 = vmatpush.bf16.msra.mxu0 0
        %2384 = vmatpush.bf16.msra.mxu0 0
        %2385 = vmatpush.bf16.msra.mxu0 0
        %2386 = vmatpush.bf16.msra.mxu0 0
        %2387 = vmatpush.bf16.msra.mxu0 0
        %2388 = vmatpush.bf16.msra.mxu0 0
        %2389 = vmatpush.bf16.msra.mxu0 0
        %2390 = vmatpush.bf16.msra.mxu0 %v2381
        %2391 = vmatmul.bf16.gmra.mxu0 %v2333
        %v2392 = vpop.f32.mrf.mxu0
        %v2393 = vadd.f32 0.0, %v2392
        %v2394 = vpop.f32.mrf.mxu0
        %v2395 = vadd.f32 0.0, %v2394
        %2396 = vmatmul.bf16.gmra.mxu0 %v2336
        %v2397 = vpop.f32.mrf.mxu0
        %v2398 = vadd.f32 0.0, %v2397
        %v2399 = vpop.f32.mrf.mxu0
        %v2400 = vadd.f32 0.0, %v2399
        %2401 = vmatmul.bf16.gmra.mxu0 %v2339
        %v2402 = vpop.f32.mrf.mxu0
        %v2403 = vadd.f32 0.0, %v2402
        %v2404 = vpop.f32.mrf.mxu0
        %v2405 = vadd.f32 0.0, %v2404
        %2406 = vmatmul.bf16.gmra.mxu0 %v2342
        %v2407 = vpop.f32.mrf.mxu0
        %v2408 = vadd.f32 0.0, %v2407
        %v2409 = vpop.f32.mrf.mxu0
        %v2410 = vadd.f32 0.0, %v2409
        %2411 = vmatmul.bf16.gmra.mxu0 %v2345
        %v2412 = vpop.f32.mrf.mxu0
        %v2413 = vadd.f32 0.0, %v2412
        %v2414 = vpop.f32.mrf.mxu0
        %v2415 = vadd.f32 0.0, %v2414
        %2416 = vmatmul.bf16.gmra.mxu0 %v2348
        %v2417 = vpop.f32.mrf.mxu0
        %v2418 = vadd.f32 0.0, %v2417
        %v2419 = vpop.f32.mrf.mxu0
        %v2420 = vadd.f32 0.0, %v2419
        %2421 = vmatmul.bf16.gmra.mxu0 %v2351
        %v2422 = vpop.f32.mrf.mxu0
        %v2423 = vadd.f32 0.0, %v2422
        %v2424 = vpop.f32.mrf.mxu0
        %v2425 = vadd.f32 0.0, %v2424
        %2426 = vmatmul.bf16.gmra.mxu0 %v2354
        %v2427 = vpop.f32.mrf.mxu0
        %v2428 = vadd.f32 0.0, %v2427
        %v2429 = vpop.f32.mrf.mxu0
        %v2430 = vadd.f32 0.0, %v2429
        %2431 = vmatmul.bf16.gmra.mxu0 %v2357
        %v2432 = vpop.f32.mrf.mxu0
        %v2433 = vadd.f32 0.0, %v2432
        %v2434 = vpop.f32.mrf.mxu0
        %v2435 = vadd.f32 0.0, %v2434
        %2436 = vmatmul.bf16.gmra.mxu0 %v2360
        %v2437 = vpop.f32.mrf.mxu0
        %v2438 = vadd.f32 0.0, %v2437
        %v2439 = vpop.f32.mrf.mxu0
        %v2440 = vadd.f32 0.0, %v2439
        %2441 = vmatmul.bf16.gmra.mxu0 %v2363
        %v2442 = vpop.f32.mrf.mxu0
        %v2443 = vadd.f32 0.0, %v2442
        %v2444 = vpop.f32.mrf.mxu0
        %v2445 = vadd.f32 0.0, %v2444
        %2446 = vmatmul.bf16.gmra.mxu0 %v2366
        %v2447 = vpop.f32.mrf.mxu0
        %v2448 = vadd.f32 0.0, %v2447
        %v2449 = vpop.f32.mrf.mxu0
        %v2450 = vadd.f32 0.0, %v2449
        %2451 = vmatmul.bf16.gmra.mxu0 %v2369
        %v2452 = vpop.f32.mrf.mxu0
        %v2453 = vadd.f32 0.0, %v2452
        %v2454 = vpop.f32.mrf.mxu0
        %v2455 = vadd.f32 0.0, %v2454
        %2456 = vmatmul.bf16.gmra.mxu0 %v2372
        %v2457 = vpop.f32.mrf.mxu0
        %v2458 = vadd.f32 0.0, %v2457
        %v2459 = vpop.f32.mrf.mxu0
        %v2460 = vadd.f32 0.0, %v2459
        %2461 = vmatmul.bf16.gmra.mxu0 %v2375
        %v2462 = vpop.f32.mrf.mxu0
        %v2463 = vadd.f32 0.0, %v2462
        %v2464 = vpop.f32.mrf.mxu0
        %v2465 = vadd.f32 0.0, %v2464
        %2466 = vmatmul.bf16.gmra.mxu0 %v2378
        %v2467 = vpop.f32.mrf.mxu0
        %v2468 = vadd.f32 0.0, %v2467
        %v2469 = vpop.f32.mrf.mxu0
        %v2470 = vadd.f32 0.0, %v2469
        %2471 = vdwg.mxu0
        %v2472 = vadd.f32 %v2218, %v2393
        %v2473 = vadd.f32 %v2219, %v2395
        %v2474 = vadd.f32 %v2220, %v2398
        %v2475 = vadd.f32 %v2221, %v2400
        %v2476 = vadd.f32 %v2222, %v2403
        %v2477 = vadd.f32 %v2223, %v2405
        %v2478 = vadd.f32 %v2224, %v2408
        %v2479 = vadd.f32 %v2225, %v2410
        %v2480 = vadd.f32 %v2226, %v2413
        %v2481 = vadd.f32 %v2227, %v2415
        %v2482 = vadd.f32 %v2228, %v2418
        %v2483 = vadd.f32 %v2229, %v2420
        %v2484 = vadd.f32 %v2230, %v2423
        %v2485 = vadd.f32 %v2231, %v2425
        %v2486 = vadd.f32 %v2232, %v2428
        %v2487 = vadd.f32 %v2233, %v2430
        %v2488 = vadd.f32 %v2234, %v2433
        %v2489 = vadd.f32 %v2235, %v2435
        %v2490 = vadd.f32 %v2236, %v2438
        %v2491 = vadd.f32 %v2237, %v2440
        %v2492 = vadd.f32 %v2238, %v2443
        %v2493 = vadd.f32 %v2239, %v2445
        %v2494 = vadd.f32 %v2240, %v2448
        %v2495 = vadd.f32 %v2241, %v2450
        %v2496 = vadd.f32 %v2242, %v2453
        %v2497 = vadd.f32 %v2243, %v2455
        %v2498 = vadd.f32 %v2244, %v2458
        %v2499 = vadd.f32 %v2245, %v2460
        %v2500 = vadd.f32 %v2246, %v2463
        %v2501 = vadd.f32 %v2247, %v2465
        %v2502 = vadd.f32 %v2248, %v2468
        %v2503 = vadd.f32 %v2249, %v2470
        %v2504 = vld [vmem:[%s482 + $0x27] sm:$0xff]
        %v2505 = vld [vmem:[%s482 + $0x2f] sm:$0xff]
        %v2506 = vld [vmem:[%s482 + $0x37] sm:$0xff]
        %v2507 = vld [vmem:[%s482 + $0x3f] sm:$0xff]
        %v2508 = vld [vmem:[%s482 + $0x47] sm:$0xff]
        %v2509 = vld [vmem:[%s482 + $0x4f] sm:$0xff]
        %v2510 = vld [vmem:[%s482 + $0x57] sm:$0xff]
        %v2511 = vld [vmem:[%s482 + $0x5f] sm:$0xff]
        %v2512 = vld [vmem:[%s482 + $0x67] sm:$0xff]
        %v2513 = vld [vmem:[%s482 + $0x6f] sm:$0xff]
        %v2514 = vld [vmem:[%s482 + $0x77] sm:$0xff]
        %v2515 = vld [vmem:[%s482 + $0x7f] sm:$0xff]
        %v2516 = vld [vmem:[%s482 + $0x87] sm:$0xff]
        %v2517 = vld [vmem:[%s482 + $0x8f] sm:$0xff]
        %v2518 = vld [vmem:[%s482 + $0x97] sm:$0xff]
        %v2519 = vld [vmem:[%s482 + $0x9f] sm:$0xff]
        %v2520 = vld [vmem:[%s482 + $0xa7] sm:$0xff]
        %v2521 = vld [vmem:[%s482 + $0xaf] sm:$0xff]
        %v2522 = vld [vmem:[%s482 + $0xb7] sm:$0xff]
        %v2523 = vld [vmem:[%s482 + $0xbf] sm:$0xff]
        %v2524 = vld [vmem:[%s482 + $0xc7] sm:$0xff]
        %v2525 = vld [vmem:[%s482 + $0xcf] sm:$0xff]
        %v2526 = vld [vmem:[%s482 + $0xd7] sm:$0xff]
        %v2527 = vld [vmem:[%s482 + $0xdf] sm:$0xff]
        %v2528 = vld [vmem:[%s482 + $0xe7] sm:$0xff]
        %v2529 = vld [vmem:[%s482 + $0xef] sm:$0xff]
        %v2530 = vld [vmem:[%s482 + $0xf7] sm:$0xff]
        %v2531 = vld [vmem:[%s482 + $0xff] sm:$0xff]
        %v2532 = vld [vmem:[%s482 + $0x107] sm:$0xff]
        %v2533 = vld [vmem:[%s482 + $0x10f] sm:$0xff]
        %v2534 = vld [vmem:[%s482 + $0x117] sm:$0xff]
        %v2535 = vld [vmem:[%s482 + $0x11f] sm:$0xff]
        %v2536 = vsel %vm1043, %v2504, 0.0
        %v2537 = vsel %vm1044, %v2505, 0.0
        %v2538 = vsel %vm1045, %v2506, 0.0
        %v2539 = vsel %vm1046, %v2507, 0.0
        %v2540 = vsel %vm1047, %v2508, 0.0
        %v2541 = vsel %vm1048, %v2509, 0.0
        %v2542 = vsel %vm1049, %v2510, 0.0
        %v2543 = vsel %vm1050, %v2511, 0.0
        %v2544 = vsel %vm1051, %v2512, 0.0
        %v2545 = vsel %vm1052, %v2513, 0.0
        %v2546 = vsel %vm1053, %v2514, 0.0
        %v2547 = vsel %vm1054, %v2515, 0.0
        %v2548 = vsel %vm1055, %v2516, 0.0
        %v2549 = vsel %vm1056, %v2517, 0.0
        %v2550 = vsel %vm1057, %v2518, 0.0
        %v2551 = vsel %vm1058, %v2519, 0.0
        %v2552 = vsel %vm1059, %v2520, 0.0
        %v2553 = vsel %vm1060, %v2521, 0.0
        %v2554 = vsel %vm1061, %v2522, 0.0
        %v2555 = vsel %vm1062, %v2523, 0.0
        %v2556 = vsel %vm1063, %v2524, 0.0
        %v2557 = vsel %vm1064, %v2525, 0.0
        %v2558 = vsel %vm1065, %v2526, 0.0
        %v2559 = vsel %vm1066, %v2527, 0.0
        %v2560 = vsel %vm1067, %v2528, 0.0
        %v2561 = vsel %vm1068, %v2529, 0.0
        %v2562 = vsel %vm1069, %v2530, 0.0
        %v2563 = vsel %vm1070, %v2531, 0.0
        %v2564 = vsel %vm1071, %v2532, 0.0
        %v2565 = vsel %vm1072, %v2533, 0.0
        %v2566 = vsel %vm1073, %v2534, 0.0
        %v2567 = vsel %vm1074, %v2535, 0.0
        %v2568 = vpack.c.bf16 %v2537, %v2536
        %v2569 = vpack.c.bf16 %v2539, %v2538
        %v2570 = vpack.c.bf16 %v2541, %v2540
        %v2571 = vpack.c.bf16 %v2543, %v2542
        %v2572 = vpack.c.bf16 %v2545, %v2544
        %v2573 = vpack.c.bf16 %v2547, %v2546
        %v2574 = vpack.c.bf16 %v2549, %v2548
        %v2575 = vpack.c.bf16 %v2551, %v2550
        %v2576 = vpack.c.bf16 %v2553, %v2552
        %v2577 = vpack.c.bf16 %v2555, %v2554
        %v2578 = vpack.c.bf16 %v2557, %v2556
        %v2579 = vpack.c.bf16 %v2559, %v2558
        %v2580 = vpack.c.bf16 %v2561, %v2560
        %v2581 = vpack.c.bf16 %v2563, %v2562
        %v2582 = vpack.c.bf16 %v2565, %v2564
        %v2583 = vpack.c.bf16 %v2567, %v2566
        %s2584 = scalar_lea.vmem %s1, 12
        %v2585 = vld [vmem:[%s2584] sm:$0x3]
        %v2587 = vsel %vm1174, %v2568, 0
        %v2590 = vsel %vm1174, %v2569, 0
        %v2593 = vsel %vm1174, %v2570, 0
        %v2596 = vsel %vm1174, %v2571, 0
        %v2599 = vsel %vm1174, %v2572, 0
        %v2602 = vsel %vm1174, %v2573, 0
        %v2605 = vsel %vm1174, %v2574, 0
        %v2608 = vsel %vm1174, %v2575, 0
        %v2611 = vsel %vm1174, %v2576, 0
        %v2614 = vsel %vm1174, %v2577, 0
        %v2617 = vsel %vm1174, %v2578, 0
        %v2620 = vsel %vm1174, %v2579, 0
        %v2623 = vsel %vm1174, %v2580, 0
        %v2626 = vsel %vm1174, %v2581, 0
        %v2629 = vsel %vm1174, %v2582, 0
        %v2632 = vsel %vm1174, %v2583, 0
        %v2635 = vsel %vm1223, %v2585, 0
        %2637 = vmatpush.bf16.msra.mxu0 0
        %2638 = vmatpush.bf16.msra.mxu0 0
        %2639 = vmatpush.bf16.msra.mxu0 0
        %2640 = vmatpush.bf16.msra.mxu0 0
        %2641 = vmatpush.bf16.msra.mxu0 0
        %2642 = vmatpush.bf16.msra.mxu0 0
        %2643 = vmatpush.bf16.msra.mxu0 0
        %2644 = vmatpush.bf16.msra.mxu0 %v2635
        %2645 = vmatmul.bf16.gmra.mxu0 %v2587
        %v2646 = vpop.f32.mrf.mxu0
        %v2647 = vadd.f32 0.0, %v2646
        %v2648 = vpop.f32.mrf.mxu0
        %v2649 = vadd.f32 0.0, %v2648
        %2650 = vmatmul.bf16.gmra.mxu0 %v2590
        %v2651 = vpop.f32.mrf.mxu0
        %v2652 = vadd.f32 0.0, %v2651
        %v2653 = vpop.f32.mrf.mxu0
        %v2654 = vadd.f32 0.0, %v2653
        %2655 = vmatmul.bf16.gmra.mxu0 %v2593
        %v2656 = vpop.f32.mrf.mxu0
        %v2657 = vadd.f32 0.0, %v2656
        %v2658 = vpop.f32.mrf.mxu0
        %v2659 = vadd.f32 0.0, %v2658
        %2660 = vmatmul.bf16.gmra.mxu0 %v2596
        %v2661 = vpop.f32.mrf.mxu0
        %v2662 = vadd.f32 0.0, %v2661
        %v2663 = vpop.f32.mrf.mxu0
        %v2664 = vadd.f32 0.0, %v2663
        %2665 = vmatmul.bf16.gmra.mxu0 %v2599
        %v2666 = vpop.f32.mrf.mxu0
        %v2667 = vadd.f32 0.0, %v2666
        %v2668 = vpop.f32.mrf.mxu0
        %v2669 = vadd.f32 0.0, %v2668
        %2670 = vmatmul.bf16.gmra.mxu0 %v2602
        %v2671 = vpop.f32.mrf.mxu0
        %v2672 = vadd.f32 0.0, %v2671
        %v2673 = vpop.f32.mrf.mxu0
        %v2674 = vadd.f32 0.0, %v2673
        %2675 = vmatmul.bf16.gmra.mxu0 %v2605
        %v2676 = vpop.f32.mrf.mxu0
        %v2677 = vadd.f32 0.0, %v2676
        %v2678 = vpop.f32.mrf.mxu0
        %v2679 = vadd.f32 0.0, %v2678
        %2680 = vmatmul.bf16.gmra.mxu0 %v2608
        %v2681 = vpop.f32.mrf.mxu0
        %v2682 = vadd.f32 0.0, %v2681
        %v2683 = vpop.f32.mrf.mxu0
        %v2684 = vadd.f32 0.0, %v2683
        %2685 = vmatmul.bf16.gmra.mxu0 %v2611
        %v2686 = vpop.f32.mrf.mxu0
        %v2687 = vadd.f32 0.0, %v2686
        %v2688 = vpop.f32.mrf.mxu0
        %v2689 = vadd.f32 0.0, %v2688
        %2690 = vmatmul.bf16.gmra.mxu0 %v2614
        %v2691 = vpop.f32.mrf.mxu0
        %v2692 = vadd.f32 0.0, %v2691
        %v2693 = vpop.f32.mrf.mxu0
        %v2694 = vadd.f32 0.0, %v2693
        %2695 = vmatmul.bf16.gmra.mxu0 %v2617
        %v2696 = vpop.f32.mrf.mxu0
        %v2697 = vadd.f32 0.0, %v2696
        %v2698 = vpop.f32.mrf.mxu0
        %v2699 = vadd.f32 0.0, %v2698
        %2700 = vmatmul.bf16.gmra.mxu0 %v2620
        %v2701 = vpop.f32.mrf.mxu0
        %v2702 = vadd.f32 0.0, %v2701
        %v2703 = vpop.f32.mrf.mxu0
        %v2704 = vadd.f32 0.0, %v2703
        %2705 = vmatmul.bf16.gmra.mxu0 %v2623
        %v2706 = vpop.f32.mrf.mxu0
        %v2707 = vadd.f32 0.0, %v2706
        %v2708 = vpop.f32.mrf.mxu0
        %v2709 = vadd.f32 0.0, %v2708
        %2710 = vmatmul.bf16.gmra.mxu0 %v2626
        %v2711 = vpop.f32.mrf.mxu0
        %v2712 = vadd.f32 0.0, %v2711
        %v2713 = vpop.f32.mrf.mxu0
        %v2714 = vadd.f32 0.0, %v2713
        %2715 = vmatmul.bf16.gmra.mxu0 %v2629
        %v2716 = vpop.f32.mrf.mxu0
        %v2717 = vadd.f32 0.0, %v2716
        %v2718 = vpop.f32.mrf.mxu0
        %v2719 = vadd.f32 0.0, %v2718
        %2720 = vmatmul.bf16.gmra.mxu0 %v2632
        %v2721 = vpop.f32.mrf.mxu0
        %v2722 = vadd.f32 0.0, %v2721
        %v2723 = vpop.f32.mrf.mxu0
        %v2724 = vadd.f32 0.0, %v2723
        %2725 = vdwg.mxu0
        %v2726 = vadd.f32 %v2472, %v2647
        %v2727 = vadd.f32 %v2473, %v2649
        %v2728 = vadd.f32 %v2474, %v2652
        %v2729 = vadd.f32 %v2475, %v2654
        %v2730 = vadd.f32 %v2476, %v2657
        %v2731 = vadd.f32 %v2477, %v2659
        %v2732 = vadd.f32 %v2478, %v2662
        %v2733 = vadd.f32 %v2479, %v2664
        %v2734 = vadd.f32 %v2480, %v2667
        %v2735 = vadd.f32 %v2481, %v2669
        %v2736 = vadd.f32 %v2482, %v2672
        %v2737 = vadd.f32 %v2483, %v2674
        %v2738 = vadd.f32 %v2484, %v2677
        %v2739 = vadd.f32 %v2485, %v2679
        %v2740 = vadd.f32 %v2486, %v2682
        %v2741 = vadd.f32 %v2487, %v2684
        %v2742 = vadd.f32 %v2488, %v2687
        %v2743 = vadd.f32 %v2489, %v2689
        %v2744 = vadd.f32 %v2490, %v2692
        %v2745 = vadd.f32 %v2491, %v2694
        %v2746 = vadd.f32 %v2492, %v2697
        %v2747 = vadd.f32 %v2493, %v2699
        %v2748 = vadd.f32 %v2494, %v2702
        %v2749 = vadd.f32 %v2495, %v2704
        %v2750 = vadd.f32 %v2496, %v2707
        %v2751 = vadd.f32 %v2497, %v2709
        %v2752 = vadd.f32 %v2498, %v2712
        %v2753 = vadd.f32 %v2499, %v2714
        %v2754 = vadd.f32 %v2500, %v2717
        %v2755 = vadd.f32 %v2501, %v2719
        %v2756 = vadd.f32 %v2502, %v2722
        %v2757 = vadd.f32 %v2503, %v2724
        %v2758 = vld [vmem:[%s482 + $0x28] sm:$0xff]
        %v2759 = vld [vmem:[%s482 + $0x30] sm:$0xff]
        %v2760 = vld [vmem:[%s482 + $0x38] sm:$0xff]
        %v2761 = vld [vmem:[%s482 + $0x40] sm:$0xff]
        %v2762 = vld [vmem:[%s482 + $0x48] sm:$0xff]
        %v2763 = vld [vmem:[%s482 + $0x50] sm:$0xff]
        %v2764 = vld [vmem:[%s482 + $0x58] sm:$0xff]
        %v2765 = vld [vmem:[%s482 + $0x60] sm:$0xff]
        %v2766 = vld [vmem:[%s482 + $0x68] sm:$0xff]
        %v2767 = vld [vmem:[%s482 + $0x70] sm:$0xff]
        %v2768 = vld [vmem:[%s482 + $0x78] sm:$0xff]
        %v2769 = vld [vmem:[%s482 + $0x80] sm:$0xff]
        %v2770 = vld [vmem:[%s482 + $0x88] sm:$0xff]
        %v2771 = vld [vmem:[%s482 + $0x90] sm:$0xff]
        %v2772 = vld [vmem:[%s482 + $0x98] sm:$0xff]
        %v2773 = vld [vmem:[%s482 + $0xa0] sm:$0xff]
        %v2774 = vld [vmem:[%s482 + $0xa8] sm:$0xff]
        %v2775 = vld [vmem:[%s482 + $0xb0] sm:$0xff]
        %v2776 = vld [vmem:[%s482 + $0xb8] sm:$0xff]
        %v2777 = vld [vmem:[%s482 + $0xc0] sm:$0xff]
        %v2778 = vld [vmem:[%s482 + $0xc8] sm:$0xff]
        %v2779 = vld [vmem:[%s482 + $0xd0] sm:$0xff]
        %v2780 = vld [vmem:[%s482 + $0xd8] sm:$0xff]
        %v2781 = vld [vmem:[%s482 + $0xe0] sm:$0xff]
        %v2782 = vld [vmem:[%s482 + $0xe8] sm:$0xff]
        %v2783 = vld [vmem:[%s482 + $0xf0] sm:$0xff]
        %v2784 = vld [vmem:[%s482 + $0xf8] sm:$0xff]
        %v2785 = vld [vmem:[%s482 + $0x100] sm:$0xff]
        %v2786 = vld [vmem:[%s482 + $0x108] sm:$0xff]
        %v2787 = vld [vmem:[%s482 + $0x110] sm:$0xff]
        %v2788 = vld [vmem:[%s482 + $0x118] sm:$0xff]
        %v2789 = vld [vmem:[%s482 + $0x120] sm:$0xff]
        %v2790 = vpack.c.bf16 %v2759, %v2758
        %v2791 = vpack.c.bf16 %v2761, %v2760
        %v2792 = vpack.c.bf16 %v2763, %v2762
        %v2793 = vpack.c.bf16 %v2765, %v2764
        %v2794 = vpack.c.bf16 %v2767, %v2766
        %v2795 = vpack.c.bf16 %v2769, %v2768
        %v2796 = vpack.c.bf16 %v2771, %v2770
        %v2797 = vpack.c.bf16 %v2773, %v2772
        %v2798 = vpack.c.bf16 %v2775, %v2774
        %v2799 = vpack.c.bf16 %v2777, %v2776
        %v2800 = vpack.c.bf16 %v2779, %v2778
        %v2801 = vpack.c.bf16 %v2781, %v2780
        %v2802 = vpack.c.bf16 %v2783, %v2782
        %v2803 = vpack.c.bf16 %v2785, %v2784
        %v2804 = vpack.c.bf16 %v2787, %v2786
        %v2805 = vpack.c.bf16 %v2789, %v2788
        %s2806 = scalar_lea.vmem %s1, 14
        %v2807 = vld [vmem:[%s2806] sm:$0x3]
        %v2809 = vsel %vm1174, %v2790, 0
        %v2812 = vsel %vm1174, %v2791, 0
        %v2815 = vsel %vm1174, %v2792, 0
        %v2818 = vsel %vm1174, %v2793, 0
        %v2821 = vsel %vm1174, %v2794, 0
        %v2824 = vsel %vm1174, %v2795, 0
        %v2827 = vsel %vm1174, %v2796, 0
        %v2830 = vsel %vm1174, %v2797, 0
        %v2833 = vsel %vm1174, %v2798, 0
        %v2836 = vsel %vm1174, %v2799, 0
        %v2839 = vsel %vm1174, %v2800, 0
        %v2842 = vsel %vm1174, %v2801, 0
        %v2845 = vsel %vm1174, %v2802, 0
        %v2848 = vsel %vm1174, %v2803, 0
        %v2851 = vsel %vm1174, %v2804, 0
        %v2854 = vsel %vm1174, %v2805, 0
        %v2857 = vsel %vm1223, %v2807, 0
        %2859 = vmatpush.bf16.msra.mxu0 0
        %2860 = vmatpush.bf16.msra.mxu0 0
        %2861 = vmatpush.bf16.msra.mxu0 0
        %2862 = vmatpush.bf16.msra.mxu0 0
        %2863 = vmatpush.bf16.msra.mxu0 0
        %2864 = vmatpush.bf16.msra.mxu0 0
        %2865 = vmatpush.bf16.msra.mxu0 0
        %2866 = vmatpush.bf16.msra.mxu0 %v2857
        %2867 = vmatmul.bf16.gmra.mxu0 %v2809
        %v2868 = vpop.f32.mrf.mxu0
        %v2869 = vadd.f32 0.0, %v2868
        %v2870 = vpop.f32.mrf.mxu0
        %v2871 = vadd.f32 0.0, %v2870
        %2872 = vmatmul.bf16.gmra.mxu0 %v2812
        %v2873 = vpop.f32.mrf.mxu0
        %v2874 = vadd.f32 0.0, %v2873
        %v2875 = vpop.f32.mrf.mxu0
        %v2876 = vadd.f32 0.0, %v2875
        %2877 = vmatmul.bf16.gmra.mxu0 %v2815
        %v2878 = vpop.f32.mrf.mxu0
        %v2879 = vadd.f32 0.0, %v2878
        %v2880 = vpop.f32.mrf.mxu0
        %v2881 = vadd.f32 0.0, %v2880
        %2882 = vmatmul.bf16.gmra.mxu0 %v2818
        %v2883 = vpop.f32.mrf.mxu0
        %v2884 = vadd.f32 0.0, %v2883
        %v2885 = vpop.f32.mrf.mxu0
        %v2886 = vadd.f32 0.0, %v2885
        %2887 = vmatmul.bf16.gmra.mxu0 %v2821
        %v2888 = vpop.f32.mrf.mxu0
        %v2889 = vadd.f32 0.0, %v2888
        %v2890 = vpop.f32.mrf.mxu0
        %v2891 = vadd.f32 0.0, %v2890
        %2892 = vmatmul.bf16.gmra.mxu0 %v2824
        %v2893 = vpop.f32.mrf.mxu0
        %v2894 = vadd.f32 0.0, %v2893
        %v2895 = vpop.f32.mrf.mxu0
        %v2896 = vadd.f32 0.0, %v2895
        %2897 = vmatmul.bf16.gmra.mxu0 %v2827
        %v2898 = vpop.f32.mrf.mxu0
        %v2899 = vadd.f32 0.0, %v2898
        %v2900 = vpop.f32.mrf.mxu0
        %v2901 = vadd.f32 0.0, %v2900
        %2902 = vmatmul.bf16.gmra.mxu0 %v2830
        %v2903 = vpop.f32.mrf.mxu0
        %v2904 = vadd.f32 0.0, %v2903
        %v2905 = vpop.f32.mrf.mxu0
        %v2906 = vadd.f32 0.0, %v2905
        %2907 = vmatmul.bf16.gmra.mxu0 %v2833
        %v2908 = vpop.f32.mrf.mxu0
        %v2909 = vadd.f32 0.0, %v2908
        %v2910 = vpop.f32.mrf.mxu0
        %v2911 = vadd.f32 0.0, %v2910
        %2912 = vmatmul.bf16.gmra.mxu0 %v2836
        %v2913 = vpop.f32.mrf.mxu0
        %v2914 = vadd.f32 0.0, %v2913
        %v2915 = vpop.f32.mrf.mxu0
        %v2916 = vadd.f32 0.0, %v2915
        %2917 = vmatmul.bf16.gmra.mxu0 %v2839
        %v2918 = vpop.f32.mrf.mxu0
        %v2919 = vadd.f32 0.0, %v2918
        %v2920 = vpop.f32.mrf.mxu0
        %v2921 = vadd.f32 0.0, %v2920
        %2922 = vmatmul.bf16.gmra.mxu0 %v2842
        %v2923 = vpop.f32.mrf.mxu0
        %v2924 = vadd.f32 0.0, %v2923
        %v2925 = vpop.f32.mrf.mxu0
        %v2926 = vadd.f32 0.0, %v2925
        %2927 = vmatmul.bf16.gmra.mxu0 %v2845
        %v2928 = vpop.f32.mrf.mxu0
        %v2929 = vadd.f32 0.0, %v2928
        %v2930 = vpop.f32.mrf.mxu0
        %v2931 = vadd.f32 0.0, %v2930
        %2932 = vmatmul.bf16.gmra.mxu0 %v2848
        %v2933 = vpop.f32.mrf.mxu0
        %v2934 = vadd.f32 0.0, %v2933
        %v2935 = vpop.f32.mrf.mxu0
        %v2936 = vadd.f32 0.0, %v2935
        %2937 = vmatmul.bf16.gmra.mxu0 %v2851
        %v2938 = vpop.f32.mrf.mxu0
        %v2939 = vadd.f32 0.0, %v2938
        %v2940 = vpop.f32.mrf.mxu0
        %v2941 = vadd.f32 0.0, %v2940
        %2942 = vmatmul.bf16.gmra.mxu0 %v2854
        %v2943 = vpop.f32.mrf.mxu0
        %v2944 = vadd.f32 0.0, %v2943
        %v2945 = vpop.f32.mrf.mxu0
        %v2946 = vadd.f32 0.0, %v2945
        %2947 = vdwg.mxu0
        %v2948 = vadd.f32 %v2726, %v2869
        %v2949 = vadd.f32 %v2727, %v2871
        %v2950 = vadd.f32 %v2728, %v2874
        %v2951 = vadd.f32 %v2729, %v2876
        %v2952 = vadd.f32 %v2730, %v2879
        %v2953 = vadd.f32 %v2731, %v2881
        %v2954 = vadd.f32 %v2732, %v2884
        %v2955 = vadd.f32 %v2733, %v2886
        %v2956 = vadd.f32 %v2734, %v2889
        %v2957 = vadd.f32 %v2735, %v2891
        %v2958 = vadd.f32 %v2736, %v2894
        %v2959 = vadd.f32 %v2737, %v2896
        %v2960 = vadd.f32 %v2738, %v2899
        %v2961 = vadd.f32 %v2739, %v2901
        %v2962 = vadd.f32 %v2740, %v2904
        %v2963 = vadd.f32 %v2741, %v2906
        %v2964 = vadd.f32 %v2742, %v2909
        %v2965 = vadd.f32 %v2743, %v2911
        %v2966 = vadd.f32 %v2744, %v2914
        %v2967 = vadd.f32 %v2745, %v2916
        %v2968 = vadd.f32 %v2746, %v2919
        %v2969 = vadd.f32 %v2747, %v2921
        %v2970 = vadd.f32 %v2748, %v2924
        %v2971 = vadd.f32 %v2749, %v2926
        %v2972 = vadd.f32 %v2750, %v2929
        %v2973 = vadd.f32 %v2751, %v2931
        %v2974 = vadd.f32 %v2752, %v2934
        %v2975 = vadd.f32 %v2753, %v2936
        %v2976 = vadd.f32 %v2754, %v2939
        %v2977 = vadd.f32 %v2755, %v2941
        %v2978 = vadd.f32 %v2756, %v2944
        %v2979 = vadd.f32 %v2757, %v2946
        %v2980 = vld [vmem:[%s482 + $0x29] sm:$0xff]
        %v2981 = vld [vmem:[%s482 + $0x31] sm:$0xff]
        %v2982 = vld [vmem:[%s482 + $0x39] sm:$0xff]
        %v2983 = vld [vmem:[%s482 + $0x41] sm:$0xff]
        %v2984 = vld [vmem:[%s482 + $0x49] sm:$0xff]
        %v2985 = vld [vmem:[%s482 + $0x51] sm:$0xff]
        %v2986 = vld [vmem:[%s482 + $0x59] sm:$0xff]
        %v2987 = vld [vmem:[%s482 + $0x61] sm:$0xff]
        %v2988 = vld [vmem:[%s482 + $0x69] sm:$0xff]
        %v2989 = vld [vmem:[%s482 + $0x71] sm:$0xff]
        %v2990 = vld [vmem:[%s482 + $0x79] sm:$0xff]
        %v2991 = vld [vmem:[%s482 + $0x81] sm:$0xff]
        %v2992 = vld [vmem:[%s482 + $0x89] sm:$0xff]
        %v2993 = vld [vmem:[%s482 + $0x91] sm:$0xff]
        %v2994 = vld [vmem:[%s482 + $0x99] sm:$0xff]
        %v2995 = vld [vmem:[%s482 + $0xa1] sm:$0xff]
        %v2996 = vld [vmem:[%s482 + $0xa9] sm:$0xff]
        %v2997 = vld [vmem:[%s482 + $0xb1] sm:$0xff]
        %v2998 = vld [vmem:[%s482 + $0xb9] sm:$0xff]
        %v2999 = vld [vmem:[%s482 + $0xc1] sm:$0xff]
        %v3000 = vld [vmem:[%s482 + $0xc9] sm:$0xff]
        %v3001 = vld [vmem:[%s482 + $0xd1] sm:$0xff]
        %v3002 = vld [vmem:[%s482 + $0xd9] sm:$0xff]
        %v3003 = vld [vmem:[%s482 + $0xe1] sm:$0xff]
        %v3004 = vld [vmem:[%s482 + $0xe9] sm:$0xff]
        %v3005 = vld [vmem:[%s482 + $0xf1] sm:$0xff]
        %v3006 = vld [vmem:[%s482 + $0xf9] sm:$0xff]
        %v3007 = vld [vmem:[%s482 + $0x101] sm:$0xff]
        %v3008 = vld [vmem:[%s482 + $0x109] sm:$0xff]
        %v3009 = vld [vmem:[%s482 + $0x111] sm:$0xff]
        %v3010 = vld [vmem:[%s482 + $0x119] sm:$0xff]
        %v3011 = vld [vmem:[%s482 + $0x121] sm:$0xff]
        %v3012 = vsel %vm1520, %v2980, 0.0
        %v3013 = vsel %vm1521, %v2981, 0.0
        %v3014 = vsel %vm1522, %v2982, 0.0
        %v3015 = vsel %vm1523, %v2983, 0.0
        %v3016 = vsel %vm1524, %v2984, 0.0
        %v3017 = vsel %vm1525, %v2985, 0.0
        %v3018 = vsel %vm1526, %v2986, 0.0
        %v3019 = vsel %vm1527, %v2987, 0.0
        %v3020 = vsel %vm1528, %v2988, 0.0
        %v3021 = vsel %vm1529, %v2989, 0.0
        %v3022 = vsel %vm1530, %v2990, 0.0
        %v3023 = vsel %vm1531, %v2991, 0.0
        %v3024 = vsel %vm1532, %v2992, 0.0
        %v3025 = vsel %vm1533, %v2993, 0.0
        %v3026 = vsel %vm1534, %v2994, 0.0
        %v3027 = vsel %vm1535, %v2995, 0.0
        %v3028 = vsel %vm1536, %v2996, 0.0
        %v3029 = vsel %vm1537, %v2997, 0.0
        %v3030 = vsel %vm1538, %v2998, 0.0
        %v3031 = vsel %vm1539, %v2999, 0.0
        %v3032 = vsel %vm1540, %v3000, 0.0
        %v3033 = vsel %vm1541, %v3001, 0.0
        %v3034 = vsel %vm1542, %v3002, 0.0
        %v3035 = vsel %vm1543, %v3003, 0.0
        %v3036 = vsel %vm1544, %v3004, 0.0
        %v3037 = vsel %vm1545, %v3005, 0.0
        %v3038 = vsel %vm1546, %v3006, 0.0
        %v3039 = vsel %vm1547, %v3007, 0.0
        %v3040 = vsel %vm1548, %v3008, 0.0
        %v3041 = vsel %vm1549, %v3009, 0.0
        %v3042 = vsel %vm1550, %v3010, 0.0
        %v3043 = vsel %vm1551, %v3011, 0.0
        %v3044 = vpack.c.bf16 %v3013, %v3012
        %v3045 = vpack.c.bf16 %v3015, %v3014
        %v3046 = vpack.c.bf16 %v3017, %v3016
        %v3047 = vpack.c.bf16 %v3019, %v3018
        %v3048 = vpack.c.bf16 %v3021, %v3020
        %v3049 = vpack.c.bf16 %v3023, %v3022
        %v3050 = vpack.c.bf16 %v3025, %v3024
        %v3051 = vpack.c.bf16 %v3027, %v3026
        %v3052 = vpack.c.bf16 %v3029, %v3028
        %v3053 = vpack.c.bf16 %v3031, %v3030
        %v3054 = vpack.c.bf16 %v3033, %v3032
        %v3055 = vpack.c.bf16 %v3035, %v3034
        %v3056 = vpack.c.bf16 %v3037, %v3036
        %v3057 = vpack.c.bf16 %v3039, %v3038
        %v3058 = vpack.c.bf16 %v3041, %v3040
        %v3059 = vpack.c.bf16 %v3043, %v3042
        %s3060 = scalar_lea.vmem %s1, 16
        %v3061 = vld [vmem:[%s3060] sm:$0x3]
        %v3063 = vsel %vm1174, %v3044, 0
        %v3066 = vsel %vm1174, %v3045, 0
        %v3069 = vsel %vm1174, %v3046, 0
        %v3072 = vsel %vm1174, %v3047, 0
        %v3075 = vsel %vm1174, %v3048, 0
        %v3078 = vsel %vm1174, %v3049, 0
        %v3081 = vsel %vm1174, %v3050, 0
        %v3084 = vsel %vm1174, %v3051, 0
        %v3087 = vsel %vm1174, %v3052, 0
        %v3090 = vsel %vm1174, %v3053, 0
        %v3093 = vsel %vm1174, %v3054, 0
        %v3096 = vsel %vm1174, %v3055, 0
        %v3099 = vsel %vm1174, %v3056, 0
        %v3102 = vsel %vm1174, %v3057, 0
        %v3105 = vsel %vm1174, %v3058, 0
        %v3108 = vsel %vm1174, %v3059, 0
        %v3111 = vsel %vm1223, %v3061, 0
        %3113 = vmatpush.bf16.msra.mxu0 0
        %3114 = vmatpush.bf16.msra.mxu0 0
        %3115 = vmatpush.bf16.msra.mxu0 0
        %3116 = vmatpush.bf16.msra.mxu0 0
        %3117 = vmatpush.bf16.msra.mxu0 0
        %3118 = vmatpush.bf16.msra.mxu0 0
        %3119 = vmatpush.bf16.msra.mxu0 0
        %3120 = vmatpush.bf16.msra.mxu0 %v3111
        %3121 = vmatmul.bf16.gmra.mxu0 %v3063
        %v3122 = vpop.f32.mrf.mxu0
        %v3123 = vadd.f32 0.0, %v3122
        %v3124 = vpop.f32.mrf.mxu0
        %v3125 = vadd.f32 0.0, %v3124
        %3126 = vmatmul.bf16.gmra.mxu0 %v3066
        %v3127 = vpop.f32.mrf.mxu0
        %v3128 = vadd.f32 0.0, %v3127
        %v3129 = vpop.f32.mrf.mxu0
        %v3130 = vadd.f32 0.0, %v3129
        %3131 = vmatmul.bf16.gmra.mxu0 %v3069
        %v3132 = vpop.f32.mrf.mxu0
        %v3133 = vadd.f32 0.0, %v3132
        %v3134 = vpop.f32.mrf.mxu0
        %v3135 = vadd.f32 0.0, %v3134
        %3136 = vmatmul.bf16.gmra.mxu0 %v3072
        %v3137 = vpop.f32.mrf.mxu0
        %v3138 = vadd.f32 0.0, %v3137
        %v3139 = vpop.f32.mrf.mxu0
        %v3140 = vadd.f32 0.0, %v3139
        %3141 = vmatmul.bf16.gmra.mxu0 %v3075
        %v3142 = vpop.f32.mrf.mxu0
        %v3143 = vadd.f32 0.0, %v3142
        %v3144 = vpop.f32.mrf.mxu0
        %v3145 = vadd.f32 0.0, %v3144
        %3146 = vmatmul.bf16.gmra.mxu0 %v3078
        %v3147 = vpop.f32.mrf.mxu0
        %v3148 = vadd.f32 0.0, %v3147
        %v3149 = vpop.f32.mrf.mxu0
        %v3150 = vadd.f32 0.0, %v3149
        %3151 = vmatmul.bf16.gmra.mxu0 %v3081
        %v3152 = vpop.f32.mrf.mxu0
        %v3153 = vadd.f32 0.0, %v3152
        %v3154 = vpop.f32.mrf.mxu0
        %v3155 = vadd.f32 0.0, %v3154
        %3156 = vmatmul.bf16.gmra.mxu0 %v3084
        %v3157 = vpop.f32.mrf.mxu0
        %v3158 = vadd.f32 0.0, %v3157
        %v3159 = vpop.f32.mrf.mxu0
        %v3160 = vadd.f32 0.0, %v3159
        %3161 = vmatmul.bf16.gmra.mxu0 %v3087
        %v3162 = vpop.f32.mrf.mxu0
        %v3163 = vadd.f32 0.0, %v3162
        %v3164 = vpop.f32.mrf.mxu0
        %v3165 = vadd.f32 0.0, %v3164
        %3166 = vmatmul.bf16.gmra.mxu0 %v3090
        %v3167 = vpop.f32.mrf.mxu0
        %v3168 = vadd.f32 0.0, %v3167
        %v3169 = vpop.f32.mrf.mxu0
        %v3170 = vadd.f32 0.0, %v3169
        %3171 = vmatmul.bf16.gmra.mxu0 %v3093
        %v3172 = vpop.f32.mrf.mxu0
        %v3173 = vadd.f32 0.0, %v3172
        %v3174 = vpop.f32.mrf.mxu0
        %v3175 = vadd.f32 0.0, %v3174
        %3176 = vmatmul.bf16.gmra.mxu0 %v3096
        %v3177 = vpop.f32.mrf.mxu0
        %v3178 = vadd.f32 0.0, %v3177
        %v3179 = vpop.f32.mrf.mxu0
        %v3180 = vadd.f32 0.0, %v3179
        %3181 = vmatmul.bf16.gmra.mxu0 %v3099
        %v3182 = vpop.f32.mrf.mxu0
        %v3183 = vadd.f32 0.0, %v3182
        %v3184 = vpop.f32.mrf.mxu0
        %v3185 = vadd.f32 0.0, %v3184
        %3186 = vmatmul.bf16.gmra.mxu0 %v3102
        %v3187 = vpop.f32.mrf.mxu0
        %v3188 = vadd.f32 0.0, %v3187
        %v3189 = vpop.f32.mrf.mxu0
        %v3190 = vadd.f32 0.0, %v3189
        %3191 = vmatmul.bf16.gmra.mxu0 %v3105
        %v3192 = vpop.f32.mrf.mxu0
        %v3193 = vadd.f32 0.0, %v3192
        %v3194 = vpop.f32.mrf.mxu0
        %v3195 = vadd.f32 0.0, %v3194
        %3196 = vmatmul.bf16.gmra.mxu0 %v3108
        %v3197 = vpop.f32.mrf.mxu0
        %v3198 = vadd.f32 0.0, %v3197
        %v3199 = vpop.f32.mrf.mxu0
        %v3200 = vadd.f32 0.0, %v3199
        %3201 = vdwg.mxu0
        %v3202 = vadd.f32 %v2948, %v3123
        %v3203 = vadd.f32 %v2949, %v3125
        %v3204 = vadd.f32 %v2950, %v3128
        %v3205 = vadd.f32 %v2951, %v3130
        %v3206 = vadd.f32 %v2952, %v3133
        %v3207 = vadd.f32 %v2953, %v3135
        %v3208 = vadd.f32 %v2954, %v3138
        %v3209 = vadd.f32 %v2955, %v3140
        %v3210 = vadd.f32 %v2956, %v3143
        %v3211 = vadd.f32 %v2957, %v3145
        %v3212 = vadd.f32 %v2958, %v3148
        %v3213 = vadd.f32 %v2959, %v3150
        %v3214 = vadd.f32 %v2960, %v3153
        %v3215 = vadd.f32 %v2961, %v3155
        %v3216 = vadd.f32 %v2962, %v3158
        %v3217 = vadd.f32 %v2963, %v3160
        %v3218 = vadd.f32 %v2964, %v3163
        %v3219 = vadd.f32 %v2965, %v3165
        %v3220 = vadd.f32 %v2966, %v3168
        %v3221 = vadd.f32 %v2967, %v3170
        %v3222 = vadd.f32 %v2968, %v3173
        %v3223 = vadd.f32 %v2969, %v3175
        %v3224 = vadd.f32 %v2970, %v3178
        %v3225 = vadd.f32 %v2971, %v3180
        %v3226 = vadd.f32 %v2972, %v3183
        %v3227 = vadd.f32 %v2973, %v3185
        %v3228 = vadd.f32 %v2974, %v3188
        %v3229 = vadd.f32 %v2975, %v3190
        %v3230 = vadd.f32 %v2976, %v3193
        %v3231 = vadd.f32 %v2977, %v3195
        %v3232 = vadd.f32 %v2978, %v3198
        %v3233 = vadd.f32 %v2979, %v3200
        %v3234 = vld [vmem:[%s2] sm:$0x1]
        %v3236 = vperm.slane %v3234, 0
        %v3238 = vadd.f32 %v3202, %v3236
        %v3239 = vadd.f32 %v3203, %v3236
        %v3240 = vadd.f32 %v3204, %v3236
        %v3241 = vadd.f32 %v3205, %v3236
        %v3242 = vadd.f32 %v3206, %v3236
        %v3243 = vadd.f32 %v3207, %v3236
        %v3244 = vadd.f32 %v3208, %v3236
        %v3245 = vadd.f32 %v3209, %v3236
        %v3246 = vadd.f32 %v3210, %v3236
        %v3247 = vadd.f32 %v3211, %v3236
        %v3248 = vadd.f32 %v3212, %v3236
        %v3249 = vadd.f32 %v3213, %v3236
        %v3250 = vadd.f32 %v3214, %v3236
        %v3251 = vadd.f32 %v3215, %v3236
        %v3252 = vadd.f32 %v3216, %v3236
        %v3253 = vadd.f32 %v3217, %v3236
        %v3254 = vadd.f32 %v3218, %v3236
        %v3255 = vadd.f32 %v3219, %v3236
        %v3256 = vadd.f32 %v3220, %v3236
        %v3257 = vadd.f32 %v3221, %v3236
        %v3258 = vadd.f32 %v3222, %v3236
        %v3259 = vadd.f32 %v3223, %v3236
        %v3260 = vadd.f32 %v3224, %v3236
        %v3261 = vadd.f32 %v3225, %v3236
        %v3262 = vadd.f32 %v3226, %v3236
        %v3263 = vadd.f32 %v3227, %v3236
        %v3264 = vadd.f32 %v3228, %v3236
        %v3265 = vadd.f32 %v3229, %v3236
        %v3266 = vadd.f32 %v3230, %v3236
        %v3267 = vadd.f32 %v3231, %v3236
        %v3268 = vadd.f32 %v3232, %v3236
        %v3269 = vadd.f32 %v3233, %v3236
        %v3270 = vld [vmem:[%s11] sm:$0xff]
        %v3271 = vld [vmem:[%s11 + $0x8] sm:$0xff]
        %v3272 = vld [vmem:[%s11 + $0x10] sm:$0xff]
        %v3273 = vld [vmem:[%s11 + $0x18] sm:$0xff]
        %v3274 = vld [vmem:[%s12] sm:$0xff]
        %vm3275 = vcmask 261120
        %v3276 = vsel %vm3275, %v3238, 0.0
        %v3277 = vsel %vm3275, %v3239, 0.0
        %v3278 = vadd.f32 %v3276, %v3277
        %v3279 = vsel %vm3275, %v3240, 0.0
        %v3280 = vadd.f32 %v3278, %v3279
        %v3281 = vsel %vm3275, %v3241, 0.0
        %v3282 = vadd.f32 %v3280, %v3281
        %v3283 = vsel %vm3275, %v3242, 0.0
        %v3284 = vadd.f32 %v3282, %v3283
        %v3285 = vsel %vm3275, %v3243, 0.0
        %v3286 = vadd.f32 %v3284, %v3285
        %v3287 = vsel %vm3275, %v3244, 0.0
        %v3288 = vadd.f32 %v3286, %v3287
        %v3289 = vsel %vm3275, %v3245, 0.0
        %v3290 = vadd.f32 %v3288, %v3289
        %v3291 = vsel %vm3275, %v3246, 0.0
        %v3292 = vadd.f32 %v3290, %v3291
        %v3293 = vsel %vm3275, %v3247, 0.0
        %v3294 = vadd.f32 %v3292, %v3293
        %v3295 = vsel %vm3275, %v3248, 0.0
        %v3296 = vadd.f32 %v3294, %v3295
        %v3297 = vsel %vm3275, %v3249, 0.0
        %v3298 = vadd.f32 %v3296, %v3297
        %v3299 = vsel %vm3275, %v3250, 0.0
        %v3300 = vadd.f32 %v3298, %v3299
        %v3301 = vsel %vm3275, %v3251, 0.0
        %v3302 = vadd.f32 %v3300, %v3301
        %v3303 = vsel %vm3275, %v3252, 0.0
        %v3304 = vadd.f32 %v3302, %v3303
        %v3305 = vsel %vm3275, %v3253, 0.0
        %v3306 = vadd.f32 %v3304, %v3305
        %v3307 = vsel %vm3275, %v3254, 0.0
        %v3308 = vadd.f32 %v3306, %v3307
        %v3309 = vsel %vm3275, %v3255, 0.0
        %v3310 = vadd.f32 %v3308, %v3309
        %v3311 = vsel %vm3275, %v3256, 0.0
        %v3312 = vadd.f32 %v3310, %v3311
        %v3313 = vsel %vm3275, %v3257, 0.0
        %v3314 = vadd.f32 %v3312, %v3313
        %v3315 = vsel %vm3275, %v3258, 0.0
        %v3316 = vadd.f32 %v3314, %v3315
        %v3317 = vsel %vm3275, %v3259, 0.0
        %v3318 = vadd.f32 %v3316, %v3317
        %v3319 = vsel %vm3275, %v3260, 0.0
        %v3320 = vadd.f32 %v3318, %v3319
        %v3321 = vsel %vm3275, %v3261, 0.0
        %v3322 = vadd.f32 %v3320, %v3321
        %v3323 = vsel %vm3275, %v3262, 0.0
        %v3324 = vadd.f32 %v3322, %v3323
        %v3325 = vsel %vm3275, %v3263, 0.0
        %v3326 = vadd.f32 %v3324, %v3325
        %v3327 = vsel %vm3275, %v3264, 0.0
        %v3328 = vadd.f32 %v3326, %v3327
        %v3329 = vsel %vm3275, %v3265, 0.0
        %v3330 = vadd.f32 %v3328, %v3329
        %v3331 = vsel %vm3275, %v3266, 0.0
        %v3332 = vadd.f32 %v3330, %v3331
        %v3333 = vsel %vm3275, %v3267, 0.0
        %v3334 = vadd.f32 %v3332, %v3333
        %v3335 = vsel %vm3275, %v3268, 0.0
        %v3336 = vadd.f32 %v3334, %v3335
        %v3337 = vsel %vm3275, %v3269, 0.0
        %v3338 = vadd.f32 %v3336, %v3337
        %v3339 = vrot.slane %v3338, 4
        %v3340 = vadd.f32 %v3338, %v3339
        %v3341 = vrot.slane %v3340, 2
        %v3342 = vadd.f32 %v3340, %v3341
        %v3343 = vrot.slane %v3342, 1
        %v3344 = vadd.f32 %v3342, %v3343
        %v3346 = vsel %vm3275, %v3344, 0
        %3348 = vmatpush.msra.mxu0 0.0
        %3349 = vmatpush.msra.mxu0 0.0
        %3350 = vmatpush.msra.mxu0 0.0
        %3351 = vmatpush.msra.mxu0 0.0
        %3352 = vmatpush.msra.mxu0 0.0
        %3353 = vmatpush.msra.mxu0 0.0
        %3354 = vmatpush.msra.mxu0 0.0
        %3355 = vmatpush.msra.mxu0 0.0
        %3356 = vmatpush.msra.mxu0 0.0
        %3357 = vmatpush.msra.mxu0 0.0
        %3358 = vmatpush.msra.mxu0 0.0
        %3359 = vmatpush.msra.mxu0 0.0
        %3360 = vmatpush.msra.mxu0 %v3273
        %3361 = vmatpush.msra.mxu0 %v3272
        %3362 = vmatpush.msra.mxu0 %v3271
        %3363 = vmatpush.msra.mxu0 %v3270
        %3364 = vmatmul.f32.gmra.mxu0 %v3346
        %v3365 = vpop.f32.mrf.mxu0
        %v3366 = vadd.f32 0.0, %v3365
        %3367 = vdwg.mxu0
        %v3368 = vrcp.pop 1024.0
        %v3369 = vmul.f32 1024.0, %v3368
        %v3370 = vsub.f32 1.0, %v3369
        %v3371 = vmul.f32 %v3368, %v3370
        %v3372 = vadd.f32 %v3368, %v3371
        %vm3373 = vweird.f32 %v3368
        %v3374 = vsel %vm3373, %v3368, %v3372
        %v3375 = vmul.f32 %v3366, %v3374
        %vm3376 = vcmask 64512
        %v3378 = vsel %vm3376, %v3375, 0
        %3380 = vmatpush.msra.mxu0 0.0
        %3381 = vmatpush.msra.mxu0 0.0
        %3382 = vmatpush.msra.mxu0 0.0
        %3383 = vmatpush.msra.mxu0 0.0
        %3384 = vmatpush.msra.mxu0 0.0
        %3385 = vmatpush.msra.mxu0 0.0
        %3386 = vmatpush.msra.mxu0 0.0
        %3387 = vmatpush.msra.mxu0 0.0
        %3388 = vmatpush.msra.mxu0 0.0
        %3389 = vmatpush.msra.mxu0 0.0
        %3390 = vmatpush.msra.mxu0 0.0
        %3391 = vmatpush.msra.mxu0 0.0
        %3392 = vmatpush.msra.mxu0 0.0
        %3393 = vmatpush.msra.mxu0 0.0
        %3394 = vmatpush.msra.mxu0 0.0
        %3395 = vmatpush.msra.mxu0 %v3274
        %3396 = vmatmul.f32.gmra.mxu0 %v3378
        %v3397 = vpop.f32.mrf.mxu0
        %v3398 = vadd.f32 0.0, %v3397
        %3399 = vdwg.mxu0
        %v3400 = vperm.slane %v3398, 0
        %v3401 = vsub.f32 %v3238, %v3400
        %v3402 = vsub.f32 %v3239, %v3400
        %v3403 = vsub.f32 %v3240, %v3400
        %v3404 = vsub.f32 %v3241, %v3400
        %v3405 = vsub.f32 %v3242, %v3400
        %v3406 = vsub.f32 %v3243, %v3400
        %v3407 = vsub.f32 %v3244, %v3400
        %v3408 = vsub.f32 %v3245, %v3400
        %v3409 = vsub.f32 %v3246, %v3400
        %v3410 = vsub.f32 %v3247, %v3400
        %v3411 = vsub.f32 %v3248, %v3400
        %v3412 = vsub.f32 %v3249, %v3400
        %v3413 = vsub.f32 %v3250, %v3400
        %v3414 = vsub.f32 %v3251, %v3400
        %v3415 = vsub.f32 %v3252, %v3400
        %v3416 = vsub.f32 %v3253, %v3400
        %v3417 = vsub.f32 %v3254, %v3400
        %v3418 = vsub.f32 %v3255, %v3400
        %v3419 = vsub.f32 %v3256, %v3400
        %v3420 = vsub.f32 %v3257, %v3400
        %v3421 = vsub.f32 %v3258, %v3400
        %v3422 = vsub.f32 %v3259, %v3400
        %v3423 = vsub.f32 %v3260, %v3400
        %v3424 = vsub.f32 %v3261, %v3400
        %v3425 = vsub.f32 %v3262, %v3400
        %v3426 = vsub.f32 %v3263, %v3400
        %v3427 = vsub.f32 %v3264, %v3400
        %v3428 = vsub.f32 %v3265, %v3400
        %v3429 = vsub.f32 %v3266, %v3400
        %v3430 = vsub.f32 %v3267, %v3400
        %v3431 = vsub.f32 %v3268, %v3400
        %v3432 = vsub.f32 %v3269, %v3400
        %v3433 = vmul.f32 %v3401, %v3401
        %v3434 = vmul.f32 %v3402, %v3402
        %v3435 = vmul.f32 %v3403, %v3403
        %v3436 = vmul.f32 %v3404, %v3404
        %v3437 = vmul.f32 %v3405, %v3405
        %v3438 = vmul.f32 %v3406, %v3406
        %v3439 = vmul.f32 %v3407, %v3407
        %v3440 = vmul.f32 %v3408, %v3408
        %v3441 = vmul.f32 %v3409, %v3409
        %v3442 = vmul.f32 %v3410, %v3410
        %v3443 = vmul.f32 %v3411, %v3411
        %v3444 = vmul.f32 %v3412, %v3412
        %v3445 = vmul.f32 %v3413, %v3413
        %v3446 = vmul.f32 %v3414, %v3414
        %v3447 = vmul.f32 %v3415, %v3415
        %v3448 = vmul.f32 %v3416, %v3416
        %v3449 = vmul.f32 %v3417, %v3417
        %v3450 = vmul.f32 %v3418, %v3418
        %v3451 = vmul.f32 %v3419, %v3419
        %v3452 = vmul.f32 %v3420, %v3420
        %v3453 = vmul.f32 %v3421, %v3421
        %v3454 = vmul.f32 %v3422, %v3422
        %v3455 = vmul.f32 %v3423, %v3423
        %v3456 = vmul.f32 %v3424, %v3424
        %v3457 = vmul.f32 %v3425, %v3425
        %v3458 = vmul.f32 %v3426, %v3426
        %v3459 = vmul.f32 %v3427, %v3427
        %v3460 = vmul.f32 %v3428, %v3428
        %v3461 = vmul.f32 %v3429, %v3429
        %v3462 = vmul.f32 %v3430, %v3430
        %v3463 = vmul.f32 %v3431, %v3431
        %v3464 = vmul.f32 %v3432, %v3432
        %v3465 = vsel %vm3275, %v3433, 0.0
        %v3466 = vsel %vm3275, %v3434, 0.0
        %v3467 = vadd.f32 %v3465, %v3466
        %v3468 = vsel %vm3275, %v3435, 0.0
        %v3469 = vadd.f32 %v3467, %v3468
        %v3470 = vsel %vm3275, %v3436, 0.0
        %v3471 = vadd.f32 %v3469, %v3470
        %v3472 = vsel %vm3275, %v3437, 0.0
        %v3473 = vadd.f32 %v3471, %v3472
        %v3474 = vsel %vm3275, %v3438, 0.0
        %v3475 = vadd.f32 %v3473, %v3474
        %v3476 = vsel %vm3275, %v3439, 0.0
        %v3477 = vadd.f32 %v3475, %v3476
        %v3478 = vsel %vm3275, %v3440, 0.0
        %v3479 = vadd.f32 %v3477, %v3478
        %v3480 = vsel %vm3275, %v3441, 0.0
        %v3481 = vadd.f32 %v3479, %v3480
        %v3482 = vsel %vm3275, %v3442, 0.0
        %v3483 = vadd.f32 %v3481, %v3482
        %v3484 = vsel %vm3275, %v3443, 0.0
        %v3485 = vadd.f32 %v3483, %v3484
        %v3486 = vsel %vm3275, %v3444, 0.0
        %v3487 = vadd.f32 %v3485, %v3486
        %v3488 = vsel %vm3275, %v3445, 0.0
        %v3489 = vadd.f32 %v3487, %v3488
        %v3490 = vsel %vm3275, %v3446, 0.0
        %v3491 = vadd.f32 %v3489, %v3490
        %v3492 = vsel %vm3275, %v3447, 0.0
        %v3493 = vadd.f32 %v3491, %v3492
        %v3494 = vsel %vm3275, %v3448, 0.0
        %v3495 = vadd.f32 %v3493, %v3494
        %v3496 = vsel %vm3275, %v3449, 0.0
        %v3497 = vadd.f32 %v3495, %v3496
        %v3498 = vsel %vm3275, %v3450, 0.0
        %v3499 = vadd.f32 %v3497, %v3498
        %v3500 = vsel %vm3275, %v3451, 0.0
        %v3501 = vadd.f32 %v3499, %v3500
        %v3502 = vsel %vm3275, %v3452, 0.0
        %v3503 = vadd.f32 %v3501, %v3502
        %v3504 = vsel %vm3275, %v3453, 0.0
        %v3505 = vadd.f32 %v3503, %v3504
        %v3506 = vsel %vm3275, %v3454, 0.0
        %v3507 = vadd.f32 %v3505, %v3506
        %v3508 = vsel %vm3275, %v3455, 0.0
        %v3509 = vadd.f32 %v3507, %v3508
        %v3510 = vsel %vm3275, %v3456, 0.0
        %v3511 = vadd.f32 %v3509, %v3510
        %v3512 = vsel %vm3275, %v3457, 0.0
        %v3513 = vadd.f32 %v3511, %v3512
        %v3514 = vsel %vm3275, %v3458, 0.0
        %v3515 = vadd.f32 %v3513, %v3514
        %v3516 = vsel %vm3275, %v3459, 0.0
        %v3517 = vadd.f32 %v3515, %v3516
        %v3518 = vsel %vm3275, %v3460, 0.0
        %v3519 = vadd.f32 %v3517, %v3518
        %v3520 = vsel %vm3275, %v3461, 0.0
        %v3521 = vadd.f32 %v3519, %v3520
        %v3522 = vsel %vm3275, %v3462, 0.0
        %v3523 = vadd.f32 %v3521, %v3522
        %v3524 = vsel %vm3275, %v3463, 0.0
        %v3525 = vadd.f32 %v3523, %v3524
        %v3526 = vsel %vm3275, %v3464, 0.0
        %v3527 = vadd.f32 %v3525, %v3526
        %v3528 = vrot.slane %v3527, 4
        %v3529 = vadd.f32 %v3527, %v3528
        %v3530 = vrot.slane %v3529, 2
        %v3531 = vadd.f32 %v3529, %v3530
        %v3532 = vrot.slane %v3531, 1
        %v3533 = vadd.f32 %v3531, %v3532
        %v3535 = vsel %vm3275, %v3533, 0
        %3537 = vmatpush.msra.mxu0 0.0
        %3538 = vmatpush.msra.mxu0 0.0
        %3539 = vmatpush.msra.mxu0 0.0
        %3540 = vmatpush.msra.mxu0 0.0
        %3541 = vmatpush.msra.mxu0 0.0
        %3542 = vmatpush.msra.mxu0 0.0
        %3543 = vmatpush.msra.mxu0 0.0
        %3544 = vmatpush.msra.mxu0 0.0
        %3545 = vmatpush.msra.mxu0 0.0
        %3546 = vmatpush.msra.mxu0 0.0
        %3547 = vmatpush.msra.mxu0 0.0
        %3548 = vmatpush.msra.mxu0 0.0
        %3549 = vmatpush.msra.mxu0 %v3273
        %3550 = vmatpush.msra.mxu0 %v3272
        %3551 = vmatpush.msra.mxu0 %v3271
        %3552 = vmatpush.msra.mxu0 %v3270
        %3553 = vmatmul.f32.gmra.mxu0 %v3535
        %v3554 = vpop.f32.mrf.mxu0
        %v3555 = vadd.f32 0.0, %v3554
        %3556 = vdwg.mxu0
        %v3557 = vmul.f32 %v3555, %v3374
        %v3559 = vsel %vm3376, %v3557, 0
        %3561 = vmatpush.msra.mxu0 0.0
        %3562 = vmatpush.msra.mxu0 0.0
        %3563 = vmatpush.msra.mxu0 0.0
        %3564 = vmatpush.msra.mxu0 0.0
        %3565 = vmatpush.msra.mxu0 0.0
        %3566 = vmatpush.msra.mxu0 0.0
        %3567 = vmatpush.msra.mxu0 0.0
        %3568 = vmatpush.msra.mxu0 0.0
        %3569 = vmatpush.msra.mxu0 0.0
        %3570 = vmatpush.msra.mxu0 0.0
        %3571 = vmatpush.msra.mxu0 0.0
        %3572 = vmatpush.msra.mxu0 0.0
        %3573 = vmatpush.msra.mxu0 0.0
        %3574 = vmatpush.msra.mxu0 0.0
        %3575 = vmatpush.msra.mxu0 0.0
        %3576 = vmatpush.msra.mxu0 %v3274
        %3577 = vmatmul.f32.gmra.mxu0 %v3559
        %v3578 = vpop.f32.mrf.mxu0
        %v3579 = vadd.f32 1e-05, %v3578
        %3580 = vdwg.mxu0
        %v3581 = vrsqrt.pop %v3579
        %v3582 = vmul.f32 %v3581, %v3579
        %v3583 = vmul.f32 %v3582, %v3581
        %v3584 = vmul.f32 0.5, %v3583
        %v3585 = vsub.f32 1.5, %v3584
        %v3586 = vmul.f32 %v3581, %v3585
        %vm3587 = vweird.f32 %v3579
        %vm3588 = vweird.f32 %v3581
        %vm3589 = vmor %vm3587, %vm3588
        %v3590 = vsel %vm3589, %v3581, %v3586
        %v3591 = vperm.slane %v3590, 0
        %v3592 = vmul.f32 %v3401, %v3591
        %v3593 = vmul.f32 %v3402, %v3591
        %v3594 = vmul.f32 %v3403, %v3591
        %v3595 = vmul.f32 %v3404, %v3591
        %v3596 = vmul.f32 %v3405, %v3591
        %v3597 = vmul.f32 %v3406, %v3591
        %v3598 = vmul.f32 %v3407, %v3591
        %v3599 = vmul.f32 %v3408, %v3591
        %v3600 = vmul.f32 %v3409, %v3591
        %v3601 = vmul.f32 %v3410, %v3591
        %v3602 = vmul.f32 %v3411, %v3591
        %v3603 = vmul.f32 %v3412, %v3591
        %v3604 = vmul.f32 %v3413, %v3591
        %v3605 = vmul.f32 %v3414, %v3591
        %v3606 = vmul.f32 %v3415, %v3591
        %v3607 = vmul.f32 %v3416, %v3591
        %v3608 = vmul.f32 %v3417, %v3591
        %v3609 = vmul.f32 %v3418, %v3591
        %v3610 = vmul.f32 %v3419, %v3591
        %v3611 = vmul.f32 %v3420, %v3591
        %v3612 = vmul.f32 %v3421, %v3591
        %v3613 = vmul.f32 %v3422, %v3591
        %v3614 = vmul.f32 %v3423, %v3591
        %v3615 = vmul.f32 %v3424, %v3591
        %v3616 = vmul.f32 %v3425, %v3591
        %v3617 = vmul.f32 %v3426, %v3591
        %v3618 = vmul.f32 %v3427, %v3591
        %v3619 = vmul.f32 %v3428, %v3591
        %v3620 = vmul.f32 %v3429, %v3591
        %v3621 = vmul.f32 %v3430, %v3591
        %v3622 = vmul.f32 %v3431, %v3591
        %v3623 = vmul.f32 %v3432, %v3591
        %v3624 = vld [vmem:[%s485] sm:$0x1]
        %v3625 = vadd.f32 %v3624, 1.0
        %v3627 = vperm.slane %v3625, 0
        %v3629 = vmul.f32 %v3592, %v3627
        %v3630 = vmul.f32 %v3593, %v3627
        %v3631 = vmul.f32 %v3594, %v3627
        %v3632 = vmul.f32 %v3595, %v3627
        %v3633 = vmul.f32 %v3596, %v3627
        %v3634 = vmul.f32 %v3597, %v3627
        %v3635 = vmul.f32 %v3598, %v3627
        %v3636 = vmul.f32 %v3599, %v3627
        %v3637 = vmul.f32 %v3600, %v3627
        %v3638 = vmul.f32 %v3601, %v3627
        %v3639 = vmul.f32 %v3602, %v3627
        %v3640 = vmul.f32 %v3603, %v3627
        %v3641 = vmul.f32 %v3604, %v3627
        %v3642 = vmul.f32 %v3605, %v3627
        %v3643 = vmul.f32 %v3606, %v3627
        %v3644 = vmul.f32 %v3607, %v3627
        %v3645 = vmul.f32 %v3608, %v3627
        %v3646 = vmul.f32 %v3609, %v3627
        %v3647 = vmul.f32 %v3610, %v3627
        %v3648 = vmul.f32 %v3611, %v3627
        %v3649 = vmul.f32 %v3612, %v3627
        %v3650 = vmul.f32 %v3613, %v3627
        %v3651 = vmul.f32 %v3614, %v3627
        %v3652 = vmul.f32 %v3615, %v3627
        %v3653 = vmul.f32 %v3616, %v3627
        %v3654 = vmul.f32 %v3617, %v3627
        %v3655 = vmul.f32 %v3618, %v3627
        %v3656 = vmul.f32 %v3619, %v3627
        %v3657 = vmul.f32 %v3620, %v3627
        %v3658 = vmul.f32 %v3621, %v3627
        %v3659 = vmul.f32 %v3622, %v3627
        %v3660 = vmul.f32 %v3623, %v3627
        %v3661 = vld [vmem:[%s488] sm:$0x1]
        %v3663 = vperm.slane %v3661, 0
        %v3665 = vadd.f32 %v3629, %v3663
        %v3666 = vadd.f32 %v3630, %v3663
        %v3667 = vadd.f32 %v3631, %v3663
        %v3668 = vadd.f32 %v3632, %v3663
        %v3669 = vadd.f32 %v3633, %v3663
        %v3670 = vadd.f32 %v3634, %v3663
        %v3671 = vadd.f32 %v3635, %v3663
        %v3672 = vadd.f32 %v3636, %v3663
        %v3673 = vadd.f32 %v3637, %v3663
        %v3674 = vadd.f32 %v3638, %v3663
        %v3675 = vadd.f32 %v3639, %v3663
        %v3676 = vadd.f32 %v3640, %v3663
        %v3677 = vadd.f32 %v3641, %v3663
        %v3678 = vadd.f32 %v3642, %v3663
        %v3679 = vadd.f32 %v3643, %v3663
        %v3680 = vadd.f32 %v3644, %v3663
        %v3681 = vadd.f32 %v3645, %v3663
        %v3682 = vadd.f32 %v3646, %v3663
        %v3683 = vadd.f32 %v3647, %v3663
        %v3684 = vadd.f32 %v3648, %v3663
        %v3685 = vadd.f32 %v3649, %v3663
        %v3686 = vadd.f32 %v3650, %v3663
        %v3687 = vadd.f32 %v3651, %v3663
        %v3688 = vadd.f32 %v3652, %v3663
        %v3689 = vadd.f32 %v3653, %v3663
        %v3690 = vadd.f32 %v3654, %v3663
        %v3691 = vadd.f32 %v3655, %v3663
        %v3692 = vadd.f32 %v3656, %v3663
        %v3693 = vadd.f32 %v3657, %v3663
        %v3694 = vadd.f32 %v3658, %v3663
        %v3695 = vadd.f32 %v3659, %v3663
        %v3696 = vadd.f32 %v3660, %v3663
        %v3697 = vsub.f32 0.0, %v3665
        %v3698 = vsub.f32 0.0, %v3666
        %v3699 = vsub.f32 0.0, %v3667
        %v3700 = vsub.f32 0.0, %v3668
        %v3701 = vsub.f32 0.0, %v3669
        %v3702 = vsub.f32 0.0, %v3670
        %v3703 = vsub.f32 0.0, %v3671
        %v3704 = vsub.f32 0.0, %v3672
        %v3705 = vsub.f32 0.0, %v3673
        %v3706 = vsub.f32 0.0, %v3674
        %v3707 = vsub.f32 0.0, %v3675
        %v3708 = vsub.f32 0.0, %v3676
        %v3709 = vsub.f32 0.0, %v3677
        %v3710 = vsub.f32 0.0, %v3678
        %v3711 = vsub.f32 0.0, %v3679
        %v3712 = vsub.f32 0.0, %v3680
        %v3713 = vsub.f32 0.0, %v3681
        %v3714 = vsub.f32 0.0, %v3682
        %v3715 = vsub.f32 0.0, %v3683
        %v3716 = vsub.f32 0.0, %v3684
        %v3717 = vsub.f32 0.0, %v3685
        %v3718 = vsub.f32 0.0, %v3686
        %v3719 = vsub.f32 0.0, %v3687
        %v3720 = vsub.f32 0.0, %v3688
        %v3721 = vsub.f32 0.0, %v3689
        %v3722 = vsub.f32 0.0, %v3690
        %v3723 = vsub.f32 0.0, %v3691
        %v3724 = vsub.f32 0.0, %v3692
        %v3725 = vsub.f32 0.0, %v3693
        %v3726 = vsub.f32 0.0, %v3694
        %v3727 = vsub.f32 0.0, %v3695
        %v3728 = vsub.f32 0.0, %v3696
        %v3729 = vmul.f32 %v3697, 1.442695
        %v3730 = vpow.pop %v3729
        %v3731 = vmul.f32 %v3698, 1.442695
        %v3732 = vpow.pop %v3731
        %v3733 = vmul.f32 %v3699, 1.442695
        %v3734 = vpow.pop %v3733
        %v3735 = vmul.f32 %v3700, 1.442695
        %v3736 = vpow.pop %v3735
        %v3737 = vmul.f32 %v3701, 1.442695
        %v3738 = vpow.pop %v3737
        %v3739 = vmul.f32 %v3702, 1.442695
        %v3740 = vpow.pop %v3739
        %v3741 = vmul.f32 %v3703, 1.442695
        %v3742 = vpow.pop %v3741
        %v3743 = vmul.f32 %v3704, 1.442695
        %v3744 = vpow.pop %v3743
        %v3745 = vmul.f32 %v3705, 1.442695
        %v3746 = vpow.pop %v3745
        %v3747 = vmul.f32 %v3706, 1.442695
        %v3748 = vpow.pop %v3747
        %v3749 = vmul.f32 %v3707, 1.442695
        %v3750 = vpow.pop %v3749
        %v3751 = vmul.f32 %v3708, 1.442695
        %v3752 = vpow.pop %v3751
        %v3753 = vmul.f32 %v3709, 1.442695
        %v3754 = vpow.pop %v3753
        %v3755 = vmul.f32 %v3710, 1.442695
        %v3756 = vpow.pop %v3755
        %v3757 = vmul.f32 %v3711, 1.442695
        %v3758 = vpow.pop %v3757
        %v3759 = vmul.f32 %v3712, 1.442695
        %v3760 = vpow.pop %v3759
        %v3761 = vmul.f32 %v3713, 1.442695
        %v3762 = vpow.pop %v3761
        %v3763 = vmul.f32 %v3714, 1.442695
        %v3764 = vpow.pop %v3763
        %v3765 = vmul.f32 %v3715, 1.442695
        %v3766 = vpow.pop %v3765
        %v3767 = vmul.f32 %v3716, 1.442695
        %v3768 = vpow.pop %v3767
        %v3769 = vmul.f32 %v3717, 1.442695
        %v3770 = vpow.pop %v3769
        %v3771 = vmul.f32 %v3718, 1.442695
        %v3772 = vpow.pop %v3771
        %v3773 = vmul.f32 %v3719, 1.442695
        %v3774 = vpow.pop %v3773
        %v3775 = vmul.f32 %v3720, 1.442695
        %v3776 = vpow.pop %v3775
        %v3777 = vmul.f32 %v3721, 1.442695
        %v3778 = vpow.pop %v3777
        %v3779 = vmul.f32 %v3722, 1.442695
        %v3780 = vpow.pop %v3779
        %v3781 = vmul.f32 %v3723, 1.442695
        %v3782 = vpow.pop %v3781
        %v3783 = vmul.f32 %v3724, 1.442695
        %v3784 = vpow.pop %v3783
        %v3785 = vmul.f32 %v3725, 1.442695
        %v3786 = vpow.pop %v3785
        %v3787 = vmul.f32 %v3726, 1.442695
        %v3788 = vpow.pop %v3787
        %v3789 = vmul.f32 %v3727, 1.442695
        %v3790 = vpow.pop %v3789
        %v3791 = vmul.f32 %v3728, 1.442695
        %v3792 = vpow.pop %v3791
        %v3793 = vadd.f32 %v3730, 1.0
        %v3794 = vadd.f32 %v3732, 1.0
        %v3795 = vadd.f32 %v3734, 1.0
        %v3796 = vadd.f32 %v3736, 1.0
        %v3797 = vadd.f32 %v3738, 1.0
        %v3798 = vadd.f32 %v3740, 1.0
        %v3799 = vadd.f32 %v3742, 1.0
        %v3800 = vadd.f32 %v3744, 1.0
        %v3801 = vadd.f32 %v3746, 1.0
        %v3802 = vadd.f32 %v3748, 1.0
        %v3803 = vadd.f32 %v3750, 1.0
        %v3804 = vadd.f32 %v3752, 1.0
        %v3805 = vadd.f32 %v3754, 1.0
        %v3806 = vadd.f32 %v3756, 1.0
        %v3807 = vadd.f32 %v3758, 1.0
        %v3808 = vadd.f32 %v3760, 1.0
        %v3809 = vadd.f32 %v3762, 1.0
        %v3810 = vadd.f32 %v3764, 1.0
        %v3811 = vadd.f32 %v3766, 1.0
        %v3812 = vadd.f32 %v3768, 1.0
        %v3813 = vadd.f32 %v3770, 1.0
        %v3814 = vadd.f32 %v3772, 1.0
        %v3815 = vadd.f32 %v3774, 1.0
        %v3816 = vadd.f32 %v3776, 1.0
        %v3817 = vadd.f32 %v3778, 1.0
        %v3818 = vadd.f32 %v3780, 1.0
        %v3819 = vadd.f32 %v3782, 1.0
        %v3820 = vadd.f32 %v3784, 1.0
        %v3821 = vadd.f32 %v3786, 1.0
        %v3822 = vadd.f32 %v3788, 1.0
        %v3823 = vadd.f32 %v3790, 1.0
        %v3824 = vadd.f32 %v3792, 1.0
        %v3825 = vrcp.pop %v3793
        %v3826 = vrcp.pop %v3794
        %v3827 = vrcp.pop %v3795
        %v3828 = vrcp.pop %v3796
        %v3829 = vrcp.pop %v3797
        %v3830 = vrcp.pop %v3798
        %v3831 = vrcp.pop %v3799
        %v3832 = vrcp.pop %v3800
        %v3833 = vrcp.pop %v3801
        %v3834 = vrcp.pop %v3802
        %v3835 = vrcp.pop %v3803
        %v3836 = vrcp.pop %v3804
        %v3837 = vrcp.pop %v3805
        %v3838 = vrcp.pop %v3806
        %v3839 = vrcp.pop %v3807
        %v3840 = vrcp.pop %v3808
        %v3841 = vrcp.pop %v3809
        %v3842 = vrcp.pop %v3810
        %v3843 = vrcp.pop %v3811
        %v3844 = vrcp.pop %v3812
        %v3845 = vrcp.pop %v3813
        %v3846 = vrcp.pop %v3814
        %v3847 = vrcp.pop %v3815
        %v3848 = vrcp.pop %v3816
        %v3849 = vrcp.pop %v3817
        %v3850 = vrcp.pop %v3818
        %v3851 = vrcp.pop %v3819
        %v3852 = vrcp.pop %v3820
        %v3853 = vrcp.pop %v3821
        %v3854 = vrcp.pop %v3822
        %v3855 = vrcp.pop %v3823
        %v3856 = vrcp.pop %v3824
        %v3857 = vmul.f32 %v3665, %v3825
        %v3858 = vmul.f32 %v3666, %v3826
        %v3859 = vmul.f32 %v3667, %v3827
        %v3860 = vmul.f32 %v3668, %v3828
        %v3861 = vmul.f32 %v3669, %v3829
        %v3862 = vmul.f32 %v3670, %v3830
        %v3863 = vmul.f32 %v3671, %v3831
        %v3864 = vmul.f32 %v3672, %v3832
        %v3865 = vmul.f32 %v3673, %v3833
        %v3866 = vmul.f32 %v3674, %v3834
        %v3867 = vmul.f32 %v3675, %v3835
        %v3868 = vmul.f32 %v3676, %v3836
        %v3869 = vmul.f32 %v3677, %v3837
        %v3870 = vmul.f32 %v3678, %v3838
        %v3871 = vmul.f32 %v3679, %v3839
        %v3872 = vmul.f32 %v3680, %v3840
        %v3873 = vmul.f32 %v3681, %v3841
        %v3874 = vmul.f32 %v3682, %v3842
        %v3875 = vmul.f32 %v3683, %v3843
        %v3876 = vmul.f32 %v3684, %v3844
        %v3877 = vmul.f32 %v3685, %v3845
        %v3878 = vmul.f32 %v3686, %v3846
        %v3879 = vmul.f32 %v3687, %v3847
        %v3880 = vmul.f32 %v3688, %v3848
        %v3881 = vmul.f32 %v3689, %v3849
        %v3882 = vmul.f32 %v3690, %v3850
        %v3883 = vmul.f32 %v3691, %v3851
        %v3884 = vmul.f32 %v3692, %v3852
        %v3885 = vmul.f32 %v3693, %v3853
        %v3886 = vmul.f32 %v3694, %v3854
        %v3887 = vmul.f32 %v3695, %v3855
        %v3888 = vmul.f32 %v3696, %v3856
        %vm3889 = vcmask 257024
        %3890 = vst.msk [vmem:[#allocation2] sm:$0xf] %vm3889, 0
        %3891 = vst.msk [vmem:[#allocation2 + $0x4] sm:$0xf] %vm3889, 0
        %3892 = vst.msk [vmem:[#allocation2 + $0x8] sm:$0xf] %vm3889, 0
        %3893 = vst.msk [vmem:[#allocation2 + $0xc] sm:$0xf] %vm3889, 0
        %3894 = vst.msk [vmem:[#allocation2 + $0x10] sm:$0xf] %vm3889, 0
        %3895 = vst.msk [vmem:[#allocation2 + $0x14] sm:$0xf] %vm3889, 0
        %3896 = vst.msk [vmem:[#allocation2 + $0x18] sm:$0xf] %vm3889, 0
        %3897 = vst.msk [vmem:[#allocation2 + $0x1c] sm:$0xf] %vm3889, 0
        %3898 = vst.msk [vmem:[#allocation2 + $0x20] sm:$0xf] %vm3889, 0
        %3899 = vst.msk [vmem:[#allocation2 + $0x24] sm:$0xf] %vm3889, 0
        %3900 = vst.msk [vmem:[#allocation2 + $0x28] sm:$0xf] %vm3889, 0
        %3901 = vst.msk [vmem:[#allocation2 + $0x2c] sm:$0xf] %vm3889, 0
        %3902 = vst.msk [vmem:[#allocation2 + $0x30] sm:$0xf] %vm3889, 0
        %3903 = vst.msk [vmem:[#allocation2 + $0x34] sm:$0xf] %vm3889, 0
        %3904 = vst.msk [vmem:[#allocation2 + $0x38] sm:$0xf] %vm3889, 0
        %3905 = vst.msk [vmem:[#allocation2 + $0x3c] sm:$0xf] %vm3889, 0
        %3906 = vst.msk [vmem:[#allocation2 + $0x40] sm:$0xf] %vm3889, 0
        %3907 = vst.msk [vmem:[#allocation2 + $0x44] sm:$0xf] %vm3889, 0
        %3908 = vst.msk [vmem:[#allocation2 + $0x48] sm:$0xf] %vm3889, 0
        %3909 = vst.msk [vmem:[#allocation2 + $0x4c] sm:$0xf] %vm3889, 0
        %3910 = vst.msk [vmem:[#allocation2 + $0x50] sm:$0xf] %vm3889, 0
        %3911 = vst.msk [vmem:[#allocation2 + $0x54] sm:$0xf] %vm3889, 0
        %3912 = vst.msk [vmem:[#allocation2 + $0x58] sm:$0xf] %vm3889, 0
        %3913 = vst.msk [vmem:[#allocation2 + $0x5c] sm:$0xf] %vm3889, 0
        %3914 = vst.msk [vmem:[#allocation2 + $0x60] sm:$0xf] %vm3889, 0
        %3915 = vst.msk [vmem:[#allocation2 + $0x64] sm:$0xf] %vm3889, 0
        %3916 = vst.msk [vmem:[#allocation2 + $0x68] sm:$0xf] %vm3889, 0
        %3917 = vst.msk [vmem:[#allocation2 + $0x6c] sm:$0xf] %vm3889, 0
        %3918 = vst.msk [vmem:[#allocation2 + $0x70] sm:$0xf] %vm3889, 0
        %3919 = vst.msk [vmem:[#allocation2 + $0x74] sm:$0xf] %vm3889, 0
        %3920 = vst.msk [vmem:[#allocation2 + $0x78] sm:$0xf] %vm3889, 0
        %3921 = vst.msk [vmem:[#allocation2 + $0x7c] sm:$0xf] %vm3889, 0
        %3922 = vst.msk [vmem:[#allocation2 + $0x80] sm:$0xf] %vm3889, 0
        %3923 = vst.msk [vmem:[#allocation2 + $0x84] sm:$0xf] %vm3889, 0
        %3924 = vst.msk [vmem:[#allocation2 + $0x88] sm:$0xf] %vm3889, 0
        %3925 = vst.msk [vmem:[#allocation2 + $0x8c] sm:$0xf] %vm3889, 0
        %3926 = vst.msk [vmem:[#allocation2 + $0x90] sm:$0xf] %vm3889, 0
        %3927 = vst.msk [vmem:[#allocation2 + $0x94] sm:$0xf] %vm3889, 0
        %v3928 = vpack.c.bf16 %v3857, %v3857
        %v3929 = vpack.c.bf16 %v3858, %v3858
        %v3930 = vpack.c.bf16 %v3859, %v3859
        %v3931 = vpack.c.bf16 %v3860, %v3860
        %v3932 = vpack.c.bf16 %v3861, %v3861
        %v3933 = vpack.c.bf16 %v3862, %v3862
        %v3934 = vpack.c.bf16 %v3863, %v3863
        %v3935 = vpack.c.bf16 %v3864, %v3864
        %v3936 = vpack.c.bf16 %v3865, %v3865
        %v3937 = vpack.c.bf16 %v3866, %v3866
        %v3938 = vpack.c.bf16 %v3867, %v3867
        %v3939 = vpack.c.bf16 %v3868, %v3868
        %v3940 = vpack.c.bf16 %v3869, %v3869
        %v3941 = vpack.c.bf16 %v3870, %v3870
        %v3942 = vpack.c.bf16 %v3871, %v3871
        %v3943 = vpack.c.bf16 %v3872, %v3872
        %v3944 = vpack.c.bf16 %v3873, %v3873
        %v3945 = vpack.c.bf16 %v3874, %v3874
        %v3946 = vpack.c.bf16 %v3875, %v3875
        %v3947 = vpack.c.bf16 %v3876, %v3876
        %v3948 = vpack.c.bf16 %v3877, %v3877
        %v3949 = vpack.c.bf16 %v3878, %v3878
        %v3950 = vpack.c.bf16 %v3879, %v3879
        %v3951 = vpack.c.bf16 %v3880, %v3880
        %v3952 = vpack.c.bf16 %v3881, %v3881
        %v3953 = vpack.c.bf16 %v3882, %v3882
        %v3954 = vpack.c.bf16 %v3883, %v3883
        %v3955 = vpack.c.bf16 %v3884, %v3884
        %v3956 = vpack.c.bf16 %v3885, %v3885
        %v3957 = vpack.c.bf16 %v3886, %v3886
        %v3958 = vpack.c.bf16 %v3887, %v3887
        %v3959 = vpack.c.bf16 %v3888, %v3888
        %3960 = vst.msk [vmem:[#allocation2 + $0xc] sm:$0xf] %vm3889, %v3928
        %3961 = vst.msk [vmem:[#allocation2 + $0x10] sm:$0xf] %vm3889, %v3929
        %3962 = vst.msk [vmem:[#allocation2 + $0x14] sm:$0xf] %vm3889, %v3930
        %3963 = vst.msk [vmem:[#allocation2 + $0x18] sm:$0xf] %vm3889, %v3931
        %3964 = vst.msk [vmem:[#allocation2 + $0x1c] sm:$0xf] %vm3889, %v3932
        %3965 = vst.msk [vmem:[#allocation2 + $0x20] sm:$0xf] %vm3889, %v3933
        %3966 = vst.msk [vmem:[#allocation2 + $0x24] sm:$0xf] %vm3889, %v3934
        %3967 = vst.msk [vmem:[#allocation2 + $0x28] sm:$0xf] %vm3889, %v3935
        %3968 = vst.msk [vmem:[#allocation2 + $0x2c] sm:$0xf] %vm3889, %v3936
        %3969 = vst.msk [vmem:[#allocation2 + $0x30] sm:$0xf] %vm3889, %v3937
        %3970 = vst.msk [vmem:[#allocation2 + $0x34] sm:$0xf] %vm3889, %v3938
        %3971 = vst.msk [vmem:[#allocation2 + $0x38] sm:$0xf] %vm3889, %v3939
        %3972 = vst.msk [vmem:[#allocation2 + $0x3c] sm:$0xf] %vm3889, %v3940
        %3973 = vst.msk [vmem:[#allocation2 + $0x40] sm:$0xf] %vm3889, %v3941
        %3974 = vst.msk [vmem:[#allocation2 + $0x44] sm:$0xf] %vm3889, %v3942
        %3975 = vst.msk [vmem:[#allocation2 + $0x48] sm:$0xf] %vm3889, %v3943
        %3976 = vst.msk [vmem:[#allocation2 + $0x4c] sm:$0xf] %vm3889, %v3944
        %3977 = vst.msk [vmem:[#allocation2 + $0x50] sm:$0xf] %vm3889, %v3945
        %3978 = vst.msk [vmem:[#allocation2 + $0x54] sm:$0xf] %vm3889, %v3946
        %3979 = vst.msk [vmem:[#allocation2 + $0x58] sm:$0xf] %vm3889, %v3947
        %3980 = vst.msk [vmem:[#allocation2 + $0x5c] sm:$0xf] %vm3889, %v3948
        %3981 = vst.msk [vmem:[#allocation2 + $0x60] sm:$0xf] %vm3889, %v3949
        %3982 = vst.msk [vmem:[#allocation2 + $0x64] sm:$0xf] %vm3889, %v3950
        %3983 = vst.msk [vmem:[#allocation2 + $0x68] sm:$0xf] %vm3889, %v3951
        %3984 = vst.msk [vmem:[#allocation2 + $0x6c] sm:$0xf] %vm3889, %v3952
        %3985 = vst.msk [vmem:[#allocation2 + $0x70] sm:$0xf] %vm3889, %v3953
        %3986 = vst.msk [vmem:[#allocation2 + $0x74] sm:$0xf] %vm3889, %v3954
        %3987 = vst.msk [vmem:[#allocation2 + $0x78] sm:$0xf] %vm3889, %v3955
        %3988 = vst.msk [vmem:[#allocation2 + $0x7c] sm:$0xf] %vm3889, %v3956
        %3989 = vst.msk [vmem:[#allocation2 + $0x80] sm:$0xf] %vm3889, %v3957
        %3990 = vst.msk [vmem:[#allocation2 + $0x84] sm:$0xf] %vm3889, %v3958
        %3991 = vst.msk [vmem:[#allocation2 + $0x88] sm:$0xf] %vm3889, %v3959
        %v3992 = vld [vmem:[#allocation2] sm:$0x8]
        %v3993 = vld [vmem:[#allocation2 + $0x4] sm:$0xf]
        %v3994 = vld [vmem:[#allocation2 + $0x8] sm:$0xf]
        %v3995 = vld [vmem:[#allocation2 + $0xc] sm:$0xf]
        %v3996 = vld [vmem:[#allocation2 + $0x10] sm:$0xf]
        %v3997 = vld [vmem:[#allocation2 + $0x14] sm:$0xf]
        %v3998 = vld [vmem:[#allocation2 + $0x18] sm:$0xf]
        %v3999 = vld [vmem:[#allocation2 + $0x1c] sm:$0xf]
        %v4000 = vld [vmem:[#allocation2 + $0x20] sm:$0xf]
        %v4001 = vld [vmem:[#allocation2 + $0x24] sm:$0xf]
        %v4002 = vld [vmem:[#allocation2 + $0x28] sm:$0xf]
        %v4003 = vld [vmem:[#allocation2 + $0x2c] sm:$0xf]
        %v4004 = vld [vmem:[#allocation2 + $0x30] sm:$0xf]
        %v4005 = vld [vmem:[#allocation2 + $0x34] sm:$0xf]
        %v4006 = vld [vmem:[#allocation2 + $0x38] sm:$0xf]
        %v4007 = vld [vmem:[#allocation2 + $0x3c] sm:$0xf]
        %v4008 = vld [vmem:[#allocation2 + $0x40] sm:$0xf]
        %v4009 = vld [vmem:[#allocation2 + $0x44] sm:$0xf]
        %v4010 = vld [vmem:[#allocation2 + $0x48] sm:$0xf]
        %v4011 = vld [vmem:[#allocation2 + $0x4c] sm:$0xf]
        %v4012 = vld [vmem:[#allocation2 + $0x50] sm:$0xf]
        %v4013 = vld [vmem:[#allocation2 + $0x54] sm:$0xf]
        %v4014 = vld [vmem:[#allocation2 + $0x58] sm:$0xf]
        %v4015 = vld [vmem:[#allocation2 + $0x5c] sm:$0xf]
        %v4016 = vld [vmem:[#allocation2 + $0x60] sm:$0xf]
        %v4017 = vld [vmem:[#allocation2 + $0x64] sm:$0xf]
        %v4018 = vld [vmem:[#allocation2 + $0x68] sm:$0xf]
        %v4019 = vld [vmem:[#allocation2 + $0x6c] sm:$0xf]
        %v4020 = vld [vmem:[#allocation2 + $0x70] sm:$0xf]
        %v4021 = vld [vmem:[#allocation2 + $0x74] sm:$0xf]
        %v4022 = vld [vmem:[#allocation2 + $0x78] sm:$0xf]
        %v4023 = vld [vmem:[#allocation2 + $0x7c] sm:$0xf]
        %v4024 = vld [vmem:[#allocation2 + $0x80] sm:$0xf]
        %vm4025 = vmpackc.low %vm1043, %vm1043
        %vm4026 = vmpackc.low %vm1044, %vm1044
        %vm4027 = vmpackc.low %vm1045, %vm1045
        %vm4028 = vmpackc.low %vm1046, %vm1046
        %vm4029 = vmpackc.low %vm1047, %vm1047
        %vm4030 = vmpackc.low %vm1048, %vm1048
        %vm4031 = vmpackc.low %vm1049, %vm1049
        %vm4032 = vmpackc.low %vm1050, %vm1050
        %vm4033 = vmpackc.low %vm1051, %vm1051
        %vm4034 = vmpackc.low %vm1052, %vm1052
        %vm4035 = vmpackc.low %vm1053, %vm1053
        %vm4036 = vmpackc.low %vm1054, %vm1054
        %vm4037 = vmpackc.low %vm1055, %vm1055
        %vm4038 = vmpackc.low %vm1056, %vm1056
        %vm4039 = vmpackc.low %vm1057, %vm1057
        %vm4040 = vmpackc.low %vm1058, %vm1058
        %vm4041 = vmpackc.low %vm1059, %vm1059
        %vm4042 = vmpackc.low %vm1060, %vm1060
        %vm4043 = vmpackc.low %vm1061, %vm1061
        %vm4044 = vmpackc.low %vm1062, %vm1062
        %vm4045 = vmpackc.low %vm1063, %vm1063
        %vm4046 = vmpackc.low %vm1064, %vm1064
        %vm4047 = vmpackc.low %vm1065, %vm1065
        %vm4048 = vmpackc.low %vm1066, %vm1066
        %vm4049 = vmpackc.low %vm1067, %vm1067
        %vm4050 = vmpackc.low %vm1068, %vm1068
        %vm4051 = vmpackc.low %vm1069, %vm1069
        %vm4052 = vmpackc.low %vm1070, %vm1070
        %vm4053 = vmpackc.low %vm1071, %vm1071
        %vm4054 = vmpackc.low %vm1072, %vm1072
        %vm4055 = vmpackc.low %vm1073, %vm1073
        %vm4056 = vmpackc.low %vm1074, %vm1074
        %v4057 = vsel %vm4025, 65537, 0
        %v4058 = vsel %vm4026, 65537, 0
        %v4059 = vsel %vm4027, 65537, 0
        %v4060 = vsel %vm4028, 65537, 0
        %v4061 = vsel %vm4029, 65537, 0
        %v4062 = vsel %vm4030, 65537, 0
        %v4063 = vsel %vm4031, 65537, 0
        %v4064 = vsel %vm4032, 65537, 0
        %v4065 = vsel %vm4033, 65537, 0
        %v4066 = vsel %vm4034, 65537, 0
        %v4067 = vsel %vm4035, 65537, 0
        %v4068 = vsel %vm4036, 65537, 0
        %v4069 = vsel %vm4037, 65537, 0
        %v4070 = vsel %vm4038, 65537, 0
        %v4071 = vsel %vm4039, 65537, 0
        %v4072 = vsel %vm4040, 65537, 0
        %v4073 = vsel %vm4041, 65537, 0
        %v4074 = vsel %vm4042, 65537, 0
        %v4075 = vsel %vm4043, 65537, 0
        %v4076 = vsel %vm4044, 65537, 0
        %v4077 = vsel %vm4045, 65537, 0
        %v4078 = vsel %vm4046, 65537, 0
        %v4079 = vsel %vm4047, 65537, 0
        %v4080 = vsel %vm4048, 65537, 0
        %v4081 = vsel %vm4049, 65537, 0
        %v4082 = vsel %vm4050, 65537, 0
        %v4083 = vsel %vm4051, 65537, 0
        %v4084 = vsel %vm4052, 65537, 0
        %v4085 = vsel %vm4053, 65537, 0
        %v4086 = vsel %vm4054, 65537, 0
        %v4087 = vsel %vm4055, 65537, 0
        %v4088 = vsel %vm4056, 65537, 0
        %vm4089 = vsmask.f32 3328
        %vm4090 = vsmask.f32 7440
        %vm4091 = vmor %vm4089, %vm4090
        %v4093 = vshll.u32 %v4057, 16
        %v4095 = vrot.slane %v4093, 5
        %v4096 = vshrl.u32 %v4057, 16
        %v4098 = vrot.slane %v4096, 4
        %v4099 = vor.u32 %v4098, %v4095
        %v4100 = vrot.slane %v4099, 4
        %v4102 = vshll.u32 %v4058, 16
        %v4104 = vrot.slane %v4102, 5
        %v4105 = vsel %vm4091, %v4100, %v4104
        %v4106 = vshrl.u32 %v4058, 16
        %v4108 = vrot.slane %v4106, 4
        %v4109 = vor.u32 %v4108, %v4104
        %v4110 = vrot.slane %v4109, 4
        %v4112 = vshll.u32 %v4059, 16
        %v4114 = vrot.slane %v4112, 5
        %v4115 = vsel %vm4091, %v4110, %v4114
        %v4116 = vshrl.u32 %v4059, 16
        %v4118 = vrot.slane %v4116, 4
        %v4119 = vor.u32 %v4118, %v4114
        %v4120 = vrot.slane %v4119, 4
        %v4122 = vshll.u32 %v4060, 16
        %v4124 = vrot.slane %v4122, 5
        %v4125 = vsel %vm4091, %v4120, %v4124
        %v4126 = vshrl.u32 %v4060, 16
        %v4128 = vrot.slane %v4126, 4
        %v4129 = vor.u32 %v4128, %v4124
        %v4130 = vrot.slane %v4129, 4
        %v4132 = vshll.u32 %v4061, 16
        %v4134 = vrot.slane %v4132, 5
        %v4135 = vsel %vm4091, %v4130, %v4134
        %v4136 = vshrl.u32 %v4061, 16
        %v4138 = vrot.slane %v4136, 4
        %v4139 = vor.u32 %v4138, %v4134
        %v4140 = vrot.slane %v4139, 4
        %v4142 = vshll.u32 %v4062, 16
        %v4144 = vrot.slane %v4142, 5
        %v4145 = vsel %vm4091, %v4140, %v4144
        %v4146 = vshrl.u32 %v4062, 16
        %v4148 = vrot.slane %v4146, 4
        %v4149 = vor.u32 %v4148, %v4144
        %v4150 = vrot.slane %v4149, 4
        %v4152 = vshll.u32 %v4063, 16
        %v4154 = vrot.slane %v4152, 5
        %v4155 = vsel %vm4091, %v4150, %v4154
        %v4156 = vshrl.u32 %v4063, 16
        %v4158 = vrot.slane %v4156, 4
        %v4159 = vor.u32 %v4158, %v4154
        %v4160 = vrot.slane %v4159, 4
        %v4162 = vshll.u32 %v4064, 16
        %v4164 = vrot.slane %v4162, 5
        %v4165 = vsel %vm4091, %v4160, %v4164
        %v4166 = vshrl.u32 %v4064, 16
        %v4168 = vrot.slane %v4166, 4
        %v4169 = vor.u32 %v4168, %v4164
        %v4170 = vrot.slane %v4169, 4
        %v4172 = vshll.u32 %v4065, 16
        %v4174 = vrot.slane %v4172, 5
        %v4175 = vsel %vm4091, %v4170, %v4174
        %v4176 = vshrl.u32 %v4065, 16
        %v4178 = vrot.slane %v4176, 4
        %v4179 = vor.u32 %v4178, %v4174
        %v4180 = vrot.slane %v4179, 4
        %v4182 = vshll.u32 %v4066, 16
        %v4184 = vrot.slane %v4182, 5
        %v4185 = vsel %vm4091, %v4180, %v4184
        %v4186 = vshrl.u32 %v4066, 16
        %v4188 = vrot.slane %v4186, 4
        %v4189 = vor.u32 %v4188, %v4184
        %v4190 = vrot.slane %v4189, 4
        %v4192 = vshll.u32 %v4067, 16
        %v4194 = vrot.slane %v4192, 5
        %v4195 = vsel %vm4091, %v4190, %v4194
        %v4196 = vshrl.u32 %v4067, 16
        %v4198 = vrot.slane %v4196, 4
        %v4199 = vor.u32 %v4198, %v4194
        %v4200 = vrot.slane %v4199, 4
        %v4202 = vshll.u32 %v4068, 16
        %v4204 = vrot.slane %v4202, 5
        %v4205 = vsel %vm4091, %v4200, %v4204
        %v4206 = vshrl.u32 %v4068, 16
        %v4208 = vrot.slane %v4206, 4
        %v4209 = vor.u32 %v4208, %v4204
        %v4210 = vrot.slane %v4209, 4
        %v4212 = vshll.u32 %v4069, 16
        %v4214 = vrot.slane %v4212, 5
        %v4215 = vsel %vm4091, %v4210, %v4214
        %v4216 = vshrl.u32 %v4069, 16
        %v4218 = vrot.slane %v4216, 4
        %v4219 = vor.u32 %v4218, %v4214
        %v4220 = vrot.slane %v4219, 4
        %v4222 = vshll.u32 %v4070, 16
        %v4224 = vrot.slane %v4222, 5
        %v4225 = vsel %vm4091, %v4220, %v4224
        %v4226 = vshrl.u32 %v4070, 16
        %v4228 = vrot.slane %v4226, 4
        %v4229 = vor.u32 %v4228, %v4224
        %v4230 = vrot.slane %v4229, 4
        %v4232 = vshll.u32 %v4071, 16
        %v4234 = vrot.slane %v4232, 5
        %v4235 = vsel %vm4091, %v4230, %v4234
        %v4236 = vshrl.u32 %v4071, 16
        %v4238 = vrot.slane %v4236, 4
        %v4239 = vor.u32 %v4238, %v4234
        %v4240 = vrot.slane %v4239, 4
        %v4242 = vshll.u32 %v4072, 16
        %v4244 = vrot.slane %v4242, 5
        %v4245 = vsel %vm4091, %v4240, %v4244
        %v4246 = vshrl.u32 %v4072, 16
        %v4248 = vrot.slane %v4246, 4
        %v4249 = vor.u32 %v4248, %v4244
        %v4250 = vrot.slane %v4249, 4
        %v4252 = vshll.u32 %v4073, 16
        %v4254 = vrot.slane %v4252, 5
        %v4255 = vsel %vm4091, %v4250, %v4254
        %v4256 = vshrl.u32 %v4073, 16
        %v4258 = vrot.slane %v4256, 4
        %v4259 = vor.u32 %v4258, %v4254
        %v4260 = vrot.slane %v4259, 4
        %v4262 = vshll.u32 %v4074, 16
        %v4264 = vrot.slane %v4262, 5
        %v4265 = vsel %vm4091, %v4260, %v4264
        %v4266 = vshrl.u32 %v4074, 16
        %v4268 = vrot.slane %v4266, 4
        %v4269 = vor.u32 %v4268, %v4264
        %v4270 = vrot.slane %v4269, 4
        %v4272 = vshll.u32 %v4075, 16
        %v4274 = vrot.slane %v4272, 5
        %v4275 = vsel %vm4091, %v4270, %v4274
        %v4276 = vshrl.u32 %v4075, 16
        %v4278 = vrot.slane %v4276, 4
        %v4279 = vor.u32 %v4278, %v4274
        %v4280 = vrot.slane %v4279, 4
        %v4282 = vshll.u32 %v4076, 16
        %v4284 = vrot.slane %v4282, 5
        %v4285 = vsel %vm4091, %v4280, %v4284
        %v4286 = vshrl.u32 %v4076, 16
        %v4288 = vrot.slane %v4286, 4
        %v4289 = vor.u32 %v4288, %v4284
        %v4290 = vrot.slane %v4289, 4
        %v4292 = vshll.u32 %v4077, 16
        %v4294 = vrot.slane %v4292, 5
        %v4295 = vsel %vm4091, %v4290, %v4294
        %v4296 = vshrl.u32 %v4077, 16
        %v4298 = vrot.slane %v4296, 4
        %v4299 = vor.u32 %v4298, %v4294
        %v4300 = vrot.slane %v4299, 4
        %v4302 = vshll.u32 %v4078, 16
        %v4304 = vrot.slane %v4302, 5
        %v4305 = vsel %vm4091, %v4300, %v4304
        %v4306 = vshrl.u32 %v4078, 16
        %v4308 = vrot.slane %v4306, 4
        %v4309 = vor.u32 %v4308, %v4304
        %v4310 = vrot.slane %v4309, 4
        %v4312 = vshll.u32 %v4079, 16
        %v4314 = vrot.slane %v4312, 5
        %v4315 = vsel %vm4091, %v4310, %v4314
        %v4316 = vshrl.u32 %v4079, 16
        %v4318 = vrot.slane %v4316, 4
        %v4319 = vor.u32 %v4318, %v4314
        %v4320 = vrot.slane %v4319, 4
        %v4322 = vshll.u32 %v4080, 16
        %v4324 = vrot.slane %v4322, 5
        %v4325 = vsel %vm4091, %v4320, %v4324
        %v4326 = vshrl.u32 %v4080, 16
        %v4328 = vrot.slane %v4326, 4
        %v4329 = vor.u32 %v4328, %v4324
        %v4330 = vrot.slane %v4329, 4
        %v4332 = vshll.u32 %v4081, 16
        %v4334 = vrot.slane %v4332, 5
        %v4335 = vsel %vm4091, %v4330, %v4334
        %v4336 = vshrl.u32 %v4081, 16
        %v4338 = vrot.slane %v4336, 4
        %v4339 = vor.u32 %v4338, %v4334
        %v4340 = vrot.slane %v4339, 4
        %v4342 = vshll.u32 %v4082, 16
        %v4344 = vrot.slane %v4342, 5
        %v4345 = vsel %vm4091, %v4340, %v4344
        %v4346 = vshrl.u32 %v4082, 16
        %v4348 = vrot.slane %v4346, 4
        %v4349 = vor.u32 %v4348, %v4344
        %v4350 = vrot.slane %v4349, 4
        %v4352 = vshll.u32 %v4083, 16
        %v4354 = vrot.slane %v4352, 5
        %v4355 = vsel %vm4091, %v4350, %v4354
        %v4356 = vshrl.u32 %v4083, 16
        %v4358 = vrot.slane %v4356, 4
        %v4359 = vor.u32 %v4358, %v4354
        %v4360 = vrot.slane %v4359, 4
        %v4362 = vshll.u32 %v4084, 16
        %v4364 = vrot.slane %v4362, 5
        %v4365 = vsel %vm4091, %v4360, %v4364
        %v4366 = vshrl.u32 %v4084, 16
        %v4368 = vrot.slane %v4366, 4
        %v4369 = vor.u32 %v4368, %v4364
        %v4370 = vrot.slane %v4369, 4
        %v4372 = vshll.u32 %v4085, 16
        %v4374 = vrot.slane %v4372, 5
        %v4375 = vsel %vm4091, %v4370, %v4374
        %v4376 = vshrl.u32 %v4085, 16
        %v4378 = vrot.slane %v4376, 4
        %v4379 = vor.u32 %v4378, %v4374
        %v4380 = vrot.slane %v4379, 4
        %v4382 = vshll.u32 %v4086, 16
        %v4384 = vrot.slane %v4382, 5
        %v4385 = vsel %vm4091, %v4380, %v4384
        %v4386 = vshrl.u32 %v4086, 16
        %v4388 = vrot.slane %v4386, 4
        %v4389 = vor.u32 %v4388, %v4384
        %v4390 = vrot.slane %v4389, 4
        %v4392 = vshll.u32 %v4087, 16
        %v4394 = vrot.slane %v4392, 5
        %v4395 = vsel %vm4091, %v4390, %v4394
        %v4396 = vshrl.u32 %v4087, 16
        %v4398 = vrot.slane %v4396, 4
        %v4399 = vor.u32 %v4398, %v4394
        %v4400 = vrot.slane %v4399, 4
        %v4402 = vshll.u32 %v4088, 16
        %v4404 = vrot.slane %v4402, 5
        %v4405 = vsel %vm4091, %v4400, %v4404
        %v4406 = vshrl.u32 %v4088, 16
        %v4408 = vrot.slane %v4406, 4
        %v4409 = vor.u32 %v4408, %v4404
        %v4410 = vrot.slane %v4409, 4
        %v4411 = vunpack.c.l.b16 %v4095
        %v4412 = vunpack.c.h.b16 %v4095
        %v4413 = vunpack.c.l.b16 0
        %v4414 = vunpack.c.h.b16 0
        %vm4415 = vcmp.ne.s32.totalorder %v4411, %v4413
        %vm4416 = vcmp.ne.s32.totalorder %v4412, %v4414
        %vm4417 = vmpackc.low %vm4416, %vm4415
        %v4418 = vunpack.c.l.b16 %v4105
        %v4419 = vunpack.c.h.b16 %v4105
        %v4420 = vunpack.c.l.b16 0
        %v4421 = vunpack.c.h.b16 0
        %vm4422 = vcmp.ne.s32.totalorder %v4418, %v4420
        %vm4423 = vcmp.ne.s32.totalorder %v4419, %v4421
        %vm4424 = vmpackc.low %vm4423, %vm4422
        %v4425 = vunpack.c.l.b16 %v4115
        %v4426 = vunpack.c.h.b16 %v4115
        %v4427 = vunpack.c.l.b16 0
        %v4428 = vunpack.c.h.b16 0
        %vm4429 = vcmp.ne.s32.totalorder %v4425, %v4427
        %vm4430 = vcmp.ne.s32.totalorder %v4426, %v4428
        %vm4431 = vmpackc.low %vm4430, %vm4429
        %v4432 = vunpack.c.l.b16 %v4125
        %v4433 = vunpack.c.h.b16 %v4125
        %v4434 = vunpack.c.l.b16 0
        %v4435 = vunpack.c.h.b16 0
        %vm4436 = vcmp.ne.s32.totalorder %v4432, %v4434
        %vm4437 = vcmp.ne.s32.totalorder %v4433, %v4435
        %vm4438 = vmpackc.low %vm4437, %vm4436
        %v4439 = vunpack.c.l.b16 %v4135
        %v4440 = vunpack.c.h.b16 %v4135
        %v4441 = vunpack.c.l.b16 0
        %v4442 = vunpack.c.h.b16 0
        %vm4443 = vcmp.ne.s32.totalorder %v4439, %v4441
        %vm4444 = vcmp.ne.s32.totalorder %v4440, %v4442
        %vm4445 = vmpackc.low %vm4444, %vm4443
        %v4446 = vunpack.c.l.b16 %v4145
        %v4447 = vunpack.c.h.b16 %v4145
        %v4448 = vunpack.c.l.b16 0
        %v4449 = vunpack.c.h.b16 0
        %vm4450 = vcmp.ne.s32.totalorder %v4446, %v4448
        %vm4451 = vcmp.ne.s32.totalorder %v4447, %v4449
        %vm4452 = vmpackc.low %vm4451, %vm4450
        %v4453 = vunpack.c.l.b16 %v4155
        %v4454 = vunpack.c.h.b16 %v4155
        %v4455 = vunpack.c.l.b16 0
        %v4456 = vunpack.c.h.b16 0
        %vm4457 = vcmp.ne.s32.totalorder %v4453, %v4455
        %vm4458 = vcmp.ne.s32.totalorder %v4454, %v4456
        %vm4459 = vmpackc.low %vm4458, %vm4457
        %v4460 = vunpack.c.l.b16 %v4165
        %v4461 = vunpack.c.h.b16 %v4165
        %v4462 = vunpack.c.l.b16 0
        %v4463 = vunpack.c.h.b16 0
        %vm4464 = vcmp.ne.s32.totalorder %v4460, %v4462
        %vm4465 = vcmp.ne.s32.totalorder %v4461, %v4463
        %vm4466 = vmpackc.low %vm4465, %vm4464
        %v4467 = vunpack.c.l.b16 %v4175
        %v4468 = vunpack.c.h.b16 %v4175
        %v4469 = vunpack.c.l.b16 0
        %v4470 = vunpack.c.h.b16 0
        %vm4471 = vcmp.ne.s32.totalorder %v4467, %v4469
        %vm4472 = vcmp.ne.s32.totalorder %v4468, %v4470
        %vm4473 = vmpackc.low %vm4472, %vm4471
        %v4474 = vunpack.c.l.b16 %v4185
        %v4475 = vunpack.c.h.b16 %v4185
        %v4476 = vunpack.c.l.b16 0
        %v4477 = vunpack.c.h.b16 0
        %vm4478 = vcmp.ne.s32.totalorder %v4474, %v4476
        %vm4479 = vcmp.ne.s32.totalorder %v4475, %v4477
        %vm4480 = vmpackc.low %vm4479, %vm4478
        %v4481 = vunpack.c.l.b16 %v4195
        %v4482 = vunpack.c.h.b16 %v4195
        %v4483 = vunpack.c.l.b16 0
        %v4484 = vunpack.c.h.b16 0
        %vm4485 = vcmp.ne.s32.totalorder %v4481, %v4483
        %vm4486 = vcmp.ne.s32.totalorder %v4482, %v4484
        %vm4487 = vmpackc.low %vm4486, %vm4485
        %v4488 = vunpack.c.l.b16 %v4205
        %v4489 = vunpack.c.h.b16 %v4205
        %v4490 = vunpack.c.l.b16 0
        %v4491 = vunpack.c.h.b16 0
        %vm4492 = vcmp.ne.s32.totalorder %v4488, %v4490
        %vm4493 = vcmp.ne.s32.totalorder %v4489, %v4491
        %vm4494 = vmpackc.low %vm4493, %vm4492
        %v4495 = vunpack.c.l.b16 %v4215
        %v4496 = vunpack.c.h.b16 %v4215
        %v4497 = vunpack.c.l.b16 0
        %v4498 = vunpack.c.h.b16 0
        %vm4499 = vcmp.ne.s32.totalorder %v4495, %v4497
        %vm4500 = vcmp.ne.s32.totalorder %v4496, %v4498
        %vm4501 = vmpackc.low %vm4500, %vm4499
        %v4502 = vunpack.c.l.b16 %v4225
        %v4503 = vunpack.c.h.b16 %v4225
        %v4504 = vunpack.c.l.b16 0
        %v4505 = vunpack.c.h.b16 0
        %vm4506 = vcmp.ne.s32.totalorder %v4502, %v4504
        %vm4507 = vcmp.ne.s32.totalorder %v4503, %v4505
        %vm4508 = vmpackc.low %vm4507, %vm4506
        %v4509 = vunpack.c.l.b16 %v4235
        %v4510 = vunpack.c.h.b16 %v4235
        %v4511 = vunpack.c.l.b16 0
        %v4512 = vunpack.c.h.b16 0
        %vm4513 = vcmp.ne.s32.totalorder %v4509, %v4511
        %vm4514 = vcmp.ne.s32.totalorder %v4510, %v4512
        %vm4515 = vmpackc.low %vm4514, %vm4513
        %v4516 = vunpack.c.l.b16 %v4245
        %v4517 = vunpack.c.h.b16 %v4245
        %v4518 = vunpack.c.l.b16 0
        %v4519 = vunpack.c.h.b16 0
        %vm4520 = vcmp.ne.s32.totalorder %v4516, %v4518
        %vm4521 = vcmp.ne.s32.totalorder %v4517, %v4519
        %vm4522 = vmpackc.low %vm4521, %vm4520
        %v4523 = vunpack.c.l.b16 %v4255
        %v4524 = vunpack.c.h.b16 %v4255
        %v4525 = vunpack.c.l.b16 0
        %v4526 = vunpack.c.h.b16 0
        %vm4527 = vcmp.ne.s32.totalorder %v4523, %v4525
        %vm4528 = vcmp.ne.s32.totalorder %v4524, %v4526
        %vm4529 = vmpackc.low %vm4528, %vm4527
        %v4530 = vunpack.c.l.b16 %v4265
        %v4531 = vunpack.c.h.b16 %v4265
        %v4532 = vunpack.c.l.b16 0
        %v4533 = vunpack.c.h.b16 0
        %vm4534 = vcmp.ne.s32.totalorder %v4530, %v4532
        %vm4535 = vcmp.ne.s32.totalorder %v4531, %v4533
        %vm4536 = vmpackc.low %vm4535, %vm4534
        %v4537 = vunpack.c.l.b16 %v4275
        %v4538 = vunpack.c.h.b16 %v4275
        %v4539 = vunpack.c.l.b16 0
        %v4540 = vunpack.c.h.b16 0
        %vm4541 = vcmp.ne.s32.totalorder %v4537, %v4539
        %vm4542 = vcmp.ne.s32.totalorder %v4538, %v4540
        %vm4543 = vmpackc.low %vm4542, %vm4541
        %v4544 = vunpack.c.l.b16 %v4285
        %v4545 = vunpack.c.h.b16 %v4285
        %v4546 = vunpack.c.l.b16 0
        %v4547 = vunpack.c.h.b16 0
        %vm4548 = vcmp.ne.s32.totalorder %v4544, %v4546
        %vm4549 = vcmp.ne.s32.totalorder %v4545, %v4547
        %vm4550 = vmpackc.low %vm4549, %vm4548
        %v4551 = vunpack.c.l.b16 %v4295
        %v4552 = vunpack.c.h.b16 %v4295
        %v4553 = vunpack.c.l.b16 0
        %v4554 = vunpack.c.h.b16 0
        %vm4555 = vcmp.ne.s32.totalorder %v4551, %v4553
        %vm4556 = vcmp.ne.s32.totalorder %v4552, %v4554
        %vm4557 = vmpackc.low %vm4556, %vm4555
        %v4558 = vunpack.c.l.b16 %v4305
        %v4559 = vunpack.c.h.b16 %v4305
        %v4560 = vunpack.c.l.b16 0
        %v4561 = vunpack.c.h.b16 0
        %vm4562 = vcmp.ne.s32.totalorder %v4558, %v4560
        %vm4563 = vcmp.ne.s32.totalorder %v4559, %v4561
        %vm4564 = vmpackc.low %vm4563, %vm4562
        %v4565 = vunpack.c.l.b16 %v4315
        %v4566 = vunpack.c.h.b16 %v4315
        %v4567 = vunpack.c.l.b16 0
        %v4568 = vunpack.c.h.b16 0
        %vm4569 = vcmp.ne.s32.totalorder %v4565, %v4567
        %vm4570 = vcmp.ne.s32.totalorder %v4566, %v4568
        %vm4571 = vmpackc.low %vm4570, %vm4569
        %v4572 = vunpack.c.l.b16 %v4325
        %v4573 = vunpack.c.h.b16 %v4325
        %v4574 = vunpack.c.l.b16 0
        %v4575 = vunpack.c.h.b16 0
        %vm4576 = vcmp.ne.s32.totalorder %v4572, %v4574
        %vm4577 = vcmp.ne.s32.totalorder %v4573, %v4575
        %vm4578 = vmpackc.low %vm4577, %vm4576
        %v4579 = vunpack.c.l.b16 %v4335
        %v4580 = vunpack.c.h.b16 %v4335
        %v4581 = vunpack.c.l.b16 0
        %v4582 = vunpack.c.h.b16 0
        %vm4583 = vcmp.ne.s32.totalorder %v4579, %v4581
        %vm4584 = vcmp.ne.s32.totalorder %v4580, %v4582
        %vm4585 = vmpackc.low %vm4584, %vm4583
        %v4586 = vunpack.c.l.b16 %v4345
        %v4587 = vunpack.c.h.b16 %v4345
        %v4588 = vunpack.c.l.b16 0
        %v4589 = vunpack.c.h.b16 0
        %vm4590 = vcmp.ne.s32.totalorder %v4586, %v4588
        %vm4591 = vcmp.ne.s32.totalorder %v4587, %v4589
        %vm4592 = vmpackc.low %vm4591, %vm4590
        %v4593 = vunpack.c.l.b16 %v4355
        %v4594 = vunpack.c.h.b16 %v4355
        %v4595 = vunpack.c.l.b16 0
        %v4596 = vunpack.c.h.b16 0
        %vm4597 = vcmp.ne.s32.totalorder %v4593, %v4595
        %vm4598 = vcmp.ne.s32.totalorder %v4594, %v4596
        %vm4599 = vmpackc.low %vm4598, %vm4597
        %v4600 = vunpack.c.l.b16 %v4365
        %v4601 = vunpack.c.h.b16 %v4365
        %v4602 = vunpack.c.l.b16 0
        %v4603 = vunpack.c.h.b16 0
        %vm4604 = vcmp.ne.s32.totalorder %v4600, %v4602
        %vm4605 = vcmp.ne.s32.totalorder %v4601, %v4603
        %vm4606 = vmpackc.low %vm4605, %vm4604
        %v4607 = vunpack.c.l.b16 %v4375
        %v4608 = vunpack.c.h.b16 %v4375
        %v4609 = vunpack.c.l.b16 0
        %v4610 = vunpack.c.h.b16 0
        %vm4611 = vcmp.ne.s32.totalorder %v4607, %v4609
        %vm4612 = vcmp.ne.s32.totalorder %v4608, %v4610
        %vm4613 = vmpackc.low %vm4612, %vm4611
        %v4614 = vunpack.c.l.b16 %v4385
        %v4615 = vunpack.c.h.b16 %v4385
        %v4616 = vunpack.c.l.b16 0
        %v4617 = vunpack.c.h.b16 0
        %vm4618 = vcmp.ne.s32.totalorder %v4614, %v4616
        %vm4619 = vcmp.ne.s32.totalorder %v4615, %v4617
        %vm4620 = vmpackc.low %vm4619, %vm4618
        %v4621 = vunpack.c.l.b16 %v4395
        %v4622 = vunpack.c.h.b16 %v4395
        %v4623 = vunpack.c.l.b16 0
        %v4624 = vunpack.c.h.b16 0
        %vm4625 = vcmp.ne.s32.totalorder %v4621, %v4623
        %vm4626 = vcmp.ne.s32.totalorder %v4622, %v4624
        %vm4627 = vmpackc.low %vm4626, %vm4625
        %v4628 = vunpack.c.l.b16 %v4405
        %v4629 = vunpack.c.h.b16 %v4405
        %v4630 = vunpack.c.l.b16 0
        %v4631 = vunpack.c.h.b16 0
        %vm4632 = vcmp.ne.s32.totalorder %v4628, %v4630
        %vm4633 = vcmp.ne.s32.totalorder %v4629, %v4631
        %vm4634 = vmpackc.low %vm4633, %vm4632
        %v4635 = vunpack.c.l.b16 %v4410
        %v4636 = vunpack.c.h.b16 %v4410
        %v4637 = vunpack.c.l.b16 0
        %v4638 = vunpack.c.h.b16 0
        %vm4639 = vcmp.ne.s32.totalorder %v4635, %v4637
        %vm4640 = vcmp.ne.s32.totalorder %v4636, %v4638
        %vm4641 = vmpackc.low %vm4640, %vm4639
        %v4642 = vsel %vm4417, %v3992, 0
        %v4643 = vsel %vm4424, %v3993, 0
        %v4644 = vsel %vm4431, %v3994, 0
        %v4645 = vsel %vm4438, %v3995, 0
        %v4646 = vsel %vm4445, %v3996, 0
        %v4647 = vsel %vm4452, %v3997, 0
        %v4648 = vsel %vm4459, %v3998, 0
        %v4649 = vsel %vm4466, %v3999, 0
        %v4650 = vsel %vm4473, %v4000, 0
        %v4651 = vsel %vm4480, %v4001, 0
        %v4652 = vsel %vm4487, %v4002, 0
        %v4653 = vsel %vm4494, %v4003, 0
        %v4654 = vsel %vm4501, %v4004, 0
        %v4655 = vsel %vm4508, %v4005, 0
        %v4656 = vsel %vm4515, %v4006, 0
        %v4657 = vsel %vm4522, %v4007, 0
        %v4658 = vsel %vm4529, %v4008, 0
        %v4659 = vsel %vm4536, %v4009, 0
        %v4660 = vsel %vm4543, %v4010, 0
        %v4661 = vsel %vm4550, %v4011, 0
        %v4662 = vsel %vm4557, %v4012, 0
        %v4663 = vsel %vm4564, %v4013, 0
        %v4664 = vsel %vm4571, %v4014, 0
        %v4665 = vsel %vm4578, %v4015, 0
        %v4666 = vsel %vm4585, %v4016, 0
        %v4667 = vsel %vm4592, %v4017, 0
        %v4668 = vsel %vm4599, %v4018, 0
        %v4669 = vsel %vm4606, %v4019, 0
        %v4670 = vsel %vm4613, %v4020, 0
        %v4671 = vsel %vm4620, %v4021, 0
        %v4672 = vsel %vm4627, %v4022, 0
        %v4673 = vsel %vm4634, %v4023, 0
        %v4674 = vsel %vm4641, %v4024, 0
        %v4675 = vld [vmem:[%s3] sm:$0xf]
        %v4676 = vld [vmem:[%s3 + $0x4] sm:$0xf]
        %v4677 = vld [vmem:[%s3 + $0x8] sm:$0xf]
        %v4678 = vld [vmem:[%s3 + $0xc] sm:$0xf]
        %s4679 = scalar_lea.vmem %s3, 16
        %v4680 = vld [vmem:[%s4679] sm:$0xf]
        %v4681 = vld [vmem:[%s4679 + $0x4] sm:$0xf]
        %v4682 = vld [vmem:[%s4679 + $0x8] sm:$0xf]
        %v4683 = vld [vmem:[%s4679 + $0xc] sm:$0xf]
        %v4716 = vunpack.c.l.b16 %v3993
        %v4717 = vunpack.c.l.b16 %v3994
        %v4718 = vunpack.c.l.b16 %v3995
        %v4719 = vunpack.c.l.b16 %v3996
        %v4720 = vunpack.c.l.b16 %v3997
        %v4721 = vunpack.c.l.b16 %v3998
        %v4722 = vunpack.c.l.b16 %v3999
        %v4723 = vunpack.c.l.b16 %v4000
        %v4724 = vunpack.c.l.b16 %v4001
        %v4725 = vunpack.c.l.b16 %v4002
        %v4726 = vunpack.c.l.b16 %v4003
        %v4727 = vunpack.c.l.b16 %v4004
        %v4728 = vunpack.c.l.b16 %v4005
        %v4729 = vunpack.c.l.b16 %v4006
        %v4730 = vunpack.c.l.b16 %v4007
        %v4731 = vunpack.c.l.b16 %v4008
        %v4732 = vunpack.c.l.b16 %v4009
        %v4733 = vunpack.c.l.b16 %v4010
        %v4734 = vunpack.c.l.b16 %v4011
        %v4735 = vunpack.c.l.b16 %v4012
        %v4736 = vunpack.c.l.b16 %v4013
        %v4737 = vunpack.c.l.b16 %v4014
        %v4738 = vunpack.c.l.b16 %v4015
        %v4739 = vunpack.c.l.b16 %v4016
        %v4740 = vunpack.c.l.b16 %v4017
        %v4741 = vunpack.c.l.b16 %v4018
        %v4742 = vunpack.c.l.b16 %v4019
        %v4743 = vunpack.c.l.b16 %v4020
        %v4744 = vunpack.c.l.b16 %v4021
        %v4745 = vunpack.c.l.b16 %v4022
        %v4746 = vunpack.c.l.b16 %v4023
        %v4747 = vunpack.c.l.b16 %v4024
        %v4748 = vpack.c.b16 %v4717, %v4716
        %v4749 = vpack.c.b16 %v4719, %v4718
        %v4750 = vpack.c.b16 %v4721, %v4720
        %v4751 = vpack.c.b16 %v4723, %v4722
        %v4752 = vpack.c.b16 %v4725, %v4724
        %v4753 = vpack.c.b16 %v4727, %v4726
        %v4754 = vpack.c.b16 %v4729, %v4728
        %v4755 = vpack.c.b16 %v4731, %v4730
        %v4756 = vpack.c.b16 %v4733, %v4732
        %v4757 = vpack.c.b16 %v4735, %v4734
        %v4758 = vpack.c.b16 %v4737, %v4736
        %v4759 = vpack.c.b16 %v4739, %v4738
        %v4760 = vpack.c.b16 %v4741, %v4740
        %v4761 = vpack.c.b16 %v4743, %v4742
        %v4762 = vpack.c.b16 %v4745, %v4744
        %v4763 = vpack.c.b16 %v4747, %v4746
        %v4768 = vunpack.c.l.b16 %v4680
        %v4769 = vunpack.c.l.b16 %v4681
        %v4770 = vunpack.c.l.b16 %v4682
        %v4771 = vunpack.c.l.b16 %v4683
        %v4772 = vpack.c.b16 %v4769, %v4768
        %v4773 = vpack.c.b16 %v4771, %v4770
        %v4777 = vsel %vm3275, %v4748, 0
        %v4780 = vsel %vm3275, %v4749, 0
        %v4783 = vsel %vm3275, %v4750, 0
        %v4786 = vsel %vm3275, %v4751, 0
        %v4789 = vsel %vm3275, %v4752, 0
        %v4792 = vsel %vm3275, %v4753, 0
        %v4795 = vsel %vm3275, %v4754, 0
        %v4798 = vsel %vm3275, %v4755, 0
        %v4801 = vsel %vm3275, %v4756, 0
        %v4804 = vsel %vm3275, %v4757, 0
        %v4807 = vsel %vm3275, %v4758, 0
        %v4810 = vsel %vm3275, %v4759, 0
        %v4813 = vsel %vm3275, %v4760, 0
        %v4816 = vsel %vm3275, %v4761, 0
        %v4819 = vsel %vm3275, %v4762, 0
        %v4822 = vsel %vm3275, %v4763, 0
        %4824 = vmatpush.bf16.msra.mxu0 0
        %4825 = vmatpush.bf16.msra.mxu0 0
        %4826 = vmatpush.bf16.msra.mxu0 0
        %4827 = vmatpush.bf16.msra.mxu0 0
        %4828 = vmatpush.bf16.msra.mxu0 0
        %4829 = vmatpush.bf16.msra.mxu0 0
        %4830 = vmatpush.bf16.msra.mxu0 %v4773
        %4831 = vmatpush.bf16.msra.mxu0 %v4772
        %4832 = vmatmul.bf16.gmra.mxu0 %v4777
        %v4833 = vpop.f32.mrf.mxu0
        %v4834 = vadd.f32 0.0, %v4833
        %v4835 = vpop.f32.mrf.mxu0
        %v4836 = vadd.f32 0.0, %v4835
        %4837 = vmatmul.bf16.gmra.mxu0 %v4780
        %v4838 = vpop.f32.mrf.mxu0
        %v4839 = vadd.f32 0.0, %v4838
        %v4840 = vpop.f32.mrf.mxu0
        %v4841 = vadd.f32 0.0, %v4840
        %4842 = vmatmul.bf16.gmra.mxu0 %v4783
        %v4843 = vpop.f32.mrf.mxu0
        %v4844 = vadd.f32 0.0, %v4843
        %v4845 = vpop.f32.mrf.mxu0
        %v4846 = vadd.f32 0.0, %v4845
        %4847 = vmatmul.bf16.gmra.mxu0 %v4786
        %v4848 = vpop.f32.mrf.mxu0
        %v4849 = vadd.f32 0.0, %v4848
        %v4850 = vpop.f32.mrf.mxu0
        %v4851 = vadd.f32 0.0, %v4850
        %4852 = vmatmul.bf16.gmra.mxu0 %v4789
        %v4853 = vpop.f32.mrf.mxu0
        %v4854 = vadd.f32 0.0, %v4853
        %v4855 = vpop.f32.mrf.mxu0
        %v4856 = vadd.f32 0.0, %v4855
        %4857 = vmatmul.bf16.gmra.mxu0 %v4792
        %v4858 = vpop.f32.mrf.mxu0
        %v4859 = vadd.f32 0.0, %v4858
        %v4860 = vpop.f32.mrf.mxu0
        %v4861 = vadd.f32 0.0, %v4860
        %4862 = vmatmul.bf16.gmra.mxu0 %v4795
        %v4863 = vpop.f32.mrf.mxu0
        %v4864 = vadd.f32 0.0, %v4863
        %v4865 = vpop.f32.mrf.mxu0
        %v4866 = vadd.f32 0.0, %v4865
        %4867 = vmatmul.bf16.gmra.mxu0 %v4798
        %v4868 = vpop.f32.mrf.mxu0
        %v4869 = vadd.f32 0.0, %v4868
        %v4870 = vpop.f32.mrf.mxu0
        %v4871 = vadd.f32 0.0, %v4870
        %4872 = vmatmul.bf16.gmra.mxu0 %v4801
        %v4873 = vpop.f32.mrf.mxu0
        %v4874 = vadd.f32 0.0, %v4873
        %v4875 = vpop.f32.mrf.mxu0
        %v4876 = vadd.f32 0.0, %v4875
        %4877 = vmatmul.bf16.gmra.mxu0 %v4804
        %v4878 = vpop.f32.mrf.mxu0
        %v4879 = vadd.f32 0.0, %v4878
        %v4880 = vpop.f32.mrf.mxu0
        %v4881 = vadd.f32 0.0, %v4880
        %4882 = vmatmul.bf16.gmra.mxu0 %v4807
        %v4883 = vpop.f32.mrf.mxu0
        %v4884 = vadd.f32 0.0, %v4883
        %v4885 = vpop.f32.mrf.mxu0
        %v4886 = vadd.f32 0.0, %v4885
        %4887 = vmatmul.bf16.gmra.mxu0 %v4810
        %v4888 = vpop.f32.mrf.mxu0
        %v4889 = vadd.f32 0.0, %v4888
        %v4890 = vpop.f32.mrf.mxu0
        %v4891 = vadd.f32 0.0, %v4890
        %4892 = vmatmul.bf16.gmra.mxu0 %v4813
        %v4893 = vpop.f32.mrf.mxu0
        %v4894 = vadd.f32 0.0, %v4893
        %v4895 = vpop.f32.mrf.mxu0
        %v4896 = vadd.f32 0.0, %v4895
        %4897 = vmatmul.bf16.gmra.mxu0 %v4816
        %v4898 = vpop.f32.mrf.mxu0
        %v4899 = vadd.f32 0.0, %v4898
        %v4900 = vpop.f32.mrf.mxu0
        %v4901 = vadd.f32 0.0, %v4900
        %4902 = vmatmul.bf16.gmra.mxu0 %v4819
        %v4903 = vpop.f32.mrf.mxu0
        %v4904 = vadd.f32 0.0, %v4903
        %v4905 = vpop.f32.mrf.mxu0
        %v4906 = vadd.f32 0.0, %v4905
        %4907 = vmatmul.bf16.gmra.mxu0 %v4822
        %v4908 = vpop.f32.mrf.mxu0
        %v4909 = vadd.f32 0.0, %v4908
        %v4910 = vpop.f32.mrf.mxu0
        %v4911 = vadd.f32 0.0, %v4910
        %4912 = vdwg.mxu0
        %v4946 = vunpack.c.l.b16 %v4642
        %v4947 = vunpack.c.l.b16 %v4643
        %v4948 = vunpack.c.l.b16 %v4644
        %v4949 = vunpack.c.l.b16 %v4645
        %v4950 = vunpack.c.l.b16 %v4646
        %v4951 = vunpack.c.l.b16 %v4647
        %v4952 = vunpack.c.l.b16 %v4648
        %v4953 = vunpack.c.l.b16 %v4649
        %v4954 = vunpack.c.l.b16 %v4650
        %v4955 = vunpack.c.l.b16 %v4651
        %v4956 = vunpack.c.l.b16 %v4652
        %v4957 = vunpack.c.l.b16 %v4653
        %v4958 = vunpack.c.l.b16 %v4654
        %v4959 = vunpack.c.l.b16 %v4655
        %v4960 = vunpack.c.l.b16 %v4656
        %v4961 = vunpack.c.l.b16 %v4657
        %v4962 = vunpack.c.l.b16 %v4658
        %v4963 = vunpack.c.l.b16 %v4659
        %v4964 = vunpack.c.l.b16 %v4660
        %v4965 = vunpack.c.l.b16 %v4661
        %v4966 = vunpack.c.l.b16 %v4662
        %v4967 = vunpack.c.l.b16 %v4663
        %v4968 = vunpack.c.l.b16 %v4664
        %v4969 = vunpack.c.l.b16 %v4665
        %v4970 = vunpack.c.l.b16 %v4666
        %v4971 = vunpack.c.l.b16 %v4667
        %v4972 = vunpack.c.l.b16 %v4668
        %v4973 = vunpack.c.l.b16 %v4669
        %v4974 = vunpack.c.l.b16 %v4670
        %v4975 = vunpack.c.l.b16 %v4671
        %v4976 = vunpack.c.l.b16 %v4672
        %v4977 = vunpack.c.l.b16 %v4673
        %v4978 = vunpack.c.l.b16 %v4674
        %v4979 = vpack.c.b16 %v4947, %v4946
        %v4980 = vpack.c.b16 %v4949, %v4948
        %v4981 = vpack.c.b16 %v4951, %v4950
        %v4982 = vpack.c.b16 %v4953, %v4952
        %v4983 = vpack.c.b16 %v4955, %v4954
        %v4984 = vpack.c.b16 %v4957, %v4956
        %v4985 = vpack.c.b16 %v4959, %v4958
        %v4986 = vpack.c.b16 %v4961, %v4960
        %v4987 = vpack.c.b16 %v4963, %v4962
        %v4988 = vpack.c.b16 %v4965, %v4964
        %v4989 = vpack.c.b16 %v4967, %v4966
        %v4990 = vpack.c.b16 %v4969, %v4968
        %v4991 = vpack.c.b16 %v4971, %v4970
        %v4992 = vpack.c.b16 %v4973, %v4972
        %v4993 = vpack.c.b16 %v4975, %v4974
        %v4994 = vpack.c.b16 %v4977, %v4976
        %v4995 = vpack.c.b16 %v4978, %v4978
        %vm4996 = vsmask.f32 4352
        %v4998 = vshrl.u32 %v4979, 16
        %v5000 = vrot.slane %v4998, 3
        %v5001 = vshll.u32 %v4979, 16
        %v5003 = vrot.slane %v5001, 4
        %v5004 = vor.u32 %v5000, %v5003
        %v5006 = vshrl.u32 %v4980, 16
        %v5008 = vrot.slane %v5006, 3
        %v5009 = vshll.u32 %v4980, 16
        %v5011 = vrot.slane %v5009, 4
        %v5012 = vor.u32 %v5008, %v5011
        %v5013 = vsel %vm4996, %v5004, %v5012
        %v5015 = vshrl.u32 %v4981, 16
        %v5017 = vrot.slane %v5015, 3
        %v5018 = vshll.u32 %v4981, 16
        %v5020 = vrot.slane %v5018, 4
        %v5021 = vor.u32 %v5017, %v5020
        %v5022 = vsel %vm4996, %v5012, %v5021
        %v5024 = vshrl.u32 %v4982, 16
        %v5026 = vrot.slane %v5024, 3
        %v5027 = vshll.u32 %v4982, 16
        %v5029 = vrot.slane %v5027, 4
        %v5030 = vor.u32 %v5026, %v5029
        %v5031 = vsel %vm4996, %v5021, %v5030
        %v5033 = vshrl.u32 %v4983, 16
        %v5035 = vrot.slane %v5033, 3
        %v5036 = vshll.u32 %v4983, 16
        %v5038 = vrot.slane %v5036, 4
        %v5039 = vor.u32 %v5035, %v5038
        %v5040 = vsel %vm4996, %v5030, %v5039
        %v5042 = vshrl.u32 %v4984, 16
        %v5044 = vrot.slane %v5042, 3
        %v5045 = vshll.u32 %v4984, 16
        %v5047 = vrot.slane %v5045, 4
        %v5048 = vor.u32 %v5044, %v5047
        %v5049 = vsel %vm4996, %v5039, %v5048
        %v5051 = vshrl.u32 %v4985, 16
        %v5053 = vrot.slane %v5051, 3
        %v5054 = vshll.u32 %v4985, 16
        %v5056 = vrot.slane %v5054, 4
        %v5057 = vor.u32 %v5053, %v5056
        %v5058 = vsel %vm4996, %v5048, %v5057
        %v5060 = vshrl.u32 %v4986, 16
        %v5062 = vrot.slane %v5060, 3
        %v5063 = vshll.u32 %v4986, 16
        %v5065 = vrot.slane %v5063, 4
        %v5066 = vor.u32 %v5062, %v5065
        %v5067 = vsel %vm4996, %v5057, %v5066
        %v5069 = vshrl.u32 %v4987, 16
        %v5071 = vrot.slane %v5069, 3
        %v5072 = vshll.u32 %v4987, 16
        %v5074 = vrot.slane %v5072, 4
        %v5075 = vor.u32 %v5071, %v5074
        %v5076 = vsel %vm4996, %v5066, %v5075
        %v5078 = vshrl.u32 %v4988, 16
        %v5080 = vrot.slane %v5078, 3
        %v5081 = vshll.u32 %v4988, 16
        %v5083 = vrot.slane %v5081, 4
        %v5084 = vor.u32 %v5080, %v5083
        %v5085 = vsel %vm4996, %v5075, %v5084
        %v5087 = vshrl.u32 %v4989, 16
        %v5089 = vrot.slane %v5087, 3
        %v5090 = vshll.u32 %v4989, 16
        %v5092 = vrot.slane %v5090, 4
        %v5093 = vor.u32 %v5089, %v5092
        %v5094 = vsel %vm4996, %v5084, %v5093
        %v5096 = vshrl.u32 %v4990, 16
        %v5098 = vrot.slane %v5096, 3
        %v5099 = vshll.u32 %v4990, 16
        %v5101 = vrot.slane %v5099, 4
        %v5102 = vor.u32 %v5098, %v5101
        %v5103 = vsel %vm4996, %v5093, %v5102
        %v5105 = vshrl.u32 %v4991, 16
        %v5107 = vrot.slane %v5105, 3
        %v5108 = vshll.u32 %v4991, 16
        %v5110 = vrot.slane %v5108, 4
        %v5111 = vor.u32 %v5107, %v5110
        %v5112 = vsel %vm4996, %v5102, %v5111
        %v5114 = vshrl.u32 %v4992, 16
        %v5116 = vrot.slane %v5114, 3
        %v5117 = vshll.u32 %v4992, 16
        %v5119 = vrot.slane %v5117, 4
        %v5120 = vor.u32 %v5116, %v5119
        %v5121 = vsel %vm4996, %v5111, %v5120
        %v5123 = vshrl.u32 %v4993, 16
        %v5125 = vrot.slane %v5123, 3
        %v5126 = vshll.u32 %v4993, 16
        %v5128 = vrot.slane %v5126, 4
        %v5129 = vor.u32 %v5125, %v5128
        %v5130 = vsel %vm4996, %v5120, %v5129
        %v5132 = vshrl.u32 %v4994, 16
        %v5134 = vrot.slane %v5132, 3
        %v5135 = vshll.u32 %v4994, 16
        %v5137 = vrot.slane %v5135, 4
        %v5138 = vor.u32 %v5134, %v5137
        %v5139 = vsel %vm4996, %v5129, %v5138
        %v5141 = vshrl.u32 %v4995, 16
        %v5143 = vrot.slane %v5141, 3
        %v5144 = vshll.u32 %v4995, 16
        %v5146 = vrot.slane %v5144, 4
        %v5147 = vor.u32 %v5143, %v5146
        %v5148 = vsel %vm4996, %v5138, %v5147
        %v5153 = vunpack.c.l.b16 %v4675
        %v5154 = vunpack.c.l.b16 %v4676
        %v5155 = vunpack.c.l.b16 %v4677
        %v5156 = vunpack.c.l.b16 %v4678
        %v5157 = vpack.c.b16 %v5154, %v5153
        %v5158 = vpack.c.b16 %v5156, %v5155
        %v5162 = vsel %vm3275, %v5013, 0
        %v5165 = vsel %vm3275, %v5022, 0
        %v5168 = vsel %vm3275, %v5031, 0
        %v5171 = vsel %vm3275, %v5040, 0
        %v5174 = vsel %vm3275, %v5049, 0
        %v5177 = vsel %vm3275, %v5058, 0
        %v5180 = vsel %vm3275, %v5067, 0
        %v5183 = vsel %vm3275, %v5076, 0
        %v5186 = vsel %vm3275, %v5085, 0
        %v5189 = vsel %vm3275, %v5094, 0
        %v5192 = vsel %vm3275, %v5103, 0
        %v5195 = vsel %vm3275, %v5112, 0
        %v5198 = vsel %vm3275, %v5121, 0
        %v5201 = vsel %vm3275, %v5130, 0
        %v5204 = vsel %vm3275, %v5139, 0
        %v5207 = vsel %vm3275, %v5148, 0
        %5209 = vmatpush.bf16.msra.mxu0 0
        %5210 = vmatpush.bf16.msra.mxu0 0
        %5211 = vmatpush.bf16.msra.mxu0 0
        %5212 = vmatpush.bf16.msra.mxu0 0
        %5213 = vmatpush.bf16.msra.mxu0 0
        %5214 = vmatpush.bf16.msra.mxu0 0
        %5215 = vmatpush.bf16.msra.mxu0 %v5158
        %5216 = vmatpush.bf16.msra.mxu0 %v5157
        %5217 = vmatmul.bf16.gmra.mxu0 %v5162
        %v5218 = vpop.f32.mrf.mxu0
        %v5219 = vadd.f32 %v4834, %v5218
        %v5220 = vpop.f32.mrf.mxu0
        %v5221 = vadd.f32 %v4836, %v5220
        %5222 = vmatmul.bf16.gmra.mxu0 %v5165
        %v5223 = vpop.f32.mrf.mxu0
        %v5224 = vadd.f32 %v4839, %v5223
        %v5225 = vpop.f32.mrf.mxu0
        %v5226 = vadd.f32 %v4841, %v5225
        %5227 = vmatmul.bf16.gmra.mxu0 %v5168
        %v5228 = vpop.f32.mrf.mxu0
        %v5229 = vadd.f32 %v4844, %v5228
        %v5230 = vpop.f32.mrf.mxu0
        %v5231 = vadd.f32 %v4846, %v5230
        %5232 = vmatmul.bf16.gmra.mxu0 %v5171
        %v5233 = vpop.f32.mrf.mxu0
        %v5234 = vadd.f32 %v4849, %v5233
        %v5235 = vpop.f32.mrf.mxu0
        %v5236 = vadd.f32 %v4851, %v5235
        %5237 = vmatmul.bf16.gmra.mxu0 %v5174
        %v5238 = vpop.f32.mrf.mxu0
        %v5239 = vadd.f32 %v4854, %v5238
        %v5240 = vpop.f32.mrf.mxu0
        %v5241 = vadd.f32 %v4856, %v5240
        %5242 = vmatmul.bf16.gmra.mxu0 %v5177
        %v5243 = vpop.f32.mrf.mxu0
        %v5244 = vadd.f32 %v4859, %v5243
        %v5245 = vpop.f32.mrf.mxu0
        %v5246 = vadd.f32 %v4861, %v5245
        %5247 = vmatmul.bf16.gmra.mxu0 %v5180
        %v5248 = vpop.f32.mrf.mxu0
        %v5249 = vadd.f32 %v4864, %v5248
        %v5250 = vpop.f32.mrf.mxu0
        %v5251 = vadd.f32 %v4866, %v5250
        %5252 = vmatmul.bf16.gmra.mxu0 %v5183
        %v5253 = vpop.f32.mrf.mxu0
        %v5254 = vadd.f32 %v4869, %v5253
        %v5255 = vpop.f32.mrf.mxu0
        %v5256 = vadd.f32 %v4871, %v5255
        %5257 = vmatmul.bf16.gmra.mxu0 %v5186
        %v5258 = vpop.f32.mrf.mxu0
        %v5259 = vadd.f32 %v4874, %v5258
        %v5260 = vpop.f32.mrf.mxu0
        %v5261 = vadd.f32 %v4876, %v5260
        %5262 = vmatmul.bf16.gmra.mxu0 %v5189
        %v5263 = vpop.f32.mrf.mxu0
        %v5264 = vadd.f32 %v4879, %v5263
        %v5265 = vpop.f32.mrf.mxu0
        %v5266 = vadd.f32 %v4881, %v5265
        %5267 = vmatmul.bf16.gmra.mxu0 %v5192
        %v5268 = vpop.f32.mrf.mxu0
        %v5269 = vadd.f32 %v4884, %v5268
        %v5270 = vpop.f32.mrf.mxu0
        %v5271 = vadd.f32 %v4886, %v5270
        %5272 = vmatmul.bf16.gmra.mxu0 %v5195
        %v5273 = vpop.f32.mrf.mxu0
        %v5274 = vadd.f32 %v4889, %v5273
        %v5275 = vpop.f32.mrf.mxu0
        %v5276 = vadd.f32 %v4891, %v5275
        %5277 = vmatmul.bf16.gmra.mxu0 %v5198
        %v5278 = vpop.f32.mrf.mxu0
        %v5279 = vadd.f32 %v4894, %v5278
        %v5280 = vpop.f32.mrf.mxu0
        %v5281 = vadd.f32 %v4896, %v5280
        %5282 = vmatmul.bf16.gmra.mxu0 %v5201
        %v5283 = vpop.f32.mrf.mxu0
        %v5284 = vadd.f32 %v4899, %v5283
        %v5285 = vpop.f32.mrf.mxu0
        %v5286 = vadd.f32 %v4901, %v5285
        %5287 = vmatmul.bf16.gmra.mxu0 %v5204
        %v5288 = vpop.f32.mrf.mxu0
        %v5289 = vadd.f32 %v4904, %v5288
        %v5290 = vpop.f32.mrf.mxu0
        %v5291 = vadd.f32 %v4906, %v5290
        %5292 = vmatmul.bf16.gmra.mxu0 %v5207
        %v5293 = vpop.f32.mrf.mxu0
        %v5294 = vadd.f32 %v4909, %v5293
        %v5295 = vpop.f32.mrf.mxu0
        %v5296 = vadd.f32 %v4911, %v5295
        %5297 = vdwg.mxu0
        %v5298 = vld [vmem:[#allocation2 + $0x4] sm:$0xf]
        %v5299 = vld [vmem:[#allocation2 + $0x8] sm:$0xf]
        %v5300 = vld [vmem:[#allocation2 + $0xc] sm:$0xf]
        %v5301 = vld [vmem:[#allocation2 + $0x10] sm:$0xf]
        %v5302 = vld [vmem:[#allocation2 + $0x14] sm:$0xf]
        %v5303 = vld [vmem:[#allocation2 + $0x18] sm:$0xf]
        %v5304 = vld [vmem:[#allocation2 + $0x1c] sm:$0xf]
        %v5305 = vld [vmem:[#allocation2 + $0x20] sm:$0xf]
        %v5306 = vld [vmem:[#allocation2 + $0x24] sm:$0xf]
        %v5307 = vld [vmem:[#allocation2 + $0x28] sm:$0xf]
        %v5308 = vld [vmem:[#allocation2 + $0x2c] sm:$0xf]
        %v5309 = vld [vmem:[#allocation2 + $0x30] sm:$0xf]
        %v5310 = vld [vmem:[#allocation2 + $0x34] sm:$0xf]
        %v5311 = vld [vmem:[#allocation2 + $0x38] sm:$0xf]
        %v5312 = vld [vmem:[#allocation2 + $0x3c] sm:$0xf]
        %v5313 = vld [vmem:[#allocation2 + $0x40] sm:$0xf]
        %v5314 = vld [vmem:[#allocation2 + $0x44] sm:$0xf]
        %v5315 = vld [vmem:[#allocation2 + $0x48] sm:$0xf]
        %v5316 = vld [vmem:[#allocation2 + $0x4c] sm:$0xf]
        %v5317 = vld [vmem:[#allocation2 + $0x50] sm:$0xf]
        %v5318 = vld [vmem:[#allocation2 + $0x54] sm:$0xf]
        %v5319 = vld [vmem:[#allocation2 + $0x58] sm:$0xf]
        %v5320 = vld [vmem:[#allocation2 + $0x5c] sm:$0xf]
        %v5321 = vld [vmem:[#allocation2 + $0x60] sm:$0xf]
        %v5322 = vld [vmem:[#allocation2 + $0x64] sm:$0xf]
        %v5323 = vld [vmem:[#allocation2 + $0x68] sm:$0xf]
        %v5324 = vld [vmem:[#allocation2 + $0x6c] sm:$0xf]
        %v5325 = vld [vmem:[#allocation2 + $0x70] sm:$0xf]
        %v5326 = vld [vmem:[#allocation2 + $0x74] sm:$0xf]
        %v5327 = vld [vmem:[#allocation2 + $0x78] sm:$0xf]
        %v5328 = vld [vmem:[#allocation2 + $0x7c] sm:$0xf]
        %v5329 = vld [vmem:[#allocation2 + $0x80] sm:$0xf]
        %v5330 = vld [vmem:[#allocation2 + $0x84] sm:$0x1]
        %vm5331 = vmpackc.low %vm1520, %vm1520
        %vm5332 = vmpackc.low %vm1521, %vm1521
        %vm5333 = vmpackc.low %vm1522, %vm1522
        %vm5334 = vmpackc.low %vm1523, %vm1523
        %vm5335 = vmpackc.low %vm1524, %vm1524
        %vm5336 = vmpackc.low %vm1525, %vm1525
        %vm5337 = vmpackc.low %vm1526, %vm1526
        %vm5338 = vmpackc.low %vm1527, %vm1527
        %vm5339 = vmpackc.low %vm1528, %vm1528
        %vm5340 = vmpackc.low %vm1529, %vm1529
        %vm5341 = vmpackc.low %vm1530, %vm1530
        %vm5342 = vmpackc.low %vm1531, %vm1531
        %vm5343 = vmpackc.low %vm1532, %vm1532
        %vm5344 = vmpackc.low %vm1533, %vm1533
        %vm5345 = vmpackc.low %vm1534, %vm1534
        %vm5346 = vmpackc.low %vm1535, %vm1535
        %vm5347 = vmpackc.low %vm1536, %vm1536
        %vm5348 = vmpackc.low %vm1537, %vm1537
        %vm5349 = vmpackc.low %vm1538, %vm1538
        %vm5350 = vmpackc.low %vm1539, %vm1539
        %vm5351 = vmpackc.low %vm1540, %vm1540
        %vm5352 = vmpackc.low %vm1541, %vm1541
        %vm5353 = vmpackc.low %vm1542, %vm1542
        %vm5354 = vmpackc.low %vm1543, %vm1543
        %vm5355 = vmpackc.low %vm1544, %vm1544
        %vm5356 = vmpackc.low %vm1545, %vm1545
        %vm5357 = vmpackc.low %vm1546, %vm1546
        %vm5358 = vmpackc.low %vm1547, %vm1547
        %vm5359 = vmpackc.low %vm1548, %vm1548
        %vm5360 = vmpackc.low %vm1549, %vm1549
        %vm5361 = vmpackc.low %vm1550, %vm1550
        %vm5362 = vmpackc.low %vm1551, %vm1551
        %v5363 = vsel %vm5331, 65537, 0
        %v5364 = vsel %vm5332, 65537, 0
        %v5365 = vsel %vm5333, 65537, 0
        %v5366 = vsel %vm5334, 65537, 0
        %v5367 = vsel %vm5335, 65537, 0
        %v5368 = vsel %vm5336, 65537, 0
        %v5369 = vsel %vm5337, 65537, 0
        %v5370 = vsel %vm5338, 65537, 0
        %v5371 = vsel %vm5339, 65537, 0
        %v5372 = vsel %vm5340, 65537, 0
        %v5373 = vsel %vm5341, 65537, 0
        %v5374 = vsel %vm5342, 65537, 0
        %v5375 = vsel %vm5343, 65537, 0
        %v5376 = vsel %vm5344, 65537, 0
        %v5377 = vsel %vm5345, 65537, 0
        %v5378 = vsel %vm5346, 65537, 0
        %v5379 = vsel %vm5347, 65537, 0
        %v5380 = vsel %vm5348, 65537, 0
        %v5381 = vsel %vm5349, 65537, 0
        %v5382 = vsel %vm5350, 65537, 0
        %v5383 = vsel %vm5351, 65537, 0
        %v5384 = vsel %vm5352, 65537, 0
        %v5385 = vsel %vm5353, 65537, 0
        %v5386 = vsel %vm5354, 65537, 0
        %v5387 = vsel %vm5355, 65537, 0
        %v5388 = vsel %vm5356, 65537, 0
        %v5389 = vsel %vm5357, 65537, 0
        %v5390 = vsel %vm5358, 65537, 0
        %v5391 = vsel %vm5359, 65537, 0
        %v5392 = vsel %vm5360, 65537, 0
        %v5393 = vsel %vm5361, 65537, 0
        %v5394 = vsel %vm5362, 65537, 0
        %vm5395 = vsmask.f32 256
        %vm5396 = vsmask.f32 4368
        %vm5397 = vmor %vm5395, %vm5396
        %v5399 = vshrl.u32 %v5363, 16
        %v5401 = vrot.slane %v5399, 7
        %v5402 = vshll.u32 %v5363, 16
        %v5404 = vor.u32 %v5401, %v5402
        %v5405 = vrot.slane %v5401, 4
        %v5407 = vshrl.u32 %v5364, 16
        %v5409 = vrot.slane %v5407, 7
        %v5410 = vshll.u32 %v5364, 16
        %v5412 = vor.u32 %v5409, %v5410
        %v5413 = vsel %vm5397, %v5405, %v5412
        %v5414 = vrot.slane %v5409, 4
        %v5416 = vshrl.u32 %v5365, 16
        %v5418 = vrot.slane %v5416, 7
        %v5419 = vshll.u32 %v5365, 16
        %v5421 = vor.u32 %v5418, %v5419
        %v5422 = vsel %vm5397, %v5414, %v5421
        %v5423 = vrot.slane %v5418, 4
        %v5425 = vshrl.u32 %v5366, 16
        %v5427 = vrot.slane %v5425, 7
        %v5428 = vshll.u32 %v5366, 16
        %v5430 = vor.u32 %v5427, %v5428
        %v5431 = vsel %vm5397, %v5423, %v5430
        %v5432 = vrot.slane %v5427, 4
        %v5434 = vshrl.u32 %v5367, 16
        %v5436 = vrot.slane %v5434, 7
        %v5437 = vshll.u32 %v5367, 16
        %v5439 = vor.u32 %v5436, %v5437
        %v5440 = vsel %vm5397, %v5432, %v5439
        %v5441 = vrot.slane %v5436, 4
        %v5443 = vshrl.u32 %v5368, 16
        %v5445 = vrot.slane %v5443, 7
        %v5446 = vshll.u32 %v5368, 16
        %v5448 = vor.u32 %v5445, %v5446
        %v5449 = vsel %vm5397, %v5441, %v5448
        %v5450 = vrot.slane %v5445, 4
        %v5452 = vshrl.u32 %v5369, 16
        %v5454 = vrot.slane %v5452, 7
        %v5455 = vshll.u32 %v5369, 16
        %v5457 = vor.u32 %v5454, %v5455
        %v5458 = vsel %vm5397, %v5450, %v5457
        %v5459 = vrot.slane %v5454, 4
        %v5461 = vshrl.u32 %v5370, 16
        %v5463 = vrot.slane %v5461, 7
        %v5464 = vshll.u32 %v5370, 16
        %v5466 = vor.u32 %v5463, %v5464
        %v5467 = vsel %vm5397, %v5459, %v5466
        %v5468 = vrot.slane %v5463, 4
        %v5470 = vshrl.u32 %v5371, 16
        %v5472 = vrot.slane %v5470, 7
        %v5473 = vshll.u32 %v5371, 16
        %v5475 = vor.u32 %v5472, %v5473
        %v5476 = vsel %vm5397, %v5468, %v5475
        %v5477 = vrot.slane %v5472, 4
        %v5479 = vshrl.u32 %v5372, 16
        %v5481 = vrot.slane %v5479, 7
        %v5482 = vshll.u32 %v5372, 16
        %v5484 = vor.u32 %v5481, %v5482
        %v5485 = vsel %vm5397, %v5477, %v5484
        %v5486 = vrot.slane %v5481, 4
        %v5488 = vshrl.u32 %v5373, 16
        %v5490 = vrot.slane %v5488, 7
        %v5491 = vshll.u32 %v5373, 16
        %v5493 = vor.u32 %v5490, %v5491
        %v5494 = vsel %vm5397, %v5486, %v5493
        %v5495 = vrot.slane %v5490, 4
        %v5497 = vshrl.u32 %v5374, 16
        %v5499 = vrot.slane %v5497, 7
        %v5500 = vshll.u32 %v5374, 16
        %v5502 = vor.u32 %v5499, %v5500
        %v5503 = vsel %vm5397, %v5495, %v5502
        %v5504 = vrot.slane %v5499, 4
        %v5506 = vshrl.u32 %v5375, 16
        %v5508 = vrot.slane %v5506, 7
        %v5509 = vshll.u32 %v5375, 16
        %v5511 = vor.u32 %v5508, %v5509
        %v5512 = vsel %vm5397, %v5504, %v5511
        %v5513 = vrot.slane %v5508, 4
        %v5515 = vshrl.u32 %v5376, 16
        %v5517 = vrot.slane %v5515, 7
        %v5518 = vshll.u32 %v5376, 16
        %v5520 = vor.u32 %v5517, %v5518
        %v5521 = vsel %vm5397, %v5513, %v5520
        %v5522 = vrot.slane %v5517, 4
        %v5524 = vshrl.u32 %v5377, 16
        %v5526 = vrot.slane %v5524, 7
        %v5527 = vshll.u32 %v5377, 16
        %v5529 = vor.u32 %v5526, %v5527
        %v5530 = vsel %vm5397, %v5522, %v5529
        %v5531 = vrot.slane %v5526, 4
        %v5533 = vshrl.u32 %v5378, 16
        %v5535 = vrot.slane %v5533, 7
        %v5536 = vshll.u32 %v5378, 16
        %v5538 = vor.u32 %v5535, %v5536
        %v5539 = vsel %vm5397, %v5531, %v5538
        %v5540 = vrot.slane %v5535, 4
        %v5542 = vshrl.u32 %v5379, 16
        %v5544 = vrot.slane %v5542, 7
        %v5545 = vshll.u32 %v5379, 16
        %v5547 = vor.u32 %v5544, %v5545
        %v5548 = vsel %vm5397, %v5540, %v5547
        %v5549 = vrot.slane %v5544, 4
        %v5551 = vshrl.u32 %v5380, 16
        %v5553 = vrot.slane %v5551, 7
        %v5554 = vshll.u32 %v5380, 16
        %v5556 = vor.u32 %v5553, %v5554
        %v5557 = vsel %vm5397, %v5549, %v5556
        %v5558 = vrot.slane %v5553, 4
        %v5560 = vshrl.u32 %v5381, 16
        %v5562 = vrot.slane %v5560, 7
        %v5563 = vshll.u32 %v5381, 16
        %v5565 = vor.u32 %v5562, %v5563
        %v5566 = vsel %vm5397, %v5558, %v5565
        %v5567 = vrot.slane %v5562, 4
        %v5569 = vshrl.u32 %v5382, 16
        %v5571 = vrot.slane %v5569, 7
        %v5572 = vshll.u32 %v5382, 16
        %v5574 = vor.u32 %v5571, %v5572
        %v5575 = vsel %vm5397, %v5567, %v5574
        %v5576 = vrot.slane %v5571, 4
        %v5578 = vshrl.u32 %v5383, 16
        %v5580 = vrot.slane %v5578, 7
        %v5581 = vshll.u32 %v5383, 16
        %v5583 = vor.u32 %v5580, %v5581
        %v5584 = vsel %vm5397, %v5576, %v5583
        %v5585 = vrot.slane %v5580, 4
        %v5587 = vshrl.u32 %v5384, 16
        %v5589 = vrot.slane %v5587, 7
        %v5590 = vshll.u32 %v5384, 16
        %v5592 = vor.u32 %v5589, %v5590
        %v5593 = vsel %vm5397, %v5585, %v5592
        %v5594 = vrot.slane %v5589, 4
        %v5596 = vshrl.u32 %v5385, 16
        %v5598 = vrot.slane %v5596, 7
        %v5599 = vshll.u32 %v5385, 16
        %v5601 = vor.u32 %v5598, %v5599
        %v5602 = vsel %vm5397, %v5594, %v5601
        %v5603 = vrot.slane %v5598, 4
        %v5605 = vshrl.u32 %v5386, 16
        %v5607 = vrot.slane %v5605, 7
        %v5608 = vshll.u32 %v5386, 16
        %v5610 = vor.u32 %v5607, %v5608
        %v5611 = vsel %vm5397, %v5603, %v5610
        %v5612 = vrot.slane %v5607, 4
        %v5614 = vshrl.u32 %v5387, 16
        %v5616 = vrot.slane %v5614, 7
        %v5617 = vshll.u32 %v5387, 16
        %v5619 = vor.u32 %v5616, %v5617
        %v5620 = vsel %vm5397, %v5612, %v5619
        %v5621 = vrot.slane %v5616, 4
        %v5623 = vshrl.u32 %v5388, 16
        %v5625 = vrot.slane %v5623, 7
        %v5626 = vshll.u32 %v5388, 16
        %v5628 = vor.u32 %v5625, %v5626
        %v5629 = vsel %vm5397, %v5621, %v5628
        %v5630 = vrot.slane %v5625, 4
        %v5632 = vshrl.u32 %v5389, 16
        %v5634 = vrot.slane %v5632, 7
        %v5635 = vshll.u32 %v5389, 16
        %v5637 = vor.u32 %v5634, %v5635
        %v5638 = vsel %vm5397, %v5630, %v5637
        %v5639 = vrot.slane %v5634, 4
        %v5641 = vshrl.u32 %v5390, 16
        %v5643 = vrot.slane %v5641, 7
        %v5644 = vshll.u32 %v5390, 16
        %v5646 = vor.u32 %v5643, %v5644
        %v5647 = vsel %vm5397, %v5639, %v5646
        %v5648 = vrot.slane %v5643, 4
        %v5650 = vshrl.u32 %v5391, 16
        %v5652 = vrot.slane %v5650, 7
        %v5653 = vshll.u32 %v5391, 16
        %v5655 = vor.u32 %v5652, %v5653
        %v5656 = vsel %vm5397, %v5648, %v5655
        %v5657 = vrot.slane %v5652, 4
        %v5659 = vshrl.u32 %v5392, 16
        %v5661 = vrot.slane %v5659, 7
        %v5662 = vshll.u32 %v5392, 16
        %v5664 = vor.u32 %v5661, %v5662
        %v5665 = vsel %vm5397, %v5657, %v5664
        %v5666 = vrot.slane %v5661, 4
        %v5668 = vshrl.u32 %v5393, 16
        %v5670 = vrot.slane %v5668, 7
        %v5671 = vshll.u32 %v5393, 16
        %v5673 = vor.u32 %v5670, %v5671
        %v5674 = vsel %vm5397, %v5666, %v5673
        %v5675 = vrot.slane %v5670, 4
        %v5677 = vshrl.u32 %v5394, 16
        %v5679 = vrot.slane %v5677, 7
        %v5680 = vshll.u32 %v5394, 16
        %v5682 = vor.u32 %v5679, %v5680
        %v5683 = vsel %vm5397, %v5675, %v5682
        %v5684 = vrot.slane %v5679, 4
        %v5685 = vunpack.c.l.b16 %v5404
        %v5686 = vunpack.c.h.b16 %v5404
        %v5687 = vunpack.c.l.b16 0
        %v5688 = vunpack.c.h.b16 0
        %vm5689 = vcmp.ne.s32.totalorder %v5685, %v5687
        %vm5690 = vcmp.ne.s32.totalorder %v5686, %v5688
        %vm5691 = vmpackc.low %vm5690, %vm5689
        %v5692 = vunpack.c.l.b16 %v5413
        %v5693 = vunpack.c.h.b16 %v5413
        %v5694 = vunpack.c.l.b16 0
        %v5695 = vunpack.c.h.b16 0
        %vm5696 = vcmp.ne.s32.totalorder %v5692, %v5694
        %vm5697 = vcmp.ne.s32.totalorder %v5693, %v5695
        %vm5698 = vmpackc.low %vm5697, %vm5696
        %v5699 = vunpack.c.l.b16 %v5422
        %v5700 = vunpack.c.h.b16 %v5422
        %v5701 = vunpack.c.l.b16 0
        %v5702 = vunpack.c.h.b16 0
        %vm5703 = vcmp.ne.s32.totalorder %v5699, %v5701
        %vm5704 = vcmp.ne.s32.totalorder %v5700, %v5702
        %vm5705 = vmpackc.low %vm5704, %vm5703
        %v5706 = vunpack.c.l.b16 %v5431
        %v5707 = vunpack.c.h.b16 %v5431
        %v5708 = vunpack.c.l.b16 0
        %v5709 = vunpack.c.h.b16 0
        %vm5710 = vcmp.ne.s32.totalorder %v5706, %v5708
        %vm5711 = vcmp.ne.s32.totalorder %v5707, %v5709
        %vm5712 = vmpackc.low %vm5711, %vm5710
        %v5713 = vunpack.c.l.b16 %v5440
        %v5714 = vunpack.c.h.b16 %v5440
        %v5715 = vunpack.c.l.b16 0
        %v5716 = vunpack.c.h.b16 0
        %vm5717 = vcmp.ne.s32.totalorder %v5713, %v5715
        %vm5718 = vcmp.ne.s32.totalorder %v5714, %v5716
        %vm5719 = vmpackc.low %vm5718, %vm5717
        %v5720 = vunpack.c.l.b16 %v5449
        %v5721 = vunpack.c.h.b16 %v5449
        %v5722 = vunpack.c.l.b16 0
        %v5723 = vunpack.c.h.b16 0
        %vm5724 = vcmp.ne.s32.totalorder %v5720, %v5722
        %vm5725 = vcmp.ne.s32.totalorder %v5721, %v5723
        %vm5726 = vmpackc.low %vm5725, %vm5724
        %v5727 = vunpack.c.l.b16 %v5458
        %v5728 = vunpack.c.h.b16 %v5458
        %v5729 = vunpack.c.l.b16 0
        %v5730 = vunpack.c.h.b16 0
        %vm5731 = vcmp.ne.s32.totalorder %v5727, %v5729
        %vm5732 = vcmp.ne.s32.totalorder %v5728, %v5730
        %vm5733 = vmpackc.low %vm5732, %vm5731
        %v5734 = vunpack.c.l.b16 %v5467
        %v5735 = vunpack.c.h.b16 %v5467
        %v5736 = vunpack.c.l.b16 0
        %v5737 = vunpack.c.h.b16 0
        %vm5738 = vcmp.ne.s32.totalorder %v5734, %v5736
        %vm5739 = vcmp.ne.s32.totalorder %v5735, %v5737
        %vm5740 = vmpackc.low %vm5739, %vm5738
        %v5741 = vunpack.c.l.b16 %v5476
        %v5742 = vunpack.c.h.b16 %v5476
        %v5743 = vunpack.c.l.b16 0
        %v5744 = vunpack.c.h.b16 0
        %vm5745 = vcmp.ne.s32.totalorder %v5741, %v5743
        %vm5746 = vcmp.ne.s32.totalorder %v5742, %v5744
        %vm5747 = vmpackc.low %vm5746, %vm5745
        %v5748 = vunpack.c.l.b16 %v5485
        %v5749 = vunpack.c.h.b16 %v5485
        %v5750 = vunpack.c.l.b16 0
        %v5751 = vunpack.c.h.b16 0
        %vm5752 = vcmp.ne.s32.totalorder %v5748, %v5750
        %vm5753 = vcmp.ne.s32.totalorder %v5749, %v5751
        %vm5754 = vmpackc.low %vm5753, %vm5752
        %v5755 = vunpack.c.l.b16 %v5494
        %v5756 = vunpack.c.h.b16 %v5494
        %v5757 = vunpack.c.l.b16 0
        %v5758 = vunpack.c.h.b16 0
        %vm5759 = vcmp.ne.s32.totalorder %v5755, %v5757
        %vm5760 = vcmp.ne.s32.totalorder %v5756, %v5758
        %vm5761 = vmpackc.low %vm5760, %vm5759
        %v5762 = vunpack.c.l.b16 %v5503
        %v5763 = vunpack.c.h.b16 %v5503
        %v5764 = vunpack.c.l.b16 0
        %v5765 = vunpack.c.h.b16 0
        %vm5766 = vcmp.ne.s32.totalorder %v5762, %v5764
        %vm5767 = vcmp.ne.s32.totalorder %v5763, %v5765
        %vm5768 = vmpackc.low %vm5767, %vm5766
        %v5769 = vunpack.c.l.b16 %v5512
        %v5770 = vunpack.c.h.b16 %v5512
        %v5771 = vunpack.c.l.b16 0
        %v5772 = vunpack.c.h.b16 0
        %vm5773 = vcmp.ne.s32.totalorder %v5769, %v5771
        %vm5774 = vcmp.ne.s32.totalorder %v5770, %v5772
        %vm5775 = vmpackc.low %vm5774, %vm5773
        %v5776 = vunpack.c.l.b16 %v5521
        %v5777 = vunpack.c.h.b16 %v5521
        %v5778 = vunpack.c.l.b16 0
        %v5779 = vunpack.c.h.b16 0
        %vm5780 = vcmp.ne.s32.totalorder %v5776, %v5778
        %vm5781 = vcmp.ne.s32.totalorder %v5777, %v5779
        %vm5782 = vmpackc.low %vm5781, %vm5780
        %v5783 = vunpack.c.l.b16 %v5530
        %v5784 = vunpack.c.h.b16 %v5530
        %v5785 = vunpack.c.l.b16 0
        %v5786 = vunpack.c.h.b16 0
        %vm5787 = vcmp.ne.s32.totalorder %v5783, %v5785
        %vm5788 = vcmp.ne.s32.totalorder %v5784, %v5786
        %vm5789 = vmpackc.low %vm5788, %vm5787
        %v5790 = vunpack.c.l.b16 %v5539
        %v5791 = vunpack.c.h.b16 %v5539
        %v5792 = vunpack.c.l.b16 0
        %v5793 = vunpack.c.h.b16 0
        %vm5794 = vcmp.ne.s32.totalorder %v5790, %v5792
        %vm5795 = vcmp.ne.s32.totalorder %v5791, %v5793
        %vm5796 = vmpackc.low %vm5795, %vm5794
        %v5797 = vunpack.c.l.b16 %v5548
        %v5798 = vunpack.c.h.b16 %v5548
        %v5799 = vunpack.c.l.b16 0
        %v5800 = vunpack.c.h.b16 0
        %vm5801 = vcmp.ne.s32.totalorder %v5797, %v5799
        %vm5802 = vcmp.ne.s32.totalorder %v5798, %v5800
        %vm5803 = vmpackc.low %vm5802, %vm5801
        %v5804 = vunpack.c.l.b16 %v5557
        %v5805 = vunpack.c.h.b16 %v5557
        %v5806 = vunpack.c.l.b16 0
        %v5807 = vunpack.c.h.b16 0
        %vm5808 = vcmp.ne.s32.totalorder %v5804, %v5806
        %vm5809 = vcmp.ne.s32.totalorder %v5805, %v5807
        %vm5810 = vmpackc.low %vm5809, %vm5808
        %v5811 = vunpack.c.l.b16 %v5566
        %v5812 = vunpack.c.h.b16 %v5566
        %v5813 = vunpack.c.l.b16 0
        %v5814 = vunpack.c.h.b16 0
        %vm5815 = vcmp.ne.s32.totalorder %v5811, %v5813
        %vm5816 = vcmp.ne.s32.totalorder %v5812, %v5814
        %vm5817 = vmpackc.low %vm5816, %vm5815
        %v5818 = vunpack.c.l.b16 %v5575
        %v5819 = vunpack.c.h.b16 %v5575
        %v5820 = vunpack.c.l.b16 0
        %v5821 = vunpack.c.h.b16 0
        %vm5822 = vcmp.ne.s32.totalorder %v5818, %v5820
        %vm5823 = vcmp.ne.s32.totalorder %v5819, %v5821
        %vm5824 = vmpackc.low %vm5823, %vm5822
        %v5825 = vunpack.c.l.b16 %v5584
        %v5826 = vunpack.c.h.b16 %v5584
        %v5827 = vunpack.c.l.b16 0
        %v5828 = vunpack.c.h.b16 0
        %vm5829 = vcmp.ne.s32.totalorder %v5825, %v5827
        %vm5830 = vcmp.ne.s32.totalorder %v5826, %v5828
        %vm5831 = vmpackc.low %vm5830, %vm5829
        %v5832 = vunpack.c.l.b16 %v5593
        %v5833 = vunpack.c.h.b16 %v5593
        %v5834 = vunpack.c.l.b16 0
        %v5835 = vunpack.c.h.b16 0
        %vm5836 = vcmp.ne.s32.totalorder %v5832, %v5834
        %vm5837 = vcmp.ne.s32.totalorder %v5833, %v5835
        %vm5838 = vmpackc.low %vm5837, %vm5836
        %v5839 = vunpack.c.l.b16 %v5602
        %v5840 = vunpack.c.h.b16 %v5602
        %v5841 = vunpack.c.l.b16 0
        %v5842 = vunpack.c.h.b16 0
        %vm5843 = vcmp.ne.s32.totalorder %v5839, %v5841
        %vm5844 = vcmp.ne.s32.totalorder %v5840, %v5842
        %vm5845 = vmpackc.low %vm5844, %vm5843
        %v5846 = vunpack.c.l.b16 %v5611
        %v5847 = vunpack.c.h.b16 %v5611
        %v5848 = vunpack.c.l.b16 0
        %v5849 = vunpack.c.h.b16 0
        %vm5850 = vcmp.ne.s32.totalorder %v5846, %v5848
        %vm5851 = vcmp.ne.s32.totalorder %v5847, %v5849
        %vm5852 = vmpackc.low %vm5851, %vm5850
        %v5853 = vunpack.c.l.b16 %v5620
        %v5854 = vunpack.c.h.b16 %v5620
        %v5855 = vunpack.c.l.b16 0
        %v5856 = vunpack.c.h.b16 0
        %vm5857 = vcmp.ne.s32.totalorder %v5853, %v5855
        %vm5858 = vcmp.ne.s32.totalorder %v5854, %v5856
        %vm5859 = vmpackc.low %vm5858, %vm5857
        %v5860 = vunpack.c.l.b16 %v5629
        %v5861 = vunpack.c.h.b16 %v5629
        %v5862 = vunpack.c.l.b16 0
        %v5863 = vunpack.c.h.b16 0
        %vm5864 = vcmp.ne.s32.totalorder %v5860, %v5862
        %vm5865 = vcmp.ne.s32.totalorder %v5861, %v5863
        %vm5866 = vmpackc.low %vm5865, %vm5864
        %v5867 = vunpack.c.l.b16 %v5638
        %v5868 = vunpack.c.h.b16 %v5638
        %v5869 = vunpack.c.l.b16 0
        %v5870 = vunpack.c.h.b16 0
        %vm5871 = vcmp.ne.s32.totalorder %v5867, %v5869
        %vm5872 = vcmp.ne.s32.totalorder %v5868, %v5870
        %vm5873 = vmpackc.low %vm5872, %vm5871
        %v5874 = vunpack.c.l.b16 %v5647
        %v5875 = vunpack.c.h.b16 %v5647
        %v5876 = vunpack.c.l.b16 0
        %v5877 = vunpack.c.h.b16 0
        %vm5878 = vcmp.ne.s32.totalorder %v5874, %v5876
        %vm5879 = vcmp.ne.s32.totalorder %v5875, %v5877
        %vm5880 = vmpackc.low %vm5879, %vm5878
        %v5881 = vunpack.c.l.b16 %v5656
        %v5882 = vunpack.c.h.b16 %v5656
        %v5883 = vunpack.c.l.b16 0
        %v5884 = vunpack.c.h.b16 0
        %vm5885 = vcmp.ne.s32.totalorder %v5881, %v5883
        %vm5886 = vcmp.ne.s32.totalorder %v5882, %v5884
        %vm5887 = vmpackc.low %vm5886, %vm5885
        %v5888 = vunpack.c.l.b16 %v5665
        %v5889 = vunpack.c.h.b16 %v5665
        %v5890 = vunpack.c.l.b16 0
        %v5891 = vunpack.c.h.b16 0
        %vm5892 = vcmp.ne.s32.totalorder %v5888, %v5890
        %vm5893 = vcmp.ne.s32.totalorder %v5889, %v5891
        %vm5894 = vmpackc.low %vm5893, %vm5892
        %v5895 = vunpack.c.l.b16 %v5674
        %v5896 = vunpack.c.h.b16 %v5674
        %v5897 = vunpack.c.l.b16 0
        %v5898 = vunpack.c.h.b16 0
        %vm5899 = vcmp.ne.s32.totalorder %v5895, %v5897
        %vm5900 = vcmp.ne.s32.totalorder %v5896, %v5898
        %vm5901 = vmpackc.low %vm5900, %vm5899
        %v5902 = vunpack.c.l.b16 %v5683
        %v5903 = vunpack.c.h.b16 %v5683
        %v5904 = vunpack.c.l.b16 0
        %v5905 = vunpack.c.h.b16 0
        %vm5906 = vcmp.ne.s32.totalorder %v5902, %v5904
        %vm5907 = vcmp.ne.s32.totalorder %v5903, %v5905
        %vm5908 = vmpackc.low %vm5907, %vm5906
        %v5909 = vunpack.c.l.b16 %v5684
        %v5910 = vunpack.c.h.b16 %v5684
        %v5911 = vunpack.c.l.b16 0
        %v5912 = vunpack.c.h.b16 0
        %vm5913 = vcmp.ne.s32.totalorder %v5909, %v5911
        %vm5914 = vcmp.ne.s32.totalorder %v5910, %v5912
        %vm5915 = vmpackc.low %vm5914, %vm5913
        %v5916 = vsel %vm5691, %v5298, 0
        %v5917 = vsel %vm5698, %v5299, 0
        %v5918 = vsel %vm5705, %v5300, 0
        %v5919 = vsel %vm5712, %v5301, 0
        %v5920 = vsel %vm5719, %v5302, 0
        %v5921 = vsel %vm5726, %v5303, 0
        %v5922 = vsel %vm5733, %v5304, 0
        %v5923 = vsel %vm5740, %v5305, 0
        %v5924 = vsel %vm5747, %v5306, 0
        %v5925 = vsel %vm5754, %v5307, 0
        %v5926 = vsel %vm5761, %v5308, 0
        %v5927 = vsel %vm5768, %v5309, 0
        %v5928 = vsel %vm5775, %v5310, 0
        %v5929 = vsel %vm5782, %v5311, 0
        %v5930 = vsel %vm5789, %v5312, 0
        %v5931 = vsel %vm5796, %v5313, 0
        %v5932 = vsel %vm5803, %v5314, 0
        %v5933 = vsel %vm5810, %v5315, 0
        %v5934 = vsel %vm5817, %v5316, 0
        %v5935 = vsel %vm5824, %v5317, 0
        %v5936 = vsel %vm5831, %v5318, 0
        %v5937 = vsel %vm5838, %v5319, 0
        %v5938 = vsel %vm5845, %v5320, 0
        %v5939 = vsel %vm5852, %v5321, 0
        %v5940 = vsel %vm5859, %v5322, 0
        %v5941 = vsel %vm5866, %v5323, 0
        %v5942 = vsel %vm5873, %v5324, 0
        %v5943 = vsel %vm5880, %v5325, 0
        %v5944 = vsel %vm5887, %v5326, 0
        %v5945 = vsel %vm5894, %v5327, 0
        %v5946 = vsel %vm5901, %v5328, 0
        %v5947 = vsel %vm5908, %v5329, 0
        %v5948 = vsel %vm5915, %v5330, 0
        %s5949 = scalar_lea.vmem %s3, 32
        %v5950 = vld [vmem:[%s5949] sm:$0xf]
        %v5951 = vld [vmem:[%s5949 + $0x4] sm:$0xf]
        %v5952 = vld [vmem:[%s5949 + $0x8] sm:$0xf]
        %v5953 = vld [vmem:[%s5949 + $0xc] sm:$0xf]
        %v5987 = vunpack.c.l.b16 %v5916
        %v5988 = vunpack.c.l.b16 %v5917
        %v5989 = vunpack.c.l.b16 %v5918
        %v5990 = vunpack.c.l.b16 %v5919
        %v5991 = vunpack.c.l.b16 %v5920
        %v5992 = vunpack.c.l.b16 %v5921
        %v5993 = vunpack.c.l.b16 %v5922
        %v5994 = vunpack.c.l.b16 %v5923
        %v5995 = vunpack.c.l.b16 %v5924
        %v5996 = vunpack.c.l.b16 %v5925
        %v5997 = vunpack.c.l.b16 %v5926
        %v5998 = vunpack.c.l.b16 %v5927
        %v5999 = vunpack.c.l.b16 %v5928
        %v6000 = vunpack.c.l.b16 %v5929
        %v6001 = vunpack.c.l.b16 %v5930
        %v6002 = vunpack.c.l.b16 %v5931
        %v6003 = vunpack.c.l.b16 %v5932
        %v6004 = vunpack.c.l.b16 %v5933
        %v6005 = vunpack.c.l.b16 %v5934
        %v6006 = vunpack.c.l.b16 %v5935
        %v6007 = vunpack.c.l.b16 %v5936
        %v6008 = vunpack.c.l.b16 %v5937
        %v6009 = vunpack.c.l.b16 %v5938
        %v6010 = vunpack.c.l.b16 %v5939
        %v6011 = vunpack.c.l.b16 %v5940
        %v6012 = vunpack.c.l.b16 %v5941
        %v6013 = vunpack.c.l.b16 %v5942
        %v6014 = vunpack.c.l.b16 %v5943
        %v6015 = vunpack.c.l.b16 %v5944
        %v6016 = vunpack.c.l.b16 %v5945
        %v6017 = vunpack.c.l.b16 %v5946
        %v6018 = vunpack.c.l.b16 %v5947
        %v6019 = vunpack.c.l.b16 %v5948
        %v6020 = vpack.c.b16 %v5988, %v5987
        %v6021 = vpack.c.b16 %v5990, %v5989
        %v6022 = vpack.c.b16 %v5992, %v5991
        %v6023 = vpack.c.b16 %v5994, %v5993
        %v6024 = vpack.c.b16 %v5996, %v5995
        %v6025 = vpack.c.b16 %v5998, %v5997
        %v6026 = vpack.c.b16 %v6000, %v5999
        %v6027 = vpack.c.b16 %v6002, %v6001
        %v6028 = vpack.c.b16 %v6004, %v6003
        %v6029 = vpack.c.b16 %v6006, %v6005
        %v6030 = vpack.c.b16 %v6008, %v6007
        %v6031 = vpack.c.b16 %v6010, %v6009
        %v6032 = vpack.c.b16 %v6012, %v6011
        %v6033 = vpack.c.b16 %v6014, %v6013
        %v6034 = vpack.c.b16 %v6016, %v6015
        %v6035 = vpack.c.b16 %v6018, %v6017
        %v6036 = vpack.c.b16 %v6019, %v6019
        %vm6037 = vsmask.f32 7424
        %v6039 = vshrl.u32 %v6020, 16
        %v6041 = vshll.u32 %v6020, 16
        %v6043 = vrot.slane %v6041, 1
        %v6044 = vor.u32 %v6039, %v6043
        %v6046 = vshll.u32 %v6021, 16
        %v6048 = vrot.slane %v6046, 1
        %v6049 = vsel %vm6037, %v6044, %v6048
        %v6050 = vshrl.u32 %v6021, 16
        %v6052 = vor.u32 %v6050, %v6048
        %v6054 = vshll.u32 %v6022, 16
        %v6056 = vrot.slane %v6054, 1
        %v6057 = vsel %vm6037, %v6052, %v6056
        %v6058 = vshrl.u32 %v6022, 16
        %v6060 = vor.u32 %v6058, %v6056
        %v6062 = vshll.u32 %v6023, 16
        %v6064 = vrot.slane %v6062, 1
        %v6065 = vsel %vm6037, %v6060, %v6064
        %v6066 = vshrl.u32 %v6023, 16
        %v6068 = vor.u32 %v6066, %v6064
        %v6070 = vshll.u32 %v6024, 16
        %v6072 = vrot.slane %v6070, 1
        %v6073 = vsel %vm6037, %v6068, %v6072
        %v6074 = vshrl.u32 %v6024, 16
        %v6076 = vor.u32 %v6074, %v6072
        %v6078 = vshll.u32 %v6025, 16
        %v6080 = vrot.slane %v6078, 1
        %v6081 = vsel %vm6037, %v6076, %v6080
        %v6082 = vshrl.u32 %v6025, 16
        %v6084 = vor.u32 %v6082, %v6080
        %v6086 = vshll.u32 %v6026, 16
        %v6088 = vrot.slane %v6086, 1
        %v6089 = vsel %vm6037, %v6084, %v6088
        %v6090 = vshrl.u32 %v6026, 16
        %v6092 = vor.u32 %v6090, %v6088
        %v6094 = vshll.u32 %v6027, 16
        %v6096 = vrot.slane %v6094, 1
        %v6097 = vsel %vm6037, %v6092, %v6096
        %v6098 = vshrl.u32 %v6027, 16
        %v6100 = vor.u32 %v6098, %v6096
        %v6102 = vshll.u32 %v6028, 16
        %v6104 = vrot.slane %v6102, 1
        %v6105 = vsel %vm6037, %v6100, %v6104
        %v6106 = vshrl.u32 %v6028, 16
        %v6108 = vor.u32 %v6106, %v6104
        %v6110 = vshll.u32 %v6029, 16
        %v6112 = vrot.slane %v6110, 1
        %v6113 = vsel %vm6037, %v6108, %v6112
        %v6114 = vshrl.u32 %v6029, 16
        %v6116 = vor.u32 %v6114, %v6112
        %v6118 = vshll.u32 %v6030, 16
        %v6120 = vrot.slane %v6118, 1
        %v6121 = vsel %vm6037, %v6116, %v6120
        %v6122 = vshrl.u32 %v6030, 16
        %v6124 = vor.u32 %v6122, %v6120
        %v6126 = vshll.u32 %v6031, 16
        %v6128 = vrot.slane %v6126, 1
        %v6129 = vsel %vm6037, %v6124, %v6128
        %v6130 = vshrl.u32 %v6031, 16
        %v6132 = vor.u32 %v6130, %v6128
        %v6134 = vshll.u32 %v6032, 16
        %v6136 = vrot.slane %v6134, 1
        %v6137 = vsel %vm6037, %v6132, %v6136
        %v6138 = vshrl.u32 %v6032, 16
        %v6140 = vor.u32 %v6138, %v6136
        %v6142 = vshll.u32 %v6033, 16
        %v6144 = vrot.slane %v6142, 1
        %v6145 = vsel %vm6037, %v6140, %v6144
        %v6146 = vshrl.u32 %v6033, 16
        %v6148 = vor.u32 %v6146, %v6144
        %v6150 = vshll.u32 %v6034, 16
        %v6152 = vrot.slane %v6150, 1
        %v6153 = vsel %vm6037, %v6148, %v6152
        %v6154 = vshrl.u32 %v6034, 16
        %v6156 = vor.u32 %v6154, %v6152
        %v6158 = vshll.u32 %v6035, 16
        %v6160 = vrot.slane %v6158, 1
        %v6161 = vsel %vm6037, %v6156, %v6160
        %v6162 = vshrl.u32 %v6035, 16
        %v6164 = vor.u32 %v6162, %v6160
        %v6166 = vshll.u32 %v6036, 16
        %v6168 = vrot.slane %v6166, 1
        %v6169 = vsel %vm6037, %v6164, %v6168
        %v6174 = vunpack.c.l.b16 %v5950
        %v6175 = vunpack.c.l.b16 %v5951
        %v6176 = vunpack.c.l.b16 %v5952
        %v6177 = vunpack.c.l.b16 %v5953
        %v6178 = vpack.c.b16 %v6175, %v6174
        %v6179 = vpack.c.b16 %v6177, %v6176
        %v6183 = vsel %vm3275, %v6049, 0
        %v6186 = vsel %vm3275, %v6057, 0
        %v6189 = vsel %vm3275, %v6065, 0
        %v6192 = vsel %vm3275, %v6073, 0
        %v6195 = vsel %vm3275, %v6081, 0
        %v6198 = vsel %vm3275, %v6089, 0
        %v6201 = vsel %vm3275, %v6097, 0
        %v6204 = vsel %vm3275, %v6105, 0
        %v6207 = vsel %vm3275, %v6113, 0
        %v6210 = vsel %vm3275, %v6121, 0
        %v6213 = vsel %vm3275, %v6129, 0
        %v6216 = vsel %vm3275, %v6137, 0
        %v6219 = vsel %vm3275, %v6145, 0
        %v6222 = vsel %vm3275, %v6153, 0
        %v6225 = vsel %vm3275, %v6161, 0
        %v6228 = vsel %vm3275, %v6169, 0
        %6230 = vmatpush.bf16.msra.mxu0 0
        %6231 = vmatpush.bf16.msra.mxu0 0
        %6232 = vmatpush.bf16.msra.mxu0 0
        %6233 = vmatpush.bf16.msra.mxu0 0
        %6234 = vmatpush.bf16.msra.mxu0 0
        %6235 = vmatpush.bf16.msra.mxu0 0
        %6236 = vmatpush.bf16.msra.mxu0 %v6179
        %6237 = vmatpush.bf16.msra.mxu0 %v6178
        %6238 = vmatmul.bf16.gmra.mxu0 %v6183
        %v6239 = vpop.f32.mrf.mxu0
        %v6240 = vadd.f32 0.0, %v6239
        %v6241 = vpop.f32.mrf.mxu0
        %v6242 = vadd.f32 0.0, %v6241
        %6243 = vmatmul.bf16.gmra.mxu0 %v6186
        %v6244 = vpop.f32.mrf.mxu0
        %v6245 = vadd.f32 0.0, %v6244
        %v6246 = vpop.f32.mrf.mxu0
        %v6247 = vadd.f32 0.0, %v6246
        %6248 = vmatmul.bf16.gmra.mxu0 %v6189
        %v6249 = vpop.f32.mrf.mxu0
        %v6250 = vadd.f32 0.0, %v6249
        %v6251 = vpop.f32.mrf.mxu0
        %v6252 = vadd.f32 0.0, %v6251
        %6253 = vmatmul.bf16.gmra.mxu0 %v6192
        %v6254 = vpop.f32.mrf.mxu0
        %v6255 = vadd.f32 0.0, %v6254
        %v6256 = vpop.f32.mrf.mxu0
        %v6257 = vadd.f32 0.0, %v6256
        %6258 = vmatmul.bf16.gmra.mxu0 %v6195
        %v6259 = vpop.f32.mrf.mxu0
        %v6260 = vadd.f32 0.0, %v6259
        %v6261 = vpop.f32.mrf.mxu0
        %v6262 = vadd.f32 0.0, %v6261
        %6263 = vmatmul.bf16.gmra.mxu0 %v6198
        %v6264 = vpop.f32.mrf.mxu0
        %v6265 = vadd.f32 0.0, %v6264
        %v6266 = vpop.f32.mrf.mxu0
        %v6267 = vadd.f32 0.0, %v6266
        %6268 = vmatmul.bf16.gmra.mxu0 %v6201
        %v6269 = vpop.f32.mrf.mxu0
        %v6270 = vadd.f32 0.0, %v6269
        %v6271 = vpop.f32.mrf.mxu0
        %v6272 = vadd.f32 0.0, %v6271
        %6273 = vmatmul.bf16.gmra.mxu0 %v6204
        %v6274 = vpop.f32.mrf.mxu0
        %v6275 = vadd.f32 0.0, %v6274
        %v6276 = vpop.f32.mrf.mxu0
        %v6277 = vadd.f32 0.0, %v6276
        %6278 = vmatmul.bf16.gmra.mxu0 %v6207
        %v6279 = vpop.f32.mrf.mxu0
        %v6280 = vadd.f32 0.0, %v6279
        %v6281 = vpop.f32.mrf.mxu0
        %v6282 = vadd.f32 0.0, %v6281
        %6283 = vmatmul.bf16.gmra.mxu0 %v6210
        %v6284 = vpop.f32.mrf.mxu0
        %v6285 = vadd.f32 0.0, %v6284
        %v6286 = vpop.f32.mrf.mxu0
        %v6287 = vadd.f32 0.0, %v6286
        %6288 = vmatmul.bf16.gmra.mxu0 %v6213
        %v6289 = vpop.f32.mrf.mxu0
        %v6290 = vadd.f32 0.0, %v6289
        %v6291 = vpop.f32.mrf.mxu0
        %v6292 = vadd.f32 0.0, %v6291
        %6293 = vmatmul.bf16.gmra.mxu0 %v6216
        %v6294 = vpop.f32.mrf.mxu0
        %v6295 = vadd.f32 0.0, %v6294
        %v6296 = vpop.f32.mrf.mxu0
        %v6297 = vadd.f32 0.0, %v6296
        %6298 = vmatmul.bf16.gmra.mxu0 %v6219
        %v6299 = vpop.f32.mrf.mxu0
        %v6300 = vadd.f32 0.0, %v6299
        %v6301 = vpop.f32.mrf.mxu0
        %v6302 = vadd.f32 0.0, %v6301
        %6303 = vmatmul.bf16.gmra.mxu0 %v6222
        %v6304 = vpop.f32.mrf.mxu0
        %v6305 = vadd.f32 0.0, %v6304
        %v6306 = vpop.f32.mrf.mxu0
        %v6307 = vadd.f32 0.0, %v6306
        %6308 = vmatmul.bf16.gmra.mxu0 %v6225
        %v6309 = vpop.f32.mrf.mxu0
        %v6310 = vadd.f32 0.0, %v6309
        %v6311 = vpop.f32.mrf.mxu0
        %v6312 = vadd.f32 0.0, %v6311
        %6313 = vmatmul.bf16.gmra.mxu0 %v6228
        %v6314 = vpop.f32.mrf.mxu0
        %v6315 = vadd.f32 0.0, %v6314
        %v6316 = vpop.f32.mrf.mxu0
        %v6317 = vadd.f32 0.0, %v6316
        %6318 = vdwg.mxu0
        %v6319 = vadd.f32 %v5219, %v6240
        %v6320 = vadd.f32 %v5221, %v6242
        %v6321 = vadd.f32 %v5224, %v6245
        %v6322 = vadd.f32 %v5226, %v6247
        %v6323 = vadd.f32 %v5229, %v6250
        %v6324 = vadd.f32 %v5231, %v6252
        %v6325 = vadd.f32 %v5234, %v6255
        %v6326 = vadd.f32 %v5236, %v6257
        %v6327 = vadd.f32 %v5239, %v6260
        %v6328 = vadd.f32 %v5241, %v6262
        %v6329 = vadd.f32 %v5244, %v6265
        %v6330 = vadd.f32 %v5246, %v6267
        %v6331 = vadd.f32 %v5249, %v6270
        %v6332 = vadd.f32 %v5251, %v6272
        %v6333 = vadd.f32 %v5254, %v6275
        %v6334 = vadd.f32 %v5256, %v6277
        %v6335 = vadd.f32 %v5259, %v6280
        %v6336 = vadd.f32 %v5261, %v6282
        %v6337 = vadd.f32 %v5264, %v6285
        %v6338 = vadd.f32 %v5266, %v6287
        %v6339 = vadd.f32 %v5269, %v6290
        %v6340 = vadd.f32 %v5271, %v6292
        %v6341 = vadd.f32 %v5274, %v6295
        %v6342 = vadd.f32 %v5276, %v6297
        %v6343 = vadd.f32 %v5279, %v6300
        %v6344 = vadd.f32 %v5281, %v6302
        %v6345 = vadd.f32 %v5284, %v6305
        %v6346 = vadd.f32 %v5286, %v6307
        %v6347 = vadd.f32 %v5289, %v6310
        %v6348 = vadd.f32 %v5291, %v6312
        %v6349 = vadd.f32 %v5294, %v6315
        %v6350 = vadd.f32 %v5296, %v6317
        %v6351 = vld [vmem:[#allocation2 + $0x8] sm:$0x8]
        %v6352 = vld [vmem:[#allocation2 + $0xc] sm:$0xf]
        %v6353 = vld [vmem:[#allocation2 + $0x10] sm:$0xf]
        %v6354 = vld [vmem:[#allocation2 + $0x14] sm:$0xf]
        %v6355 = vld [vmem:[#allocation2 + $0x18] sm:$0xf]
        %v6356 = vld [vmem:[#allocation2 + $0x1c] sm:$0xf]
        %v6357 = vld [vmem:[#allocation2 + $0x20] sm:$0xf]
        %v6358 = vld [vmem:[#allocation2 + $0x24] sm:$0xf]
        %v6359 = vld [vmem:[#allocation2 + $0x28] sm:$0xf]
        %v6360 = vld [vmem:[#allocation2 + $0x2c] sm:$0xf]
        %v6361 = vld [vmem:[#allocation2 + $0x30] sm:$0xf]
        %v6362 = vld [vmem:[#allocation2 + $0x34] sm:$0xf]
        %v6363 = vld [vmem:[#allocation2 + $0x38] sm:$0xf]
        %v6364 = vld [vmem:[#allocation2 + $0x3c] sm:$0xf]
        %v6365 = vld [vmem:[#allocation2 + $0x40] sm:$0xf]
        %v6366 = vld [vmem:[#allocation2 + $0x44] sm:$0xf]
        %v6367 = vld [vmem:[#allocation2 + $0x48] sm:$0xf]
        %v6368 = vld [vmem:[#allocation2 + $0x4c] sm:$0xf]
        %v6369 = vld [vmem:[#allocation2 + $0x50] sm:$0xf]
        %v6370 = vld [vmem:[#allocation2 + $0x54] sm:$0xf]
        %v6371 = vld [vmem:[#allocation2 + $0x58] sm:$0xf]
        %v6372 = vld [vmem:[#allocation2 + $0x5c] sm:$0xf]
        %v6373 = vld [vmem:[#allocation2 + $0x60] sm:$0xf]
        %v6374 = vld [vmem:[#allocation2 + $0x64] sm:$0xf]
        %v6375 = vld [vmem:[#allocation2 + $0x68] sm:$0xf]
        %v6376 = vld [vmem:[#allocation2 + $0x6c] sm:$0xf]
        %v6377 = vld [vmem:[#allocation2 + $0x70] sm:$0xf]
        %v6378 = vld [vmem:[#allocation2 + $0x74] sm:$0xf]
        %v6379 = vld [vmem:[#allocation2 + $0x78] sm:$0xf]
        %v6380 = vld [vmem:[#allocation2 + $0x7c] sm:$0xf]
        %v6381 = vld [vmem:[#allocation2 + $0x80] sm:$0xf]
        %v6382 = vld [vmem:[#allocation2 + $0x84] sm:$0xf]
        %v6383 = vld [vmem:[#allocation2 + $0x88] sm:$0xf]
        %v6384 = vsel %vm4417, %v6351, 0
        %v6385 = vsel %vm4424, %v6352, 0
        %v6386 = vsel %vm4431, %v6353, 0
        %v6387 = vsel %vm4438, %v6354, 0
        %v6388 = vsel %vm4445, %v6355, 0
        %v6389 = vsel %vm4452, %v6356, 0
        %v6390 = vsel %vm4459, %v6357, 0
        %v6391 = vsel %vm4466, %v6358, 0
        %v6392 = vsel %vm4473, %v6359, 0
        %v6393 = vsel %vm4480, %v6360, 0
        %v6394 = vsel %vm4487, %v6361, 0
        %v6395 = vsel %vm4494, %v6362, 0
        %v6396 = vsel %vm4501, %v6363, 0
        %v6397 = vsel %vm4508, %v6364, 0
        %v6398 = vsel %vm4515, %v6365, 0
        %v6399 = vsel %vm4522, %v6366, 0
        %v6400 = vsel %vm4529, %v6367, 0
        %v6401 = vsel %vm4536, %v6368, 0
        %v6402 = vsel %vm4543, %v6369, 0
        %v6403 = vsel %vm4550, %v6370, 0
        %v6404 = vsel %vm4557, %v6371, 0
        %v6405 = vsel %vm4564, %v6372, 0
        %v6406 = vsel %vm4571, %v6373, 0
        %v6407 = vsel %vm4578, %v6374, 0
        %v6408 = vsel %vm4585, %v6375, 0
        %v6409 = vsel %vm4592, %v6376, 0
        %v6410 = vsel %vm4599, %v6377, 0
        %v6411 = vsel %vm4606, %v6378, 0
        %v6412 = vsel %vm4613, %v6379, 0
        %v6413 = vsel %vm4620, %v6380, 0
        %v6414 = vsel %vm4627, %v6381, 0
        %v6415 = vsel %vm4634, %v6382, 0
        %v6416 = vsel %vm4641, %v6383, 0
        %s6417 = scalar_lea.vmem %s3, 48
        %v6418 = vld [vmem:[%s6417] sm:$0xf]
        %v6419 = vld [vmem:[%s6417 + $0x4] sm:$0xf]
        %v6420 = vld [vmem:[%s6417 + $0x8] sm:$0xf]
        %v6421 = vld [vmem:[%s6417 + $0xc] sm:$0xf]
        %v6455 = vunpack.c.l.b16 %v6384
        %v6456 = vunpack.c.l.b16 %v6385
        %v6457 = vunpack.c.l.b16 %v6386
        %v6458 = vunpack.c.l.b16 %v6387
        %v6459 = vunpack.c.l.b16 %v6388
        %v6460 = vunpack.c.l.b16 %v6389
        %v6461 = vunpack.c.l.b16 %v6390
        %v6462 = vunpack.c.l.b16 %v6391
        %v6463 = vunpack.c.l.b16 %v6392
        %v6464 = vunpack.c.l.b16 %v6393
        %v6465 = vunpack.c.l.b16 %v6394
        %v6466 = vunpack.c.l.b16 %v6395
        %v6467 = vunpack.c.l.b16 %v6396
        %v6468 = vunpack.c.l.b16 %v6397
        %v6469 = vunpack.c.l.b16 %v6398
        %v6470 = vunpack.c.l.b16 %v6399
        %v6471 = vunpack.c.l.b16 %v6400
        %v6472 = vunpack.c.l.b16 %v6401
        %v6473 = vunpack.c.l.b16 %v6402
        %v6474 = vunpack.c.l.b16 %v6403
        %v6475 = vunpack.c.l.b16 %v6404
        %v6476 = vunpack.c.l.b16 %v6405
        %v6477 = vunpack.c.l.b16 %v6406
        %v6478 = vunpack.c.l.b16 %v6407
        %v6479 = vunpack.c.l.b16 %v6408
        %v6480 = vunpack.c.l.b16 %v6409
        %v6481 = vunpack.c.l.b16 %v6410
        %v6482 = vunpack.c.l.b16 %v6411
        %v6483 = vunpack.c.l.b16 %v6412
        %v6484 = vunpack.c.l.b16 %v6413
        %v6485 = vunpack.c.l.b16 %v6414
        %v6486 = vunpack.c.l.b16 %v6415
        %v6487 = vunpack.c.l.b16 %v6416
        %v6488 = vpack.c.b16 %v6456, %v6455
        %v6489 = vpack.c.b16 %v6458, %v6457
        %v6490 = vpack.c.b16 %v6460, %v6459
        %v6491 = vpack.c.b16 %v6462, %v6461
        %v6492 = vpack.c.b16 %v6464, %v6463
        %v6493 = vpack.c.b16 %v6466, %v6465
        %v6494 = vpack.c.b16 %v6468, %v6467
        %v6495 = vpack.c.b16 %v6470, %v6469
        %v6496 = vpack.c.b16 %v6472, %v6471
        %v6497 = vpack.c.b16 %v6474, %v6473
        %v6498 = vpack.c.b16 %v6476, %v6475
        %v6499 = vpack.c.b16 %v6478, %v6477
        %v6500 = vpack.c.b16 %v6480, %v6479
        %v6501 = vpack.c.b16 %v6482, %v6481
        %v6502 = vpack.c.b16 %v6484, %v6483
        %v6503 = vpack.c.b16 %v6486, %v6485
        %v6504 = vpack.c.b16 %v6487, %v6487
        %v6506 = vshrl.u32 %v6488, 16
        %v6508 = vrot.slane %v6506, 3
        %v6509 = vshll.u32 %v6488, 16
        %v6511 = vrot.slane %v6509, 4
        %v6512 = vor.u32 %v6508, %v6511
        %v6514 = vshrl.u32 %v6489, 16
        %v6516 = vrot.slane %v6514, 3
        %v6517 = vshll.u32 %v6489, 16
        %v6519 = vrot.slane %v6517, 4
        %v6520 = vor.u32 %v6516, %v6519
        %v6521 = vsel %vm4996, %v6512, %v6520
        %v6523 = vshrl.u32 %v6490, 16
        %v6525 = vrot.slane %v6523, 3
        %v6526 = vshll.u32 %v6490, 16
        %v6528 = vrot.slane %v6526, 4
        %v6529 = vor.u32 %v6525, %v6528
        %v6530 = vsel %vm4996, %v6520, %v6529
        %v6532 = vshrl.u32 %v6491, 16
        %v6534 = vrot.slane %v6532, 3
        %v6535 = vshll.u32 %v6491, 16
        %v6537 = vrot.slane %v6535, 4
        %v6538 = vor.u32 %v6534, %v6537
        %v6539 = vsel %vm4996, %v6529, %v6538
        %v6541 = vshrl.u32 %v6492, 16
        %v6543 = vrot.slane %v6541, 3
        %v6544 = vshll.u32 %v6492, 16
        %v6546 = vrot.slane %v6544, 4
        %v6547 = vor.u32 %v6543, %v6546
        %v6548 = vsel %vm4996, %v6538, %v6547
        %v6550 = vshrl.u32 %v6493, 16
        %v6552 = vrot.slane %v6550, 3
        %v6553 = vshll.u32 %v6493, 16
        %v6555 = vrot.slane %v6553, 4
        %v6556 = vor.u32 %v6552, %v6555
        %v6557 = vsel %vm4996, %v6547, %v6556
        %v6559 = vshrl.u32 %v6494, 16
        %v6561 = vrot.slane %v6559, 3
        %v6562 = vshll.u32 %v6494, 16
        %v6564 = vrot.slane %v6562, 4
        %v6565 = vor.u32 %v6561, %v6564
        %v6566 = vsel %vm4996, %v6556, %v6565
        %v6568 = vshrl.u32 %v6495, 16
        %v6570 = vrot.slane %v6568, 3
        %v6571 = vshll.u32 %v6495, 16
        %v6573 = vrot.slane %v6571, 4
        %v6574 = vor.u32 %v6570, %v6573
        %v6575 = vsel %vm4996, %v6565, %v6574
        %v6577 = vshrl.u32 %v6496, 16
        %v6579 = vrot.slane %v6577, 3
        %v6580 = vshll.u32 %v6496, 16
        %v6582 = vrot.slane %v6580, 4
        %v6583 = vor.u32 %v6579, %v6582
        %v6584 = vsel %vm4996, %v6574, %v6583
        %v6586 = vshrl.u32 %v6497, 16
        %v6588 = vrot.slane %v6586, 3
        %v6589 = vshll.u32 %v6497, 16
        %v6591 = vrot.slane %v6589, 4
        %v6592 = vor.u32 %v6588, %v6591
        %v6593 = vsel %vm4996, %v6583, %v6592
        %v6595 = vshrl.u32 %v6498, 16
        %v6597 = vrot.slane %v6595, 3
        %v6598 = vshll.u32 %v6498, 16
        %v6600 = vrot.slane %v6598, 4
        %v6601 = vor.u32 %v6597, %v6600
        %v6602 = vsel %vm4996, %v6592, %v6601
        %v6604 = vshrl.u32 %v6499, 16
        %v6606 = vrot.slane %v6604, 3
        %v6607 = vshll.u32 %v6499, 16
        %v6609 = vrot.slane %v6607, 4
        %v6610 = vor.u32 %v6606, %v6609
        %v6611 = vsel %vm4996, %v6601, %v6610
        %v6613 = vshrl.u32 %v6500, 16
        %v6615 = vrot.slane %v6613, 3
        %v6616 = vshll.u32 %v6500, 16
        %v6618 = vrot.slane %v6616, 4
        %v6619 = vor.u32 %v6615, %v6618
        %v6620 = vsel %vm4996, %v6610, %v6619
        %v6622 = vshrl.u32 %v6501, 16
        %v6624 = vrot.slane %v6622, 3
        %v6625 = vshll.u32 %v6501, 16
        %v6627 = vrot.slane %v6625, 4
        %v6628 = vor.u32 %v6624, %v6627
        %v6629 = vsel %vm4996, %v6619, %v6628
        %v6631 = vshrl.u32 %v6502, 16
        %v6633 = vrot.slane %v6631, 3
        %v6634 = vshll.u32 %v6502, 16
        %v6636 = vrot.slane %v6634, 4
        %v6637 = vor.u32 %v6633, %v6636
        %v6638 = vsel %vm4996, %v6628, %v6637
        %v6640 = vshrl.u32 %v6503, 16
        %v6642 = vrot.slane %v6640, 3
        %v6643 = vshll.u32 %v6503, 16
        %v6645 = vrot.slane %v6643, 4
        %v6646 = vor.u32 %v6642, %v6645
        %v6647 = vsel %vm4996, %v6637, %v6646
        %v6649 = vshrl.u32 %v6504, 16
        %v6651 = vrot.slane %v6649, 3
        %v6652 = vshll.u32 %v6504, 16
        %v6654 = vrot.slane %v6652, 4
        %v6655 = vor.u32 %v6651, %v6654
        %v6656 = vsel %vm4996, %v6646, %v6655
        %v6661 = vunpack.c.l.b16 %v6418
        %v6662 = vunpack.c.l.b16 %v6419
        %v6663 = vunpack.c.l.b16 %v6420
        %v6664 = vunpack.c.l.b16 %v6421
        %v6665 = vpack.c.b16 %v6662, %v6661
        %v6666 = vpack.c.b16 %v6664, %v6663
        %v6670 = vsel %vm3275, %v6521, 0
        %v6673 = vsel %vm3275, %v6530, 0
        %v6676 = vsel %vm3275, %v6539, 0
        %v6679 = vsel %vm3275, %v6548, 0
        %v6682 = vsel %vm3275, %v6557, 0
        %v6685 = vsel %vm3275, %v6566, 0
        %v6688 = vsel %vm3275, %v6575, 0
        %v6691 = vsel %vm3275, %v6584, 0
        %v6694 = vsel %vm3275, %v6593, 0
        %v6697 = vsel %vm3275, %v6602, 0
        %v6700 = vsel %vm3275, %v6611, 0
        %v6703 = vsel %vm3275, %v6620, 0
        %v6706 = vsel %vm3275, %v6629, 0
        %v6709 = vsel %vm3275, %v6638, 0
        %v6712 = vsel %vm3275, %v6647, 0
        %v6715 = vsel %vm3275, %v6656, 0
        %6717 = vmatpush.bf16.msra.mxu0 0
        %6718 = vmatpush.bf16.msra.mxu0 0
        %6719 = vmatpush.bf16.msra.mxu0 0
        %6720 = vmatpush.bf16.msra.mxu0 0
        %6721 = vmatpush.bf16.msra.mxu0 0
        %6722 = vmatpush.bf16.msra.mxu0 0
        %6723 = vmatpush.bf16.msra.mxu0 %v6666
        %6724 = vmatpush.bf16.msra.mxu0 %v6665
        %6725 = vmatmul.bf16.gmra.mxu0 %v6670
        %v6726 = vpop.f32.mrf.mxu0
        %v6727 = vadd.f32 0.0, %v6726
        %v6728 = vpop.f32.mrf.mxu0
        %v6729 = vadd.f32 0.0, %v6728
        %6730 = vmatmul.bf16.gmra.mxu0 %v6673
        %v6731 = vpop.f32.mrf.mxu0
        %v6732 = vadd.f32 0.0, %v6731
        %v6733 = vpop.f32.mrf.mxu0
        %v6734 = vadd.f32 0.0, %v6733
        %6735 = vmatmul.bf16.gmra.mxu0 %v6676
        %v6736 = vpop.f32.mrf.mxu0
        %v6737 = vadd.f32 0.0, %v6736
        %v6738 = vpop.f32.mrf.mxu0
        %v6739 = vadd.f32 0.0, %v6738
        %6740 = vmatmul.bf16.gmra.mxu0 %v6679
        %v6741 = vpop.f32.mrf.mxu0
        %v6742 = vadd.f32 0.0, %v6741
        %v6743 = vpop.f32.mrf.mxu0
        %v6744 = vadd.f32 0.0, %v6743
        %6745 = vmatmul.bf16.gmra.mxu0 %v6682
        %v6746 = vpop.f32.mrf.mxu0
        %v6747 = vadd.f32 0.0, %v6746
        %v6748 = vpop.f32.mrf.mxu0
        %v6749 = vadd.f32 0.0, %v6748
        %6750 = vmatmul.bf16.gmra.mxu0 %v6685
        %v6751 = vpop.f32.mrf.mxu0
        %v6752 = vadd.f32 0.0, %v6751
        %v6753 = vpop.f32.mrf.mxu0
        %v6754 = vadd.f32 0.0, %v6753
        %6755 = vmatmul.bf16.gmra.mxu0 %v6688
        %v6756 = vpop.f32.mrf.mxu0
        %v6757 = vadd.f32 0.0, %v6756
        %v6758 = vpop.f32.mrf.mxu0
        %v6759 = vadd.f32 0.0, %v6758
        %6760 = vmatmul.bf16.gmra.mxu0 %v6691
        %v6761 = vpop.f32.mrf.mxu0
        %v6762 = vadd.f32 0.0, %v6761
        %v6763 = vpop.f32.mrf.mxu0
        %v6764 = vadd.f32 0.0, %v6763
        %6765 = vmatmul.bf16.gmra.mxu0 %v6694
        %v6766 = vpop.f32.mrf.mxu0
        %v6767 = vadd.f32 0.0, %v6766
        %v6768 = vpop.f32.mrf.mxu0
        %v6769 = vadd.f32 0.0, %v6768
        %6770 = vmatmul.bf16.gmra.mxu0 %v6697
        %v6771 = vpop.f32.mrf.mxu0
        %v6772 = vadd.f32 0.0, %v6771
        %v6773 = vpop.f32.mrf.mxu0
        %v6774 = vadd.f32 0.0, %v6773
        %6775 = vmatmul.bf16.gmra.mxu0 %v6700
        %v6776 = vpop.f32.mrf.mxu0
        %v6777 = vadd.f32 0.0, %v6776
        %v6778 = vpop.f32.mrf.mxu0
        %v6779 = vadd.f32 0.0, %v6778
        %6780 = vmatmul.bf16.gmra.mxu0 %v6703
        %v6781 = vpop.f32.mrf.mxu0
        %v6782 = vadd.f32 0.0, %v6781
        %v6783 = vpop.f32.mrf.mxu0
        %v6784 = vadd.f32 0.0, %v6783
        %6785 = vmatmul.bf16.gmra.mxu0 %v6706
        %v6786 = vpop.f32.mrf.mxu0
        %v6787 = vadd.f32 0.0, %v6786
        %v6788 = vpop.f32.mrf.mxu0
        %v6789 = vadd.f32 0.0, %v6788
        %6790 = vmatmul.bf16.gmra.mxu0 %v6709
        %v6791 = vpop.f32.mrf.mxu0
        %v6792 = vadd.f32 0.0, %v6791
        %v6793 = vpop.f32.mrf.mxu0
        %v6794 = vadd.f32 0.0, %v6793
        %6795 = vmatmul.bf16.gmra.mxu0 %v6712
        %v6796 = vpop.f32.mrf.mxu0
        %v6797 = vadd.f32 0.0, %v6796
        %v6798 = vpop.f32.mrf.mxu0
        %v6799 = vadd.f32 0.0, %v6798
        %6800 = vmatmul.bf16.gmra.mxu0 %v6715
        %v6801 = vpop.f32.mrf.mxu0
        %v6802 = vadd.f32 0.0, %v6801
        %v6803 = vpop.f32.mrf.mxu0
        %v6804 = vadd.f32 0.0, %v6803
        %6805 = vdwg.mxu0
        %v6806 = vadd.f32 %v6319, %v6727
        %v6807 = vadd.f32 %v6320, %v6729
        %v6808 = vadd.f32 %v6321, %v6732
        %v6809 = vadd.f32 %v6322, %v6734
        %v6810 = vadd.f32 %v6323, %v6737
        %v6811 = vadd.f32 %v6324, %v6739
        %v6812 = vadd.f32 %v6325, %v6742
        %v6813 = vadd.f32 %v6326, %v6744
        %v6814 = vadd.f32 %v6327, %v6747
        %v6815 = vadd.f32 %v6328, %v6749
        %v6816 = vadd.f32 %v6329, %v6752
        %v6817 = vadd.f32 %v6330, %v6754
        %v6818 = vadd.f32 %v6331, %v6757
        %v6819 = vadd.f32 %v6332, %v6759
        %v6820 = vadd.f32 %v6333, %v6762
        %v6821 = vadd.f32 %v6334, %v6764
        %v6822 = vadd.f32 %v6335, %v6767
        %v6823 = vadd.f32 %v6336, %v6769
        %v6824 = vadd.f32 %v6337, %v6772
        %v6825 = vadd.f32 %v6338, %v6774
        %v6826 = vadd.f32 %v6339, %v6777
        %v6827 = vadd.f32 %v6340, %v6779
        %v6828 = vadd.f32 %v6341, %v6782
        %v6829 = vadd.f32 %v6342, %v6784
        %v6830 = vadd.f32 %v6343, %v6787
        %v6831 = vadd.f32 %v6344, %v6789
        %v6832 = vadd.f32 %v6345, %v6792
        %v6833 = vadd.f32 %v6346, %v6794
        %v6834 = vadd.f32 %v6347, %v6797
        %v6835 = vadd.f32 %v6348, %v6799
        %v6836 = vadd.f32 %v6349, %v6802
        %v6837 = vadd.f32 %v6350, %v6804
        %s6838 = scalar_lea.vmem %s3, 64
        %v6839 = vld [vmem:[%s6838] sm:$0xf]
        %v6840 = vld [vmem:[%s6838 + $0x4] sm:$0xf]
        %v6841 = vld [vmem:[%s6838 + $0x8] sm:$0xf]
        %v6842 = vld [vmem:[%s6838 + $0xc] sm:$0xf]
        %v6875 = vunpack.c.l.b16 %v6352
        %v6876 = vunpack.c.l.b16 %v6353
        %v6877 = vunpack.c.l.b16 %v6354
        %v6878 = vunpack.c.l.b16 %v6355
        %v6879 = vunpack.c.l.b16 %v6356
        %v6880 = vunpack.c.l.b16 %v6357
        %v6881 = vunpack.c.l.b16 %v6358
        %v6882 = vunpack.c.l.b16 %v6359
        %v6883 = vunpack.c.l.b16 %v6360
        %v6884 = vunpack.c.l.b16 %v6361
        %v6885 = vunpack.c.l.b16 %v6362
        %v6886 = vunpack.c.l.b16 %v6363
        %v6887 = vunpack.c.l.b16 %v6364
        %v6888 = vunpack.c.l.b16 %v6365
        %v6889 = vunpack.c.l.b16 %v6366
        %v6890 = vunpack.c.l.b16 %v6367
        %v6891 = vunpack.c.l.b16 %v6368
        %v6892 = vunpack.c.l.b16 %v6369
        %v6893 = vunpack.c.l.b16 %v6370
        %v6894 = vunpack.c.l.b16 %v6371
        %v6895 = vunpack.c.l.b16 %v6372
        %v6896 = vunpack.c.l.b16 %v6373
        %v6897 = vunpack.c.l.b16 %v6374
        %v6898 = vunpack.c.l.b16 %v6375
        %v6899 = vunpack.c.l.b16 %v6376
        %v6900 = vunpack.c.l.b16 %v6377
        %v6901 = vunpack.c.l.b16 %v6378
        %v6902 = vunpack.c.l.b16 %v6379
        %v6903 = vunpack.c.l.b16 %v6380
        %v6904 = vunpack.c.l.b16 %v6381
        %v6905 = vunpack.c.l.b16 %v6382
        %v6906 = vunpack.c.l.b16 %v6383
        %v6907 = vpack.c.b16 %v6876, %v6875
        %v6908 = vpack.c.b16 %v6878, %v6877
        %v6909 = vpack.c.b16 %v6880, %v6879
        %v6910 = vpack.c.b16 %v6882, %v6881
        %v6911 = vpack.c.b16 %v6884, %v6883
        %v6912 = vpack.c.b16 %v6886, %v6885
        %v6913 = vpack.c.b16 %v6888, %v6887
        %v6914 = vpack.c.b16 %v6890, %v6889
        %v6915 = vpack.c.b16 %v6892, %v6891
        %v6916 = vpack.c.b16 %v6894, %v6893
        %v6917 = vpack.c.b16 %v6896, %v6895
        %v6918 = vpack.c.b16 %v6898, %v6897
        %v6919 = vpack.c.b16 %v6900, %v6899
        %v6920 = vpack.c.b16 %v6902, %v6901
        %v6921 = vpack.c.b16 %v6904, %v6903
        %v6922 = vpack.c.b16 %v6906, %v6905
        %v6927 = vunpack.c.l.b16 %v6839
        %v6928 = vunpack.c.l.b16 %v6840
        %v6929 = vunpack.c.l.b16 %v6841
        %v6930 = vunpack.c.l.b16 %v6842
        %v6931 = vpack.c.b16 %v6928, %v6927
        %v6932 = vpack.c.b16 %v6930, %v6929
        %v6936 = vsel %vm3275, %v6907, 0
        %v6939 = vsel %vm3275, %v6908, 0
        %v6942 = vsel %vm3275, %v6909, 0
        %v6945 = vsel %vm3275, %v6910, 0
        %v6948 = vsel %vm3275, %v6911, 0
        %v6951 = vsel %vm3275, %v6912, 0
        %v6954 = vsel %vm3275, %v6913, 0
        %v6957 = vsel %vm3275, %v6914, 0
        %v6960 = vsel %vm3275, %v6915, 0
        %v6963 = vsel %vm3275, %v6916, 0
        %v6966 = vsel %vm3275, %v6917, 0
        %v6969 = vsel %vm3275, %v6918, 0
        %v6972 = vsel %vm3275, %v6919, 0
        %v6975 = vsel %vm3275, %v6920, 0
        %v6978 = vsel %vm3275, %v6921, 0
        %v6981 = vsel %vm3275, %v6922, 0
        %6983 = vmatpush.bf16.msra.mxu0 0
        %6984 = vmatpush.bf16.msra.mxu0 0
        %6985 = vmatpush.bf16.msra.mxu0 0
        %6986 = vmatpush.bf16.msra.mxu0 0
        %6987 = vmatpush.bf16.msra.mxu0 0
        %6988 = vmatpush.bf16.msra.mxu0 0
        %6989 = vmatpush.bf16.msra.mxu0 %v6932
        %6990 = vmatpush.bf16.msra.mxu0 %v6931
        %6991 = vmatmul.bf16.gmra.mxu0 %v6936
        %v6992 = vpop.f32.mrf.mxu0
        %v6993 = vadd.f32 0.0, %v6992
        %v6994 = vpop.f32.mrf.mxu0
        %v6995 = vadd.f32 0.0, %v6994
        %6996 = vmatmul.bf16.gmra.mxu0 %v6939
        %v6997 = vpop.f32.mrf.mxu0
        %v6998 = vadd.f32 0.0, %v6997
        %v6999 = vpop.f32.mrf.mxu0
        %v7000 = vadd.f32 0.0, %v6999
        %7001 = vmatmul.bf16.gmra.mxu0 %v6942
        %v7002 = vpop.f32.mrf.mxu0
        %v7003 = vadd.f32 0.0, %v7002
        %v7004 = vpop.f32.mrf.mxu0
        %v7005 = vadd.f32 0.0, %v7004
        %7006 = vmatmul.bf16.gmra.mxu0 %v6945
        %v7007 = vpop.f32.mrf.mxu0
        %v7008 = vadd.f32 0.0, %v7007
        %v7009 = vpop.f32.mrf.mxu0
        %v7010 = vadd.f32 0.0, %v7009
        %7011 = vmatmul.bf16.gmra.mxu0 %v6948
        %v7012 = vpop.f32.mrf.mxu0
        %v7013 = vadd.f32 0.0, %v7012
        %v7014 = vpop.f32.mrf.mxu0
        %v7015 = vadd.f32 0.0, %v7014
        %7016 = vmatmul.bf16.gmra.mxu0 %v6951
        %v7017 = vpop.f32.mrf.mxu0
        %v7018 = vadd.f32 0.0, %v7017
        %v7019 = vpop.f32.mrf.mxu0
        %v7020 = vadd.f32 0.0, %v7019
        %7021 = vmatmul.bf16.gmra.mxu0 %v6954
        %v7022 = vpop.f32.mrf.mxu0
        %v7023 = vadd.f32 0.0, %v7022
        %v7024 = vpop.f32.mrf.mxu0
        %v7025 = vadd.f32 0.0, %v7024
        %7026 = vmatmul.bf16.gmra.mxu0 %v6957
        %v7027 = vpop.f32.mrf.mxu0
        %v7028 = vadd.f32 0.0, %v7027
        %v7029 = vpop.f32.mrf.mxu0
        %v7030 = vadd.f32 0.0, %v7029
        %7031 = vmatmul.bf16.gmra.mxu0 %v6960
        %v7032 = vpop.f32.mrf.mxu0
        %v7033 = vadd.f32 0.0, %v7032
        %v7034 = vpop.f32.mrf.mxu0
        %v7035 = vadd.f32 0.0, %v7034
        %7036 = vmatmul.bf16.gmra.mxu0 %v6963
        %v7037 = vpop.f32.mrf.mxu0
        %v7038 = vadd.f32 0.0, %v7037
        %v7039 = vpop.f32.mrf.mxu0
        %v7040 = vadd.f32 0.0, %v7039
        %7041 = vmatmul.bf16.gmra.mxu0 %v6966
        %v7042 = vpop.f32.mrf.mxu0
        %v7043 = vadd.f32 0.0, %v7042
        %v7044 = vpop.f32.mrf.mxu0
        %v7045 = vadd.f32 0.0, %v7044
        %7046 = vmatmul.bf16.gmra.mxu0 %v6969
        %v7047 = vpop.f32.mrf.mxu0
        %v7048 = vadd.f32 0.0, %v7047
        %v7049 = vpop.f32.mrf.mxu0
        %v7050 = vadd.f32 0.0, %v7049
        %7051 = vmatmul.bf16.gmra.mxu0 %v6972
        %v7052 = vpop.f32.mrf.mxu0
        %v7053 = vadd.f32 0.0, %v7052
        %v7054 = vpop.f32.mrf.mxu0
        %v7055 = vadd.f32 0.0, %v7054
        %7056 = vmatmul.bf16.gmra.mxu0 %v6975
        %v7057 = vpop.f32.mrf.mxu0
        %v7058 = vadd.f32 0.0, %v7057
        %v7059 = vpop.f32.mrf.mxu0
        %v7060 = vadd.f32 0.0, %v7059
        %7061 = vmatmul.bf16.gmra.mxu0 %v6978
        %v7062 = vpop.f32.mrf.mxu0
        %v7063 = vadd.f32 0.0, %v7062
        %v7064 = vpop.f32.mrf.mxu0
        %v7065 = vadd.f32 0.0, %v7064
        %7066 = vmatmul.bf16.gmra.mxu0 %v6981
        %v7067 = vpop.f32.mrf.mxu0
        %v7068 = vadd.f32 0.0, %v7067
        %v7069 = vpop.f32.mrf.mxu0
        %v7070 = vadd.f32 0.0, %v7069
        %7071 = vdwg.mxu0
        %v7072 = vadd.f32 %v6806, %v6993
        %v7073 = vadd.f32 %v6807, %v6995
        %v7074 = vadd.f32 %v6808, %v6998
        %v7075 = vadd.f32 %v6809, %v7000
        %v7076 = vadd.f32 %v6810, %v7003
        %v7077 = vadd.f32 %v6811, %v7005
        %v7078 = vadd.f32 %v6812, %v7008
        %v7079 = vadd.f32 %v6813, %v7010
        %v7080 = vadd.f32 %v6814, %v7013
        %v7081 = vadd.f32 %v6815, %v7015
        %v7082 = vadd.f32 %v6816, %v7018
        %v7083 = vadd.f32 %v6817, %v7020
        %v7084 = vadd.f32 %v6818, %v7023
        %v7085 = vadd.f32 %v6819, %v7025
        %v7086 = vadd.f32 %v6820, %v7028
        %v7087 = vadd.f32 %v6821, %v7030
        %v7088 = vadd.f32 %v6822, %v7033
        %v7089 = vadd.f32 %v6823, %v7035
        %v7090 = vadd.f32 %v6824, %v7038
        %v7091 = vadd.f32 %v6825, %v7040
        %v7092 = vadd.f32 %v6826, %v7043
        %v7093 = vadd.f32 %v6827, %v7045
        %v7094 = vadd.f32 %v6828, %v7048
        %v7095 = vadd.f32 %v6829, %v7050
        %v7096 = vadd.f32 %v6830, %v7053
        %v7097 = vadd.f32 %v6831, %v7055
        %v7098 = vadd.f32 %v6832, %v7058
        %v7099 = vadd.f32 %v6833, %v7060
        %v7100 = vadd.f32 %v6834, %v7063
        %v7101 = vadd.f32 %v6835, %v7065
        %v7102 = vadd.f32 %v6836, %v7068
        %v7103 = vadd.f32 %v6837, %v7070
        %v7104 = vld [vmem:[#allocation2 + $0xc] sm:$0xf]
        %v7105 = vld [vmem:[#allocation2 + $0x10] sm:$0xf]
        %v7106 = vld [vmem:[#allocation2 + $0x14] sm:$0xf]
        %v7107 = vld [vmem:[#allocation2 + $0x18] sm:$0xf]
        %v7108 = vld [vmem:[#allocation2 + $0x1c] sm:$0xf]
        %v7109 = vld [vmem:[#allocation2 + $0x20] sm:$0xf]
        %v7110 = vld [vmem:[#allocation2 + $0x24] sm:$0xf]
        %v7111 = vld [vmem:[#allocation2 + $0x28] sm:$0xf]
        %v7112 = vld [vmem:[#allocation2 + $0x2c] sm:$0xf]
        %v7113 = vld [vmem:[#allocation2 + $0x30] sm:$0xf]
        %v7114 = vld [vmem:[#allocation2 + $0x34] sm:$0xf]
        %v7115 = vld [vmem:[#allocation2 + $0x38] sm:$0xf]
        %v7116 = vld [vmem:[#allocation2 + $0x3c] sm:$0xf]
        %v7117 = vld [vmem:[#allocation2 + $0x40] sm:$0xf]
        %v7118 = vld [vmem:[#allocation2 + $0x44] sm:$0xf]
        %v7119 = vld [vmem:[#allocation2 + $0x48] sm:$0xf]
        %v7120 = vld [vmem:[#allocation2 + $0x4c] sm:$0xf]
        %v7121 = vld [vmem:[#allocation2 + $0x50] sm:$0xf]
        %v7122 = vld [vmem:[#allocation2 + $0x54] sm:$0xf]
        %v7123 = vld [vmem:[#allocation2 + $0x58] sm:$0xf]
        %v7124 = vld [vmem:[#allocation2 + $0x5c] sm:$0xf]
        %v7125 = vld [vmem:[#allocation2 + $0x60] sm:$0xf]
        %v7126 = vld [vmem:[#allocation2 + $0x64] sm:$0xf]
        %v7127 = vld [vmem:[#allocation2 + $0x68] sm:$0xf]
        %v7128 = vld [vmem:[#allocation2 + $0x6c] sm:$0xf]
        %v7129 = vld [vmem:[#allocation2 + $0x70] sm:$0xf]
        %v7130 = vld [vmem:[#allocation2 + $0x74] sm:$0xf]
        %v7131 = vld [vmem:[#allocation2 + $0x78] sm:$0xf]
        %v7132 = vld [vmem:[#allocation2 + $0x7c] sm:$0xf]
        %v7133 = vld [vmem:[#allocation2 + $0x80] sm:$0xf]
        %v7134 = vld [vmem:[#allocation2 + $0x84] sm:$0xf]
        %v7135 = vld [vmem:[#allocation2 + $0x88] sm:$0xf]
        %v7136 = vld [vmem:[#allocation2 + $0x8c] sm:$0x1]
        %v7137 = vsel %vm5691, %v7104, 0
        %v7138 = vsel %vm5698, %v7105, 0
        %v7139 = vsel %vm5705, %v7106, 0
        %v7140 = vsel %vm5712, %v7107, 0
        %v7141 = vsel %vm5719, %v7108, 0
        %v7142 = vsel %vm5726, %v7109, 0
        %v7143 = vsel %vm5733, %v7110, 0
        %v7144 = vsel %vm5740, %v7111, 0
        %v7145 = vsel %vm5747, %v7112, 0
        %v7146 = vsel %vm5754, %v7113, 0
        %v7147 = vsel %vm5761, %v7114, 0
        %v7148 = vsel %vm5768, %v7115, 0
        %v7149 = vsel %vm5775, %v7116, 0
        %v7150 = vsel %vm5782, %v7117, 0
        %v7151 = vsel %vm5789, %v7118, 0
        %v7152 = vsel %vm5796, %v7119, 0
        %v7153 = vsel %vm5803, %v7120, 0
        %v7154 = vsel %vm5810, %v7121, 0
        %v7155 = vsel %vm5817, %v7122, 0
        %v7156 = vsel %vm5824, %v7123, 0
        %v7157 = vsel %vm5831, %v7124, 0
        %v7158 = vsel %vm5838, %v7125, 0
        %v7159 = vsel %vm5845, %v7126, 0
        %v7160 = vsel %vm5852, %v7127, 0
        %v7161 = vsel %vm5859, %v7128, 0
        %v7162 = vsel %vm5866, %v7129, 0
        %v7163 = vsel %vm5873, %v7130, 0
        %v7164 = vsel %vm5880, %v7131, 0
        %v7165 = vsel %vm5887, %v7132, 0
        %v7166 = vsel %vm5894, %v7133, 0
        %v7167 = vsel %vm5901, %v7134, 0
        %v7168 = vsel %vm5908, %v7135, 0
        %v7169 = vsel %vm5915, %v7136, 0
        %s7170 = scalar_lea.vmem %s3, 80
        %v7171 = vld [vmem:[%s7170] sm:$0xf]
        %v7172 = vld [vmem:[%s7170 + $0x4] sm:$0xf]
        %v7173 = vld [vmem:[%s7170 + $0x8] sm:$0xf]
        %v7174 = vld [vmem:[%s7170 + $0xc] sm:$0xf]
        %v7208 = vunpack.c.l.b16 %v7137
        %v7209 = vunpack.c.l.b16 %v7138
        %v7210 = vunpack.c.l.b16 %v7139
        %v7211 = vunpack.c.l.b16 %v7140
        %v7212 = vunpack.c.l.b16 %v7141
        %v7213 = vunpack.c.l.b16 %v7142
        %v7214 = vunpack.c.l.b16 %v7143
        %v7215 = vunpack.c.l.b16 %v7144
        %v7216 = vunpack.c.l.b16 %v7145
        %v7217 = vunpack.c.l.b16 %v7146
        %v7218 = vunpack.c.l.b16 %v7147
        %v7219 = vunpack.c.l.b16 %v7148
        %v7220 = vunpack.c.l.b16 %v7149
        %v7221 = vunpack.c.l.b16 %v7150
        %v7222 = vunpack.c.l.b16 %v7151
        %v7223 = vunpack.c.l.b16 %v7152
        %v7224 = vunpack.c.l.b16 %v7153
        %v7225 = vunpack.c.l.b16 %v7154
        %v7226 = vunpack.c.l.b16 %v7155
        %v7227 = vunpack.c.l.b16 %v7156
        %v7228 = vunpack.c.l.b16 %v7157
        %v7229 = vunpack.c.l.b16 %v7158
        %v7230 = vunpack.c.l.b16 %v7159
        %v7231 = vunpack.c.l.b16 %v7160
        %v7232 = vunpack.c.l.b16 %v7161
        %v7233 = vunpack.c.l.b16 %v7162
        %v7234 = vunpack.c.l.b16 %v7163
        %v7235 = vunpack.c.l.b16 %v7164
        %v7236 = vunpack.c.l.b16 %v7165
        %v7237 = vunpack.c.l.b16 %v7166
        %v7238 = vunpack.c.l.b16 %v7167
        %v7239 = vunpack.c.l.b16 %v7168
        %v7240 = vunpack.c.l.b16 %v7169
        %v7241 = vpack.c.b16 %v7209, %v7208
        %v7242 = vpack.c.b16 %v7211, %v7210
        %v7243 = vpack.c.b16 %v7213, %v7212
        %v7244 = vpack.c.b16 %v7215, %v7214
        %v7245 = vpack.c.b16 %v7217, %v7216
        %v7246 = vpack.c.b16 %v7219, %v7218
        %v7247 = vpack.c.b16 %v7221, %v7220
        %v7248 = vpack.c.b16 %v7223, %v7222
        %v7249 = vpack.c.b16 %v7225, %v7224
        %v7250 = vpack.c.b16 %v7227, %v7226
        %v7251 = vpack.c.b16 %v7229, %v7228
        %v7252 = vpack.c.b16 %v7231, %v7230
        %v7253 = vpack.c.b16 %v7233, %v7232
        %v7254 = vpack.c.b16 %v7235, %v7234
        %v7255 = vpack.c.b16 %v7237, %v7236
        %v7256 = vpack.c.b16 %v7239, %v7238
        %v7257 = vpack.c.b16 %v7240, %v7240
        %v7259 = vshrl.u32 %v7241, 16
        %v7261 = vshll.u32 %v7241, 16
        %v7263 = vrot.slane %v7261, 1
        %v7264 = vor.u32 %v7259, %v7263
        %v7266 = vshll.u32 %v7242, 16
        %v7268 = vrot.slane %v7266, 1
        %v7269 = vsel %vm6037, %v7264, %v7268
        %v7270 = vshrl.u32 %v7242, 16
        %v7272 = vor.u32 %v7270, %v7268
        %v7274 = vshll.u32 %v7243, 16
        %v7276 = vrot.slane %v7274, 1
        %v7277 = vsel %vm6037, %v7272, %v7276
        %v7278 = vshrl.u32 %v7243, 16
        %v7280 = vor.u32 %v7278, %v7276
        %v7282 = vshll.u32 %v7244, 16
        %v7284 = vrot.slane %v7282, 1
        %v7285 = vsel %vm6037, %v7280, %v7284
        %v7286 = vshrl.u32 %v7244, 16
        %v7288 = vor.u32 %v7286, %v7284
        %v7290 = vshll.u32 %v7245, 16
        %v7292 = vrot.slane %v7290, 1
        %v7293 = vsel %vm6037, %v7288, %v7292
        %v7294 = vshrl.u32 %v7245, 16
        %v7296 = vor.u32 %v7294, %v7292
        %v7298 = vshll.u32 %v7246, 16
        %v7300 = vrot.slane %v7298, 1
        %v7301 = vsel %vm6037, %v7296, %v7300
        %v7302 = vshrl.u32 %v7246, 16
        %v7304 = vor.u32 %v7302, %v7300
        %v7306 = vshll.u32 %v7247, 16
        %v7308 = vrot.slane %v7306, 1
        %v7309 = vsel %vm6037, %v7304, %v7308
        %v7310 = vshrl.u32 %v7247, 16
        %v7312 = vor.u32 %v7310, %v7308
        %v7314 = vshll.u32 %v7248, 16
        %v7316 = vrot.slane %v7314, 1
        %v7317 = vsel %vm6037, %v7312, %v7316
        %v7318 = vshrl.u32 %v7248, 16
        %v7320 = vor.u32 %v7318, %v7316
        %v7322 = vshll.u32 %v7249, 16
        %v7324 = vrot.slane %v7322, 1
        %v7325 = vsel %vm6037, %v7320, %v7324
        %v7326 = vshrl.u32 %v7249, 16
        %v7328 = vor.u32 %v7326, %v7324
        %v7330 = vshll.u32 %v7250, 16
        %v7332 = vrot.slane %v7330, 1
        %v7333 = vsel %vm6037, %v7328, %v7332
        %v7334 = vshrl.u32 %v7250, 16
        %v7336 = vor.u32 %v7334, %v7332
        %v7338 = vshll.u32 %v7251, 16
        %v7340 = vrot.slane %v7338, 1
        %v7341 = vsel %vm6037, %v7336, %v7340
        %v7342 = vshrl.u32 %v7251, 16
        %v7344 = vor.u32 %v7342, %v7340
        %v7346 = vshll.u32 %v7252, 16
        %v7348 = vrot.slane %v7346, 1
        %v7349 = vsel %vm6037, %v7344, %v7348
        %v7350 = vshrl.u32 %v7252, 16
        %v7352 = vor.u32 %v7350, %v7348
        %v7354 = vshll.u32 %v7253, 16
        %v7356 = vrot.slane %v7354, 1
        %v7357 = vsel %vm6037, %v7352, %v7356
        %v7358 = vshrl.u32 %v7253, 16
        %v7360 = vor.u32 %v7358, %v7356
        %v7362 = vshll.u32 %v7254, 16
        %v7364 = vrot.slane %v7362, 1
        %v7365 = vsel %vm6037, %v7360, %v7364
        %v7366 = vshrl.u32 %v7254, 16
        %v7368 = vor.u32 %v7366, %v7364
        %v7370 = vshll.u32 %v7255, 16
        %v7372 = vrot.slane %v7370, 1
        %v7373 = vsel %vm6037, %v7368, %v7372
        %v7374 = vshrl.u32 %v7255, 16
        %v7376 = vor.u32 %v7374, %v7372
        %v7378 = vshll.u32 %v7256, 16
        %v7380 = vrot.slane %v7378, 1
        %v7381 = vsel %vm6037, %v7376, %v7380
        %v7382 = vshrl.u32 %v7256, 16
        %v7384 = vor.u32 %v7382, %v7380
        %v7386 = vshll.u32 %v7257, 16
        %v7388 = vrot.slane %v7386, 1
        %v7389 = vsel %vm6037, %v7384, %v7388
        %v7394 = vunpack.c.l.b16 %v7171
        %v7395 = vunpack.c.l.b16 %v7172
        %v7396 = vunpack.c.l.b16 %v7173
        %v7397 = vunpack.c.l.b16 %v7174
        %v7398 = vpack.c.b16 %v7395, %v7394
        %v7399 = vpack.c.b16 %v7397, %v7396
        %v7403 = vsel %vm3275, %v7269, 0
        %v7406 = vsel %vm3275, %v7277, 0
        %v7409 = vsel %vm3275, %v7285, 0
        %v7412 = vsel %vm3275, %v7293, 0
        %v7415 = vsel %vm3275, %v7301, 0
        %v7418 = vsel %vm3275, %v7309, 0
        %v7421 = vsel %vm3275, %v7317, 0
        %v7424 = vsel %vm3275, %v7325, 0
        %v7427 = vsel %vm3275, %v7333, 0
        %v7430 = vsel %vm3275, %v7341, 0
        %v7433 = vsel %vm3275, %v7349, 0
        %v7436 = vsel %vm3275, %v7357, 0
        %v7439 = vsel %vm3275, %v7365, 0
        %v7442 = vsel %vm3275, %v7373, 0
        %v7445 = vsel %vm3275, %v7381, 0
        %v7448 = vsel %vm3275, %v7389, 0
        %7450 = vmatpush.bf16.msra.mxu0 0
        %7451 = vmatpush.bf16.msra.mxu0 0
        %7452 = vmatpush.bf16.msra.mxu0 0
        %7453 = vmatpush.bf16.msra.mxu0 0
        %7454 = vmatpush.bf16.msra.mxu0 0
        %7455 = vmatpush.bf16.msra.mxu0 0
        %7456 = vmatpush.bf16.msra.mxu0 %v7399
        %7457 = vmatpush.bf16.msra.mxu0 %v7398
        %7458 = vmatmul.bf16.gmra.mxu0 %v7403
        %v7459 = vpop.f32.mrf.mxu0
        %v7460 = vadd.f32 0.0, %v7459
        %v7461 = vpop.f32.mrf.mxu0
        %v7462 = vadd.f32 0.0, %v7461
        %7463 = vmatmul.bf16.gmra.mxu0 %v7406
        %v7464 = vpop.f32.mrf.mxu0
        %v7465 = vadd.f32 0.0, %v7464
        %v7466 = vpop.f32.mrf.mxu0
        %v7467 = vadd.f32 0.0, %v7466
        %7468 = vmatmul.bf16.gmra.mxu0 %v7409
        %v7469 = vpop.f32.mrf.mxu0
        %v7470 = vadd.f32 0.0, %v7469
        %v7471 = vpop.f32.mrf.mxu0
        %v7472 = vadd.f32 0.0, %v7471
        %7473 = vmatmul.bf16.gmra.mxu0 %v7412
        %v7474 = vpop.f32.mrf.mxu0
        %v7475 = vadd.f32 0.0, %v7474
        %v7476 = vpop.f32.mrf.mxu0
        %v7477 = vadd.f32 0.0, %v7476
        %7478 = vmatmul.bf16.gmra.mxu0 %v7415
        %v7479 = vpop.f32.mrf.mxu0
        %v7480 = vadd.f32 0.0, %v7479
        %v7481 = vpop.f32.mrf.mxu0
        %v7482 = vadd.f32 0.0, %v7481
        %7483 = vmatmul.bf16.gmra.mxu0 %v7418
        %v7484 = vpop.f32.mrf.mxu0
        %v7485 = vadd.f32 0.0, %v7484
        %v7486 = vpop.f32.mrf.mxu0
        %v7487 = vadd.f32 0.0, %v7486
        %7488 = vmatmul.bf16.gmra.mxu0 %v7421
        %v7489 = vpop.f32.mrf.mxu0
        %v7490 = vadd.f32 0.0, %v7489
        %v7491 = vpop.f32.mrf.mxu0
        %v7492 = vadd.f32 0.0, %v7491
        %7493 = vmatmul.bf16.gmra.mxu0 %v7424
        %v7494 = vpop.f32.mrf.mxu0
        %v7495 = vadd.f32 0.0, %v7494
        %v7496 = vpop.f32.mrf.mxu0
        %v7497 = vadd.f32 0.0, %v7496
        %7498 = vmatmul.bf16.gmra.mxu0 %v7427
        %v7499 = vpop.f32.mrf.mxu0
        %v7500 = vadd.f32 0.0, %v7499
        %v7501 = vpop.f32.mrf.mxu0
        %v7502 = vadd.f32 0.0, %v7501
        %7503 = vmatmul.bf16.gmra.mxu0 %v7430
        %v7504 = vpop.f32.mrf.mxu0
        %v7505 = vadd.f32 0.0, %v7504
        %v7506 = vpop.f32.mrf.mxu0
        %v7507 = vadd.f32 0.0, %v7506
        %7508 = vmatmul.bf16.gmra.mxu0 %v7433
        %v7509 = vpop.f32.mrf.mxu0
        %v7510 = vadd.f32 0.0, %v7509
        %v7511 = vpop.f32.mrf.mxu0
        %v7512 = vadd.f32 0.0, %v7511
        %7513 = vmatmul.bf16.gmra.mxu0 %v7436
        %v7514 = vpop.f32.mrf.mxu0
        %v7515 = vadd.f32 0.0, %v7514
        %v7516 = vpop.f32.mrf.mxu0
        %v7517 = vadd.f32 0.0, %v7516
        %7518 = vmatmul.bf16.gmra.mxu0 %v7439
        %v7519 = vpop.f32.mrf.mxu0
        %v7520 = vadd.f32 0.0, %v7519
        %v7521 = vpop.f32.mrf.mxu0
        %v7522 = vadd.f32 0.0, %v7521
        %7523 = vmatmul.bf16.gmra.mxu0 %v7442
        %v7524 = vpop.f32.mrf.mxu0
        %v7525 = vadd.f32 0.0, %v7524
        %v7526 = vpop.f32.mrf.mxu0
        %v7527 = vadd.f32 0.0, %v7526
        %7528 = vmatmul.bf16.gmra.mxu0 %v7445
        %v7529 = vpop.f32.mrf.mxu0
        %v7530 = vadd.f32 0.0, %v7529
        %v7531 = vpop.f32.mrf.mxu0
        %v7532 = vadd.f32 0.0, %v7531
        %7533 = vmatmul.bf16.gmra.mxu0 %v7448
        %v7534 = vpop.f32.mrf.mxu0
        %v7535 = vadd.f32 0.0, %v7534
        %v7536 = vpop.f32.mrf.mxu0
        %v7537 = vadd.f32 0.0, %v7536
        %7538 = vdwg.mxu0
        %v7539 = vadd.f32 %v7072, %v7460
        %v7540 = vadd.f32 %v7073, %v7462
        %v7541 = vadd.f32 %v7074, %v7465
        %v7542 = vadd.f32 %v7075, %v7467
        %v7543 = vadd.f32 %v7076, %v7470
        %v7544 = vadd.f32 %v7077, %v7472
        %v7545 = vadd.f32 %v7078, %v7475
        %v7546 = vadd.f32 %v7079, %v7477
        %v7547 = vadd.f32 %v7080, %v7480
        %v7548 = vadd.f32 %v7081, %v7482
        %v7549 = vadd.f32 %v7082, %v7485
        %v7550 = vadd.f32 %v7083, %v7487
        %v7551 = vadd.f32 %v7084, %v7490
        %v7552 = vadd.f32 %v7085, %v7492
        %v7553 = vadd.f32 %v7086, %v7495
        %v7554 = vadd.f32 %v7087, %v7497
        %v7555 = vadd.f32 %v7088, %v7500
        %v7556 = vadd.f32 %v7089, %v7502
        %v7557 = vadd.f32 %v7090, %v7505
        %v7558 = vadd.f32 %v7091, %v7507
        %v7559 = vadd.f32 %v7092, %v7510
        %v7560 = vadd.f32 %v7093, %v7512
        %v7561 = vadd.f32 %v7094, %v7515
        %v7562 = vadd.f32 %v7095, %v7517
        %v7563 = vadd.f32 %v7096, %v7520
        %v7564 = vadd.f32 %v7097, %v7522
        %v7565 = vadd.f32 %v7098, %v7525
        %v7566 = vadd.f32 %v7099, %v7527
        %v7567 = vadd.f32 %v7100, %v7530
        %v7568 = vadd.f32 %v7101, %v7532
        %v7569 = vadd.f32 %v7102, %v7535
        %v7570 = vadd.f32 %v7103, %v7537
        %v7571 = vld [vmem:[#allocation2 + $0x10] sm:$0x8]
        %v7572 = vld [vmem:[#allocation2 + $0x14] sm:$0xf]
        %v7573 = vld [vmem:[#allocation2 + $0x18] sm:$0xf]
        %v7574 = vld [vmem:[#allocation2 + $0x1c] sm:$0xf]
        %v7575 = vld [vmem:[#allocation2 + $0x20] sm:$0xf]
        %v7576 = vld [vmem:[#allocation2 + $0x24] sm:$0xf]
        %v7577 = vld [vmem:[#allocation2 + $0x28] sm:$0xf]
        %v7578 = vld [vmem:[#allocation2 + $0x2c] sm:$0xf]
        %v7579 = vld [vmem:[#allocation2 + $0x30] sm:$0xf]
        %v7580 = vld [vmem:[#allocation2 + $0x34] sm:$0xf]
        %v7581 = vld [vmem:[#allocation2 + $0x38] sm:$0xf]
        %v7582 = vld [vmem:[#allocation2 + $0x3c] sm:$0xf]
        %v7583 = vld [vmem:[#allocation2 + $0x40] sm:$0xf]
        %v7584 = vld [vmem:[#allocation2 + $0x44] sm:$0xf]
        %v7585 = vld [vmem:[#allocation2 + $0x48] sm:$0xf]
        %v7586 = vld [vmem:[#allocation2 + $0x4c] sm:$0xf]
        %v7587 = vld [vmem:[#allocation2 + $0x50] sm:$0xf]
        %v7588 = vld [vmem:[#allocation2 + $0x54] sm:$0xf]
        %v7589 = vld [vmem:[#allocation2 + $0x58] sm:$0xf]
        %v7590 = vld [vmem:[#allocation2 + $0x5c] sm:$0xf]
        %v7591 = vld [vmem:[#allocation2 + $0x60] sm:$0xf]
        %v7592 = vld [vmem:[#allocation2 + $0x64] sm:$0xf]
        %v7593 = vld [vmem:[#allocation2 + $0x68] sm:$0xf]
        %v7594 = vld [vmem:[#allocation2 + $0x6c] sm:$0xf]
        %v7595 = vld [vmem:[#allocation2 + $0x70] sm:$0xf]
        %v7596 = vld [vmem:[#allocation2 + $0x74] sm:$0xf]
        %v7597 = vld [vmem:[#allocation2 + $0x78] sm:$0xf]
        %v7598 = vld [vmem:[#allocation2 + $0x7c] sm:$0xf]
        %v7599 = vld [vmem:[#allocation2 + $0x80] sm:$0xf]
        %v7600 = vld [vmem:[#allocation2 + $0x84] sm:$0xf]
        %v7601 = vld [vmem:[#allocation2 + $0x88] sm:$0xf]
        %v7602 = vld [vmem:[#allocation2 + $0x8c] sm:$0xf]
        %v7603 = vld [vmem:[#allocation2 + $0x90] sm:$0xf]
        %v7604 = vsel %vm4417, %v7571, 0
        %v7605 = vsel %vm4424, %v7572, 0
        %v7606 = vsel %vm4431, %v7573, 0
        %v7607 = vsel %vm4438, %v7574, 0
        %v7608 = vsel %vm4445, %v7575, 0
        %v7609 = vsel %vm4452, %v7576, 0
        %v7610 = vsel %vm4459, %v7577, 0
        %v7611 = vsel %vm4466, %v7578, 0
        %v7612 = vsel %vm4473, %v7579, 0
        %v7613 = vsel %vm4480, %v7580, 0
        %v7614 = vsel %vm4487, %v7581, 0
        %v7615 = vsel %vm4494, %v7582, 0
        %v7616 = vsel %vm4501, %v7583, 0
        %v7617 = vsel %vm4508, %v7584, 0
        %v7618 = vsel %vm4515, %v7585, 0
        %v7619 = vsel %vm4522, %v7586, 0
        %v7620 = vsel %vm4529, %v7587, 0
        %v7621 = vsel %vm4536, %v7588, 0
        %v7622 = vsel %vm4543, %v7589, 0
        %v7623 = vsel %vm4550, %v7590, 0
        %v7624 = vsel %vm4557, %v7591, 0
        %v7625 = vsel %vm4564, %v7592, 0
        %v7626 = vsel %vm4571, %v7593, 0
        %v7627 = vsel %vm4578, %v7594, 0
        %v7628 = vsel %vm4585, %v7595, 0
        %v7629 = vsel %vm4592, %v7596, 0
        %v7630 = vsel %vm4599, %v7597, 0
        %v7631 = vsel %vm4606, %v7598, 0
        %v7632 = vsel %vm4613, %v7599, 0
        %v7633 = vsel %vm4620, %v7600, 0
        %v7634 = vsel %vm4627, %v7601, 0
        %v7635 = vsel %vm4634, %v7602, 0
        %v7636 = vsel %vm4641, %v7603, 0
        %s7637 = scalar_lea.vmem %s3, 96
        %v7638 = vld [vmem:[%s7637] sm:$0xf]
        %v7639 = vld [vmem:[%s7637 + $0x4] sm:$0xf]
        %v7640 = vld [vmem:[%s7637 + $0x8] sm:$0xf]
        %v7641 = vld [vmem:[%s7637 + $0xc] sm:$0xf]
        %v7675 = vunpack.c.l.b16 %v7604
        %v7676 = vunpack.c.l.b16 %v7605
        %v7677 = vunpack.c.l.b16 %v7606
        %v7678 = vunpack.c.l.b16 %v7607
        %v7679 = vunpack.c.l.b16 %v7608
        %v7680 = vunpack.c.l.b16 %v7609
        %v7681 = vunpack.c.l.b16 %v7610
        %v7682 = vunpack.c.l.b16 %v7611
        %v7683 = vunpack.c.l.b16 %v7612
        %v7684 = vunpack.c.l.b16 %v7613
        %v7685 = vunpack.c.l.b16 %v7614
        %v7686 = vunpack.c.l.b16 %v7615
        %v7687 = vunpack.c.l.b16 %v7616
        %v7688 = vunpack.c.l.b16 %v7617
        %v7689 = vunpack.c.l.b16 %v7618
        %v7690 = vunpack.c.l.b16 %v7619
        %v7691 = vunpack.c.l.b16 %v7620
        %v7692 = vunpack.c.l.b16 %v7621
        %v7693 = vunpack.c.l.b16 %v7622
        %v7694 = vunpack.c.l.b16 %v7623
        %v7695 = vunpack.c.l.b16 %v7624
        %v7696 = vunpack.c.l.b16 %v7625
        %v7697 = vunpack.c.l.b16 %v7626
        %v7698 = vunpack.c.l.b16 %v7627
        %v7699 = vunpack.c.l.b16 %v7628
        %v7700 = vunpack.c.l.b16 %v7629
        %v7701 = vunpack.c.l.b16 %v7630
        %v7702 = vunpack.c.l.b16 %v7631
        %v7703 = vunpack.c.l.b16 %v7632
        %v7704 = vunpack.c.l.b16 %v7633
        %v7705 = vunpack.c.l.b16 %v7634
        %v7706 = vunpack.c.l.b16 %v7635
        %v7707 = vunpack.c.l.b16 %v7636
        %v7708 = vpack.c.b16 %v7676, %v7675
        %v7709 = vpack.c.b16 %v7678, %v7677
        %v7710 = vpack.c.b16 %v7680, %v7679
        %v7711 = vpack.c.b16 %v7682, %v7681
        %v7712 = vpack.c.b16 %v7684, %v7683
        %v7713 = vpack.c.b16 %v7686, %v7685
        %v7714 = vpack.c.b16 %v7688, %v7687
        %v7715 = vpack.c.b16 %v7690, %v7689
        %v7716 = vpack.c.b16 %v7692, %v7691
        %v7717 = vpack.c.b16 %v7694, %v7693
        %v7718 = vpack.c.b16 %v7696, %v7695
        %v7719 = vpack.c.b16 %v7698, %v7697
        %v7720 = vpack.c.b16 %v7700, %v7699
        %v7721 = vpack.c.b16 %v7702, %v7701
        %v7722 = vpack.c.b16 %v7704, %v7703
        %v7723 = vpack.c.b16 %v7706, %v7705
        %v7724 = vpack.c.b16 %v7707, %v7707
        %v7726 = vshrl.u32 %v7708, 16
        %v7728 = vrot.slane %v7726, 3
        %v7729 = vshll.u32 %v7708, 16
        %v7731 = vrot.slane %v7729, 4
        %v7732 = vor.u32 %v7728, %v7731
        %v7734 = vshrl.u32 %v7709, 16
        %v7736 = vrot.slane %v7734, 3
        %v7737 = vshll.u32 %v7709, 16
        %v7739 = vrot.slane %v7737, 4
        %v7740 = vor.u32 %v7736, %v7739
        %v7741 = vsel %vm4996, %v7732, %v7740
        %v7743 = vshrl.u32 %v7710, 16
        %v7745 = vrot.slane %v7743, 3
        %v7746 = vshll.u32 %v7710, 16
        %v7748 = vrot.slane %v7746, 4
        %v7749 = vor.u32 %v7745, %v7748
        %v7750 = vsel %vm4996, %v7740, %v7749
        %v7752 = vshrl.u32 %v7711, 16
        %v7754 = vrot.slane %v7752, 3
        %v7755 = vshll.u32 %v7711, 16
        %v7757 = vrot.slane %v7755, 4
        %v7758 = vor.u32 %v7754, %v7757
        %v7759 = vsel %vm4996, %v7749, %v7758
        %v7761 = vshrl.u32 %v7712, 16
        %v7763 = vrot.slane %v7761, 3
        %v7764 = vshll.u32 %v7712, 16
        %v7766 = vrot.slane %v7764, 4
        %v7767 = vor.u32 %v7763, %v7766
        %v7768 = vsel %vm4996, %v7758, %v7767
        %v7770 = vshrl.u32 %v7713, 16
        %v7772 = vrot.slane %v7770, 3
        %v7773 = vshll.u32 %v7713, 16
        %v7775 = vrot.slane %v7773, 4
        %v7776 = vor.u32 %v7772, %v7775
        %v7777 = vsel %vm4996, %v7767, %v7776
        %v7779 = vshrl.u32 %v7714, 16
        %v7781 = vrot.slane %v7779, 3
        %v7782 = vshll.u32 %v7714, 16
        %v7784 = vrot.slane %v7782, 4
        %v7785 = vor.u32 %v7781, %v7784
        %v7786 = vsel %vm4996, %v7776, %v7785
        %v7788 = vshrl.u32 %v7715, 16
        %v7790 = vrot.slane %v7788, 3
        %v7791 = vshll.u32 %v7715, 16
        %v7793 = vrot.slane %v7791, 4
        %v7794 = vor.u32 %v7790, %v7793
        %v7795 = vsel %vm4996, %v7785, %v7794
        %v7797 = vshrl.u32 %v7716, 16
        %v7799 = vrot.slane %v7797, 3
        %v7800 = vshll.u32 %v7716, 16
        %v7802 = vrot.slane %v7800, 4
        %v7803 = vor.u32 %v7799, %v7802
        %v7804 = vsel %vm4996, %v7794, %v7803
        %v7806 = vshrl.u32 %v7717, 16
        %v7808 = vrot.slane %v7806, 3
        %v7809 = vshll.u32 %v7717, 16
        %v7811 = vrot.slane %v7809, 4
        %v7812 = vor.u32 %v7808, %v7811
        %v7813 = vsel %vm4996, %v7803, %v7812
        %v7815 = vshrl.u32 %v7718, 16
        %v7817 = vrot.slane %v7815, 3
        %v7818 = vshll.u32 %v7718, 16
        %v7820 = vrot.slane %v7818, 4
        %v7821 = vor.u32 %v7817, %v7820
        %v7822 = vsel %vm4996, %v7812, %v7821
        %v7824 = vshrl.u32 %v7719, 16
        %v7826 = vrot.slane %v7824, 3
        %v7827 = vshll.u32 %v7719, 16
        %v7829 = vrot.slane %v7827, 4
        %v7830 = vor.u32 %v7826, %v7829
        %v7831 = vsel %vm4996, %v7821, %v7830
        %v7833 = vshrl.u32 %v7720, 16
        %v7835 = vrot.slane %v7833, 3
        %v7836 = vshll.u32 %v7720, 16
        %v7838 = vrot.slane %v7836, 4
        %v7839 = vor.u32 %v7835, %v7838
        %v7840 = vsel %vm4996, %v7830, %v7839
        %v7842 = vshrl.u32 %v7721, 16
        %v7844 = vrot.slane %v7842, 3
        %v7845 = vshll.u32 %v7721, 16
        %v7847 = vrot.slane %v7845, 4
        %v7848 = vor.u32 %v7844, %v7847
        %v7849 = vsel %vm4996, %v7839, %v7848
        %v7851 = vshrl.u32 %v7722, 16
        %v7853 = vrot.slane %v7851, 3
        %v7854 = vshll.u32 %v7722, 16
        %v7856 = vrot.slane %v7854, 4
        %v7857 = vor.u32 %v7853, %v7856
        %v7858 = vsel %vm4996, %v7848, %v7857
        %v7860 = vshrl.u32 %v7723, 16
        %v7862 = vrot.slane %v7860, 3
        %v7863 = vshll.u32 %v7723, 16
        %v7865 = vrot.slane %v7863, 4
        %v7866 = vor.u32 %v7862, %v7865
        %v7867 = vsel %vm4996, %v7857, %v7866
        %v7869 = vshrl.u32 %v7724, 16
        %v7871 = vrot.slane %v7869, 3
        %v7872 = vshll.u32 %v7724, 16
        %v7874 = vrot.slane %v7872, 4
        %v7875 = vor.u32 %v7871, %v7874
        %v7876 = vsel %vm4996, %v7866, %v7875
        %v7881 = vunpack.c.l.b16 %v7638
        %v7882 = vunpack.c.l.b16 %v7639
        %v7883 = vunpack.c.l.b16 %v7640
        %v7884 = vunpack.c.l.b16 %v7641
        %v7885 = vpack.c.b16 %v7882, %v7881
        %v7886 = vpack.c.b16 %v7884, %v7883
        %v7890 = vsel %vm3275, %v7741, 0
        %v7893 = vsel %vm3275, %v7750, 0
        %v7896 = vsel %vm3275, %v7759, 0
        %v7899 = vsel %vm3275, %v7768, 0
        %v7902 = vsel %vm3275, %v7777, 0
        %v7905 = vsel %vm3275, %v7786, 0
        %v7908 = vsel %vm3275, %v7795, 0
        %v7911 = vsel %vm3275, %v7804, 0
        %v7914 = vsel %vm3275, %v7813, 0
        %v7917 = vsel %vm3275, %v7822, 0
        %v7920 = vsel %vm3275, %v7831, 0
        %v7923 = vsel %vm3275, %v7840, 0
        %v7926 = vsel %vm3275, %v7849, 0
        %v7929 = vsel %vm3275, %v7858, 0
        %v7932 = vsel %vm3275, %v7867, 0
        %v7935 = vsel %vm3275, %v7876, 0
        %7937 = vmatpush.bf16.msra.mxu0 0
        %7938 = vmatpush.bf16.msra.mxu0 0
        %7939 = vmatpush.bf16.msra.mxu0 0
        %7940 = vmatpush.bf16.msra.mxu0 0
        %7941 = vmatpush.bf16.msra.mxu0 0
        %7942 = vmatpush.bf16.msra.mxu0 0
        %7943 = vmatpush.bf16.msra.mxu0 %v7886
        %7944 = vmatpush.bf16.msra.mxu0 %v7885
        %7945 = vmatmul.bf16.gmra.mxu0 %v7890
        %v7946 = vpop.f32.mrf.mxu0
        %v7947 = vadd.f32 0.0, %v7946
        %v7948 = vpop.f32.mrf.mxu0
        %v7949 = vadd.f32 0.0, %v7948
        %7950 = vmatmul.bf16.gmra.mxu0 %v7893
        %v7951 = vpop.f32.mrf.mxu0
        %v7952 = vadd.f32 0.0, %v7951
        %v7953 = vpop.f32.mrf.mxu0
        %v7954 = vadd.f32 0.0, %v7953
        %7955 = vmatmul.bf16.gmra.mxu0 %v7896
        %v7956 = vpop.f32.mrf.mxu0
        %v7957 = vadd.f32 0.0, %v7956
        %v7958 = vpop.f32.mrf.mxu0
        %v7959 = vadd.f32 0.0, %v7958
        %7960 = vmatmul.bf16.gmra.mxu0 %v7899
        %v7961 = vpop.f32.mrf.mxu0
        %v7962 = vadd.f32 0.0, %v7961
        %v7963 = vpop.f32.mrf.mxu0
        %v7964 = vadd.f32 0.0, %v7963
        %7965 = vmatmul.bf16.gmra.mxu0 %v7902
        %v7966 = vpop.f32.mrf.mxu0
        %v7967 = vadd.f32 0.0, %v7966
        %v7968 = vpop.f32.mrf.mxu0
        %v7969 = vadd.f32 0.0, %v7968
        %7970 = vmatmul.bf16.gmra.mxu0 %v7905
        %v7971 = vpop.f32.mrf.mxu0
        %v7972 = vadd.f32 0.0, %v7971
        %v7973 = vpop.f32.mrf.mxu0
        %v7974 = vadd.f32 0.0, %v7973
        %7975 = vmatmul.bf16.gmra.mxu0 %v7908
        %v7976 = vpop.f32.mrf.mxu0
        %v7977 = vadd.f32 0.0, %v7976
        %v7978 = vpop.f32.mrf.mxu0
        %v7979 = vadd.f32 0.0, %v7978
        %7980 = vmatmul.bf16.gmra.mxu0 %v7911
        %v7981 = vpop.f32.mrf.mxu0
        %v7982 = vadd.f32 0.0, %v7981
        %v7983 = vpop.f32.mrf.mxu0
        %v7984 = vadd.f32 0.0, %v7983
        %7985 = vmatmul.bf16.gmra.mxu0 %v7914
        %v7986 = vpop.f32.mrf.mxu0
        %v7987 = vadd.f32 0.0, %v7986
        %v7988 = vpop.f32.mrf.mxu0
        %v7989 = vadd.f32 0.0, %v7988
        %7990 = vmatmul.bf16.gmra.mxu0 %v7917
        %v7991 = vpop.f32.mrf.mxu0
        %v7992 = vadd.f32 0.0, %v7991
        %v7993 = vpop.f32.mrf.mxu0
        %v7994 = vadd.f32 0.0, %v7993
        %7995 = vmatmul.bf16.gmra.mxu0 %v7920
        %v7996 = vpop.f32.mrf.mxu0
        %v7997 = vadd.f32 0.0, %v7996
        %v7998 = vpop.f32.mrf.mxu0
        %v7999 = vadd.f32 0.0, %v7998
        %8000 = vmatmul.bf16.gmra.mxu0 %v7923
        %v8001 = vpop.f32.mrf.mxu0
        %v8002 = vadd.f32 0.0, %v8001
        %v8003 = vpop.f32.mrf.mxu0
        %v8004 = vadd.f32 0.0, %v8003
        %8005 = vmatmul.bf16.gmra.mxu0 %v7926
        %v8006 = vpop.f32.mrf.mxu0
        %v8007 = vadd.f32 0.0, %v8006
        %v8008 = vpop.f32.mrf.mxu0
        %v8009 = vadd.f32 0.0, %v8008
        %8010 = vmatmul.bf16.gmra.mxu0 %v7929
        %v8011 = vpop.f32.mrf.mxu0
        %v8012 = vadd.f32 0.0, %v8011
        %v8013 = vpop.f32.mrf.mxu0
        %v8014 = vadd.f32 0.0, %v8013
        %8015 = vmatmul.bf16.gmra.mxu0 %v7932
        %v8016 = vpop.f32.mrf.mxu0
        %v8017 = vadd.f32 0.0, %v8016
        %v8018 = vpop.f32.mrf.mxu0
        %v8019 = vadd.f32 0.0, %v8018
        %8020 = vmatmul.bf16.gmra.mxu0 %v7935
        %v8021 = vpop.f32.mrf.mxu0
        %v8022 = vadd.f32 0.0, %v8021
        %v8023 = vpop.f32.mrf.mxu0
        %v8024 = vadd.f32 0.0, %v8023
        %8025 = vdwg.mxu0
        %v8026 = vadd.f32 %v7539, %v7947
        %v8027 = vadd.f32 %v7540, %v7949
        %v8028 = vadd.f32 %v7541, %v7952
        %v8029 = vadd.f32 %v7542, %v7954
        %v8030 = vadd.f32 %v7543, %v7957
        %v8031 = vadd.f32 %v7544, %v7959
        %v8032 = vadd.f32 %v7545, %v7962
        %v8033 = vadd.f32 %v7546, %v7964
        %v8034 = vadd.f32 %v7547, %v7967
        %v8035 = vadd.f32 %v7548, %v7969
        %v8036 = vadd.f32 %v7549, %v7972
        %v8037 = vadd.f32 %v7550, %v7974
        %v8038 = vadd.f32 %v7551, %v7977
        %v8039 = vadd.f32 %v7552, %v7979
        %v8040 = vadd.f32 %v7553, %v7982
        %v8041 = vadd.f32 %v7554, %v7984
        %v8042 = vadd.f32 %v7555, %v7987
        %v8043 = vadd.f32 %v7556, %v7989
        %v8044 = vadd.f32 %v7557, %v7992
        %v8045 = vadd.f32 %v7558, %v7994
        %v8046 = vadd.f32 %v7559, %v7997
        %v8047 = vadd.f32 %v7560, %v7999
        %v8048 = vadd.f32 %v7561, %v8002
        %v8049 = vadd.f32 %v7562, %v8004
        %v8050 = vadd.f32 %v7563, %v8007
        %v8051 = vadd.f32 %v7564, %v8009
        %v8052 = vadd.f32 %v7565, %v8012
        %v8053 = vadd.f32 %v7566, %v8014
        %v8054 = vadd.f32 %v7567, %v8017
        %v8055 = vadd.f32 %v7568, %v8019
        %v8056 = vadd.f32 %v7569, %v8022
        %v8057 = vadd.f32 %v7570, %v8024
        %s8058 = scalar_lea.vmem %s3, 112
        %v8059 = vld [vmem:[%s8058] sm:$0xf]
        %v8060 = vld [vmem:[%s8058 + $0x4] sm:$0xf]
        %v8061 = vld [vmem:[%s8058 + $0x8] sm:$0xf]
        %v8062 = vld [vmem:[%s8058 + $0xc] sm:$0xf]
        %v8095 = vunpack.c.l.b16 %v7572
        %v8096 = vunpack.c.l.b16 %v7573
        %v8097 = vunpack.c.l.b16 %v7574
        %v8098 = vunpack.c.l.b16 %v7575
        %v8099 = vunpack.c.l.b16 %v7576
        %v8100 = vunpack.c.l.b16 %v7577
        %v8101 = vunpack.c.l.b16 %v7578
        %v8102 = vunpack.c.l.b16 %v7579
        %v8103 = vunpack.c.l.b16 %v7580
        %v8104 = vunpack.c.l.b16 %v7581
        %v8105 = vunpack.c.l.b16 %v7582
        %v8106 = vunpack.c.l.b16 %v7583
        %v8107 = vunpack.c.l.b16 %v7584
        %v8108 = vunpack.c.l.b16 %v7585
        %v8109 = vunpack.c.l.b16 %v7586
        %v8110 = vunpack.c.l.b16 %v7587
        %v8111 = vunpack.c.l.b16 %v7588
        %v8112 = vunpack.c.l.b16 %v7589
        %v8113 = vunpack.c.l.b16 %v7590
        %v8114 = vunpack.c.l.b16 %v7591
        %v8115 = vunpack.c.l.b16 %v7592
        %v8116 = vunpack.c.l.b16 %v7593
        %v8117 = vunpack.c.l.b16 %v7594
        %v8118 = vunpack.c.l.b16 %v7595
        %v8119 = vunpack.c.l.b16 %v7596
        %v8120 = vunpack.c.l.b16 %v7597
        %v8121 = vunpack.c.l.b16 %v7598
        %v8122 = vunpack.c.l.b16 %v7599
        %v8123 = vunpack.c.l.b16 %v7600
        %v8124 = vunpack.c.l.b16 %v7601
        %v8125 = vunpack.c.l.b16 %v7602
        %v8126 = vunpack.c.l.b16 %v7603
        %v8127 = vpack.c.b16 %v8096, %v8095
        %v8128 = vpack.c.b16 %v8098, %v8097
        %v8129 = vpack.c.b16 %v8100, %v8099
        %v8130 = vpack.c.b16 %v8102, %v8101
        %v8131 = vpack.c.b16 %v8104, %v8103
        %v8132 = vpack.c.b16 %v8106, %v8105
        %v8133 = vpack.c.b16 %v8108, %v8107
        %v8134 = vpack.c.b16 %v8110, %v8109
        %v8135 = vpack.c.b16 %v8112, %v8111
        %v8136 = vpack.c.b16 %v8114, %v8113
        %v8137 = vpack.c.b16 %v8116, %v8115
        %v8138 = vpack.c.b16 %v8118, %v8117
        %v8139 = vpack.c.b16 %v8120, %v8119
        %v8140 = vpack.c.b16 %v8122, %v8121
        %v8141 = vpack.c.b16 %v8124, %v8123
        %v8142 = vpack.c.b16 %v8126, %v8125
        %v8147 = vunpack.c.l.b16 %v8059
        %v8148 = vunpack.c.l.b16 %v8060
        %v8149 = vunpack.c.l.b16 %v8061
        %v8150 = vunpack.c.l.b16 %v8062
        %v8151 = vpack.c.b16 %v8148, %v8147
        %v8152 = vpack.c.b16 %v8150, %v8149
        %v8156 = vsel %vm3275, %v8127, 0
        %v8159 = vsel %vm3275, %v8128, 0
        %v8162 = vsel %vm3275, %v8129, 0
        %v8165 = vsel %vm3275, %v8130, 0
        %v8168 = vsel %vm3275, %v8131, 0
        %v8171 = vsel %vm3275, %v8132, 0
        %v8174 = vsel %vm3275, %v8133, 0
        %v8177 = vsel %vm3275, %v8134, 0
        %v8180 = vsel %vm3275, %v8135, 0
        %v8183 = vsel %vm3275, %v8136, 0
        %v8186 = vsel %vm3275, %v8137, 0
        %v8189 = vsel %vm3275, %v8138, 0
        %v8192 = vsel %vm3275, %v8139, 0
        %v8195 = vsel %vm3275, %v8140, 0
        %v8198 = vsel %vm3275, %v8141, 0
        %v8201 = vsel %vm3275, %v8142, 0
        %8203 = vmatpush.bf16.msra.mxu0 0
        %8204 = vmatpush.bf16.msra.mxu0 0
        %8205 = vmatpush.bf16.msra.mxu0 0
        %8206 = vmatpush.bf16.msra.mxu0 0
        %8207 = vmatpush.bf16.msra.mxu0 0
        %8208 = vmatpush.bf16.msra.mxu0 0
        %8209 = vmatpush.bf16.msra.mxu0 %v8152
        %8210 = vmatpush.bf16.msra.mxu0 %v8151
        %8211 = vmatmul.bf16.gmra.mxu0 %v8156
        %v8212 = vpop.f32.mrf.mxu0
        %v8213 = vadd.f32 0.0, %v8212
        %v8214 = vpop.f32.mrf.mxu0
        %v8215 = vadd.f32 0.0, %v8214
        %8216 = vmatmul.bf16.gmra.mxu0 %v8159
        %v8217 = vpop.f32.mrf.mxu0
        %v8218 = vadd.f32 0.0, %v8217
        %v8219 = vpop.f32.mrf.mxu0
        %v8220 = vadd.f32 0.0, %v8219
        %8221 = vmatmul.bf16.gmra.mxu0 %v8162
        %v8222 = vpop.f32.mrf.mxu0
        %v8223 = vadd.f32 0.0, %v8222
        %v8224 = vpop.f32.mrf.mxu0
        %v8225 = vadd.f32 0.0, %v8224
        %8226 = vmatmul.bf16.gmra.mxu0 %v8165
        %v8227 = vpop.f32.mrf.mxu0
        %v8228 = vadd.f32 0.0, %v8227
        %v8229 = vpop.f32.mrf.mxu0
        %v8230 = vadd.f32 0.0, %v8229
        %8231 = vmatmul.bf16.gmra.mxu0 %v8168
        %v8232 = vpop.f32.mrf.mxu0
        %v8233 = vadd.f32 0.0, %v8232
        %v8234 = vpop.f32.mrf.mxu0
        %v8235 = vadd.f32 0.0, %v8234
        %8236 = vmatmul.bf16.gmra.mxu0 %v8171
        %v8237 = vpop.f32.mrf.mxu0
        %v8238 = vadd.f32 0.0, %v8237
        %v8239 = vpop.f32.mrf.mxu0
        %v8240 = vadd.f32 0.0, %v8239
        %8241 = vmatmul.bf16.gmra.mxu0 %v8174
        %v8242 = vpop.f32.mrf.mxu0
        %v8243 = vadd.f32 0.0, %v8242
        %v8244 = vpop.f32.mrf.mxu0
        %v8245 = vadd.f32 0.0, %v8244
        %8246 = vmatmul.bf16.gmra.mxu0 %v8177
        %v8247 = vpop.f32.mrf.mxu0
        %v8248 = vadd.f32 0.0, %v8247
        %v8249 = vpop.f32.mrf.mxu0
        %v8250 = vadd.f32 0.0, %v8249
        %8251 = vmatmul.bf16.gmra.mxu0 %v8180
        %v8252 = vpop.f32.mrf.mxu0
        %v8253 = vadd.f32 0.0, %v8252
        %v8254 = vpop.f32.mrf.mxu0
        %v8255 = vadd.f32 0.0, %v8254
        %8256 = vmatmul.bf16.gmra.mxu0 %v8183
        %v8257 = vpop.f32.mrf.mxu0
        %v8258 = vadd.f32 0.0, %v8257
        %v8259 = vpop.f32.mrf.mxu0
        %v8260 = vadd.f32 0.0, %v8259
        %8261 = vmatmul.bf16.gmra.mxu0 %v8186
        %v8262 = vpop.f32.mrf.mxu0
        %v8263 = vadd.f32 0.0, %v8262
        %v8264 = vpop.f32.mrf.mxu0
        %v8265 = vadd.f32 0.0, %v8264
        %8266 = vmatmul.bf16.gmra.mxu0 %v8189
        %v8267 = vpop.f32.mrf.mxu0
        %v8268 = vadd.f32 0.0, %v8267
        %v8269 = vpop.f32.mrf.mxu0
        %v8270 = vadd.f32 0.0, %v8269
        %8271 = vmatmul.bf16.gmra.mxu0 %v8192
        %v8272 = vpop.f32.mrf.mxu0
        %v8273 = vadd.f32 0.0, %v8272
        %v8274 = vpop.f32.mrf.mxu0
        %v8275 = vadd.f32 0.0, %v8274
        %8276 = vmatmul.bf16.gmra.mxu0 %v8195
        %v8277 = vpop.f32.mrf.mxu0
        %v8278 = vadd.f32 0.0, %v8277
        %v8279 = vpop.f32.mrf.mxu0
        %v8280 = vadd.f32 0.0, %v8279
        %8281 = vmatmul.bf16.gmra.mxu0 %v8198
        %v8282 = vpop.f32.mrf.mxu0
        %v8283 = vadd.f32 0.0, %v8282
        %v8284 = vpop.f32.mrf.mxu0
        %v8285 = vadd.f32 0.0, %v8284
        %8286 = vmatmul.bf16.gmra.mxu0 %v8201
        %v8287 = vpop.f32.mrf.mxu0
        %v8288 = vadd.f32 0.0, %v8287
        %v8289 = vpop.f32.mrf.mxu0
        %v8290 = vadd.f32 0.0, %v8289
        %8291 = vdwg.mxu0
        %v8292 = vadd.f32 %v8026, %v8213
        %v8293 = vadd.f32 %v8027, %v8215
        %v8294 = vadd.f32 %v8028, %v8218
        %v8295 = vadd.f32 %v8029, %v8220
        %v8296 = vadd.f32 %v8030, %v8223
        %v8297 = vadd.f32 %v8031, %v8225
        %v8298 = vadd.f32 %v8032, %v8228
        %v8299 = vadd.f32 %v8033, %v8230
        %v8300 = vadd.f32 %v8034, %v8233
        %v8301 = vadd.f32 %v8035, %v8235
        %v8302 = vadd.f32 %v8036, %v8238
        %v8303 = vadd.f32 %v8037, %v8240
        %v8304 = vadd.f32 %v8038, %v8243
        %v8305 = vadd.f32 %v8039, %v8245
        %v8306 = vadd.f32 %v8040, %v8248
        %v8307 = vadd.f32 %v8041, %v8250
        %v8308 = vadd.f32 %v8042, %v8253
        %v8309 = vadd.f32 %v8043, %v8255
        %v8310 = vadd.f32 %v8044, %v8258
        %v8311 = vadd.f32 %v8045, %v8260
        %v8312 = vadd.f32 %v8046, %v8263
        %v8313 = vadd.f32 %v8047, %v8265
        %v8314 = vadd.f32 %v8048, %v8268
        %v8315 = vadd.f32 %v8049, %v8270
        %v8316 = vadd.f32 %v8050, %v8273
        %v8317 = vadd.f32 %v8051, %v8275
        %v8318 = vadd.f32 %v8052, %v8278
        %v8319 = vadd.f32 %v8053, %v8280
        %v8320 = vadd.f32 %v8054, %v8283
        %v8321 = vadd.f32 %v8055, %v8285
        %v8322 = vadd.f32 %v8056, %v8288
        %v8323 = vadd.f32 %v8057, %v8290
        %v8324 = vld [vmem:[#allocation2 + $0x14] sm:$0xf]
        %v8325 = vld [vmem:[#allocation2 + $0x18] sm:$0xf]
        %v8326 = vld [vmem:[#allocation2 + $0x1c] sm:$0xf]
        %v8327 = vld [vmem:[#allocation2 + $0x20] sm:$0xf]
        %v8328 = vld [vmem:[#allocation2 + $0x24] sm:$0xf]
        %v8329 = vld [vmem:[#allocation2 + $0x28] sm:$0xf]
        %v8330 = vld [vmem:[#allocation2 + $0x2c] sm:$0xf]
        %v8331 = vld [vmem:[#allocation2 + $0x30] sm:$0xf]
        %v8332 = vld [vmem:[#allocation2 + $0x34] sm:$0xf]
        %v8333 = vld [vmem:[#allocation2 + $0x38] sm:$0xf]
        %v8334 = vld [vmem:[#allocation2 + $0x3c] sm:$0xf]
        %v8335 = vld [vmem:[#allocation2 + $0x40] sm:$0xf]
        %v8336 = vld [vmem:[#allocation2 + $0x44] sm:$0xf]
        %v8337 = vld [vmem:[#allocation2 + $0x48] sm:$0xf]
        %v8338 = vld [vmem:[#allocation2 + $0x4c] sm:$0xf]
        %v8339 = vld [vmem:[#allocation2 + $0x50] sm:$0xf]
        %v8340 = vld [vmem:[#allocation2 + $0x54] sm:$0xf]
        %v8341 = vld [vmem:[#allocation2 + $0x58] sm:$0xf]
        %v8342 = vld [vmem:[#allocation2 + $0x5c] sm:$0xf]
        %v8343 = vld [vmem:[#allocation2 + $0x60] sm:$0xf]
        %v8344 = vld [vmem:[#allocation2 + $0x64] sm:$0xf]
        %v8345 = vld [vmem:[#allocation2 + $0x68] sm:$0xf]
        %v8346 = vld [vmem:[#allocation2 + $0x6c] sm:$0xf]
        %v8347 = vld [vmem:[#allocation2 + $0x70] sm:$0xf]
        %v8348 = vld [vmem:[#allocation2 + $0x74] sm:$0xf]
        %v8349 = vld [vmem:[#allocation2 + $0x78] sm:$0xf]
        %v8350 = vld [vmem:[#allocation2 + $0x7c] sm:$0xf]
        %v8351 = vld [vmem:[#allocation2 + $0x80] sm:$0xf]
        %v8352 = vld [vmem:[#allocation2 + $0x84] sm:$0xf]
        %v8353 = vld [vmem:[#allocation2 + $0x88] sm:$0xf]
        %v8354 = vld [vmem:[#allocation2 + $0x8c] sm:$0xf]
        %v8355 = vld [vmem:[#allocation2 + $0x90] sm:$0xf]
        %v8356 = vld [vmem:[#allocation2 + $0x94] sm:$0x1]
        %v8357 = vsel %vm5691, %v8324, 0
        %v8358 = vsel %vm5698, %v8325, 0
        %v8359 = vsel %vm5705, %v8326, 0
        %v8360 = vsel %vm5712, %v8327, 0
        %v8361 = vsel %vm5719, %v8328, 0
        %v8362 = vsel %vm5726, %v8329, 0
        %v8363 = vsel %vm5733, %v8330, 0
        %v8364 = vsel %vm5740, %v8331, 0
        %v8365 = vsel %vm5747, %v8332, 0
        %v8366 = vsel %vm5754, %v8333, 0
        %v8367 = vsel %vm5761, %v8334, 0
        %v8368 = vsel %vm5768, %v8335, 0
        %v8369 = vsel %vm5775, %v8336, 0
        %v8370 = vsel %vm5782, %v8337, 0
        %v8371 = vsel %vm5789, %v8338, 0
        %v8372 = vsel %vm5796, %v8339, 0
        %v8373 = vsel %vm5803, %v8340, 0
        %v8374 = vsel %vm5810, %v8341, 0
        %v8375 = vsel %vm5817, %v8342, 0
        %v8376 = vsel %vm5824, %v8343, 0
        %v8377 = vsel %vm5831, %v8344, 0
        %v8378 = vsel %vm5838, %v8345, 0
        %v8379 = vsel %vm5845, %v8346, 0
        %v8380 = vsel %vm5852, %v8347, 0
        %v8381 = vsel %vm5859, %v8348, 0
        %v8382 = vsel %vm5866, %v8349, 0
        %v8383 = vsel %vm5873, %v8350, 0
        %v8384 = vsel %vm5880, %v8351, 0
        %v8385 = vsel %vm5887, %v8352, 0
        %v8386 = vsel %vm5894, %v8353, 0
        %v8387 = vsel %vm5901, %v8354, 0
        %v8388 = vsel %vm5908, %v8355, 0
        %v8389 = vsel %vm5915, %v8356, 0
        %s8390 = scalar_lea.vmem %s3, 128
        %v8391 = vld [vmem:[%s8390] sm:$0xf]
        %v8392 = vld [vmem:[%s8390 + $0x4] sm:$0xf]
        %v8393 = vld [vmem:[%s8390 + $0x8] sm:$0xf]
        %v8394 = vld [vmem:[%s8390 + $0xc] sm:$0xf]
        %v8428 = vunpack.c.l.b16 %v8357
        %v8429 = vunpack.c.l.b16 %v8358
        %v8430 = vunpack.c.l.b16 %v8359
        %v8431 = vunpack.c.l.b16 %v8360
        %v8432 = vunpack.c.l.b16 %v8361
        %v8433 = vunpack.c.l.b16 %v8362
        %v8434 = vunpack.c.l.b16 %v8363
        %v8435 = vunpack.c.l.b16 %v8364
        %v8436 = vunpack.c.l.b16 %v8365
        %v8437 = vunpack.c.l.b16 %v8366
        %v8438 = vunpack.c.l.b16 %v8367
        %v8439 = vunpack.c.l.b16 %v8368
        %v8440 = vunpack.c.l.b16 %v8369
        %v8441 = vunpack.c.l.b16 %v8370
        %v8442 = vunpack.c.l.b16 %v8371
        %v8443 = vunpack.c.l.b16 %v8372
        %v8444 = vunpack.c.l.b16 %v8373
        %v8445 = vunpack.c.l.b16 %v8374
        %v8446 = vunpack.c.l.b16 %v8375
        %v8447 = vunpack.c.l.b16 %v8376
        %v8448 = vunpack.c.l.b16 %v8377
        %v8449 = vunpack.c.l.b16 %v8378
        %v8450 = vunpack.c.l.b16 %v8379
        %v8451 = vunpack.c.l.b16 %v8380
        %v8452 = vunpack.c.l.b16 %v8381
        %v8453 = vunpack.c.l.b16 %v8382
        %v8454 = vunpack.c.l.b16 %v8383
        %v8455 = vunpack.c.l.b16 %v8384
        %v8456 = vunpack.c.l.b16 %v8385
        %v8457 = vunpack.c.l.b16 %v8386
        %v8458 = vunpack.c.l.b16 %v8387
        %v8459 = vunpack.c.l.b16 %v8388
        %v8460 = vunpack.c.l.b16 %v8389
        %v8461 = vpack.c.b16 %v8429, %v8428
        %v8462 = vpack.c.b16 %v8431, %v8430
        %v8463 = vpack.c.b16 %v8433, %v8432
        %v8464 = vpack.c.b16 %v8435, %v8434
        %v8465 = vpack.c.b16 %v8437, %v8436
        %v8466 = vpack.c.b16 %v8439, %v8438
        %v8467 = vpack.c.b16 %v8441, %v8440
        %v8468 = vpack.c.b16 %v8443, %v8442
        %v8469 = vpack.c.b16 %v8445, %v8444
        %v8470 = vpack.c.b16 %v8447, %v8446
        %v8471 = vpack.c.b16 %v8449, %v8448
        %v8472 = vpack.c.b16 %v8451, %v8450
        %v8473 = vpack.c.b16 %v8453, %v8452
        %v8474 = vpack.c.b16 %v8455, %v8454
        %v8475 = vpack.c.b16 %v8457, %v8456
        %v8476 = vpack.c.b16 %v8459, %v8458
        %v8477 = vpack.c.b16 %v8460, %v8460
        %v8479 = vshrl.u32 %v8461, 16
        %v8481 = vshll.u32 %v8461, 16
        %v8483 = vrot.slane %v8481, 1
        %v8484 = vor.u32 %v8479, %v8483
        %v8486 = vshll.u32 %v8462, 16
        %v8488 = vrot.slane %v8486, 1
        %v8489 = vsel %vm6037, %v8484, %v8488
        %v8490 = vshrl.u32 %v8462, 16
        %v8492 = vor.u32 %v8490, %v8488
        %v8494 = vshll.u32 %v8463, 16
        %v8496 = vrot.slane %v8494, 1
        %v8497 = vsel %vm6037, %v8492, %v8496
        %v8498 = vshrl.u32 %v8463, 16
        %v8500 = vor.u32 %v8498, %v8496
        %v8502 = vshll.u32 %v8464, 16
        %v8504 = vrot.slane %v8502, 1
        %v8505 = vsel %vm6037, %v8500, %v8504
        %v8506 = vshrl.u32 %v8464, 16
        %v8508 = vor.u32 %v8506, %v8504
        %v8510 = vshll.u32 %v8465, 16
        %v8512 = vrot.slane %v8510, 1
        %v8513 = vsel %vm6037, %v8508, %v8512
        %v8514 = vshrl.u32 %v8465, 16
        %v8516 = vor.u32 %v8514, %v8512
        %v8518 = vshll.u32 %v8466, 16
        %v8520 = vrot.slane %v8518, 1
        %v8521 = vsel %vm6037, %v8516, %v8520
        %v8522 = vshrl.u32 %v8466, 16
        %v8524 = vor.u32 %v8522, %v8520
        %v8526 = vshll.u32 %v8467, 16
        %v8528 = vrot.slane %v8526, 1
        %v8529 = vsel %vm6037, %v8524, %v8528
        %v8530 = vshrl.u32 %v8467, 16
        %v8532 = vor.u32 %v8530, %v8528
        %v8534 = vshll.u32 %v8468, 16
        %v8536 = vrot.slane %v8534, 1
        %v8537 = vsel %vm6037, %v8532, %v8536
        %v8538 = vshrl.u32 %v8468, 16
        %v8540 = vor.u32 %v8538, %v8536
        %v8542 = vshll.u32 %v8469, 16
        %v8544 = vrot.slane %v8542, 1
        %v8545 = vsel %vm6037, %v8540, %v8544
        %v8546 = vshrl.u32 %v8469, 16
        %v8548 = vor.u32 %v8546, %v8544
        %v8550 = vshll.u32 %v8470, 16
        %v8552 = vrot.slane %v8550, 1
        %v8553 = vsel %vm6037, %v8548, %v8552
        %v8554 = vshrl.u32 %v8470, 16
        %v8556 = vor.u32 %v8554, %v8552
        %v8558 = vshll.u32 %v8471, 16
        %v8560 = vrot.slane %v8558, 1
        %v8561 = vsel %vm6037, %v8556, %v8560
        %v8562 = vshrl.u32 %v8471, 16
        %v8564 = vor.u32 %v8562, %v8560
        %v8566 = vshll.u32 %v8472, 16
        %v8568 = vrot.slane %v8566, 1
        %v8569 = vsel %vm6037, %v8564, %v8568
        %v8570 = vshrl.u32 %v8472, 16
        %v8572 = vor.u32 %v8570, %v8568
        %v8574 = vshll.u32 %v8473, 16
        %v8576 = vrot.slane %v8574, 1
        %v8577 = vsel %vm6037, %v8572, %v8576
        %v8578 = vshrl.u32 %v8473, 16
        %v8580 = vor.u32 %v8578, %v8576
        %v8582 = vshll.u32 %v8474, 16
        %v8584 = vrot.slane %v8582, 1
        %v8585 = vsel %vm6037, %v8580, %v8584
        %v8586 = vshrl.u32 %v8474, 16
        %v8588 = vor.u32 %v8586, %v8584
        %v8590 = vshll.u32 %v8475, 16
        %v8592 = vrot.slane %v8590, 1
        %v8593 = vsel %vm6037, %v8588, %v8592
        %v8594 = vshrl.u32 %v8475, 16
        %v8596 = vor.u32 %v8594, %v8592
        %v8598 = vshll.u32 %v8476, 16
        %v8600 = vrot.slane %v8598, 1
        %v8601 = vsel %vm6037, %v8596, %v8600
        %v8602 = vshrl.u32 %v8476, 16
        %v8604 = vor.u32 %v8602, %v8600
        %v8606 = vshll.u32 %v8477, 16
        %v8608 = vrot.slane %v8606, 1
        %v8609 = vsel %vm6037, %v8604, %v8608
        %v8614 = vunpack.c.l.b16 %v8391
        %v8615 = vunpack.c.l.b16 %v8392
        %v8616 = vunpack.c.l.b16 %v8393
        %v8617 = vunpack.c.l.b16 %v8394
        %v8618 = vpack.c.b16 %v8615, %v8614
        %v8619 = vpack.c.b16 %v8617, %v8616
        %v8623 = vsel %vm3275, %v8489, 0
        %v8626 = vsel %vm3275, %v8497, 0
        %v8629 = vsel %vm3275, %v8505, 0
        %v8632 = vsel %vm3275, %v8513, 0
        %v8635 = vsel %vm3275, %v8521, 0
        %v8638 = vsel %vm3275, %v8529, 0
        %v8641 = vsel %vm3275, %v8537, 0
        %v8644 = vsel %vm3275, %v8545, 0
        %v8647 = vsel %vm3275, %v8553, 0
        %v8650 = vsel %vm3275, %v8561, 0
        %v8653 = vsel %vm3275, %v8569, 0
        %v8656 = vsel %vm3275, %v8577, 0
        %v8659 = vsel %vm3275, %v8585, 0
        %v8662 = vsel %vm3275, %v8593, 0
        %v8665 = vsel %vm3275, %v8601, 0
        %v8668 = vsel %vm3275, %v8609, 0
        %8670 = vmatpush.bf16.msra.mxu0 0
        %8671 = vmatpush.bf16.msra.mxu0 0
        %8672 = vmatpush.bf16.msra.mxu0 0
        %8673 = vmatpush.bf16.msra.mxu0 0
        %8674 = vmatpush.bf16.msra.mxu0 0
        %8675 = vmatpush.bf16.msra.mxu0 0
        %8676 = vmatpush.bf16.msra.mxu0 %v8619
        %8677 = vmatpush.bf16.msra.mxu0 %v8618
        %8678 = vmatmul.bf16.gmra.mxu0 %v8623
        %v8679 = vpop.f32.mrf.mxu0
        %v8680 = vadd.f32 0.0, %v8679
        %v8681 = vpop.f32.mrf.mxu0
        %v8682 = vadd.f32 0.0, %v8681
        %8683 = vmatmul.bf16.gmra.mxu0 %v8626
        %v8684 = vpop.f32.mrf.mxu0
        %v8685 = vadd.f32 0.0, %v8684
        %v8686 = vpop.f32.mrf.mxu0
        %v8687 = vadd.f32 0.0, %v8686
        %8688 = vmatmul.bf16.gmra.mxu0 %v8629
        %v8689 = vpop.f32.mrf.mxu0
        %v8690 = vadd.f32 0.0, %v8689
        %v8691 = vpop.f32.mrf.mxu0
        %v8692 = vadd.f32 0.0, %v8691
        %8693 = vmatmul.bf16.gmra.mxu0 %v8632
        %v8694 = vpop.f32.mrf.mxu0
        %v8695 = vadd.f32 0.0, %v8694
        %v8696 = vpop.f32.mrf.mxu0
        %v8697 = vadd.f32 0.0, %v8696
        %8698 = vmatmul.bf16.gmra.mxu0 %v8635
        %v8699 = vpop.f32.mrf.mxu0
        %v8700 = vadd.f32 0.0, %v8699
        %v8701 = vpop.f32.mrf.mxu0
        %v8702 = vadd.f32 0.0, %v8701
        %8703 = vmatmul.bf16.gmra.mxu0 %v8638
        %v8704 = vpop.f32.mrf.mxu0
        %v8705 = vadd.f32 0.0, %v8704
        %v8706 = vpop.f32.mrf.mxu0
        %v8707 = vadd.f32 0.0, %v8706
        %8708 = vmatmul.bf16.gmra.mxu0 %v8641
        %v8709 = vpop.f32.mrf.mxu0
        %v8710 = vadd.f32 0.0, %v8709
        %v8711 = vpop.f32.mrf.mxu0
        %v8712 = vadd.f32 0.0, %v8711
        %8713 = vmatmul.bf16.gmra.mxu0 %v8644
        %v8714 = vpop.f32.mrf.mxu0
        %v8715 = vadd.f32 0.0, %v8714
        %v8716 = vpop.f32.mrf.mxu0
        %v8717 = vadd.f32 0.0, %v8716
        %8718 = vmatmul.bf16.gmra.mxu0 %v8647
        %v8719 = vpop.f32.mrf.mxu0
        %v8720 = vadd.f32 0.0, %v8719
        %v8721 = vpop.f32.mrf.mxu0
        %v8722 = vadd.f32 0.0, %v8721
        %8723 = vmatmul.bf16.gmra.mxu0 %v8650
        %v8724 = vpop.f32.mrf.mxu0
        %v8725 = vadd.f32 0.0, %v8724
        %v8726 = vpop.f32.mrf.mxu0
        %v8727 = vadd.f32 0.0, %v8726
        %8728 = vmatmul.bf16.gmra.mxu0 %v8653
        %v8729 = vpop.f32.mrf.mxu0
        %v8730 = vadd.f32 0.0, %v8729
        %v8731 = vpop.f32.mrf.mxu0
        %v8732 = vadd.f32 0.0, %v8731
        %8733 = vmatmul.bf16.gmra.mxu0 %v8656
        %v8734 = vpop.f32.mrf.mxu0
        %v8735 = vadd.f32 0.0, %v8734
        %v8736 = vpop.f32.mrf.mxu0
        %v8737 = vadd.f32 0.0, %v8736
        %8738 = vmatmul.bf16.gmra.mxu0 %v8659
        %v8739 = vpop.f32.mrf.mxu0
        %v8740 = vadd.f32 0.0, %v8739
        %v8741 = vpop.f32.mrf.mxu0
        %v8742 = vadd.f32 0.0, %v8741
        %8743 = vmatmul.bf16.gmra.mxu0 %v8662
        %v8744 = vpop.f32.mrf.mxu0
        %v8745 = vadd.f32 0.0, %v8744
        %v8746 = vpop.f32.mrf.mxu0
        %v8747 = vadd.f32 0.0, %v8746
        %8748 = vmatmul.bf16.gmra.mxu0 %v8665
        %v8749 = vpop.f32.mrf.mxu0
        %v8750 = vadd.f32 0.0, %v8749
        %v8751 = vpop.f32.mrf.mxu0
        %v8752 = vadd.f32 0.0, %v8751
        %8753 = vmatmul.bf16.gmra.mxu0 %v8668
        %v8754 = vpop.f32.mrf.mxu0
        %v8755 = vadd.f32 0.0, %v8754
        %v8756 = vpop.f32.mrf.mxu0
        %v8757 = vadd.f32 0.0, %v8756
        %8758 = vdwg.mxu0
        %v8759 = vadd.f32 %v8292, %v8680
        %v8760 = vadd.f32 %v8293, %v8682
        %v8761 = vadd.f32 %v8294, %v8685
        %v8762 = vadd.f32 %v8295, %v8687
        %v8763 = vadd.f32 %v8296, %v8690
        %v8764 = vadd.f32 %v8297, %v8692
        %v8765 = vadd.f32 %v8298, %v8695
        %v8766 = vadd.f32 %v8299, %v8697
        %v8767 = vadd.f32 %v8300, %v8700
        %v8768 = vadd.f32 %v8301, %v8702
        %v8769 = vadd.f32 %v8302, %v8705
        %v8770 = vadd.f32 %v8303, %v8707
        %v8771 = vadd.f32 %v8304, %v8710
        %v8772 = vadd.f32 %v8305, %v8712
        %v8773 = vadd.f32 %v8306, %v8715
        %v8774 = vadd.f32 %v8307, %v8717
        %v8775 = vadd.f32 %v8308, %v8720
        %v8776 = vadd.f32 %v8309, %v8722
        %v8777 = vadd.f32 %v8310, %v8725
        %v8778 = vadd.f32 %v8311, %v8727
        %v8779 = vadd.f32 %v8312, %v8730
        %v8780 = vadd.f32 %v8313, %v8732
        %v8781 = vadd.f32 %v8314, %v8735
        %v8782 = vadd.f32 %v8315, %v8737
        %v8783 = vadd.f32 %v8316, %v8740
        %v8784 = vadd.f32 %v8317, %v8742
        %v8785 = vadd.f32 %v8318, %v8745
        %v8786 = vadd.f32 %v8319, %v8747
        %v8787 = vadd.f32 %v8320, %v8750
        %v8788 = vadd.f32 %v8321, %v8752
        %v8789 = vadd.f32 %v8322, %v8755
        %v8790 = vadd.f32 %v8323, %v8757
        %v8791 = vld [vmem:[%s4] sm:$0x1]
        %v8793 = vperm.slane %v8791, 0
        %v8795 = vadd.f32 %v8759, %v8793
        %v8796 = vadd.f32 %v8760, %v8793
        %v8797 = vadd.f32 %v8761, %v8793
        %v8798 = vadd.f32 %v8762, %v8793
        %v8799 = vadd.f32 %v8763, %v8793
        %v8800 = vadd.f32 %v8764, %v8793
        %v8801 = vadd.f32 %v8765, %v8793
        %v8802 = vadd.f32 %v8766, %v8793
        %v8803 = vadd.f32 %v8767, %v8793
        %v8804 = vadd.f32 %v8768, %v8793
        %v8805 = vadd.f32 %v8769, %v8793
        %v8806 = vadd.f32 %v8770, %v8793
        %v8807 = vadd.f32 %v8771, %v8793
        %v8808 = vadd.f32 %v8772, %v8793
        %v8809 = vadd.f32 %v8773, %v8793
        %v8810 = vadd.f32 %v8774, %v8793
        %v8811 = vadd.f32 %v8775, %v8793
        %v8812 = vadd.f32 %v8776, %v8793
        %v8813 = vadd.f32 %v8777, %v8793
        %v8814 = vadd.f32 %v8778, %v8793
        %v8815 = vadd.f32 %v8779, %v8793
        %v8816 = vadd.f32 %v8780, %v8793
        %v8817 = vadd.f32 %v8781, %v8793
        %v8818 = vadd.f32 %v8782, %v8793
        %v8819 = vadd.f32 %v8783, %v8793
        %v8820 = vadd.f32 %v8784, %v8793
        %v8821 = vadd.f32 %v8785, %v8793
        %v8822 = vadd.f32 %v8786, %v8793
        %v8823 = vadd.f32 %v8787, %v8793
        %v8824 = vadd.f32 %v8788, %v8793
        %v8825 = vadd.f32 %v8789, %v8793
        %v8826 = vadd.f32 %v8790, %v8793
        %v8827 = vld [vmem:[%s11] sm:$0xff]
        %v8828 = vld [vmem:[%s11 + $0x8] sm:$0xff]
        %v8829 = vld [vmem:[%s11 + $0x10] sm:$0xff]
        %v8830 = vld [vmem:[%s11 + $0x18] sm:$0xff]
        %v8831 = vld [vmem:[%s12] sm:$0xff]
        %v8832 = vsel %vm3275, %v8795, 0.0
        %v8833 = vsel %vm3275, %v8796, 0.0
        %v8834 = vadd.f32 %v8832, %v8833
        %v8835 = vsel %vm3275, %v8797, 0.0
        %v8836 = vadd.f32 %v8834, %v8835
        %v8837 = vsel %vm3275, %v8798, 0.0
        %v8838 = vadd.f32 %v8836, %v8837
        %v8839 = vsel %vm3275, %v8799, 0.0
        %v8840 = vadd.f32 %v8838, %v8839
        %v8841 = vsel %vm3275, %v8800, 0.0
        %v8842 = vadd.f32 %v8840, %v8841
        %v8843 = vsel %vm3275, %v8801, 0.0
        %v8844 = vadd.f32 %v8842, %v8843
        %v8845 = vsel %vm3275, %v8802, 0.0
        %v8846 = vadd.f32 %v8844, %v8845
        %v8847 = vsel %vm3275, %v8803, 0.0
        %v8848 = vadd.f32 %v8846, %v8847
        %v8849 = vsel %vm3275, %v8804, 0.0
        %v8850 = vadd.f32 %v8848, %v8849
        %v8851 = vsel %vm3275, %v8805, 0.0
        %v8852 = vadd.f32 %v8850, %v8851
        %v8853 = vsel %vm3275, %v8806, 0.0
        %v8854 = vadd.f32 %v8852, %v8853
        %v8855 = vsel %vm3275, %v8807, 0.0
        %v8856 = vadd.f32 %v8854, %v8855
        %v8857 = vsel %vm3275, %v8808, 0.0
        %v8858 = vadd.f32 %v8856, %v8857
        %v8859 = vsel %vm3275, %v8809, 0.0
        %v8860 = vadd.f32 %v8858, %v8859
        %v8861 = vsel %vm3275, %v8810, 0.0
        %v8862 = vadd.f32 %v8860, %v8861
        %v8863 = vsel %vm3275, %v8811, 0.0
        %v8864 = vadd.f32 %v8862, %v8863
        %v8865 = vsel %vm3275, %v8812, 0.0
        %v8866 = vadd.f32 %v8864, %v8865
        %v8867 = vsel %vm3275, %v8813, 0.0
        %v8868 = vadd.f32 %v8866, %v8867
        %v8869 = vsel %vm3275, %v8814, 0.0
        %v8870 = vadd.f32 %v8868, %v8869
        %v8871 = vsel %vm3275, %v8815, 0.0
        %v8872 = vadd.f32 %v8870, %v8871
        %v8873 = vsel %vm3275, %v8816, 0.0
        %v8874 = vadd.f32 %v8872, %v8873
        %v8875 = vsel %vm3275, %v8817, 0.0
        %v8876 = vadd.f32 %v8874, %v8875
        %v8877 = vsel %vm3275, %v8818, 0.0
        %v8878 = vadd.f32 %v8876, %v8877
        %v8879 = vsel %vm3275, %v8819, 0.0
        %v8880 = vadd.f32 %v8878, %v8879
        %v8881 = vsel %vm3275, %v8820, 0.0
        %v8882 = vadd.f32 %v8880, %v8881
        %v8883 = vsel %vm3275, %v8821, 0.0
        %v8884 = vadd.f32 %v8882, %v8883
        %v8885 = vsel %vm3275, %v8822, 0.0
        %v8886 = vadd.f32 %v8884, %v8885
        %v8887 = vsel %vm3275, %v8823, 0.0
        %v8888 = vadd.f32 %v8886, %v8887
        %v8889 = vsel %vm3275, %v8824, 0.0
        %v8890 = vadd.f32 %v8888, %v8889
        %v8891 = vsel %vm3275, %v8825, 0.0
        %v8892 = vadd.f32 %v8890, %v8891
        %v8893 = vsel %vm3275, %v8826, 0.0
        %v8894 = vadd.f32 %v8892, %v8893
        %v8895 = vrot.slane %v8894, 4
        %v8896 = vadd.f32 %v8894, %v8895
        %v8897 = vrot.slane %v8896, 2
        %v8898 = vadd.f32 %v8896, %v8897
        %v8899 = vrot.slane %v8898, 1
        %v8900 = vadd.f32 %v8898, %v8899
        %v8902 = vsel %vm3275, %v8900, 0
        %8904 = vmatpush.msra.mxu0 0.0
        %8905 = vmatpush.msra.mxu0 0.0
        %8906 = vmatpush.msra.mxu0 0.0
        %8907 = vmatpush.msra.mxu0 0.0
        %8908 = vmatpush.msra.mxu0 0.0
        %8909 = vmatpush.msra.mxu0 0.0
        %8910 = vmatpush.msra.mxu0 0.0
        %8911 = vmatpush.msra.mxu0 0.0
        %8912 = vmatpush.msra.mxu0 0.0
        %8913 = vmatpush.msra.mxu0 0.0
        %8914 = vmatpush.msra.mxu0 0.0
        %8915 = vmatpush.msra.mxu0 0.0
        %8916 = vmatpush.msra.mxu0 %v8830
        %8917 = vmatpush.msra.mxu0 %v8829
        %8918 = vmatpush.msra.mxu0 %v8828
        %8919 = vmatpush.msra.mxu0 %v8827
        %8920 = vmatmul.f32.gmra.mxu0 %v8902
        %v8921 = vpop.f32.mrf.mxu0
        %v8922 = vadd.f32 0.0, %v8921
        %8923 = vdwg.mxu0
        %v8924 = vmul.f32 %v8922, %v3374
        %v8926 = vsel %vm3376, %v8924, 0
        %8928 = vmatpush.msra.mxu0 0.0
        %8929 = vmatpush.msra.mxu0 0.0
        %8930 = vmatpush.msra.mxu0 0.0
        %8931 = vmatpush.msra.mxu0 0.0
        %8932 = vmatpush.msra.mxu0 0.0
        %8933 = vmatpush.msra.mxu0 0.0
        %8934 = vmatpush.msra.mxu0 0.0
        %8935 = vmatpush.msra.mxu0 0.0
        %8936 = vmatpush.msra.mxu0 0.0
        %8937 = vmatpush.msra.mxu0 0.0
        %8938 = vmatpush.msra.mxu0 0.0
        %8939 = vmatpush.msra.mxu0 0.0
        %8940 = vmatpush.msra.mxu0 0.0
        %8941 = vmatpush.msra.mxu0 0.0
        %8942 = vmatpush.msra.mxu0 0.0
        %8943 = vmatpush.msra.mxu0 %v8831
        %8944 = vmatmul.f32.gmra.mxu0 %v8926
        %v8945 = vpop.f32.mrf.mxu0
        %v8946 = vadd.f32 0.0, %v8945
        %8947 = vdwg.mxu0
        %v8948 = vperm.slane %v8946, 0
        %v8949 = vsub.f32 %v8795, %v8948
        %v8950 = vsub.f32 %v8796, %v8948
        %v8951 = vsub.f32 %v8797, %v8948
        %v8952 = vsub.f32 %v8798, %v8948
        %v8953 = vsub.f32 %v8799, %v8948
        %v8954 = vsub.f32 %v8800, %v8948
        %v8955 = vsub.f32 %v8801, %v8948
        %v8956 = vsub.f32 %v8802, %v8948
        %v8957 = vsub.f32 %v8803, %v8948
        %v8958 = vsub.f32 %v8804, %v8948
        %v8959 = vsub.f32 %v8805, %v8948
        %v8960 = vsub.f32 %v8806, %v8948
        %v8961 = vsub.f32 %v8807, %v8948
        %v8962 = vsub.f32 %v8808, %v8948
        %v8963 = vsub.f32 %v8809, %v8948
        %v8964 = vsub.f32 %v8810, %v8948
        %v8965 = vsub.f32 %v8811, %v8948
        %v8966 = vsub.f32 %v8812, %v8948
        %v8967 = vsub.f32 %v8813, %v8948
        %v8968 = vsub.f32 %v8814, %v8948
        %v8969 = vsub.f32 %v8815, %v8948
        %v8970 = vsub.f32 %v8816, %v8948
        %v8971 = vsub.f32 %v8817, %v8948
        %v8972 = vsub.f32 %v8818, %v8948
        %v8973 = vsub.f32 %v8819, %v8948
        %v8974 = vsub.f32 %v8820, %v8948
        %v8975 = vsub.f32 %v8821, %v8948
        %v8976 = vsub.f32 %v8822, %v8948
        %v8977 = vsub.f32 %v8823, %v8948
        %v8978 = vsub.f32 %v8824, %v8948
        %v8979 = vsub.f32 %v8825, %v8948
        %v8980 = vsub.f32 %v8826, %v8948
        %v8981 = vmul.f32 %v8949, %v8949
        %v8982 = vmul.f32 %v8950, %v8950
        %v8983 = vmul.f32 %v8951, %v8951
        %v8984 = vmul.f32 %v8952, %v8952
        %v8985 = vmul.f32 %v8953, %v8953
        %v8986 = vmul.f32 %v8954, %v8954
        %v8987 = vmul.f32 %v8955, %v8955
        %v8988 = vmul.f32 %v8956, %v8956
        %v8989 = vmul.f32 %v8957, %v8957
        %v8990 = vmul.f32 %v8958, %v8958
        %v8991 = vmul.f32 %v8959, %v8959
        %v8992 = vmul.f32 %v8960, %v8960
        %v8993 = vmul.f32 %v8961, %v8961
        %v8994 = vmul.f32 %v8962, %v8962
        %v8995 = vmul.f32 %v8963, %v8963
        %v8996 = vmul.f32 %v8964, %v8964
        %v8997 = vmul.f32 %v8965, %v8965
        %v8998 = vmul.f32 %v8966, %v8966
        %v8999 = vmul.f32 %v8967, %v8967
        %v9000 = vmul.f32 %v8968, %v8968
        %v9001 = vmul.f32 %v8969, %v8969
        %v9002 = vmul.f32 %v8970, %v8970
        %v9003 = vmul.f32 %v8971, %v8971
        %v9004 = vmul.f32 %v8972, %v8972
        %v9005 = vmul.f32 %v8973, %v8973
        %v9006 = vmul.f32 %v8974, %v8974
        %v9007 = vmul.f32 %v8975, %v8975
        %v9008 = vmul.f32 %v8976, %v8976
        %v9009 = vmul.f32 %v8977, %v8977
        %v9010 = vmul.f32 %v8978, %v8978
        %v9011 = vmul.f32 %v8979, %v8979
        %v9012 = vmul.f32 %v8980, %v8980
        %v9013 = vsel %vm3275, %v8981, 0.0
        %v9014 = vsel %vm3275, %v8982, 0.0
        %v9015 = vadd.f32 %v9013, %v9014
        %v9016 = vsel %vm3275, %v8983, 0.0
        %v9017 = vadd.f32 %v9015, %v9016
        %v9018 = vsel %vm3275, %v8984, 0.0
        %v9019 = vadd.f32 %v9017, %v9018
        %v9020 = vsel %vm3275, %v8985, 0.0
        %v9021 = vadd.f32 %v9019, %v9020
        %v9022 = vsel %vm3275, %v8986, 0.0
        %v9023 = vadd.f32 %v9021, %v9022
        %v9024 = vsel %vm3275, %v8987, 0.0
        %v9025 = vadd.f32 %v9023, %v9024
        %v9026 = vsel %vm3275, %v8988, 0.0
        %v9027 = vadd.f32 %v9025, %v9026
        %v9028 = vsel %vm3275, %v8989, 0.0
        %v9029 = vadd.f32 %v9027, %v9028
        %v9030 = vsel %vm3275, %v8990, 0.0
        %v9031 = vadd.f32 %v9029, %v9030
        %v9032 = vsel %vm3275, %v8991, 0.0
        %v9033 = vadd.f32 %v9031, %v9032
        %v9034 = vsel %vm3275, %v8992, 0.0
        %v9035 = vadd.f32 %v9033, %v9034
        %v9036 = vsel %vm3275, %v8993, 0.0
        %v9037 = vadd.f32 %v9035, %v9036
        %v9038 = vsel %vm3275, %v8994, 0.0
        %v9039 = vadd.f32 %v9037, %v9038
        %v9040 = vsel %vm3275, %v8995, 0.0
        %v9041 = vadd.f32 %v9039, %v9040
        %v9042 = vsel %vm3275, %v8996, 0.0
        %v9043 = vadd.f32 %v9041, %v9042
        %v9044 = vsel %vm3275, %v8997, 0.0
        %v9045 = vadd.f32 %v9043, %v9044
        %v9046 = vsel %vm3275, %v8998, 0.0
        %v9047 = vadd.f32 %v9045, %v9046
        %v9048 = vsel %vm3275, %v8999, 0.0
        %v9049 = vadd.f32 %v9047, %v9048
        %v9050 = vsel %vm3275, %v9000, 0.0
        %v9051 = vadd.f32 %v9049, %v9050
        %v9052 = vsel %vm3275, %v9001, 0.0
        %v9053 = vadd.f32 %v9051, %v9052
        %v9054 = vsel %vm3275, %v9002, 0.0
        %v9055 = vadd.f32 %v9053, %v9054
        %v9056 = vsel %vm3275, %v9003, 0.0
        %v9057 = vadd.f32 %v9055, %v9056
        %v9058 = vsel %vm3275, %v9004, 0.0
        %v9059 = vadd.f32 %v9057, %v9058
        %v9060 = vsel %vm3275, %v9005, 0.0
        %v9061 = vadd.f32 %v9059, %v9060
        %v9062 = vsel %vm3275, %v9006, 0.0
        %v9063 = vadd.f32 %v9061, %v9062
        %v9064 = vsel %vm3275, %v9007, 0.0
        %v9065 = vadd.f32 %v9063, %v9064
        %v9066 = vsel %vm3275, %v9008, 0.0
        %v9067 = vadd.f32 %v9065, %v9066
        %v9068 = vsel %vm3275, %v9009, 0.0
        %v9069 = vadd.f32 %v9067, %v9068
        %v9070 = vsel %vm3275, %v9010, 0.0
        %v9071 = vadd.f32 %v9069, %v9070
        %v9072 = vsel %vm3275, %v9011, 0.0
        %v9073 = vadd.f32 %v9071, %v9072
        %v9074 = vsel %vm3275, %v9012, 0.0
        %v9075 = vadd.f32 %v9073, %v9074
        %v9076 = vrot.slane %v9075, 4
        %v9077 = vadd.f32 %v9075, %v9076
        %v9078 = vrot.slane %v9077, 2
        %v9079 = vadd.f32 %v9077, %v9078
        %v9080 = vrot.slane %v9079, 1
        %v9081 = vadd.f32 %v9079, %v9080
        %v9083 = vsel %vm3275, %v9081, 0
        %9085 = vmatpush.msra.mxu0 0.0
        %9086 = vmatpush.msra.mxu0 0.0
        %9087 = vmatpush.msra.mxu0 0.0
        %9088 = vmatpush.msra.mxu0 0.0
        %9089 = vmatpush.msra.mxu0 0.0
        %9090 = vmatpush.msra.mxu0 0.0
        %9091 = vmatpush.msra.mxu0 0.0
        %9092 = vmatpush.msra.mxu0 0.0
        %9093 = vmatpush.msra.mxu0 0.0
        %9094 = vmatpush.msra.mxu0 0.0
        %9095 = vmatpush.msra.mxu0 0.0
        %9096 = vmatpush.msra.mxu0 0.0
        %9097 = vmatpush.msra.mxu0 %v8830
        %9098 = vmatpush.msra.mxu0 %v8829
        %9099 = vmatpush.msra.mxu0 %v8828
        %9100 = vmatpush.msra.mxu0 %v8827
        %9101 = vmatmul.f32.gmra.mxu0 %v9083
        %v9102 = vpop.f32.mrf.mxu0
        %v9103 = vadd.f32 0.0, %v9102
        %9104 = vdwg.mxu0
        %v9105 = vmul.f32 %v9103, %v3374
        %v9107 = vsel %vm3376, %v9105, 0
        %9109 = vmatpush.msra.mxu0 0.0
        %9110 = vmatpush.msra.mxu0 0.0
        %9111 = vmatpush.msra.mxu0 0.0
        %9112 = vmatpush.msra.mxu0 0.0
        %9113 = vmatpush.msra.mxu0 0.0
        %9114 = vmatpush.msra.mxu0 0.0
        %9115 = vmatpush.msra.mxu0 0.0
        %9116 = vmatpush.msra.mxu0 0.0
        %9117 = vmatpush.msra.mxu0 0.0
        %9118 = vmatpush.msra.mxu0 0.0
        %9119 = vmatpush.msra.mxu0 0.0
        %9120 = vmatpush.msra.mxu0 0.0
        %9121 = vmatpush.msra.mxu0 0.0
        %9122 = vmatpush.msra.mxu0 0.0
        %9123 = vmatpush.msra.mxu0 0.0
        %9124 = vmatpush.msra.mxu0 %v8831
        %9125 = vmatmul.f32.gmra.mxu0 %v9107
        %v9126 = vpop.f32.mrf.mxu0
        %v9127 = vadd.f32 1e-05, %v9126
        %9128 = vdwg.mxu0
        %v9129 = vrsqrt.pop %v9127
        %v9130 = vmul.f32 %v9129, %v9127
        %v9131 = vmul.f32 %v9130, %v9129
        %v9132 = vmul.f32 0.5, %v9131
        %v9133 = vsub.f32 1.5, %v9132
        %v9134 = vmul.f32 %v9129, %v9133
        %vm9135 = vweird.f32 %v9127
        %vm9136 = vweird.f32 %v9129
        %vm9137 = vmor %vm9135, %vm9136
        %v9138 = vsel %vm9137, %v9129, %v9134
        %v9139 = vperm.slane %v9138, 0
        %v9140 = vmul.f32 %v8949, %v9139
        %v9141 = vmul.f32 %v8950, %v9139
        %v9142 = vmul.f32 %v8951, %v9139
        %v9143 = vmul.f32 %v8952, %v9139
        %v9144 = vmul.f32 %v8953, %v9139
        %v9145 = vmul.f32 %v8954, %v9139
        %v9146 = vmul.f32 %v8955, %v9139
        %v9147 = vmul.f32 %v8956, %v9139
        %v9148 = vmul.f32 %v8957, %v9139
        %v9149 = vmul.f32 %v8958, %v9139
        %v9150 = vmul.f32 %v8959, %v9139
        %v9151 = vmul.f32 %v8960, %v9139
        %v9152 = vmul.f32 %v8961, %v9139
        %v9153 = vmul.f32 %v8962, %v9139
        %v9154 = vmul.f32 %v8963, %v9139
        %v9155 = vmul.f32 %v8964, %v9139
        %v9156 = vmul.f32 %v8965, %v9139
        %v9157 = vmul.f32 %v8966, %v9139
        %v9158 = vmul.f32 %v8967, %v9139
        %v9159 = vmul.f32 %v8968, %v9139
        %v9160 = vmul.f32 %v8969, %v9139
        %v9161 = vmul.f32 %v8970, %v9139
        %v9162 = vmul.f32 %v8971, %v9139
        %v9163 = vmul.f32 %v8972, %v9139
        %v9164 = vmul.f32 %v8973, %v9139
        %v9165 = vmul.f32 %v8974, %v9139
        %v9166 = vmul.f32 %v8975, %v9139
        %v9167 = vmul.f32 %v8976, %v9139
        %v9168 = vmul.f32 %v8977, %v9139
        %v9169 = vmul.f32 %v8978, %v9139
        %v9170 = vmul.f32 %v8979, %v9139
        %v9171 = vmul.f32 %v8980, %v9139
        %v9172 = vld [vmem:[%s491] sm:$0x1]
        %v9173 = vadd.f32 %v9172, 1.0
        %v9175 = vperm.slane %v9173, 0
        %v9177 = vmul.f32 %v9140, %v9175
        %v9178 = vmul.f32 %v9141, %v9175
        %v9179 = vmul.f32 %v9142, %v9175
        %v9180 = vmul.f32 %v9143, %v9175
        %v9181 = vmul.f32 %v9144, %v9175
        %v9182 = vmul.f32 %v9145, %v9175
        %v9183 = vmul.f32 %v9146, %v9175
        %v9184 = vmul.f32 %v9147, %v9175
        %v9185 = vmul.f32 %v9148, %v9175
        %v9186 = vmul.f32 %v9149, %v9175
        %v9187 = vmul.f32 %v9150, %v9175
        %v9188 = vmul.f32 %v9151, %v9175
        %v9189 = vmul.f32 %v9152, %v9175
        %v9190 = vmul.f32 %v9153, %v9175
        %v9191 = vmul.f32 %v9154, %v9175
        %v9192 = vmul.f32 %v9155, %v9175
        %v9193 = vmul.f32 %v9156, %v9175
        %v9194 = vmul.f32 %v9157, %v9175
        %v9195 = vmul.f32 %v9158, %v9175
        %v9196 = vmul.f32 %v9159, %v9175
        %v9197 = vmul.f32 %v9160, %v9175
        %v9198 = vmul.f32 %v9161, %v9175
        %v9199 = vmul.f32 %v9162, %v9175
        %v9200 = vmul.f32 %v9163, %v9175
        %v9201 = vmul.f32 %v9164, %v9175
        %v9202 = vmul.f32 %v9165, %v9175
        %v9203 = vmul.f32 %v9166, %v9175
        %v9204 = vmul.f32 %v9167, %v9175
        %v9205 = vmul.f32 %v9168, %v9175
        %v9206 = vmul.f32 %v9169, %v9175
        %v9207 = vmul.f32 %v9170, %v9175
        %v9208 = vmul.f32 %v9171, %v9175
        %v9209 = vld [vmem:[%s494] sm:$0x1]
        %v9211 = vperm.slane %v9209, 0
        %v9213 = vadd.f32 %v9177, %v9211
        %v9214 = vadd.f32 %v9178, %v9211
        %v9215 = vadd.f32 %v9179, %v9211
        %v9216 = vadd.f32 %v9180, %v9211
        %v9217 = vadd.f32 %v9181, %v9211
        %v9218 = vadd.f32 %v9182, %v9211
        %v9219 = vadd.f32 %v9183, %v9211
        %v9220 = vadd.f32 %v9184, %v9211
        %v9221 = vadd.f32 %v9185, %v9211
        %v9222 = vadd.f32 %v9186, %v9211
        %v9223 = vadd.f32 %v9187, %v9211
        %v9224 = vadd.f32 %v9188, %v9211
        %v9225 = vadd.f32 %v9189, %v9211
        %v9226 = vadd.f32 %v9190, %v9211
        %v9227 = vadd.f32 %v9191, %v9211
        %v9228 = vadd.f32 %v9192, %v9211
        %v9229 = vadd.f32 %v9193, %v9211
        %v9230 = vadd.f32 %v9194, %v9211
        %v9231 = vadd.f32 %v9195, %v9211
        %v9232 = vadd.f32 %v9196, %v9211
        %v9233 = vadd.f32 %v9197, %v9211
        %v9234 = vadd.f32 %v9198, %v9211
        %v9235 = vadd.f32 %v9199, %v9211
        %v9236 = vadd.f32 %v9200, %v9211
        %v9237 = vadd.f32 %v9201, %v9211
        %v9238 = vadd.f32 %v9202, %v9211
        %v9239 = vadd.f32 %v9203, %v9211
        %v9240 = vadd.f32 %v9204, %v9211
        %v9241 = vadd.f32 %v9205, %v9211
        %v9242 = vadd.f32 %v9206, %v9211
        %v9243 = vadd.f32 %v9207, %v9211
        %v9244 = vadd.f32 %v9208, %v9211
        %v9245 = vld [vmem:[%s482 + $0x18] sm:$0xff]
        %v9246 = vld [vmem:[%s482 + $0x20] sm:$0xff]
        %v9247 = vld [vmem:[%s482 + $0x28] sm:$0xff]
        %v9248 = vld [vmem:[%s482 + $0x30] sm:$0xff]
        %v9249 = vld [vmem:[%s482 + $0x38] sm:$0xff]
        %v9250 = vld [vmem:[%s482 + $0x40] sm:$0xff]
        %v9251 = vld [vmem:[%s482 + $0x48] sm:$0xff]
        %v9252 = vld [vmem:[%s482 + $0x50] sm:$0xff]
        %v9253 = vld [vmem:[%s482 + $0x58] sm:$0xff]
        %v9254 = vld [vmem:[%s482 + $0x60] sm:$0xff]
        %v9255 = vld [vmem:[%s482 + $0x68] sm:$0xff]
        %v9256 = vld [vmem:[%s482 + $0x70] sm:$0xff]
        %v9257 = vld [vmem:[%s482 + $0x78] sm:$0xff]
        %v9258 = vld [vmem:[%s482 + $0x80] sm:$0xff]
        %v9259 = vld [vmem:[%s482 + $0x88] sm:$0xff]
        %v9260 = vld [vmem:[%s482 + $0x90] sm:$0xff]
        %v9261 = vld [vmem:[%s482 + $0x98] sm:$0xff]
        %v9262 = vld [vmem:[%s482 + $0xa0] sm:$0xff]
        %v9263 = vld [vmem:[%s482 + $0xa8] sm:$0xff]
        %v9264 = vld [vmem:[%s482 + $0xb0] sm:$0xff]
        %v9265 = vld [vmem:[%s482 + $0xb8] sm:$0xff]
        %v9266 = vld [vmem:[%s482 + $0xc0] sm:$0xff]
        %v9267 = vld [vmem:[%s482 + $0xc8] sm:$0xff]
        %v9268 = vld [vmem:[%s482 + $0xd0] sm:$0xff]
        %v9269 = vld [vmem:[%s482 + $0xd8] sm:$0xff]
        %v9270 = vld [vmem:[%s482 + $0xe0] sm:$0xff]
        %v9271 = vld [vmem:[%s482 + $0xe8] sm:$0xff]
        %v9272 = vld [vmem:[%s482 + $0xf0] sm:$0xff]
        %v9273 = vld [vmem:[%s482 + $0xf8] sm:$0xff]
        %v9274 = vld [vmem:[%s482 + $0x100] sm:$0xff]
        %v9275 = vld [vmem:[%s482 + $0x108] sm:$0xff]
        %v9276 = vld [vmem:[%s482 + $0x110] sm:$0xff]
        %v9277 = vld [vmem:[%s5] sm:$0xf]
        %v9279 = vsel %vm1174, %v9245, 0
        %v9282 = vsel %vm1174, %v9246, 0
        %v9285 = vsel %vm1174, %v9247, 0
        %v9288 = vsel %vm1174, %v9248, 0
        %v9291 = vsel %vm1174, %v9249, 0
        %v9294 = vsel %vm1174, %v9250, 0
        %v9297 = vsel %vm1174, %v9251, 0
        %v9300 = vsel %vm1174, %v9252, 0
        %v9303 = vsel %vm1174, %v9253, 0
        %v9306 = vsel %vm1174, %v9254, 0
        %v9309 = vsel %vm1174, %v9255, 0
        %v9312 = vsel %vm1174, %v9256, 0
        %v9315 = vsel %vm1174, %v9257, 0
        %v9318 = vsel %vm1174, %v9258, 0
        %v9321 = vsel %vm1174, %v9259, 0
        %v9324 = vsel %vm1174, %v9260, 0
        %v9327 = vsel %vm1174, %v9261, 0
        %v9330 = vsel %vm1174, %v9262, 0
        %v9333 = vsel %vm1174, %v9263, 0
        %v9336 = vsel %vm1174, %v9264, 0
        %v9339 = vsel %vm1174, %v9265, 0
        %v9342 = vsel %vm1174, %v9266, 0
        %v9345 = vsel %vm1174, %v9267, 0
        %v9348 = vsel %vm1174, %v9268, 0
        %v9351 = vsel %vm1174, %v9269, 0
        %v9354 = vsel %vm1174, %v9270, 0
        %v9357 = vsel %vm1174, %v9271, 0
        %v9360 = vsel %vm1174, %v9272, 0
        %v9363 = vsel %vm1174, %v9273, 0
        %v9366 = vsel %vm1174, %v9274, 0
        %v9369 = vsel %vm1174, %v9275, 0
        %v9372 = vsel %vm1174, %v9276, 0
        %vm9374 = vcmask 1043456
        %v9376 = vsel %vm9374, %v9277, 0
        %9378 = vmatpush.msra.mxu0 0.0
        %9379 = vmatpush.msra.mxu0 0.0
        %9380 = vmatpush.msra.mxu0 0.0
        %9381 = vmatpush.msra.mxu0 0.0
        %9382 = vmatpush.msra.mxu0 0.0
        %9383 = vmatpush.msra.mxu0 0.0
        %9384 = vmatpush.msra.mxu0 0.0
        %9385 = vmatpush.msra.mxu0 0.0
        %9386 = vmatpush.msra.mxu0 0.0
        %9387 = vmatpush.msra.mxu0 0.0
        %9388 = vmatpush.msra.mxu0 0.0
        %9389 = vmatpush.msra.mxu0 0.0
        %9390 = vmatpush.msra.mxu0 0.0
        %9391 = vmatpush.msra.mxu0 0.0
        %9392 = vmatpush.msra.mxu0 0.0
        %9393 = vmatpush.msra.mxu0 %v9376
        %9394 = vmatmul.f32.gmra.mxu0 %v9279
        %v9395 = vpop.f32.mrf.mxu0
        %v9396 = vadd.f32 0.0, %v9395
        %9397 = vmatmul.f32.gmra.mxu0 %v9282
        %v9398 = vpop.f32.mrf.mxu0
        %v9399 = vadd.f32 0.0, %v9398
        %9400 = vmatmul.f32.gmra.mxu0 %v9285
        %v9401 = vpop.f32.mrf.mxu0
        %v9402 = vadd.f32 0.0, %v9401
        %9403 = vmatmul.f32.gmra.mxu0 %v9288
        %v9404 = vpop.f32.mrf.mxu0
        %v9405 = vadd.f32 0.0, %v9404
        %9406 = vmatmul.f32.gmra.mxu0 %v9291
        %v9407 = vpop.f32.mrf.mxu0
        %v9408 = vadd.f32 0.0, %v9407
        %9409 = vmatmul.f32.gmra.mxu0 %v9294
        %v9410 = vpop.f32.mrf.mxu0
        %v9411 = vadd.f32 0.0, %v9410
        %9412 = vmatmul.f32.gmra.mxu0 %v9297
        %v9413 = vpop.f32.mrf.mxu0
        %v9414 = vadd.f32 0.0, %v9413
        %9415 = vmatmul.f32.gmra.mxu0 %v9300
        %v9416 = vpop.f32.mrf.mxu0
        %v9417 = vadd.f32 0.0, %v9416
        %9418 = vmatmul.f32.gmra.mxu0 %v9303
        %v9419 = vpop.f32.mrf.mxu0
        %v9420 = vadd.f32 0.0, %v9419
        %9421 = vmatmul.f32.gmra.mxu0 %v9306
        %v9422 = vpop.f32.mrf.mxu0
        %v9423 = vadd.f32 0.0, %v9422
        %9424 = vmatmul.f32.gmra.mxu0 %v9309
        %v9425 = vpop.f32.mrf.mxu0
        %v9426 = vadd.f32 0.0, %v9425
        %9427 = vmatmul.f32.gmra.mxu0 %v9312
        %v9428 = vpop.f32.mrf.mxu0
        %v9429 = vadd.f32 0.0, %v9428
        %9430 = vmatmul.f32.gmra.mxu0 %v9315
        %v9431 = vpop.f32.mrf.mxu0
        %v9432 = vadd.f32 0.0, %v9431
        %9433 = vmatmul.f32.gmra.mxu0 %v9318
        %v9434 = vpop.f32.mrf.mxu0
        %v9435 = vadd.f32 0.0, %v9434
        %9436 = vmatmul.f32.gmra.mxu0 %v9321
        %v9437 = vpop.f32.mrf.mxu0
        %v9438 = vadd.f32 0.0, %v9437
        %9439 = vmatmul.f32.gmra.mxu0 %v9324
        %v9440 = vpop.f32.mrf.mxu0
        %v9441 = vadd.f32 0.0, %v9440
        %9442 = vmatmul.f32.gmra.mxu0 %v9327
        %v9443 = vpop.f32.mrf.mxu0
        %v9444 = vadd.f32 0.0, %v9443
        %9445 = vmatmul.f32.gmra.mxu0 %v9330
        %v9446 = vpop.f32.mrf.mxu0
        %v9447 = vadd.f32 0.0, %v9446
        %9448 = vmatmul.f32.gmra.mxu0 %v9333
        %v9449 = vpop.f32.mrf.mxu0
        %v9450 = vadd.f32 0.0, %v9449
        %9451 = vmatmul.f32.gmra.mxu0 %v9336
        %v9452 = vpop.f32.mrf.mxu0
        %v9453 = vadd.f32 0.0, %v9452
        %9454 = vmatmul.f32.gmra.mxu0 %v9339
        %v9455 = vpop.f32.mrf.mxu0
        %v9456 = vadd.f32 0.0, %v9455
        %9457 = vmatmul.f32.gmra.mxu0 %v9342
        %v9458 = vpop.f32.mrf.mxu0
        %v9459 = vadd.f32 0.0, %v9458
        %9460 = vmatmul.f32.gmra.mxu0 %v9345
        %v9461 = vpop.f32.mrf.mxu0
        %v9462 = vadd.f32 0.0, %v9461
        %9463 = vmatmul.f32.gmra.mxu0 %v9348
        %v9464 = vpop.f32.mrf.mxu0
        %v9465 = vadd.f32 0.0, %v9464
        %9466 = vmatmul.f32.gmra.mxu0 %v9351
        %v9467 = vpop.f32.mrf.mxu0
        %v9468 = vadd.f32 0.0, %v9467
        %9469 = vmatmul.f32.gmra.mxu0 %v9354
        %v9470 = vpop.f32.mrf.mxu0
        %v9471 = vadd.f32 0.0, %v9470
        %9472 = vmatmul.f32.gmra.mxu0 %v9357
        %v9473 = vpop.f32.mrf.mxu0
        %v9474 = vadd.f32 0.0, %v9473
        %9475 = vmatmul.f32.gmra.mxu0 %v9360
        %v9476 = vpop.f32.mrf.mxu0
        %v9477 = vadd.f32 0.0, %v9476
        %9478 = vmatmul.f32.gmra.mxu0 %v9363
        %v9479 = vpop.f32.mrf.mxu0
        %v9480 = vadd.f32 0.0, %v9479
        %9481 = vmatmul.f32.gmra.mxu0 %v9366
        %v9482 = vpop.f32.mrf.mxu0
        %v9483 = vadd.f32 0.0, %v9482
        %9484 = vmatmul.f32.gmra.mxu0 %v9369
        %v9485 = vpop.f32.mrf.mxu0
        %v9486 = vadd.f32 0.0, %v9485
        %9487 = vmatmul.f32.gmra.mxu0 %v9372
        %v9488 = vpop.f32.mrf.mxu0
        %v9489 = vadd.f32 0.0, %v9488
        %9490 = vdwg.mxu0
        %v9491 = vadd.f32 %v9213, %v9396
        %v9492 = vadd.f32 %v9214, %v9399
        %v9493 = vadd.f32 %v9215, %v9402
        %v9494 = vadd.f32 %v9216, %v9405
        %v9495 = vadd.f32 %v9217, %v9408
        %v9496 = vadd.f32 %v9218, %v9411
        %v9497 = vadd.f32 %v9219, %v9414
        %v9498 = vadd.f32 %v9220, %v9417
        %v9499 = vadd.f32 %v9221, %v9420
        %v9500 = vadd.f32 %v9222, %v9423
        %v9501 = vadd.f32 %v9223, %v9426
        %v9502 = vadd.f32 %v9224, %v9429
        %v9503 = vadd.f32 %v9225, %v9432
        %v9504 = vadd.f32 %v9226, %v9435
        %v9505 = vadd.f32 %v9227, %v9438
        %v9506 = vadd.f32 %v9228, %v9441
        %v9507 = vadd.f32 %v9229, %v9444
        %v9508 = vadd.f32 %v9230, %v9447
        %v9509 = vadd.f32 %v9231, %v9450
        %v9510 = vadd.f32 %v9232, %v9453
        %v9511 = vadd.f32 %v9233, %v9456
        %v9512 = vadd.f32 %v9234, %v9459
        %v9513 = vadd.f32 %v9235, %v9462
        %v9514 = vadd.f32 %v9236, %v9465
        %v9515 = vadd.f32 %v9237, %v9468
        %v9516 = vadd.f32 %v9238, %v9471
        %v9517 = vadd.f32 %v9239, %v9474
        %v9518 = vadd.f32 %v9240, %v9477
        %v9519 = vadd.f32 %v9241, %v9480
        %v9520 = vadd.f32 %v9242, %v9483
        %v9521 = vadd.f32 %v9243, %v9486
        %v9522 = vadd.f32 %v9244, %v9489
        %v9523 = vld [vmem:[%s6] sm:$0x1]
        %v9525 = vperm.slane %v9523, 0
        %v9527 = vadd.f32 %v9491, %v9525
        %v9528 = vadd.f32 %v9492, %v9525
        %v9529 = vadd.f32 %v9493, %v9525
        %v9530 = vadd.f32 %v9494, %v9525
        %v9531 = vadd.f32 %v9495, %v9525
        %v9532 = vadd.f32 %v9496, %v9525
        %v9533 = vadd.f32 %v9497, %v9525
        %v9534 = vadd.f32 %v9498, %v9525
        %v9535 = vadd.f32 %v9499, %v9525
        %v9536 = vadd.f32 %v9500, %v9525
        %v9537 = vadd.f32 %v9501, %v9525
        %v9538 = vadd.f32 %v9502, %v9525
        %v9539 = vadd.f32 %v9503, %v9525
        %v9540 = vadd.f32 %v9504, %v9525
        %v9541 = vadd.f32 %v9505, %v9525
        %v9542 = vadd.f32 %v9506, %v9525
        %v9543 = vadd.f32 %v9507, %v9525
        %v9544 = vadd.f32 %v9508, %v9525
        %v9545 = vadd.f32 %v9509, %v9525
        %v9546 = vadd.f32 %v9510, %v9525
        %v9547 = vadd.f32 %v9511, %v9525
        %v9548 = vadd.f32 %v9512, %v9525
        %v9549 = vadd.f32 %v9513, %v9525
        %v9550 = vadd.f32 %v9514, %v9525
        %v9551 = vadd.f32 %v9515, %v9525
        %v9552 = vadd.f32 %v9516, %v9525
        %v9553 = vadd.f32 %v9517, %v9525
        %v9554 = vadd.f32 %v9518, %v9525
        %v9555 = vadd.f32 %v9519, %v9525
        %v9556 = vadd.f32 %v9520, %v9525
        %v9557 = vadd.f32 %v9521, %v9525
        %v9558 = vadd.f32 %v9522, %v9525
        %9559 = vst.msk [vmem:[%s477] sm:$0xff] %vm3275, %v9527
        %9560 = vst.msk [vmem:[%s477 + $0x8] sm:$0xff] %vm3275, %v9528
        %9561 = vst.msk [vmem:[%s477 + $0x10] sm:$0xff] %vm3275, %v9529
        %9562 = vst.msk [vmem:[%s477 + $0x18] sm:$0xff] %vm3275, %v9530
        %9563 = vst.msk [vmem:[%s477 + $0x20] sm:$0xff] %vm3275, %v9531
        %9564 = vst.msk [vmem:[%s477 + $0x28] sm:$0xff] %vm3275, %v9532
        %9565 = vst.msk [vmem:[%s477 + $0x30] sm:$0xff] %vm3275, %v9533
        %9566 = vst.msk [vmem:[%s477 + $0x38] sm:$0xff] %vm3275, %v9534
        %9567 = vst.msk [vmem:[%s477 + $0x40] sm:$0xff] %vm3275, %v9535
        %9568 = vst.msk [vmem:[%s477 + $0x48] sm:$0xff] %vm3275, %v9536
        %9569 = vst.msk [vmem:[%s477 + $0x50] sm:$0xff] %vm3275, %v9537
        %9570 = vst.msk [vmem:[%s477 + $0x58] sm:$0xff] %vm3275, %v9538
        %9571 = vst.msk [vmem:[%s477 + $0x60] sm:$0xff] %vm3275, %v9539
        %9572 = vst.msk [vmem:[%s477 + $0x68] sm:$0xff] %vm3275, %v9540
        %9573 = vst.msk [vmem:[%s477 + $0x70] sm:$0xff] %vm3275, %v9541
        %9574 = vst.msk [vmem:[%s477 + $0x78] sm:$0xff] %vm3275, %v9542
        %9575 = vst.msk [vmem:[%s477 + $0x80] sm:$0xff] %vm3275, %v9543
        %9576 = vst.msk [vmem:[%s477 + $0x88] sm:$0xff] %vm3275, %v9544
        %9577 = vst.msk [vmem:[%s477 + $0x90] sm:$0xff] %vm3275, %v9545
        %9578 = vst.msk [vmem:[%s477 + $0x98] sm:$0xff] %vm3275, %v9546
        %9579 = vst.msk [vmem:[%s477 + $0xa0] sm:$0xff] %vm3275, %v9547
        %9580 = vst.msk [vmem:[%s477 + $0xa8] sm:$0xff] %vm3275, %v9548
        %9581 = vst.msk [vmem:[%s477 + $0xb0] sm:$0xff] %vm3275, %v9549
        %9582 = vst.msk [vmem:[%s477 + $0xb8] sm:$0xff] %vm3275, %v9550
        %9583 = vst.msk [vmem:[%s477 + $0xc0] sm:$0xff] %vm3275, %v9551
        %9584 = vst.msk [vmem:[%s477 + $0xc8] sm:$0xff] %vm3275, %v9552
        %9585 = vst.msk [vmem:[%s477 + $0xd0] sm:$0xff] %vm3275, %v9553
        %9586 = vst.msk [vmem:[%s477 + $0xd8] sm:$0xff] %vm3275, %v9554
        %9587 = vst.msk [vmem:[%s477 + $0xe0] sm:$0xff] %vm3275, %v9555
        %9588 = vst.msk [vmem:[%s477 + $0xe8] sm:$0xff] %vm3275, %v9556
        %9589 = vst.msk [vmem:[%s477 + $0xf0] sm:$0xff] %vm3275, %v9557
        %9590 = vst.msk [vmem:[%s477 + $0xf8] sm:$0xff] %vm3275, %v9558
        %s9591 = sand.u32 %s333, 1
        %s9592 = scalar_lea.sflag [#allocation4], %s9591
        %s9593 = sand.u32 %s333, 1
        %s9594 = smul.addr %s9593, 256
        %s9595 = scalar_lea.vmem [#allocation3], %s9594
        // Predicated region
        $region73: #{student_block_forward.1} parent=71 // pred_check
          %p9596 = pneg %p343
        $region74: #{student_block_forward.1} parent=71 // pred_check_branch
          %9598 = sbr.rel (%p9596) target = $region76
        $region75: #{student_block_forward.1} parent=71 // pred_region
          %9600 = vsyncadd %s9592, 0
          %s9601 = smul.addr %s27, 32
          %s9602 = smul.addr %s9601, 8
          %s9603 = scalar_lea.hbm %s13, %s9602
          %s9604 = sshll.u32 %s9595, 4
          %s9605 = int_to_ptr.vmem [resolvable:$true] %s9604
          %s9606 = sshll.u32 %s9603, 4
          %s9607 = int_to_ptr.hbm [resolvable:$true] %s9606
          %9612 = dma.vmem_to_hbm [thread:$0]  %s9605, 4096, %s9607, %s9592, 128, 128, 8
        $region76: #{student_block_forward.1} parent=71 // pred_fallthru
          _
      $region72: #{student_block_forward.1} parent=5 // pred_fallthru
        _
      %p9613 = scmp.le.s32.totalorder 2, %s22
      // Predicated region
      $region77: #{student_block_forward.1} parent=5 // pred_check
        %p9614 = pneg %p9613
      $region78: #{student_block_forward.1} parent=5 // pred_check_branch
        %9616 = sbr.rel (%p9614) target = $region80
      $region79: #{student_block_forward.1} parent=5 // pred_region
        %s9617 = ssub.s32 %s22, 2
        // Predicated region
        $region81: #{student_block_forward.1} parent=79 // pred_check
          %p9618 = pneg %p349
        $region82: #{student_block_forward.1} parent=79 // pred_check_branch
          %9620 = sbr.rel (%p9618) target = $region84
        $region83: #{student_block_forward.1} parent=79 // pred_region
          %s9621 = sand.u32 %s334, 1
          %s9622 = scalar_lea.sflag [#allocation4], %s9621
          %s9623 = sand.u32 %s334, 1
          %s9624 = smul.addr %s9623, 256
          %s9625 = scalar_lea.vmem [#allocation3], %s9624
          %9627 = dma.done %s9622, 4096
        $region84: #{student_block_forward.1} parent=79 // pred_fallthru
          _
      $region80: #{student_block_forward.1} parent=5 // pred_fallthru
        _
    $region6: #{student_block_forward.1} parent=1 // loop_footer
      %s26 = sadd.s32 1, %s22
    $region7: #{student_block_forward.1} parent=1 // loop_footer_branch
      %21 = sbr.rel target = $region3
    $region8: #{student_block_forward.1} parent=1 // loop_exit
      _
    %9628 = vsyncpa [#allocation4], 1
    %s9629 = scalar_lea.sflag [#allocation4], 1
    %9630 = vsyncpa %s9629, 1

</llo_original>
